<compile_context>
chip_gen: v7x
topology: tpu7x:2x2x1
jax: 0.10.0
libtpu: 0.0.40
codegen_flags: <defaults>
</compile_context>

<pallas_src>
import functools
import math

import numpy as np
import jax
import jax.numpy as jnp
from jax.experimental import pallas as pl
from jax.experimental.pallas import tpu as pltpu


# --------------------------- generation-aware sizing -------------------------

@functools.lru_cache(maxsize=None)
def _vmem_limit_bytes():
    try:
        cap = int(pltpu.get_tpu_info().vmem_capacity_bytes)
    except Exception:
        cap = 64 * 1024 * 1024          # conservative fallback (v7x-sized)
    return min((cap * 3) // 4, 112 * 1024 * 1024)


def _tile_caps():
    # (tm_cap, tn_cap, tv_cap). Bigger tiles on v5e/v6e (128 MiB VMEM) than v7x (64 MiB).
    if _vmem_limit_bytes() >= 80 * 1024 * 1024:
        return 512, 4096, 2048
    return 256, 2048, 2048


def _compiler_params(n_axes, semantics=None):
    return pltpu.CompilerParams(
        dimension_semantics=semantics or ("parallel",) * n_axes,
        vmem_limit_bytes=_vmem_limit_bytes())


def _round_up(x, m):
    return (x + m - 1) // m * m


def _pad_rows(x, m):
    pad = _round_up(x.shape[0], m) - x.shape[0]
    return x if pad == 0 else jnp.pad(x, ((0, pad), (0, 0)))


def _pad_cols(x, m, value=0.0):
    pad = _round_up(x.shape[-1], m) - x.shape[-1]
    if pad == 0:
        return x
    widths = [(0, 0)] * (x.ndim - 1) + [(0, pad)]
    return jnp.pad(x, widths, constant_values=value)


def _flatten(x):
    *lead, K = x.shape
    M = int(np.prod(lead)) if lead else 1
    return x.reshape(M, K), lead


def _attn_q_tile(L, cap=256):
    if L <= cap or L % 8 != 0:
        return L
    t = cap - (cap % 8)
    while t >= 8:
        if L % t == 0:
            return t
        t -= 8
    return L


# ----------------------------- kernel bodies --------------------------------

def _ln_core(x, g, b, eps):
    x = x.astype(jnp.float32)
    mean = jnp.mean(x, axis=-1, keepdims=True)
    xc = x - mean
    var = jnp.mean(xc * xc, axis=-1, keepdims=True)
    return xc * jax.lax.rsqrt(var + eps) * g + b


def _ln_linear_kernel(x_ref, g_ref, b_ref, w_ref, bias_ref, o_ref, *, eps, activation):
    # LayerNorm (f32 stats) fused with the following projection (bf16 MXU, f32 acc).
    xn = _ln_core(x_ref[...], g_ref[...], b_ref[...], eps)
    y = jnp.dot(xn.astype(jnp.bfloat16), w_ref[...],
                preferred_element_type=jnp.float32) + bias_ref[...]
    if activation == "relu":
        y = jnp.maximum(y, 0.0)
    o_ref[...] = y.astype(o_ref.dtype)


def _linear_residual_kernel(x_ref, res_ref, w_ref, bias_ref, o_ref):
    # Projection + bias + residual add fused; residual stream stays f32.
    o_ref[...] = (res_ref[...]
                  + jnp.dot(x_ref[...].astype(jnp.bfloat16), w_ref[...],
                            preferred_element_type=jnp.float32)
                  + bias_ref[...])


def _attend(q, k, v, *, nhead, causal, scale, q_start):
    """q: (Lq, d), k/v: (Lk, d) bf16 -> (Lq, d) f32. Single batched contraction per stage."""
    Lq, d = q.shape
    Lk = k.shape[0]
    dh = d // nhead
    qh = jnp.swapaxes(q.reshape(Lq, nhead, dh), 0, 1)    # (h, Lq, dh)
    kh = jnp.swapaxes(k.reshape(Lk, nhead, dh), 0, 1)    # (h, Lk, dh)
    vh = jnp.swapaxes(v.reshape(Lk, nhead, dh), 0, 1)    # (h, Lk, dh)
    s = jnp.einsum('hqc,hkc->hqk', qh, kh,
                   preferred_element_type=jnp.float32) * scale
    if causal:
        qi = jax.lax.broadcasted_iota(jnp.int32, (1, Lq, Lk), 1) + q_start
        ki = jax.lax.broadcasted_iota(jnp.int32, (1, Lq, Lk), 2)
        s = jnp.where(ki <= qi, s, -1e30)
    m = jnp.max(s, axis=-1, keepdims=True)
    e = jnp.exp(s - m)
    p = e * pl.reciprocal(jnp.sum(e, axis=-1, keepdims=True), approx=True)
    o = jnp.einsum('hqk,hkc->hqc', p.astype(jnp.bfloat16), vh,
                   preferred_element_type=jnp.float32)
    return jnp.swapaxes(o, 0, 1).reshape(Lq, d)


def _self_attn_kernel(q_ref, kv_ref, o_ref, *, nhead, causal, scale, d, tq):
    q = q_ref[:, :d]                         # (tq, d)   from packed (tq, 3d)
    k = kv_ref[:, d:2 * d]                   # (L, d)
    v = kv_ref[:, 2 * d:]                    # (L, d)
    q_start = pl.program_id(1) * tq
    o_ref[...] = _attend(q, k, v, nhead=nhead, causal=causal, scale=scale,
                         q_start=q_start).astype(o_ref.dtype)


def _cross_attn_kernel(q_ref, kv_ref, o_ref, *, nhead, scale, d):
    kv = kv_ref[...]                         # (Lk, 2d) packed KV
    o_ref[...] = _attend(q_ref[...], kv[:, :d], kv[:, d:],
                         nhead=nhead, causal=False, scale=scale,
                         q_start=0).astype(o_ref.dtype)


def _head_logits_kernel(x_ref, g_ref, b_ref, w_ref, bias_ref,
                        logits_ref, m_ref, l_ref, xn_scratch, *, eps):
    # dec_norm fused with fc_out, vocab-tiled; streaming (online) max / sum-exp stats.
    j = pl.program_id(1)

    @pl.when(j == 0)
    def _():
        xn_scratch[...] = _ln_core(x_ref[...], g_ref[...], b_ref[...],
                                   eps).astype(jnp.bfloat16)
        m_ref[...] = jnp.full(m_ref.shape, -jnp.inf, jnp.float32)
        l_ref[...] = jnp.zeros(l_ref.shape, jnp.float32)

    logits = jnp.dot(xn_scratch[...], w_ref[...],
                     preferred_element_type=jnp.float32) + bias_ref[...]
    logits_ref[...] = logits
    m_prev = m_ref[...]
    m_new = jnp.maximum(m_prev, jnp.max(logits, axis=-1, keepdims=True))
    l_ref[...] = (l_ref[...] * jnp.exp(m_prev - m_new)
                  + jnp.sum(jnp.exp(logits - m_new), axis=-1, keepdims=True))
    m_ref[...] = m_new


def _logsoftmax_apply_kernel(logits_ref, m_ref, l_ref, o_ref):
    o_ref[...] = logits_ref[...] - (m_ref[...] + jnp.log(l_ref[...]))


# ------------------------------ pallas wrappers ------------------------------

def ln_linear(x, g, b, w, bias, *, eps=1e-8, activation=None, out_dtype=jnp.bfloat16):
    x2, lead = _flatten(x)
    M, K = x2.shape
    N = w.shape[1]
    tm_cap, tn_cap, _ = _tile_caps()
    tm = min(_round_up(M, 8), tm_cap)
    tn = min(_round_up(N, 128), tn_cap)
    x2p = _pad_rows(x2, tm)
    wp = _pad_cols(w, tn)
    bp = _pad_cols(bias.reshape(1, N), tn)
    Mp, Np = x2p.shape[0], wp.shape[1]
    out = pl.pallas_call(
        functools.partial(_ln_linear_kernel, eps=eps, activation=activation),
        out_shape=jax.ShapeDtypeStruct((Mp, Np), out_dtype),
        grid=(Np // tn, Mp // tm),   # weight block invariant along the fast (M) axis
        in_specs=[pl.BlockSpec((tm, K), lambda j, i: (i, 0)),
                  pl.BlockSpec((1, K), lambda j, i: (0, 0)),
                  pl.BlockSpec((1, K), lambda j, i: (0, 0)),
                  pl.BlockSpec((K, tn), lambda j, i: (0, j)),
                  pl.BlockSpec((1, tn), lambda j, i: (0, j))],
        out_specs=pl.BlockSpec((tm, tn), lambda j, i: (i, j)),
        compiler_params=_compiler_params(2),
    )(x2p, g.reshape(1, K), b.reshape(1, K), wp, bp)
    return out[:M, :N].reshape(*lead, N)


def linear_residual(x, res, w, bias):
    x2, lead = _flatten(x)
    r2, _ = _flatten(res)
    M, K = x2.shape
    N = w.shape[1]
    tm_cap, tn_cap, _ = _tile_caps()
    tm = min(_round_up(M, 8), tm_cap)
    tn = min(_round_up(N, 128), tn_cap)
    x2p = _pad_rows(x2, tm)
    r2p = _pad_cols(_pad_rows(r2, tm), tn)
    wp = _pad_cols(w, tn)
    bp = _pad_cols(bias.reshape(1, N), tn)
    Mp, Np = x2p.shape[0], wp.shape[1]
    out = pl.pallas_call(
        _linear_residual_kernel,
        out_shape=jax.ShapeDtypeStruct((Mp, Np), jnp.float32),
        grid=(Np // tn, Mp // tm),
        in_specs=[pl.BlockSpec((tm, K), lambda j, i: (i, 0)),
                  pl.BlockSpec((tm, tn), lambda j, i: (i, j)),
                  pl.BlockSpec((K, tn), lambda j, i: (0, j)),
                  pl.BlockSpec((1, tn), lambda j, i: (0, j))],
        out_specs=pl.BlockSpec((tm, tn), lambda j, i: (i, j)),
        input_output_aliases={1: 0},   # in-place residual update
        compiler_params=_compiler_params(2),
    )(x2p, r2p, wp, bp)
    return out[:M, :N].reshape(*lead, N)


def self_attention(qkv, d_model, nhead, causal):
    B, L, threed = qkv.shape
    tq = _attn_q_tile(L)
    scale = 1.0 / math.sqrt(d_model // nhead)
    return pl.pallas_call(
        functools.partial(_self_attn_kernel, nhead=nhead, causal=causal,
                          scale=scale, d=d_model, tq=tq),
        out_shape=jax.ShapeDtypeStruct((B, L, d_model), jnp.bfloat16),
        grid=(B, L // tq),
        in_specs=[pl.BlockSpec((None, tq, threed), lambda b, qi: (b, qi, 0)),
                  pl.BlockSpec((None, L, threed), lambda b, qi: (b, 0, 0))],
        out_specs=pl.BlockSpec((None, tq, d_model), lambda b, qi: (b, qi, 0)),
        compiler_params=_compiler_params(2),
    )(qkv, qkv)
    # TODO(synk): causal KV-tile skipping (kv grid axis + pl.when) not implemented; the
    #             causal mask alone keeps results correct.


def cross_attention(q, kv, d_model, nhead):
    B, Lq, _ = q.shape
    Lk = kv.shape[1]
    tq = _attn_q_tile(Lq)
    scale = 1.0 / math.sqrt(d_model // nhead)
    return pl.pallas_call(
        functools.partial(_cross_attn_kernel, nhead=nhead, scale=scale, d=d_model),
        out_shape=jax.ShapeDtypeStruct((B, Lq, d_model), jnp.bfloat16),
        grid=(B, Lq // tq),
        in_specs=[pl.BlockSpec((None, tq, d_model), lambda b, qi: (b, qi, 0)),
                  pl.BlockSpec((None, Lk, 2 * d_model), lambda b, qi: (b, 0, 0))],
        out_specs=pl.BlockSpec((None, tq, d_model), lambda b, qi: (b, qi, 0)),
        compiler_params=_compiler_params(2),
    )(q, kv)


def ln_linear_logsoftmax(x, g, b, w, bias, *, eps=1e-8):
    x2, lead = _flatten(x)
    M, K = x2.shape
    V = w.shape[1]
    tm_cap, _, tv_cap = _tile_caps()
    tm = min(_round_up(M, 8), tm_cap)
    tv = min(_round_up(V, 128), tv_cap)
    x2p = _pad_rows(x2, tm)
    wp = _pad_cols(w, tv)                                           # padded cols: weight 0
    bp = _pad_cols(bias.reshape(1, V).astype(jnp.float32), tv, value=-1e30)  # -> logit -1e30
    Mp, Vp = x2p.shape[0], wp.shape[1]
    grid = (Mp // tm, Vp // tv)

    logits, m, l = pl.pallas_call(
        functools.partial(_head_logits_kernel, eps=eps),
        out_shape=(jax.ShapeDtypeStruct((Mp, Vp), jnp.float32),
                   jax.ShapeDtypeStruct((Mp, 1), jnp.float32),
                   jax.ShapeDtypeStruct((Mp, 1), jnp.float32)),
        grid=grid,
        in_specs=[pl.BlockSpec((tm, K), lambda i, j: (i, 0)),
                  pl.BlockSpec((1, K), lambda i, j: (0, 0)),
                  pl.BlockSpec((1, K), lambda i, j: (0, 0)),
                  pl.BlockSpec((K, tv), lambda i, j: (0, j)),
                  pl.BlockSpec((1, tv), lambda i, j: (0, j))],
        out_specs=(pl.BlockSpec((tm, tv), lambda i, j: (i, j)),
                   pl.BlockSpec((tm, 1), lambda i, j: (i, 0)),
                   pl.BlockSpec((tm, 1), lambda i, j: (i, 0))),
        scratch_shapes=[pltpu.VMEM((tm, K), jnp.bfloat16)],
        compiler_params=_compiler_params(2, ("parallel", "arbitrary")),
    )(x2p, g.reshape(1, K), b.reshape(1, K), wp, bp)

    out = pl.pallas_call(
        _logsoftmax_apply_kernel,
        out_shape=jax.ShapeDtypeStruct((Mp, Vp), jnp.float32),
        grid=grid,
        in_specs=[pl.BlockSpec((tm, tv), lambda i, j: (i, j)),
                  pl.BlockSpec((tm, 1), lambda i, j: (i, 0)),
                  pl.BlockSpec((tm, 1), lambda i, j: (i, 0))],
        out_specs=pl.BlockSpec((tm, tv), lambda i, j: (i, j)),
        compiler_params=_compiler_params(2),
    )(logits, m, l)
    return out[:M, :V].reshape(*lead, V)


# --------------------------- Transformer pieces ------------------------------

def encoder_layer(x, p, nhead):
    d = x.shape[-1]
    qkv = ln_linear(x, p["ln1"]["g"], p["ln1"]["b"], p["sa"]["in_w"], p["sa"]["in_b"])
    attn = self_attention(qkv, d, nhead, causal=False)
    x = linear_residual(attn, x, p["sa"]["out_w"], p["sa"]["out_b"])
    h = ln_linear(x, p["ln2"]["g"], p["ln2"]["b"], p["ff"]["w1"], p["ff"]["b1"],
                  activation="relu")
    x = linear_residual(h, x, p["ff"]["w2"], p["ff"]["b2"])
    return x


def decoder_layer(x, mem, enc_norm, p, nhead):
    d = x.shape[-1]
    # causal self-attention
    qkv = ln_linear(x, p["ln1"]["g"], p["ln1"]["b"], p["sa"]["in_w"], p["sa"]["in_b"])
    attn = self_attention(qkv, d, nhead, causal=True)
    x = linear_residual(attn, x, p["sa"]["out_w"], p["sa"]["out_b"])
    # cross-attention: Q from LN2(x); K/V from enc_norm(mem) fused into the KV projection
    q = ln_linear(x, p["ln2"]["g"], p["ln2"]["b"], p["ca"]["wq"], p["ca"]["bq"])
    kv = ln_linear(mem, enc_norm["g"], enc_norm["b"], p["ca"]["wkv"], p["ca"]["bkv"])
    attn = cross_attention(q, kv, d, nhead)
    x = linear_residual(attn, x, p["ca"]["out_w"], p["ca"]["out_b"])
    # FFN
    h = ln_linear(x, p["ln3"]["g"], p["ln3"]["b"], p["ff"]["w1"], p["ff"]["b1"],
                  activation="relu")
    x = linear_residual(h, x, p["ff"]["w2"], p["ff"]["b2"])
    return x


def position_encoding(max_len, d):
    pos = np.arange(max_len, dtype=np.float32).reshape(-1, 1)
    _2i = np.arange(0, d, 2, dtype=np.float32)
    X = pos / np.power(10000.0, _2i / d)
    P = np.zeros((max_len, d), dtype=np.float32)
    P[:, 0::2] = np.sin(X)
    P[:, 1::2] = np.cos(X)
    return jnp.asarray(P)


# ------------------------------- init helpers --------------------------------

def _w(key, shape):
    return (jax.random.normal(key, shape, jnp.float32) * 0.02).astype(jnp.bfloat16)


def _init_self_mha(key, d):
    k1, k2 = jax.random.split(key)
    return dict(in_w=_w(k1, (d, 3 * d)), in_b=jnp.zeros((3 * d,), jnp.float32),
                out_w=_w(k2, (d, d)), out_b=jnp.zeros((d,), jnp.float32))


def _init_cross_mha(key, d):
    k1, k2, k3 = jax.random.split(key, 3)
    return dict(wq=_w(k1, (d, d)), bq=jnp.zeros((d,), jnp.float32),
                wkv=_w(k2, (d, 2 * d)), bkv=jnp.zeros((2 * d,), jnp.float32),
                out_w=_w(k3, (d, d)), out_b=jnp.zeros((d,), jnp.float32))


def _init_ln(d):
    return dict(g=jnp.ones((d,), jnp.float32), b=jnp.zeros((d,), jnp.float32))


def _init_ff(key, d, dff):
    k1, k2 = jax.random.split(key)
    return dict(w1=_w(k1, (d, dff)), b1=jnp.zeros((dff,), jnp.float32),
                w2=_w(k2, (dff, d)), b2=jnp.zeros((d,), jnp.float32))


def init_chatbot_params(key, d_model, voc_size, dff, n_enc, n_dec, max_len=1000):
    keys = jax.random.split(key, 2 + 2 * n_enc + 3 * n_dec)
    ki = iter(keys)
    params = dict(
        embed_table=jax.random.normal(next(ki), (voc_size, d_model), jnp.float32) * 0.02,
        pos_enc=position_encoding(max_len, d_model),
        enc_layers=[], dec_layers=[],
        enc_norm=_init_ln(d_model), dec_norm=_init_ln(d_model),
        fc_w=_w(next(ki), (d_model, voc_size)),
        fc_b=jnp.zeros((voc_size,), jnp.float32),
    )
    for _ in range(n_enc):
        params["enc_layers"].append(dict(
            sa=_init_self_mha(next(ki), d_model), ff=_init_ff(next(ki), d_model, dff),
            ln1=_init_ln(d_model), ln2=_init_ln(d_model)))
    for _ in range(n_dec):
        params["dec_layers"].append(dict(
            sa=_init_self_mha(next(ki), d_model), ca=_init_cross_mha(next(ki), d_model),
            ff=_init_ff(next(ki), d_model, dff),
            ln1=_init_ln(d_model), ln2=_init_ln(d_model), ln3=_init_ln(d_model)))
    return params


# ------------------------------- ChatBot forward -----------------------------

def chatbot_forward(params, src_tokens, tgt_tokens, nhead=8):
    # embed_tokens: deterministic embedding-table lookup (stand-in for FlagModel)
    src = params["embed_table"][src_tokens]            # (N, Ls, d)
    tgt = params["embed_table"][tgt_tokens]            # (N, Lt, d)

    # PositionEmbedding
    src = src + params["pos_enc"][:src.shape[1]]
    tgt = tgt + params["pos_enc"][:tgt.shape[1]]

    # Transformer encoder (pre-LN); final encoder norm is fused into decoder KV projections
    mem = src
    for p in params["enc_layers"]:
        mem = encoder_layer(mem, p, nhead)

    # Transformer decoder (pre-LN, causal self-attn)
    y = tgt
    for p in params["dec_layers"]:
        y = decoder_layer(y, mem, params["enc_norm"], p, nhead)

    # dec_norm + fc_out + log_softmax (vocab-tiled streaming LSE head)
    return ln_linear_logsoftmax(y, params["dec_norm"]["g"], params["dec_norm"]["b"],
                                params["fc_w"], params["fc_b"])


# ---------------------------------- main --------------------------------------

if __name__ == "__main__":
    # Small shapes consistent with the module (d_model divisible by nhead=8).
    B, L = 2, 8
    d_model, nhead, dff = 128, 8, 256
    voc_size = 512
    n_enc, n_dec = 2, 2   # module uses 6/6; reduced layer count for a quick demo

    key = jax.random.PRNGKey(0)
    pk, sk, tk = jax.random.split(key, 3)
    params = init_chatbot_params(pk, d_model, voc_size, dff, n_enc, n_dec)

    src = jax.random.randint(sk, (B, L), 0, voc_size, dtype=jnp.int32)
    tgt = jax.random.randint(tk, (B, L), 0, voc_size, dtype=jnp.int32)

    fwd = jax.jit(functools.partial(chatbot_forward, nhead=nhead))
    out = jax.block_until_ready(fwd(params, src, tgt))

    assert out.shape == (B, L, voc_size)
    assert bool(jnp.all(jnp.isfinite(out)))
    # log-softmax rows should (log-)sum to ~0
    assert bool(jnp.allclose(jnp.sum(jnp.exp(out), axis=-1), 1.0, atol=1e-3))
    print("KERNEL_OK")
</pallas_src>

<mosaic_0001>
module attributes {stable_mosaic.version = 11 : i64} {
  func.func @_self_attn_kernel(%arg0: i32, %arg1: i32, %arg2: memref<1x8x384xbf16, #tpu.memory_space<vmem>>, %arg3: memref<1x8x384xbf16, #tpu.memory_space<vmem>>, %arg4: memref<1x8x128xbf16, #tpu.memory_space<vmem>>) attributes {dimension_semantics = [#tpu.dimension_semantics<parallel>, #tpu.dimension_semantics<parallel>], iteration_bounds = array<i64: 2, 1>, scalar_prefetch = 0 : i64, scratch_operands = 0 : i64, tpu.core_type = #tpu.core_type<tc>, window_params = [{transform_indices = @transform_0, window_bounds = array<i64: 1, 8, 384>}, {transform_indices = @transform_1, window_bounds = array<i64: 1, 8, 384>}, {transform_indices = @transform_2, window_bounds = array<i64: 1, 8, 128>}]} {
    %c0 = arith.constant 0 : index
    %c0_0 = arith.constant 0 : index
    %c0_1 = arith.constant 0 : index
    %0 = vector.load %arg2[%c0, %c0_0, %c0_1] : memref<1x8x384xbf16, #tpu.memory_space<vmem>>, vector<1x8x128xbf16>
    %1 = vector.shape_cast %0 : vector<1x8x128xbf16> to vector<8x128xbf16>
    %c0_2 = arith.constant 0 : index
    %c0_3 = arith.constant 0 : index
    %c128 = arith.constant 128 : index
    %2 = vector.load %arg3[%c0_2, %c0_3, %c128] : memref<1x8x384xbf16, #tpu.memory_space<vmem>>, vector<1x8x128xbf16>
    %3 = vector.shape_cast %2 : vector<1x8x128xbf16> to vector<8x128xbf16>
    %c0_4 = arith.constant 0 : index
    %c0_5 = arith.constant 0 : index
    %c256 = arith.constant 256 : index
    %4 = vector.load %arg3[%c0_4, %c0_5, %c256] : memref<1x8x384xbf16, #tpu.memory_space<vmem>>, vector<1x8x128xbf16>
    %5 = vector.shape_cast %4 : vector<1x8x128xbf16> to vector<8x128xbf16>
    %6 = vector.shape_cast %1 : vector<8x128xbf16> to vector<8x8x16xbf16>
    %7 = tpu.transpose %6, [1, 0, 2] : vector<8x8x16xbf16> -> vector<8x8x16xbf16>
    %8 = vector.shape_cast %3 : vector<8x128xbf16> to vector<8x8x16xbf16>
    %9 = tpu.transpose %8, [1, 0, 2] : vector<8x8x16xbf16> -> vector<8x8x16xbf16>
    %10 = vector.shape_cast %5 : vector<8x128xbf16> to vector<8x8x16xbf16>
    %11 = tpu.transpose %10, [1, 0, 2] : vector<8x8x16xbf16> -> vector<8x8x16xbf16>
    "tpu.trace_start"() <{level = 10 : i32, message = "hqc,hkc->hqk"}> : () -> ()
    %cst = arith.constant dense<0.000000e+00> : vector<8x8x8xf32>
    %12 = tpu.matmul %7, %9, %cst {dimension_numbers = #tpu.dot_dimension_numbers<[2], [2], [1], [1], [0, 0, 0, 1, 1, 1], [0], [0]>} : vector<8x8x16xbf16>, vector<8x8x16xbf16>, vector<8x8x8xf32> -> vector<8x8x8xf32>
    "tpu.trace_stop"() : () -> ()
    %cst_6 = arith.constant 2.500000e-01 : f32
    %13 = vector.broadcast %cst_6 : f32 to vector<8x8x8xf32>
    %14 = arith.mulf %12, %13 : vector<8x8x8xf32>
    %cst_7 = arith.constant dense<0xFF800000> : vector<8x8xf32>
    %15 = vector.multi_reduction <maximumf>, %14, %cst_7 [2] : vector<8x8x8xf32> to vector<8x8xf32>
    %16 = vector.shape_cast %15 : vector<8x8xf32> to vector<8x8x1xf32>
    %17 = vector.broadcast %16 : vector<8x8x1xf32> to vector<8x8x8xf32>
    %18 = arith.subf %14, %17 : vector<8x8x8xf32>
    %19 = math.exp %18 : vector<8x8x8xf32>
    %cst_8 = arith.constant dense<0.000000e+00> : vector<8x8xf32>
    %20 = vector.multi_reduction <add>, %19, %cst_8 [2] : vector<8x8x8xf32> to vector<8x8xf32>
    %21 = vector.shape_cast %20 : vector<8x8xf32> to vector<8x8x1xf32>
    %22 = tpu.reciprocal %21 {approx = true} : vector<8x8x1xf32> -> vector<8x8x1xf32>
    %23 = vector.broadcast %22 : vector<8x8x1xf32> to vector<8x8x8xf32>
    %24 = arith.mulf %19, %23 : vector<8x8x8xf32>
    %25 = arith.truncf %24 : vector<8x8x8xf32> to vector<8x8x8xbf16>
    "tpu.trace_start"() <{level = 10 : i32, message = "hqk,hkc->hqc"}> : () -> ()
    %cst_9 = arith.constant dense<0.000000e+00> : vector<8x8x16xf32>
    %26 = tpu.matmul %25, %11, %cst_9 {dimension_numbers = #tpu.dot_dimension_numbers<[2], [1], [1], [2], [0, 0, 0, 1, 1, 2], [0], [0]>} : vector<8x8x8xbf16>, vector<8x8x16xbf16>, vector<8x8x16xf32> -> vector<8x8x16xf32>
    "tpu.trace_stop"() : () -> ()
    %27 = tpu.transpose %26, [1, 0, 2] : vector<8x8x16xf32> -> vector<8x8x16xf32>
    %28 = vector.shape_cast %27 : vector<8x8x16xf32> to vector<8x128xf32>
    %29 = arith.truncf %28 : vector<8x128xf32> to vector<8x128xbf16>
    %c0_10 = arith.constant 0 : index
    %c0_11 = arith.constant 0 : index
    %c0_12 = arith.constant 0 : index
    %30 = vector.load %arg4[%c0_10, %c0_11, %c0_12] : memref<1x8x128xbf16, #tpu.memory_space<vmem>>, vector<1x8x128xbf16>
    %31 = vector.shape_cast %30 : vector<1x8x128xbf16> to vector<8x128xbf16>
    %32 = vector.shape_cast %29 : vector<8x128xbf16> to vector<1x8x128xbf16>
    tpu.vector_store %arg4[%c0_10, %c0_11, %c0_12], %32 {strides = array<i32>} : memref<1x8x128xbf16, #tpu.memory_space<vmem>>, vector<1x8x128xbf16>,
    return
  }
  func.func @transform_0(%arg0: i32, %arg1: i32) -> (i32, i32, i32) {
    %c0_i32 = arith.constant 0 : i32
    %c0_i32_0 = arith.constant 0 : i32
    return %arg0, %arg1, %c0_i32 : i32, i32, i32
  }
  func.func @transform_1(%arg0: i32, %arg1: i32) -> (i32, i32, i32) {
    %c0_i32 = arith.constant 0 : i32
    %c0_i32_0 = arith.constant 0 : i32
    %c0_i32_1 = arith.constant 0 : i32
    return %arg0, %c0_i32, %c0_i32_0 : i32, i32, i32
  }
  func.func @transform_2(%arg0: i32, %arg1: i32) -> (i32, i32, i32) {
    %c0_i32 = arith.constant 0 : i32
    %c0_i32_0 = arith.constant 0 : i32
    return %arg0, %arg1, %c0_i32 : i32, i32, i32
  }
}

module attributes {stable_mosaic.version = 11 : i64} {
  func.func @_ln_linear_kernel(%arg0: i32, %arg1: i32, %arg2: memref<16x128xf32, #tpu.memory_space<vmem>>, %arg3: memref<1x128xf32, #tpu.memory_space<vmem>>, %arg4: memref<1x128xf32, #tpu.memory_space<vmem>>, %arg5: memref<128x384xbf16, #tpu.memory_space<vmem>>, %arg6: memref<1x384xf32, #tpu.memory_space<vmem>>, %arg7: memref<16x384xbf16, #tpu.memory_space<vmem>>) attributes {dimension_semantics = [#tpu.dimension_semantics<parallel>, #tpu.dimension_semantics<parallel>], iteration_bounds = array<i64: 1, 1>, scalar_prefetch = 0 : i64, scratch_operands = 0 : i64, tpu.core_type = #tpu.core_type<tc>, window_params = [{transform_indices = @transform_0, window_bounds = array<i64: 16, 128>}, {pipeline_mode = #tpu.pipeline_mode<synchronous>, transform_indices = @transform_1, window_bounds = array<i64: 1, 128>}, {pipeline_mode = #tpu.pipeline_mode<synchronous>, transform_indices = @transform_2, window_bounds = array<i64: 1, 128>}, {transform_indices = @transform_3, window_bounds = array<i64: 128, 384>}, {transform_indices = @transform_4, window_bounds = array<i64: 1, 384>}, {transform_indices = @transform_5, window_bounds = array<i64: 16, 384>}]} {
    %c0 = arith.constant 0 : index
    %c0_0 = arith.constant 0 : index
    %0 = vector.load %arg2[%c0, %c0_0] : memref<16x128xf32, #tpu.memory_space<vmem>>, vector<16x128xf32>
    %c0_1 = arith.constant 0 : index
    %c0_2 = arith.constant 0 : index
    %1 = vector.load %arg3[%c0_1, %c0_2] : memref<1x128xf32, #tpu.memory_space<vmem>>, vector<1x128xf32>
    %c0_3 = arith.constant 0 : index
    %c0_4 = arith.constant 0 : index
    %2 = vector.load %arg4[%c0_3, %c0_4] : memref<1x128xf32, #tpu.memory_space<vmem>>, vector<1x128xf32>
    %cst = arith.constant dense<0.000000e+00> : vector<16xf32>
    %3 = vector.multi_reduction <add>, %0, %cst [1] : vector<16x128xf32> to vector<16xf32>
    %4 = vector.shape_cast %3 : vector<16xf32> to vector<16x1xf32>
    %cst_5 = arith.constant 1.280000e+02 : f32
    %5 = vector.broadcast %cst_5 : f32 to vector<16x1xf32>
    %6 = arith.divf %4, %5 : vector<16x1xf32>
    %7 = vector.broadcast %6 : vector<16x1xf32> to vector<16x128xf32>
    %8 = arith.subf %0, %7 : vector<16x128xf32>
    %9 = arith.mulf %8, %8 : vector<16x128xf32>
    %cst_6 = arith.constant dense<0.000000e+00> : vector<16xf32>
    %10 = vector.multi_reduction <add>, %9, %cst_6 [1] : vector<16x128xf32> to vector<16xf32>
    %11 = vector.shape_cast %10 : vector<16xf32> to vector<16x1xf32>
    %cst_7 = arith.constant 1.280000e+02 : f32
    %12 = vector.broadcast %cst_7 : f32 to vector<16x1xf32>
    %13 = arith.divf %11, %12 : vector<16x1xf32>
    %cst_8 = arith.constant 9.99999993E-9 : f32
    %14 = vector.broadcast %cst_8 : f32 to vector<16x1xf32>
    %15 = arith.addf %13, %14 : vector<16x1xf32>
    %16 = math.rsqrt %15 : vector<16x1xf32>
    %17 = vector.broadcast %16 : vector<16x1xf32> to vector<16x128xf32>
    %18 = arith.mulf %8, %17 : vector<16x128xf32>
    %19 = vector.broadcast %1 : vector<1x128xf32> to vector<16x128xf32>
    %20 = arith.mulf %18, %19 : vector<16x128xf32>
    %21 = vector.broadcast %2 : vector<1x128xf32> to vector<16x128xf32>
    %22 = arith.addf %20, %21 : vector<16x128xf32>
    %23 = arith.truncf %22 : vector<16x128xf32> to vector<16x128xbf16>
    %c0_9 = arith.constant 0 : index
    %c0_10 = arith.constant 0 : index
    %24 = vector.load %arg5[%c0_9, %c0_10] : memref<128x384xbf16, #tpu.memory_space<vmem>>, vector<128x384xbf16>
    %cst_11 = arith.constant dense<0.000000e+00> : vector<16x384xf32>
    %25 = tpu.matmul %23, %24, %cst_11 {dimension_numbers = #tpu.dot_dimension_numbers<[1], [0], [0], [1], [0, 0, 1, 1], [], []>} : vector<16x128xbf16>, vector<128x384xbf16>, vector<16x384xf32> -> vector<16x384xf32>
    %c0_12 = arith.constant 0 : index
    %c0_13 = arith.constant 0 : index
    %26 = vector.load %arg6[%c0_12, %c0_13] : memref<1x384xf32, #tpu.memory_space<vmem>>, vector<1x384xf32>
    %27 = vector.broadcast %26 : vector<1x384xf32> to vector<16x384xf32>
    %28 = arith.addf %25, %27 : vector<16x384xf32>
    %29 = arith.truncf %28 : vector<16x384xf32> to vector<16x384xbf16>
    %c0_14 = arith.constant 0 : index
    %c0_15 = arith.constant 0 : index
    %30 = vector.load %arg7[%c0_14, %c0_15] : memref<16x384xbf16, #tpu.memory_space<vmem>>, vector<16x384xbf16>
    tpu.vector_store %arg7[%c0_14, %c0_15], %29 {strides = array<i32>} : memref<16x384xbf16, #tpu.memory_space<vmem>>, vector<16x384xbf16>,
    return
  }
  func.func @transform_0(%arg0: i32, %arg1: i32) -> (i32, i32) {
    %c0_i32 = arith.constant 0 : i32
    %c0_i32_0 = arith.constant 0 : i32
    return %arg1, %c0_i32 : i32, i32
  }
  func.func @transform_1(%arg0: i32, %arg1: i32) -> (i32, i32) {
    %c0_i32 = arith.constant 0 : i32
    %c0_i32_0 = arith.constant 0 : i32
    %c0_i32_1 = arith.constant 0 : i32
    return %c0_i32, %c0_i32_0 : i32, i32
  }
  func.func @transform_2(%arg0: i32, %arg1: i32) -> (i32, i32) {
    %c0_i32 = arith.constant 0 : i32
    %c0_i32_0 = arith.constant 0 : i32
    %c0_i32_1 = arith.constant 0 : i32
    return %c0_i32, %c0_i32_0 : i32, i32
  }
  func.func @transform_3(%arg0: i32, %arg1: i32) -> (i32, i32) {
    %c0_i32 = arith.constant 0 : i32
    %c0_i32_0 = arith.constant 0 : i32
    return %c0_i32, %arg0 : i32, i32
  }
  func.func @transform_4(%arg0: i32, %arg1: i32) -> (i32, i32) {
    %c0_i32 = arith.constant 0 : i32
    %c0_i32_0 = arith.constant 0 : i32
    return %c0_i32, %arg0 : i32, i32
  }
  func.func @transform_5(%arg0: i32, %arg1: i32) -> (i32, i32) {
    %c0_i32 = arith.constant 0 : i32
    return %arg1, %arg0 : i32, i32
  }
}

module attributes {stable_mosaic.version = 11 : i64} {
  func.func @_linear_residual_kernel(%arg0: i32, %arg1: i32, %arg2: memref<16x128xbf16, #tpu.memory_space<vmem>>, %arg3: memref<16x128xf32, #tpu.memory_space<vmem>>, %arg4: memref<128x128xbf16, #tpu.memory_space<vmem>>, %arg5: memref<1x128xf32, #tpu.memory_space<vmem>>, %arg6: memref<16x128xf32, #tpu.memory_space<vmem>>) attributes {dimension_semantics = [#tpu.dimension_semantics<parallel>, #tpu.dimension_semantics<parallel>], iteration_bounds = array<i64: 1, 1>, scalar_prefetch = 0 : i64, scratch_operands = 0 : i64, tpu.core_type = #tpu.core_type<tc>, window_params = [{transform_indices = @transform_0, window_bounds = array<i64: 16, 128>}, {transform_indices = @transform_1, window_bounds = array<i64: 16, 128>}, {transform_indices = @transform_2, window_bounds = array<i64: 128, 128>}, {transform_indices = @transform_3, window_bounds = array<i64: 1, 128>}, {transform_indices = @transform_4, window_bounds = array<i64: 16, 128>}]} {
    %c0 = arith.constant 0 : index
    %c0_0 = arith.constant 0 : index
    %0 = vector.load %arg3[%c0, %c0_0] : memref<16x128xf32, #tpu.memory_space<vmem>>, vector<16x128xf32>
    %c0_1 = arith.constant 0 : index
    %c0_2 = arith.constant 0 : index
    %1 = vector.load %arg2[%c0_1, %c0_2] : memref<16x128xbf16, #tpu.memory_space<vmem>>, vector<16x128xbf16>
    %c0_3 = arith.constant 0 : index
    %c0_4 = arith.constant 0 : index
    %2 = vector.load %arg4[%c0_3, %c0_4] : memref<128x128xbf16, #tpu.memory_space<vmem>>, vector<128x128xbf16>
    %cst = arith.constant dense<0.000000e+00> : vector<16x128xf32>
    %3 = tpu.matmul %1, %2, %cst {dimension_numbers = #tpu.dot_dimension_numbers<[1], [0], [0], [1], [0, 0, 1, 1], [], []>} : vector<16x128xbf16>, vector<128x128xbf16>, vector<16x128xf32> -> vector<16x128xf32>
    %4 = arith.addf %0, %3 : vector<16x128xf32>
    %c0_5 = arith.constant 0 : index
    %c0_6 = arith.constant 0 : index
    %5 = vector.load %arg5[%c0_5, %c0_6] : memref<1x128xf32, #tpu.memory_space<vmem>>, vector<1x128xf32>
    %6 = vector.broadcast %5 : vector<1x128xf32> to vector<16x128xf32>
    %7 = arith.addf %4, %6 : vector<16x128xf32>
    %c0_7 = arith.constant 0 : index
    %c0_8 = arith.constant 0 : index
    %8 = vector.load %arg6[%c0_7, %c0_8] : memref<16x128xf32, #tpu.memory_space<vmem>>, vector<16x128xf32>
    tpu.vector_store %arg6[%c0_7, %c0_8], %7 {strides = array<i32>} : memref<16x128xf32, #tpu.memory_space<vmem>>, vector<16x128xf32>,
    return
  }
  func.func @transform_0(%arg0: i32, %arg1: i32) -> (i32, i32) {
    %c0_i32 = arith.constant 0 : i32
    %c0_i32_0 = arith.constant 0 : i32
    return %arg1, %c0_i32 : i32, i32
  }
  func.func @transform_1(%arg0: i32, %arg1: i32) -> (i32, i32) {
    %c0_i32 = arith.constant 0 : i32
    return %arg1, %arg0 : i32, i32
  }
  func.func @transform_2(%arg0: i32, %arg1: i32) -> (i32, i32) {
    %c0_i32 = arith.constant 0 : i32
    %c0_i32_0 = arith.constant 0 : i32
    return %c0_i32, %arg0 : i32, i32
  }
  func.func @transform_3(%arg0: i32, %arg1: i32) -> (i32, i32) {
    %c0_i32 = arith.constant 0 : i32
    %c0_i32_0 = arith.constant 0 : i32
    return %c0_i32, %arg0 : i32, i32
  }
  func.func @transform_4(%arg0: i32, %arg1: i32) -> (i32, i32) {
    %c0_i32 = arith.constant 0 : i32
    return %arg1, %arg0 : i32, i32
  }
}

module attributes {stable_mosaic.version = 11 : i64} {
  func.func @_ln_linear_kernel(%arg0: i32, %arg1: i32, %arg2: memref<16x128xf32, #tpu.memory_space<vmem>>, %arg3: memref<1x128xf32, #tpu.memory_space<vmem>>, %arg4: memref<1x128xf32, #tpu.memory_space<vmem>>, %arg5: memref<128x256xbf16, #tpu.memory_space<vmem>>, %arg6: memref<1x256xf32, #tpu.memory_space<vmem>>, %arg7: memref<16x256xbf16, #tpu.memory_space<vmem>>) attributes {dimension_semantics = [#tpu.dimension_semantics<parallel>, #tpu.dimension_semantics<parallel>], iteration_bounds = array<i64: 1, 1>, scalar_prefetch = 0 : i64, scratch_operands = 0 : i64, tpu.core_type = #tpu.core_type<tc>, window_params = [{transform_indices = @transform_0, window_bounds = array<i64: 16, 128>}, {pipeline_mode = #tpu.pipeline_mode<synchronous>, transform_indices = @transform_1, window_bounds = array<i64: 1, 128>}, {pipeline_mode = #tpu.pipeline_mode<synchronous>, transform_indices = @transform_2, window_bounds = array<i64: 1, 128>}, {transform_indices = @transform_3, window_bounds = array<i64: 128, 256>}, {transform_indices = @transform_4, window_bounds = array<i64: 1, 256>}, {transform_indices = @transform_5, window_bounds = array<i64: 16, 256>}]} {
    %c0 = arith.constant 0 : index
    %c0_0 = arith.constant 0 : index
    %0 = vector.load %arg2[%c0, %c0_0] : memref<16x128xf32, #tpu.memory_space<vmem>>, vector<16x128xf32>
    %c0_1 = arith.constant 0 : index
    %c0_2 = arith.constant 0 : index
    %1 = vector.load %arg3[%c0_1, %c0_2] : memref<1x128xf32, #tpu.memory_space<vmem>>, vector<1x128xf32>
    %c0_3 = arith.constant 0 : index
    %c0_4 = arith.constant 0 : index
    %2 = vector.load %arg4[%c0_3, %c0_4] : memref<1x128xf32, #tpu.memory_space<vmem>>, vector<1x128xf32>
    %cst = arith.constant dense<0.000000e+00> : vector<16xf32>
    %3 = vector.multi_reduction <add>, %0, %cst [1] : vector<16x128xf32> to vector<16xf32>
    %4 = vector.shape_cast %3 : vector<16xf32> to vector<16x1xf32>
    %cst_5 = arith.constant 1.280000e+02 : f32
    %5 = vector.broadcast %cst_5 : f32 to vector<16x1xf32>
    %6 = arith.divf %4, %5 : vector<16x1xf32>
    %7 = vector.broadcast %6 : vector<16x1xf32> to vector<16x128xf32>
    %8 = arith.subf %0, %7 : vector<16x128xf32>
    %9 = arith.mulf %8, %8 : vector<16x128xf32>
    %cst_6 = arith.constant dense<0.000000e+00> : vector<16xf32>
    %10 = vector.multi_reduction <add>, %9, %cst_6 [1] : vector<16x128xf32> to vector<16xf32>
    %11 = vector.shape_cast %10 : vector<16xf32> to vector<16x1xf32>
    %cst_7 = arith.constant 1.280000e+02 : f32
    %12 = vector.broadcast %cst_7 : f32 to vector<16x1xf32>
    %13 = arith.divf %11, %12 : vector<16x1xf32>
    %cst_8 = arith.constant 9.99999993E-9 : f32
    %14 = vector.broadcast %cst_8 : f32 to vector<16x1xf32>
    %15 = arith.addf %13, %14 : vector<16x1xf32>
    %16 = math.rsqrt %15 : vector<16x1xf32>
    %17 = vector.broadcast %16 : vector<16x1xf32> to vector<16x128xf32>
    %18 = arith.mulf %8, %17 : vector<16x128xf32>
    %19 = vector.broadcast %1 : vector<1x128xf32> to vector<16x128xf32>
    %20 = arith.mulf %18, %19 : vector<16x128xf32>
    %21 = vector.broadcast %2 : vector<1x128xf32> to vector<16x128xf32>
    %22 = arith.addf %20, %21 : vector<16x128xf32>
    %23 = arith.truncf %22 : vector<16x128xf32> to vector<16x128xbf16>
    %c0_9 = arith.constant 0 : index
    %c0_10 = arith.constant 0 : index
    %24 = vector.load %arg5[%c0_9, %c0_10] : memref<128x256xbf16, #tpu.memory_space<vmem>>, vector<128x256xbf16>
    %cst_11 = arith.constant dense<0.000000e+00> : vector<16x256xf32>
    %25 = tpu.matmul %23, %24, %cst_11 {dimension_numbers = #tpu.dot_dimension_numbers<[1], [0], [0], [1], [0, 0, 1, 1], [], []>} : vector<16x128xbf16>, vector<128x256xbf16>, vector<16x256xf32> -> vector<16x256xf32>
    %c0_12 = arith.constant 0 : index
    %c0_13 = arith.constant 0 : index
    %26 = vector.load %arg6[%c0_12, %c0_13] : memref<1x256xf32, #tpu.memory_space<vmem>>, vector<1x256xf32>
    %27 = vector.broadcast %26 : vector<1x256xf32> to vector<16x256xf32>
    %28 = arith.addf %25, %27 : vector<16x256xf32>
    %cst_14 = arith.constant 0.000000e+00 : f32
    %29 = vector.broadcast %cst_14 : f32 to vector<16x256xf32>
    %30 = arith.maximumf %28, %29 : vector<16x256xf32>
    %31 = arith.truncf %30 : vector<16x256xf32> to vector<16x256xbf16>
    %c0_15 = arith.constant 0 : index
    %c0_16 = arith.constant 0 : index
    %32 = vector.load %arg7[%c0_15, %c0_16] : memref<16x256xbf16, #tpu.memory_space<vmem>>, vector<16x256xbf16>
    tpu.vector_store %arg7[%c0_15, %c0_16], %31 {strides = array<i32>} : memref<16x256xbf16, #tpu.memory_space<vmem>>, vector<16x256xbf16>,
    return
  }
  func.func @transform_0(%arg0: i32, %arg1: i32) -> (i32, i32) {
    %c0_i32 = arith.constant 0 : i32
    %c0_i32_0 = arith.constant 0 : i32
    return %arg1, %c0_i32 : i32, i32
  }
  func.func @transform_1(%arg0: i32, %arg1: i32) -> (i32, i32) {
    %c0_i32 = arith.constant 0 : i32
    %c0_i32_0 = arith.constant 0 : i32
    %c0_i32_1 = arith.constant 0 : i32
    return %c0_i32, %c0_i32_0 : i32, i32
  }
  func.func @transform_2(%arg0: i32, %arg1: i32) -> (i32, i32) {
    %c0_i32 = arith.constant 0 : i32
    %c0_i32_0 = arith.constant 0 : i32
    %c0_i32_1 = arith.constant 0 : i32
    return %c0_i32, %c0_i32_0 : i32, i32
  }
  func.func @transform_3(%arg0: i32, %arg1: i32) -> (i32, i32) {
    %c0_i32 = arith.constant 0 : i32
    %c0_i32_0 = arith.constant 0 : i32
    return %c0_i32, %arg0 : i32, i32
  }
  func.func @transform_4(%arg0: i32, %arg1: i32) -> (i32, i32) {
    %c0_i32 = arith.constant 0 : i32
    %c0_i32_0 = arith.constant 0 : i32
    return %c0_i32, %arg0 : i32, i32
  }
  func.func @transform_5(%arg0: i32, %arg1: i32) -> (i32, i32) {
    %c0_i32 = arith.constant 0 : i32
    return %arg1, %arg0 : i32, i32
  }
}

module attributes {stable_mosaic.version = 11 : i64} {
  func.func @_linear_residual_kernel(%arg0: i32, %arg1: i32, %arg2: memref<16x256xbf16, #tpu.memory_space<vmem>>, %arg3: memref<16x128xf32, #tpu.memory_space<vmem>>, %arg4: memref<256x128xbf16, #tpu.memory_space<vmem>>, %arg5: memref<1x128xf32, #tpu.memory_space<vmem>>, %arg6: memref<16x128xf32, #tpu.memory_space<vmem>>) attributes {dimension_semantics = [#tpu.dimension_semantics<parallel>, #tpu.dimension_semantics<parallel>], iteration_bounds = array<i64: 1, 1>, scalar_prefetch = 0 : i64, scratch_operands = 0 : i64, tpu.core_type = #tpu.core_type<tc>, window_params = [{transform_indices = @transform_0, window_bounds = array<i64: 16, 256>}, {transform_indices = @transform_1, window_bounds = array<i64: 16, 128>}, {transform_indices = @transform_2, window_bounds = array<i64: 256, 128>}, {transform_indices = @transform_3, window_bounds = array<i64: 1, 128>}, {transform_indices = @transform_4, window_bounds = array<i64: 16, 128>}]} {
    %c0 = arith.constant 0 : index
    %c0_0 = arith.constant 0 : index
    %0 = vector.load %arg3[%c0, %c0_0] : memref<16x128xf32, #tpu.memory_space<vmem>>, vector<16x128xf32>
    %c0_1 = arith.constant 0 : index
    %c0_2 = arith.constant 0 : index
    %1 = vector.load %arg2[%c0_1, %c0_2] : memref<16x256xbf16, #tpu.memory_space<vmem>>, vector<16x256xbf16>
    %c0_3 = arith.constant 0 : index
    %c0_4 = arith.constant 0 : index
    %2 = vector.load %arg4[%c0_3, %c0_4] : memref<256x128xbf16, #tpu.memory_space<vmem>>, vector<256x128xbf16>
    %cst = arith.constant dense<0.000000e+00> : vector<16x128xf32>
    %3 = tpu.matmul %1, %2, %cst {dimension_numbers = #tpu.dot_dimension_numbers<[1], [0], [0], [1], [0, 0, 1, 1], [], []>} : vector<16x256xbf16>, vector<256x128xbf16>, vector<16x128xf32> -> vector<16x128xf32>
    %4 = arith.addf %0, %3 : vector<16x128xf32>
    %c0_5 = arith.constant 0 : index
    %c0_6 = arith.constant 0 : index
    %5 = vector.load %arg5[%c0_5, %c0_6] : memref<1x128xf32, #tpu.memory_space<vmem>>, vector<1x128xf32>
    %6 = vector.broadcast %5 : vector<1x128xf32> to vector<16x128xf32>
    %7 = arith.addf %4, %6 : vector<16x128xf32>
    %c0_7 = arith.constant 0 : index
    %c0_8 = arith.constant 0 : index
    %8 = vector.load %arg6[%c0_7, %c0_8] : memref<16x128xf32, #tpu.memory_space<vmem>>, vector<16x128xf32>
    tpu.vector_store %arg6[%c0_7, %c0_8], %7 {strides = array<i32>} : memref<16x128xf32, #tpu.memory_space<vmem>>, vector<16x128xf32>,
    return
  }
  func.func @transform_0(%arg0: i32, %arg1: i32) -> (i32, i32) {
    %c0_i32 = arith.constant 0 : i32
    %c0_i32_0 = arith.constant 0 : i32
    return %arg1, %c0_i32 : i32, i32
  }
  func.func @transform_1(%arg0: i32, %arg1: i32) -> (i32, i32) {
    %c0_i32 = arith.constant 0 : i32
    return %arg1, %arg0 : i32, i32
  }
  func.func @transform_2(%arg0: i32, %arg1: i32) -> (i32, i32) {
    %c0_i32 = arith.constant 0 : i32
    %c0_i32_0 = arith.constant 0 : i32
    return %c0_i32, %arg0 : i32, i32
  }
  func.func @transform_3(%arg0: i32, %arg1: i32) -> (i32, i32) {
    %c0_i32 = arith.constant 0 : i32
    %c0_i32_0 = arith.constant 0 : i32
    return %c0_i32, %arg0 : i32, i32
  }
  func.func @transform_4(%arg0: i32, %arg1: i32) -> (i32, i32) {
    %c0_i32 = arith.constant 0 : i32
    return %arg1, %arg0 : i32, i32
  }
}

module attributes {stable_mosaic.version = 11 : i64} {
  func.func @_ln_linear_kernel(%arg0: i32, %arg1: i32, %arg2: memref<16x128xf32, #tpu.memory_space<vmem>>, %arg3: memref<1x128xf32, #tpu.memory_space<vmem>>, %arg4: memref<1x128xf32, #tpu.memory_space<vmem>>, %arg5: memref<128x256xbf16, #tpu.memory_space<vmem>>, %arg6: memref<1x256xf32, #tpu.memory_space<vmem>>, %arg7: memref<16x256xbf16, #tpu.memory_space<vmem>>) attributes {dimension_semantics = [#tpu.dimension_semantics<parallel>, #tpu.dimension_semantics<parallel>], iteration_bounds = array<i64: 1, 1>, scalar_prefetch = 0 : i64, scratch_operands = 0 : i64, tpu.core_type = #tpu.core_type<tc>, window_params = [{transform_indices = @transform_0, window_bounds = array<i64: 16, 128>}, {pipeline_mode = #tpu.pipeline_mode<synchronous>, transform_indices = @transform_1, window_bounds = array<i64: 1, 128>}, {pipeline_mode = #tpu.pipeline_mode<synchronous>, transform_indices = @transform_2, window_bounds = array<i64: 1, 128>}, {transform_indices = @transform_3, window_bounds = array<i64: 128, 256>}, {transform_indices = @transform_4, window_bounds = array<i64: 1, 256>}, {transform_indices = @transform_5, window_bounds = array<i64: 16, 256>}]} {
    %c0 = arith.constant 0 : index
    %c0_0 = arith.constant 0 : index
    %0 = vector.load %arg2[%c0, %c0_0] : memref<16x128xf32, #tpu.memory_space<vmem>>, vector<16x128xf32>
    %c0_1 = arith.constant 0 : index
    %c0_2 = arith.constant 0 : index
    %1 = vector.load %arg3[%c0_1, %c0_2] : memref<1x128xf32, #tpu.memory_space<vmem>>, vector<1x128xf32>
    %c0_3 = arith.constant 0 : index
    %c0_4 = arith.constant 0 : index
    %2 = vector.load %arg4[%c0_3, %c0_4] : memref<1x128xf32, #tpu.memory_space<vmem>>, vector<1x128xf32>
    %cst = arith.constant dense<0.000000e+00> : vector<16xf32>
    %3 = vector.multi_reduction <add>, %0, %cst [1] : vector<16x128xf32> to vector<16xf32>
    %4 = vector.shape_cast %3 : vector<16xf32> to vector<16x1xf32>
    %cst_5 = arith.constant 1.280000e+02 : f32
    %5 = vector.broadcast %cst_5 : f32 to vector<16x1xf32>
    %6 = arith.divf %4, %5 : vector<16x1xf32>
    %7 = vector.broadcast %6 : vector<16x1xf32> to vector<16x128xf32>
    %8 = arith.subf %0, %7 : vector<16x128xf32>
    %9 = arith.mulf %8, %8 : vector<16x128xf32>
    %cst_6 = arith.constant dense<0.000000e+00> : vector<16xf32>
    %10 = vector.multi_reduction <add>, %9, %cst_6 [1] : vector<16x128xf32> to vector<16xf32>
    %11 = vector.shape_cast %10 : vector<16xf32> to vector<16x1xf32>
    %cst_7 = arith.constant 1.280000e+02 : f32
    %12 = vector.broadcast %cst_7 : f32 to vector<16x1xf32>
    %13 = arith.divf %11, %12 : vector<16x1xf32>
    %cst_8 = arith.constant 9.99999993E-9 : f32
    %14 = vector.broadcast %cst_8 : f32 to vector<16x1xf32>
    %15 = arith.addf %13, %14 : vector<16x1xf32>
    %16 = math.rsqrt %15 : vector<16x1xf32>
    %17 = vector.broadcast %16 : vector<16x1xf32> to vector<16x128xf32>
    %18 = arith.mulf %8, %17 : vector<16x128xf32>
    %19 = vector.broadcast %1 : vector<1x128xf32> to vector<16x128xf32>
    %20 = arith.mulf %18, %19 : vector<16x128xf32>
    %21 = vector.broadcast %2 : vector<1x128xf32> to vector<16x128xf32>
    %22 = arith.addf %20, %21 : vector<16x128xf32>
    %23 = arith.truncf %22 : vector<16x128xf32> to vector<16x128xbf16>
    %c0_9 = arith.constant 0 : index
    %c0_10 = arith.constant 0 : index
    %24 = vector.load %arg5[%c0_9, %c0_10] : memref<128x256xbf16, #tpu.memory_space<vmem>>, vector<128x256xbf16>
    %cst_11 = arith.constant dense<0.000000e+00> : vector<16x256xf32>
    %25 = tpu.matmul %23, %24, %cst_11 {dimension_numbers = #tpu.dot_dimension_numbers<[1], [0], [0], [1], [0, 0, 1, 1], [], []>} : vector<16x128xbf16>, vector<128x256xbf16>, vector<16x256xf32> -> vector<16x256xf32>
    %c0_12 = arith.constant 0 : index
    %c0_13 = arith.constant 0 : index
    %26 = vector.load %arg6[%c0_12, %c0_13] : memref<1x256xf32, #tpu.memory_space<vmem>>, vector<1x256xf32>
    %27 = vector.broadcast %26 : vector<1x256xf32> to vector<16x256xf32>
    %28 = arith.addf %25, %27 : vector<16x256xf32>
    %29 = arith.truncf %28 : vector<16x256xf32> to vector<16x256xbf16>
    %c0_14 = arith.constant 0 : index
    %c0_15 = arith.constant 0 : index
    %30 = vector.load %arg7[%c0_14, %c0_15] : memref<16x256xbf16, #tpu.memory_space<vmem>>, vector<16x256xbf16>
    tpu.vector_store %arg7[%c0_14, %c0_15], %29 {strides = array<i32>} : memref<16x256xbf16, #tpu.memory_space<vmem>>, vector<16x256xbf16>,
    return
  }
  func.func @transform_0(%arg0: i32, %arg1: i32) -> (i32, i32) {
    %c0_i32 = arith.constant 0 : i32
    %c0_i32_0 = arith.constant 0 : i32
    return %arg1, %c0_i32 : i32, i32
  }
  func.func @transform_1(%arg0: i32, %arg1: i32) -> (i32, i32) {
    %c0_i32 = arith.constant 0 : i32
    %c0_i32_0 = arith.constant 0 : i32
    %c0_i32_1 = arith.constant 0 : i32
    return %c0_i32, %c0_i32_0 : i32, i32
  }
  func.func @transform_2(%arg0: i32, %arg1: i32) -> (i32, i32) {
    %c0_i32 = arith.constant 0 : i32
    %c0_i32_0 = arith.constant 0 : i32
    %c0_i32_1 = arith.constant 0 : i32
    return %c0_i32, %c0_i32_0 : i32, i32
  }
  func.func @transform_3(%arg0: i32, %arg1: i32) -> (i32, i32) {
    %c0_i32 = arith.constant 0 : i32
    %c0_i32_0 = arith.constant 0 : i32
    return %c0_i32, %arg0 : i32, i32
  }
  func.func @transform_4(%arg0: i32, %arg1: i32) -> (i32, i32) {
    %c0_i32 = arith.constant 0 : i32
    %c0_i32_0 = arith.constant 0 : i32
    return %c0_i32, %arg0 : i32, i32
  }
  func.func @transform_5(%arg0: i32, %arg1: i32) -> (i32, i32) {
    %c0_i32 = arith.constant 0 : i32
    return %arg1, %arg0 : i32, i32
  }
}

module attributes {stable_mosaic.version = 11 : i64} {
  func.func @_self_attn_kernel(%arg0: i32, %arg1: i32, %arg2: memref<1x8x384xbf16, #tpu.memory_space<vmem>>, %arg3: memref<1x8x384xbf16, #tpu.memory_space<vmem>>, %arg4: memref<1x8x128xbf16, #tpu.memory_space<vmem>>) attributes {dimension_semantics = [#tpu.dimension_semantics<parallel>, #tpu.dimension_semantics<parallel>], iteration_bounds = array<i64: 2, 1>, scalar_prefetch = 0 : i64, scratch_operands = 0 : i64, tpu.core_type = #tpu.core_type<tc>, window_params = [{transform_indices = @transform_0, window_bounds = array<i64: 1, 8, 384>}, {transform_indices = @transform_1, window_bounds = array<i64: 1, 8, 384>}, {transform_indices = @transform_2, window_bounds = array<i64: 1, 8, 128>}]} {
    %c0 = arith.constant 0 : index
    %c0_0 = arith.constant 0 : index
    %c0_1 = arith.constant 0 : index
    %0 = vector.load %arg2[%c0, %c0_0, %c0_1] : memref<1x8x384xbf16, #tpu.memory_space<vmem>>, vector<1x8x128xbf16>
    %1 = vector.shape_cast %0 : vector<1x8x128xbf16> to vector<8x128xbf16>
    %c0_2 = arith.constant 0 : index
    %c0_3 = arith.constant 0 : index
    %c128 = arith.constant 128 : index
    %2 = vector.load %arg3[%c0_2, %c0_3, %c128] : memref<1x8x384xbf16, #tpu.memory_space<vmem>>, vector<1x8x128xbf16>
    %3 = vector.shape_cast %2 : vector<1x8x128xbf16> to vector<8x128xbf16>
    %c0_4 = arith.constant 0 : index
    %c0_5 = arith.constant 0 : index
    %c256 = arith.constant 256 : index
    %4 = vector.load %arg3[%c0_4, %c0_5, %c256] : memref<1x8x384xbf16, #tpu.memory_space<vmem>>, vector<1x8x128xbf16>
    %5 = vector.shape_cast %4 : vector<1x8x128xbf16> to vector<8x128xbf16>
    %c8_i32 = arith.constant 8 : i32
    %6 = arith.muli %arg1, %c8_i32 : i32
    %7 = vector.shape_cast %1 : vector<8x128xbf16> to vector<8x8x16xbf16>
    %8 = tpu.transpose %7, [1, 0, 2] : vector<8x8x16xbf16> -> vector<8x8x16xbf16>
    %9 = vector.shape_cast %3 : vector<8x128xbf16> to vector<8x8x16xbf16>
    %10 = tpu.transpose %9, [1, 0, 2] : vector<8x8x16xbf16> -> vector<8x8x16xbf16>
    %11 = vector.shape_cast %5 : vector<8x128xbf16> to vector<8x8x16xbf16>
    %12 = tpu.transpose %11, [1, 0, 2] : vector<8x8x16xbf16> -> vector<8x8x16xbf16>
    "tpu.trace_start"() <{level = 10 : i32, message = "hqc,hkc->hqk"}> : () -> ()
    %cst = arith.constant dense<0.000000e+00> : vector<8x8x8xf32>
    %13 = tpu.matmul %8, %10, %cst {dimension_numbers = #tpu.dot_dimension_numbers<[2], [2], [1], [1], [0, 0, 0, 1, 1, 1], [0], [0]>} : vector<8x8x16xbf16>, vector<8x8x16xbf16>, vector<8x8x8xf32> -> vector<8x8x8xf32>
    "tpu.trace_stop"() : () -> ()
    %cst_6 = arith.constant 2.500000e-01 : f32
    %14 = vector.broadcast %cst_6 : f32 to vector<8x8x8xf32>
    %15 = arith.mulf %13, %14 : vector<8x8x8xf32>
    %16 = tpu.iota {dimensions = array<i32: 1>} : vector<1x8x8xi32>
    %17 = vector.broadcast %6 : i32 to vector<1x8x8xi32>
    %18 = arith.addi %16, %17 : vector<1x8x8xi32>
    %19 = tpu.iota {dimensions = array<i32: 2>} : vector<1x8x8xi32>
    %20 = arith.cmpi sle, %19, %18 : vector<1x8x8xi32>
    %cst_7 = arith.constant -1.000000e+30 : f32
    %21 = vector.shape_cast %20 : vector<1x8x8xi1> to vector<1x8x8xi1>
    %22 = vector.broadcast %21 : vector<1x8x8xi1> to vector<8x8x8xi1>
    %23 = vector.broadcast %cst_7 : f32 to vector<8x8x8xf32>
    %24 = arith.select %22, %15, %23 : vector<8x8x8xi1>, vector<8x8x8xf32>
    %cst_8 = arith.constant dense<0xFF800000> : vector<8x8xf32>
    %25 = vector.multi_reduction <maximumf>, %24, %cst_8 [2] : vector<8x8x8xf32> to vector<8x8xf32>
    %26 = vector.shape_cast %25 : vector<8x8xf32> to vector<8x8x1xf32>
    %27 = vector.broadcast %26 : vector<8x8x1xf32> to vector<8x8x8xf32>
    %28 = arith.subf %24, %27 : vector<8x8x8xf32>
    %29 = math.exp %28 : vector<8x8x8xf32>
    %cst_9 = arith.constant dense<0.000000e+00> : vector<8x8xf32>
    %30 = vector.multi_reduction <add>, %29, %cst_9 [2] : vector<8x8x8xf32> to vector<8x8xf32>
    %31 = vector.shape_cast %30 : vector<8x8xf32> to vector<8x8x1xf32>
    %32 = tpu.reciprocal %31 {approx = true} : vector<8x8x1xf32> -> vector<8x8x1xf32>
    %33 = vector.broadcast %32 : vector<8x8x1xf32> to vector<8x8x8xf32>
    %34 = arith.mulf %29, %33 : vector<8x8x8xf32>
    %35 = arith.truncf %34 : vector<8x8x8xf32> to vector<8x8x8xbf16>
    "tpu.trace_start"() <{level = 10 : i32, message = "hqk,hkc->hqc"}> : () -> ()
    %cst_10 = arith.constant dense<0.000000e+00> : vector<8x8x16xf32>
    %36 = tpu.matmul %35, %12, %cst_10 {dimension_numbers = #tpu.dot_dimension_numbers<[2], [1], [1], [2], [0, 0, 0, 1, 1, 2], [0], [0]>} : vector<8x8x8xbf16>, vector<8x8x16xbf16>, vector<8x8x16xf32> -> vector<8x8x16xf32>
    "tpu.trace_stop"() : () -> ()
    %37 = tpu.transpose %36, [1, 0, 2] : vector<8x8x16xf32> -> vector<8x8x16xf32>
    %38 = vector.shape_cast %37 : vector<8x8x16xf32> to vector<8x128xf32>
    %39 = arith.truncf %38 : vector<8x128xf32> to vector<8x128xbf16>
    %c0_11 = arith.constant 0 : index
    %c0_12 = arith.constant 0 : index
    %c0_13 = arith.constant 0 : index
    %40 = vector.load %arg4[%c0_11, %c0_12, %c0_13] : memref<1x8x128xbf16, #tpu.memory_space<vmem>>, vector<1x8x128xbf16>
    %41 = vector.shape_cast %40 : vector<1x8x128xbf16> to vector<8x128xbf16>
    %42 = vector.shape_cast %39 : vector<8x128xbf16> to vector<1x8x128xbf16>
    tpu.vector_store %arg4[%c0_11, %c0_12, %c0_13], %42 {strides = array<i32>} : memref<1x8x128xbf16, #tpu.memory_space<vmem>>, vector<1x8x128xbf16>,
    return
  }
  func.func @transform_0(%arg0: i32, %arg1: i32) -> (i32, i32, i32) {
    %c0_i32 = arith.constant 0 : i32
    %c0_i32_0 = arith.constant 0 : i32
    return %arg0, %arg1, %c0_i32 : i32, i32, i32
  }
  func.func @transform_1(%arg0: i32, %arg1: i32) -> (i32, i32, i32) {
    %c0_i32 = arith.constant 0 : i32
    %c0_i32_0 = arith.constant 0 : i32
    %c0_i32_1 = arith.constant 0 : i32
    return %arg0, %c0_i32, %c0_i32_0 : i32, i32, i32
  }
  func.func @transform_2(%arg0: i32, %arg1: i32) -> (i32, i32, i32) {
    %c0_i32 = arith.constant 0 : i32
    %c0_i32_0 = arith.constant 0 : i32
    return %arg0, %arg1, %c0_i32 : i32, i32, i32
  }
}

module attributes {stable_mosaic.version = 11 : i64} {
  func.func @_ln_linear_kernel(%arg0: i32, %arg1: i32, %arg2: memref<16x128xf32, #tpu.memory_space<vmem>>, %arg3: memref<1x128xf32, #tpu.memory_space<vmem>>, %arg4: memref<1x128xf32, #tpu.memory_space<vmem>>, %arg5: memref<128x128xbf16, #tpu.memory_space<vmem>>, %arg6: memref<1x128xf32, #tpu.memory_space<vmem>>, %arg7: memref<16x128xbf16, #tpu.memory_space<vmem>>) attributes {dimension_semantics = [#tpu.dimension_semantics<parallel>, #tpu.dimension_semantics<parallel>], iteration_bounds = array<i64: 1, 1>, scalar_prefetch = 0 : i64, scratch_operands = 0 : i64, tpu.core_type = #tpu.core_type<tc>, window_params = [{transform_indices = @transform_0, window_bounds = array<i64: 16, 128>}, {pipeline_mode = #tpu.pipeline_mode<synchronous>, transform_indices = @transform_1, window_bounds = array<i64: 1, 128>}, {pipeline_mode = #tpu.pipeline_mode<synchronous>, transform_indices = @transform_2, window_bounds = array<i64: 1, 128>}, {transform_indices = @transform_3, window_bounds = array<i64: 128, 128>}, {transform_indices = @transform_4, window_bounds = array<i64: 1, 128>}, {transform_indices = @transform_5, window_bounds = array<i64: 16, 128>}]} {
    %c0 = arith.constant 0 : index
    %c0_0 = arith.constant 0 : index
    %0 = vector.load %arg2[%c0, %c0_0] : memref<16x128xf32, #tpu.memory_space<vmem>>, vector<16x128xf32>
    %c0_1 = arith.constant 0 : index
    %c0_2 = arith.constant 0 : index
    %1 = vector.load %arg3[%c0_1, %c0_2] : memref<1x128xf32, #tpu.memory_space<vmem>>, vector<1x128xf32>
    %c0_3 = arith.constant 0 : index
    %c0_4 = arith.constant 0 : index
    %2 = vector.load %arg4[%c0_3, %c0_4] : memref<1x128xf32, #tpu.memory_space<vmem>>, vector<1x128xf32>
    %cst = arith.constant dense<0.000000e+00> : vector<16xf32>
    %3 = vector.multi_reduction <add>, %0, %cst [1] : vector<16x128xf32> to vector<16xf32>
    %4 = vector.shape_cast %3 : vector<16xf32> to vector<16x1xf32>
    %cst_5 = arith.constant 1.280000e+02 : f32
    %5 = vector.broadcast %cst_5 : f32 to vector<16x1xf32>
    %6 = arith.divf %4, %5 : vector<16x1xf32>
    %7 = vector.broadcast %6 : vector<16x1xf32> to vector<16x128xf32>
    %8 = arith.subf %0, %7 : vector<16x128xf32>
    %9 = arith.mulf %8, %8 : vector<16x128xf32>
    %cst_6 = arith.constant dense<0.000000e+00> : vector<16xf32>
    %10 = vector.multi_reduction <add>, %9, %cst_6 [1] : vector<16x128xf32> to vector<16xf32>
    %11 = vector.shape_cast %10 : vector<16xf32> to vector<16x1xf32>
    %cst_7 = arith.constant 1.280000e+02 : f32
    %12 = vector.broadcast %cst_7 : f32 to vector<16x1xf32>
    %13 = arith.divf %11, %12 : vector<16x1xf32>
    %cst_8 = arith.constant 9.99999993E-9 : f32
    %14 = vector.broadcast %cst_8 : f32 to vector<16x1xf32>
    %15 = arith.addf %13, %14 : vector<16x1xf32>
    %16 = math.rsqrt %15 : vector<16x1xf32>
    %17 = vector.broadcast %16 : vector<16x1xf32> to vector<16x128xf32>
    %18 = arith.mulf %8, %17 : vector<16x128xf32>
    %19 = vector.broadcast %1 : vector<1x128xf32> to vector<16x128xf32>
    %20 = arith.mulf %18, %19 : vector<16x128xf32>
    %21 = vector.broadcast %2 : vector<1x128xf32> to vector<16x128xf32>
    %22 = arith.addf %20, %21 : vector<16x128xf32>
    %23 = arith.truncf %22 : vector<16x128xf32> to vector<16x128xbf16>
    %c0_9 = arith.constant 0 : index
    %c0_10 = arith.constant 0 : index
    %24 = vector.load %arg5[%c0_9, %c0_10] : memref<128x128xbf16, #tpu.memory_space<vmem>>, vector<128x128xbf16>
    %cst_11 = arith.constant dense<0.000000e+00> : vector<16x128xf32>
    %25 = tpu.matmul %23, %24, %cst_11 {dimension_numbers = #tpu.dot_dimension_numbers<[1], [0], [0], [1], [0, 0, 1, 1], [], []>} : vector<16x128xbf16>, vector<128x128xbf16>, vector<16x128xf32> -> vector<16x128xf32>
    %c0_12 = arith.constant 0 : index
    %c0_13 = arith.constant 0 : index
    %26 = vector.load %arg6[%c0_12, %c0_13] : memref<1x128xf32, #tpu.memory_space<vmem>>, vector<1x128xf32>
    %27 = vector.broadcast %26 : vector<1x128xf32> to vector<16x128xf32>
    %28 = arith.addf %25, %27 : vector<16x128xf32>
    %29 = arith.truncf %28 : vector<16x128xf32> to vector<16x128xbf16>
    %c0_14 = arith.constant 0 : index
    %c0_15 = arith.constant 0 : index
    %30 = vector.load %arg7[%c0_14, %c0_15] : memref<16x128xbf16, #tpu.memory_space<vmem>>, vector<16x128xbf16>
    tpu.vector_store %arg7[%c0_14, %c0_15], %29 {strides = array<i32>} : memref<16x128xbf16, #tpu.memory_space<vmem>>, vector<16x128xbf16>,
    return
  }
  func.func @transform_0(%arg0: i32, %arg1: i32) -> (i32, i32) {
    %c0_i32 = arith.constant 0 : i32
    %c0_i32_0 = arith.constant 0 : i32
    return %arg1, %c0_i32 : i32, i32
  }
  func.func @transform_1(%arg0: i32, %arg1: i32) -> (i32, i32) {
    %c0_i32 = arith.constant 0 : i32
    %c0_i32_0 = arith.constant 0 : i32
    %c0_i32_1 = arith.constant 0 : i32
    return %c0_i32, %c0_i32_0 : i32, i32
  }
  func.func @transform_2(%arg0: i32, %arg1: i32) -> (i32, i32) {
    %c0_i32 = arith.constant 0 : i32
    %c0_i32_0 = arith.constant 0 : i32
    %c0_i32_1 = arith.constant 0 : i32
    return %c0_i32, %c0_i32_0 : i32, i32
  }
  func.func @transform_3(%arg0: i32, %arg1: i32) -> (i32, i32) {
    %c0_i32 = arith.constant 0 : i32
    %c0_i32_0 = arith.constant 0 : i32
    return %c0_i32, %arg0 : i32, i32
  }
  func.func @transform_4(%arg0: i32, %arg1: i32) -> (i32, i32) {
    %c0_i32 = arith.constant 0 : i32
    %c0_i32_0 = arith.constant 0 : i32
    return %c0_i32, %arg0 : i32, i32
  }
  func.func @transform_5(%arg0: i32, %arg1: i32) -> (i32, i32) {
    %c0_i32 = arith.constant 0 : i32
    return %arg1, %arg0 : i32, i32
  }
}

module attributes {stable_mosaic.version = 11 : i64} {
  func.func @_cross_attn_kernel(%arg0: i32, %arg1: i32, %arg2: memref<1x8x128xbf16, #tpu.memory_space<vmem>>, %arg3: memref<1x8x256xbf16, #tpu.memory_space<vmem>>, %arg4: memref<1x8x128xbf16, #tpu.memory_space<vmem>>) attributes {dimension_semantics = [#tpu.dimension_semantics<parallel>, #tpu.dimension_semantics<parallel>], iteration_bounds = array<i64: 2, 1>, scalar_prefetch = 0 : i64, scratch_operands = 0 : i64, tpu.core_type = #tpu.core_type<tc>, window_params = [{transform_indices = @transform_0, window_bounds = array<i64: 1, 8, 128>}, {transform_indices = @transform_1, window_bounds = array<i64: 1, 8, 256>}, {transform_indices = @transform_2, window_bounds = array<i64: 1, 8, 128>}]} {
    %c0 = arith.constant 0 : index
    %c0_0 = arith.constant 0 : index
    %c0_1 = arith.constant 0 : index
    %0 = vector.load %arg3[%c0, %c0_0, %c0_1] : memref<1x8x256xbf16, #tpu.memory_space<vmem>>, vector<1x8x256xbf16>
    %1 = vector.shape_cast %0 : vector<1x8x256xbf16> to vector<8x256xbf16>
    %c0_2 = arith.constant 0 : index
    %c0_3 = arith.constant 0 : index
    %c0_4 = arith.constant 0 : index
    %2 = vector.load %arg2[%c0_2, %c0_3, %c0_4] : memref<1x8x128xbf16, #tpu.memory_space<vmem>>, vector<1x8x128xbf16>
    %3 = vector.shape_cast %2 : vector<1x8x128xbf16> to vector<8x128xbf16>
    %4 = vector.extract_strided_slice %1 {offsets = [0, 0], sizes = [8, 128], strides = [1, 1]} : vector<8x256xbf16> to vector<8x128xbf16>
    %5 = vector.extract_strided_slice %1 {offsets = [0, 128], sizes = [8, 128], strides = [1, 1]} : vector<8x256xbf16> to vector<8x128xbf16>
    %6 = vector.shape_cast %3 : vector<8x128xbf16> to vector<8x8x16xbf16>
    %7 = tpu.transpose %6, [1, 0, 2] : vector<8x8x16xbf16> -> vector<8x8x16xbf16>
    %8 = vector.shape_cast %4 : vector<8x128xbf16> to vector<8x8x16xbf16>
    %9 = tpu.transpose %8, [1, 0, 2] : vector<8x8x16xbf16> -> vector<8x8x16xbf16>
    %10 = vector.shape_cast %5 : vector<8x128xbf16> to vector<8x8x16xbf16>
    %11 = tpu.transpose %10, [1, 0, 2] : vector<8x8x16xbf16> -> vector<8x8x16xbf16>
    "tpu.trace_start"() <{level = 10 : i32, message = "hqc,hkc->hqk"}> : () -> ()
    %cst = arith.constant dense<0.000000e+00> : vector<8x8x8xf32>
    %12 = tpu.matmul %7, %9, %cst {dimension_numbers = #tpu.dot_dimension_numbers<[2], [2], [1], [1], [0, 0, 0, 1, 1, 1], [0], [0]>} : vector<8x8x16xbf16>, vector<8x8x16xbf16>, vector<8x8x8xf32> -> vector<8x8x8xf32>
    "tpu.trace_stop"() : () -> ()
    %cst_5 = arith.constant 2.500000e-01 : f32
    %13 = vector.broadcast %cst_5 : f32 to vector<8x8x8xf32>
    %14 = arith.mulf %12, %13 : vector<8x8x8xf32>
    %cst_6 = arith.constant dense<0xFF800000> : vector<8x8xf32>
    %15 = vector.multi_reduction <maximumf>, %14, %cst_6 [2] : vector<8x8x8xf32> to vector<8x8xf32>
    %16 = vector.shape_cast %15 : vector<8x8xf32> to vector<8x8x1xf32>
    %17 = vector.broadcast %16 : vector<8x8x1xf32> to vector<8x8x8xf32>
    %18 = arith.subf %14, %17 : vector<8x8x8xf32>
    %19 = math.exp %18 : vector<8x8x8xf32>
    %cst_7 = arith.constant dense<0.000000e+00> : vector<8x8xf32>
    %20 = vector.multi_reduction <add>, %19, %cst_7 [2] : vector<8x8x8xf32> to vector<8x8xf32>
    %21 = vector.shape_cast %20 : vector<8x8xf32> to vector<8x8x1xf32>
    %22 = tpu.reciprocal %21 {approx = true} : vector<8x8x1xf32> -> vector<8x8x1xf32>
    %23 = vector.broadcast %22 : vector<8x8x1xf32> to vector<8x8x8xf32>
    %24 = arith.mulf %19, %23 : vector<8x8x8xf32>
    %25 = arith.truncf %24 : vector<8x8x8xf32> to vector<8x8x8xbf16>
    "tpu.trace_start"() <{level = 10 : i32, message = "hqk,hkc->hqc"}> : () -> ()
    %cst_8 = arith.constant dense<0.000000e+00> : vector<8x8x16xf32>
    %26 = tpu.matmul %25, %11, %cst_8 {dimension_numbers = #tpu.dot_dimension_numbers<[2], [1], [1], [2], [0, 0, 0, 1, 1, 2], [0], [0]>} : vector<8x8x8xbf16>, vector<8x8x16xbf16>, vector<8x8x16xf32> -> vector<8x8x16xf32>
    "tpu.trace_stop"() : () -> ()
    %27 = tpu.transpose %26, [1, 0, 2] : vector<8x8x16xf32> -> vector<8x8x16xf32>
    %28 = vector.shape_cast %27 : vector<8x8x16xf32> to vector<8x128xf32>
    %29 = arith.truncf %28 : vector<8x128xf32> to vector<8x128xbf16>
    %c0_9 = arith.constant 0 : index
    %c0_10 = arith.constant 0 : index
    %c0_11 = arith.constant 0 : index
    %30 = vector.load %arg4[%c0_9, %c0_10, %c0_11] : memref<1x8x128xbf16, #tpu.memory_space<vmem>>, vector<1x8x128xbf16>
    %31 = vector.shape_cast %30 : vector<1x8x128xbf16> to vector<8x128xbf16>
    %32 = vector.shape_cast %29 : vector<8x128xbf16> to vector<1x8x128xbf16>
    tpu.vector_store %arg4[%c0_9, %c0_10, %c0_11], %32 {strides = array<i32>} : memref<1x8x128xbf16, #tpu.memory_space<vmem>>, vector<1x8x128xbf16>,
    return
  }
  func.func @transform_0(%arg0: i32, %arg1: i32) -> (i32, i32, i32) {
    %c0_i32 = arith.constant 0 : i32
    %c0_i32_0 = arith.constant 0 : i32
    return %arg0, %arg1, %c0_i32 : i32, i32, i32
  }
  func.func @transform_1(%arg0: i32, %arg1: i32) -> (i32, i32, i32) {
    %c0_i32 = arith.constant 0 : i32
    %c0_i32_0 = arith.constant 0 : i32
    %c0_i32_1 = arith.constant 0 : i32
    return %arg0, %c0_i32, %c0_i32_0 : i32, i32, i32
  }
  func.func @transform_2(%arg0: i32, %arg1: i32) -> (i32, i32, i32) {
    %c0_i32 = arith.constant 0 : i32
    %c0_i32_0 = arith.constant 0 : i32
    return %arg0, %arg1, %c0_i32 : i32, i32, i32
  }
}

module attributes {stable_mosaic.version = 11 : i64} {
  func.func @_head_logits_kernel(%arg0: i32, %arg1: i32, %arg2: memref<16x128xf32, #tpu.memory_space<vmem>>, %arg3: memref<1x128xf32, #tpu.memory_space<vmem>>, %arg4: memref<1x128xf32, #tpu.memory_space<vmem>>, %arg5: memref<128x512xbf16, #tpu.memory_space<vmem>>, %arg6: memref<1x512xf32, #tpu.memory_space<vmem>>, %arg7: memref<16x512xf32, #tpu.memory_space<vmem>>, %arg8: memref<16x1xf32, #tpu.memory_space<vmem>>, %arg9: memref<16x1xf32, #tpu.memory_space<vmem>>, %arg10: memref<16x128xbf16, #tpu.memory_space<vmem>>) attributes {dimension_semantics = [#tpu.dimension_semantics<parallel>, #tpu.dimension_semantics<arbitrary>], iteration_bounds = array<i64: 1, 1>, scalar_prefetch = 0 : i64, scratch_operands = 1 : i64, tpu.core_type = #tpu.core_type<tc>, window_params = [{transform_indices = @transform_0, window_bounds = array<i64: 16, 128>}, {pipeline_mode = #tpu.pipeline_mode<synchronous>, transform_indices = @transform_1, window_bounds = array<i64: 1, 128>}, {pipeline_mode = #tpu.pipeline_mode<synchronous>, transform_indices = @transform_2, window_bounds = array<i64: 1, 128>}, {transform_indices = @transform_3, window_bounds = array<i64: 128, 512>}, {transform_indices = @transform_4, window_bounds = array<i64: 1, 512>}, {transform_indices = @transform_5, window_bounds = array<i64: 16, 512>}, {transform_indices = @transform_6, window_bounds = array<i64: 16, 1>}, {transform_indices = @transform_7, window_bounds = array<i64: 16, 1>}]} {
    %c0_i32 = arith.constant 0 : i32
    %0 = arith.cmpi eq, %arg1, %c0_i32 : i32
    %1 = arith.extui %0 : i1 to i32
    %c0_i32_0 = arith.constant 0 : i32
    %2 = arith.cmpi ne, %1, %c0_i32_0 : i32
    scf.if %2 {
      %c0_18 = arith.constant 0 : index
      %c0_19 = arith.constant 0 : index
      %26 = vector.load %arg2[%c0_18, %c0_19] : memref<16x128xf32, #tpu.memory_space<vmem>>, vector<16x128xf32>
      %c0_20 = arith.constant 0 : index
      %c0_21 = arith.constant 0 : index
      %27 = vector.load %arg3[%c0_20, %c0_21] : memref<1x128xf32, #tpu.memory_space<vmem>>, vector<1x128xf32>
      %c0_22 = arith.constant 0 : index
      %c0_23 = arith.constant 0 : index
      %28 = vector.load %arg4[%c0_22, %c0_23] : memref<1x128xf32, #tpu.memory_space<vmem>>, vector<1x128xf32>
      %cst_24 = arith.constant dense<0.000000e+00> : vector<16xf32>
      %29 = vector.multi_reduction <add>, %26, %cst_24 [1] : vector<16x128xf32> to vector<16xf32>
      %30 = vector.shape_cast %29 : vector<16xf32> to vector<16x1xf32>
      %cst_25 = arith.constant 1.280000e+02 : f32
      %31 = vector.broadcast %cst_25 : f32 to vector<16x1xf32>
      %32 = arith.divf %30, %31 : vector<16x1xf32>
      %33 = vector.broadcast %32 : vector<16x1xf32> to vector<16x128xf32>
      %34 = arith.subf %26, %33 : vector<16x128xf32>
      %35 = arith.mulf %34, %34 : vector<16x128xf32>
      %cst_26 = arith.constant dense<0.000000e+00> : vector<16xf32>
      %36 = vector.multi_reduction <add>, %35, %cst_26 [1] : vector<16x128xf32> to vector<16xf32>
      %37 = vector.shape_cast %36 : vector<16xf32> to vector<16x1xf32>
      %cst_27 = arith.constant 1.280000e+02 : f32
      %38 = vector.broadcast %cst_27 : f32 to vector<16x1xf32>
      %39 = arith.divf %37, %38 : vector<16x1xf32>
      %cst_28 = arith.constant 9.99999993E-9 : f32
      %40 = vector.broadcast %cst_28 : f32 to vector<16x1xf32>
      %41 = arith.addf %39, %40 : vector<16x1xf32>
      %42 = math.rsqrt %41 : vector<16x1xf32>
      %43 = vector.broadcast %42 : vector<16x1xf32> to vector<16x128xf32>
      %44 = arith.mulf %34, %43 : vector<16x128xf32>
      %45 = vector.broadcast %27 : vector<1x128xf32> to vector<16x128xf32>
      %46 = arith.mulf %44, %45 : vector<16x128xf32>
      %47 = vector.broadcast %28 : vector<1x128xf32> to vector<16x128xf32>
      %48 = arith.addf %46, %47 : vector<16x128xf32>
      %49 = arith.truncf %48 : vector<16x128xf32> to vector<16x128xbf16>
      %c0_29 = arith.constant 0 : index
      %c0_30 = arith.constant 0 : index
      %50 = vector.load %arg10[%c0_29, %c0_30] : memref<16x128xbf16, #tpu.memory_space<vmem>>, vector<16x128xbf16>
      tpu.vector_store %arg10[%c0_29, %c0_30], %49 {strides = array<i32>} : memref<16x128xbf16, #tpu.memory_space<vmem>>, vector<16x128xbf16>,
      %cst_31 = arith.constant 0xFF800000 : f32
      %51 = vector.broadcast %cst_31 : f32 to vector<16x1xf32>
      %c0_32 = arith.constant 0 : index
      %c0_33 = arith.constant 0 : index
      %52 = vector.load %arg8[%c0_32, %c0_33] : memref<16x1xf32, #tpu.memory_space<vmem>>, vector<16x1xf32>
      tpu.vector_store %arg8[%c0_32, %c0_33], %51 {strides = array<i32>} : memref<16x1xf32, #tpu.memory_space<vmem>>, vector<16x1xf32>,
      %cst_34 = arith.constant 0.000000e+00 : f32
      %53 = vector.broadcast %cst_34 : f32 to vector<16x1xf32>
      %c0_35 = arith.constant 0 : index
      %c0_36 = arith.constant 0 : index
      %54 = vector.load %arg9[%c0_35, %c0_36] : memref<16x1xf32, #tpu.memory_space<vmem>>, vector<16x1xf32>
      tpu.vector_store %arg9[%c0_35, %c0_36], %53 {strides = array<i32>} : memref<16x1xf32, #tpu.memory_space<vmem>>, vector<16x1xf32>,
    } else {
    }
    %c0 = arith.constant 0 : index
    %c0_1 = arith.constant 0 : index
    %3 = vector.load %arg10[%c0, %c0_1] : memref<16x128xbf16, #tpu.memory_space<vmem>>, vector<16x128xbf16>
    %c0_2 = arith.constant 0 : index
    %c0_3 = arith.constant 0 : index
    %4 = vector.load %arg5[%c0_2, %c0_3] : memref<128x512xbf16, #tpu.memory_space<vmem>>, vector<128x512xbf16>
    %cst = arith.constant dense<0.000000e+00> : vector<16x512xf32>
    %5 = tpu.matmul %3, %4, %cst {dimension_numbers = #tpu.dot_dimension_numbers<[1], [0], [0], [1], [0, 0, 1, 1], [], []>} : vector<16x128xbf16>, vector<128x512xbf16>, vector<16x512xf32> -> vector<16x512xf32>
    %c0_4 = arith.constant 0 : index
    %c0_5 = arith.constant 0 : index
    %6 = vector.load %arg6[%c0_4, %c0_5] : memref<1x512xf32, #tpu.memory_space<vmem>>, vector<1x512xf32>
    %7 = vector.broadcast %6 : vector<1x512xf32> to vector<16x512xf32>
    %8 = arith.addf %5, %7 : vector<16x512xf32>
    %c0_6 = arith.constant 0 : index
    %c0_7 = arith.constant 0 : index
    %9 = vector.load %arg7[%c0_6, %c0_7] : memref<16x512xf32, #tpu.memory_space<vmem>>, vector<16x512xf32>
    tpu.vector_store %arg7[%c0_6, %c0_7], %8 {strides = array<i32>} : memref<16x512xf32, #tpu.memory_space<vmem>>, vector<16x512xf32>,
    %c0_8 = arith.constant 0 : index
    %c0_9 = arith.constant 0 : index
    %10 = vector.load %arg8[%c0_8, %c0_9] : memref<16x1xf32, #tpu.memory_space<vmem>>, vector<16x1xf32>
    %cst_10 = arith.constant dense<0xFF800000> : vector<16xf32>
    %11 = vector.multi_reduction <maximumf>, %8, %cst_10 [1] : vector<16x512xf32> to vector<16xf32>
    %12 = vector.shape_cast %11 : vector<16xf32> to vector<16x1xf32>
    %13 = arith.maximumf %10, %12 : vector<16x1xf32>
    %c0_11 = arith.constant 0 : index
    %c0_12 = arith.constant 0 : index
    %14 = vector.load %arg9[%c0_11, %c0_12] : memref<16x1xf32, #tpu.memory_space<vmem>>, vector<16x1xf32>
    %15 = arith.subf %10, %13 : vector<16x1xf32>
    %16 = math.exp %15 : vector<16x1xf32>
    %17 = arith.mulf %14, %16 : vector<16x1xf32>
    %18 = vector.broadcast %13 : vector<16x1xf32> to vector<16x512xf32>
    %19 = arith.subf %8, %18 : vector<16x512xf32>
    %20 = math.exp %19 : vector<16x512xf32>
    %cst_13 = arith.constant dense<0.000000e+00> : vector<16xf32>
    %21 = vector.multi_reduction <add>, %20, %cst_13 [1] : vector<16x512xf32> to vector<16xf32>
    %22 = vector.shape_cast %21 : vector<16xf32> to vector<16x1xf32>
    %23 = arith.addf %17, %22 : vector<16x1xf32>
    %c0_14 = arith.constant 0 : index
    %c0_15 = arith.constant 0 : index
    %24 = vector.load %arg9[%c0_14, %c0_15] : memref<16x1xf32, #tpu.memory_space<vmem>>, vector<16x1xf32>
    tpu.vector_store %arg9[%c0_14, %c0_15], %23 {strides = array<i32>} : memref<16x1xf32, #tpu.memory_space<vmem>>, vector<16x1xf32>,
    %c0_16 = arith.constant 0 : index
    %c0_17 = arith.constant 0 : index
    %25 = vector.load %arg8[%c0_16, %c0_17] : memref<16x1xf32, #tpu.memory_space<vmem>>, vector<16x1xf32>
    tpu.vector_store %arg8[%c0_16, %c0_17], %13 {strides = array<i32>} : memref<16x1xf32, #tpu.memory_space<vmem>>, vector<16x1xf32>,
    return
  }
  func.func @transform_0(%arg0: i32, %arg1: i32) -> (i32, i32) {
    %c0_i32 = arith.constant 0 : i32
    %c0_i32_0 = arith.constant 0 : i32
    return %arg0, %c0_i32 : i32, i32
  }
  func.func @transform_1(%arg0: i32, %arg1: i32) -> (i32, i32) {
    %c0_i32 = arith.constant 0 : i32
    %c0_i32_0 = arith.constant 0 : i32
    %c0_i32_1 = arith.constant 0 : i32
    return %c0_i32, %c0_i32_0 : i32, i32
  }
  func.func @transform_2(%arg0: i32, %arg1: i32) -> (i32, i32) {
    %c0_i32 = arith.constant 0 : i32
    %c0_i32_0 = arith.constant 0 : i32
    %c0_i32_1 = arith.constant 0 : i32
    return %c0_i32, %c0_i32_0 : i32, i32
  }
  func.func @transform_3(%arg0: i32, %arg1: i32) -> (i32, i32) {
    %c0_i32 = arith.constant 0 : i32
    %c0_i32_0 = arith.constant 0 : i32
    return %c0_i32, %arg1 : i32, i32
  }
  func.func @transform_4(%arg0: i32, %arg1: i32) -> (i32, i32) {
    %c0_i32 = arith.constant 0 : i32
    %c0_i32_0 = arith.constant 0 : i32
    return %c0_i32, %arg1 : i32, i32
  }
  func.func @transform_5(%arg0: i32, %arg1: i32) -> (i32, i32) {
    %c0_i32 = arith.constant 0 : i32
    return %arg0, %arg1 : i32, i32
  }
  func.func @transform_6(%arg0: i32, %arg1: i32) -> (i32, i32) {
    %c0_i32 = arith.constant 0 : i32
    %c0_i32_0 = arith.constant 0 : i32
    return %arg0, %c0_i32 : i32, i32
  }
  func.func @transform_7(%arg0: i32, %arg1: i32) -> (i32, i32) {
    %c0_i32 = arith.constant 0 : i32
    %c0_i32_0 = arith.constant 0 : i32
    return %arg0, %c0_i32 : i32, i32
  }
}

module attributes {stable_mosaic.version = 11 : i64} {
  func.func @_logsoftmax_apply_kernel(%arg0: i32, %arg1: i32, %arg2: memref<16x512xf32, #tpu.memory_space<vmem>>, %arg3: memref<16x1xf32, #tpu.memory_space<vmem>>, %arg4: memref<16x1xf32, #tpu.memory_space<vmem>>, %arg5: memref<16x512xf32, #tpu.memory_space<vmem>>) attributes {dimension_semantics = [#tpu.dimension_semantics<parallel>, #tpu.dimension_semantics<parallel>], iteration_bounds = array<i64: 1, 1>, scalar_prefetch = 0 : i64, scratch_operands = 0 : i64, tpu.core_type = #tpu.core_type<tc>, window_params = [{transform_indices = @transform_0, window_bounds = array<i64: 16, 512>}, {transform_indices = @transform_1, window_bounds = array<i64: 16, 1>}, {transform_indices = @transform_2, window_bounds = array<i64: 16, 1>}, {transform_indices = @transform_3, window_bounds = array<i64: 16, 512>}]} {
    %c0 = arith.constant 0 : index
    %c0_0 = arith.constant 0 : index
    %0 = vector.load %arg2[%c0, %c0_0] : memref<16x512xf32, #tpu.memory_space<vmem>>, vector<16x512xf32>
    %c0_1 = arith.constant 0 : index
    %c0_2 = arith.constant 0 : index
    %1 = vector.load %arg3[%c0_1, %c0_2] : memref<16x1xf32, #tpu.memory_space<vmem>>, vector<16x1xf32>
    %c0_3 = arith.constant 0 : index
    %c0_4 = arith.constant 0 : index
    %2 = vector.load %arg4[%c0_3, %c0_4] : memref<16x1xf32, #tpu.memory_space<vmem>>, vector<16x1xf32>
    %3 = math.log %2 : vector<16x1xf32>
    %4 = arith.addf %1, %3 : vector<16x1xf32>
    %5 = vector.broadcast %4 : vector<16x1xf32> to vector<16x512xf32>
    %6 = arith.subf %0, %5 : vector<16x512xf32>
    %c0_5 = arith.constant 0 : index
    %c0_6 = arith.constant 0 : index
    %7 = vector.load %arg5[%c0_5, %c0_6] : memref<16x512xf32, #tpu.memory_space<vmem>>, vector<16x512xf32>
    tpu.vector_store %arg5[%c0_5, %c0_6], %6 {strides = array<i32>} : memref<16x512xf32, #tpu.memory_space<vmem>>, vector<16x512xf32>,
    return
  }
  func.func @transform_0(%arg0: i32, %arg1: i32) -> (i32, i32) {
    %c0_i32 = arith.constant 0 : i32
    return %arg0, %arg1 : i32, i32
  }
  func.func @transform_1(%arg0: i32, %arg1: i32) -> (i32, i32) {
    %c0_i32 = arith.constant 0 : i32
    %c0_i32_0 = arith.constant 0 : i32
    return %arg0, %c0_i32 : i32, i32
  }
  func.func @transform_2(%arg0: i32, %arg1: i32) -> (i32, i32) {
    %c0_i32 = arith.constant 0 : i32
    %c0_i32_0 = arith.constant 0 : i32
    return %arg0, %c0_i32 : i32, i32
  }
  func.func @transform_3(%arg0: i32, %arg1: i32) -> (i32, i32) {
    %c0_i32 = arith.constant 0 : i32
    return %arg0, %arg1 : i32, i32
  }
}

</mosaic_0001>

<llo_original>
// kernel: chatbot_forward.32
$region0: #{chatbot_forward.32}
  #allocation0 [shape = 'u32[]', space=smem, size = 0x4, offset = 0x4, fixed_abs, tag = 'smem constant byte address 0x4 - core index']
  #allocation1 [shape = 'u32[144,128]{1,0:T(1,128)}', space=vmem, size = 0x12000, scoped, tag = 'internal scratch']
  %s0 = inlined_call_operand.vmem [shape: bf16[16,128], index: 0, kind: input, shape index: {}]
  %s1 = inlined_call_operand.vmem [shape: f32[16,128], index: 1, kind: input, shape index: {}, may-alias: {1,4}]
  %s2 = inlined_call_operand.vmem [shape: bf16[128,128], index: 2, kind: input, shape index: {}]
  %s3 = inlined_call_operand.vmem [shape: f32[1,128], index: 3, kind: input, shape index: {}]
  %s4 = inlined_call_operand.vmem [shape: f32[16,128], index: 4, kind: output, shape index: {}, may-alias: {1,4}]
  %s5 = sld [smem:[#allocation0]]
  $region26: #{chatbot_forward.32} parent=0
    _
  %s7 = ssub.s32 1, %s5
  %s8 = scalar_select 0, %s7, %s5
  // Predicated region
  $region2: #{chatbot_forward.32} parent=0 // pred_check
    _
  $region3: #{chatbot_forward.32} parent=0 // pred_check_branch
    %10 = sbr.rel (0) target = $region5
  $region4: #{chatbot_forward.32} parent=0 // pred_region
    _
  $region5: #{chatbot_forward.32} parent=0 // pred_fallthru
    _
  // Predicated region
  $region6: #{chatbot_forward.32} parent=0 // pred_check
    _
  $region7: #{chatbot_forward.32} parent=0 // pred_check_branch
    %12 = sbr.rel (0) target = $region9
  $region8: #{chatbot_forward.32} parent=0 // pred_region
    _
  $region9: #{chatbot_forward.32} parent=0 // pred_fallthru
    _
  // Predicated region
  $region10: #{chatbot_forward.32} parent=0 // pred_check
    _
  $region11: #{chatbot_forward.32} parent=0 // pred_check_branch
    %14 = sbr.rel (0) target = $region13
  $region12: #{chatbot_forward.32} parent=0 // pred_region
    _
  $region13: #{chatbot_forward.32} parent=0 // pred_fallthru
    _
  // Predicated region
  $region14: #{chatbot_forward.32} parent=0 // pred_check
    _
  $region15: #{chatbot_forward.32} parent=0 // pred_check_branch
    %16 = sbr.rel (0) target = $region17
  $region16: #{chatbot_forward.32} parent=0 // pred_region
    _
  $region17: #{chatbot_forward.32} parent=0 // pred_fallthru
    _
  %v18 = vld [vmem:[%s1] sm:$0xff]
  %v19 = vld [vmem:[%s1 + $0x8] sm:$0xff]
  %v20 = vld [vmem:[%s0] sm:$0xf]
  %v21 = vld [vmem:[%s0 + $0x4] sm:$0xf]
  %v22 = vld [vmem:[%s2] sm:$0xf]
  %v23 = vld [vmem:[%s2 + $0x4] sm:$0xf]
  %v24 = vld [vmem:[%s2 + $0x8] sm:$0xf]
  %v25 = vld [vmem:[%s2 + $0xc] sm:$0xf]
  %v26 = vld [vmem:[%s2 + $0x10] sm:$0xf]
  %v27 = vld [vmem:[%s2 + $0x14] sm:$0xf]
  %v28 = vld [vmem:[%s2 + $0x18] sm:$0xf]
  %v29 = vld [vmem:[%s2 + $0x1c] sm:$0xf]
  %v30 = vld [vmem:[%s2 + $0x20] sm:$0xf]
  %v31 = vld [vmem:[%s2 + $0x24] sm:$0xf]
  %v32 = vld [vmem:[%s2 + $0x28] sm:$0xf]
  %v33 = vld [vmem:[%s2 + $0x2c] sm:$0xf]
  %v34 = vld [vmem:[%s2 + $0x30] sm:$0xf]
  %v35 = vld [vmem:[%s2 + $0x34] sm:$0xf]
  %v36 = vld [vmem:[%s2 + $0x38] sm:$0xf]
  %v37 = vld [vmem:[%s2 + $0x3c] sm:$0xf]
  %v40 = vunpack.c.l.b16 %v20
  %v41 = vunpack.c.l.b16 %v21
  %v42 = vpack.c.b16 %v41, %v40
  %v60 = vunpack.c.l.b16 %v22
  %v61 = vunpack.c.l.b16 %v23
  %v62 = vunpack.c.l.b16 %v24
  %v63 = vunpack.c.l.b16 %v25
  %v64 = vunpack.c.l.b16 %v26
  %v65 = vunpack.c.l.b16 %v27
  %v66 = vunpack.c.l.b16 %v28
  %v67 = vunpack.c.l.b16 %v29
  %v68 = vunpack.c.l.b16 %v30
  %v69 = vunpack.c.l.b16 %v31
  %v70 = vunpack.c.l.b16 %v32
  %v71 = vunpack.c.l.b16 %v33
  %v72 = vunpack.c.l.b16 %v34
  %v73 = vunpack.c.l.b16 %v35
  %v74 = vunpack.c.l.b16 %v36
  %v75 = vunpack.c.l.b16 %v37
  %v76 = vpack.c.b16 %v61, %v60
  %v77 = vpack.c.b16 %v63, %v62
  %v78 = vpack.c.b16 %v65, %v64
  %v79 = vpack.c.b16 %v67, %v66
  %v80 = vpack.c.b16 %v69, %v68
  %v81 = vpack.c.b16 %v71, %v70
  %v82 = vpack.c.b16 %v73, %v72
  %v83 = vpack.c.b16 %v75, %v74
  %92 = vmatprep.subr.bf16.mxu0 0
  %93 = vmatpush1.bf16.msra.mxu0 %v76
  %94 = vmatprep.subr.bf16.mxu0 0
  %95 = vmatpush1.bf16.msra.mxu0 %v77
  %96 = vmatprep.subr.bf16.mxu0 0
  %97 = vmatpush1.bf16.msra.mxu0 %v78
  %98 = vmatprep.subr.bf16.mxu0 0
  %99 = vmatpush1.bf16.msra.mxu0 %v79
  %100 = vmatprep.subr.bf16.mxu0 0
  %101 = vmatpush1.bf16.msra.mxu0 %v80
  %102 = vmatprep.subr.bf16.mxu0 0
  %103 = vmatpush1.bf16.msra.mxu0 %v81
  %104 = vmatprep.subr.bf16.mxu0 0
  %105 = vmatpush1.bf16.msra.mxu0 %v82
  %106 = vmatprep.subr.bf16.mxu0 0
  %107 = vmatpush1.bf16.msra.mxu0 %v83
  %108 = vmatprep.subr.bf16.mxu0 0
  %109 = vmatpush1.bf16.msra.mxu0 0
  %110 = vmatprep.subr.bf16.mxu0 0
  %111 = vmatpush1.bf16.msra.mxu0 0
  %112 = vmatprep.subr.bf16.mxu0 0
  %113 = vmatpush1.bf16.msra.mxu0 0
  %114 = vmatprep.subr.bf16.mxu0 0
  %115 = vmatpush1.bf16.msra.mxu0 0
  %116 = vmatprep.subr.bf16.mxu0 0
  %117 = vmatpush1.bf16.msra.mxu0 0
  %118 = vmatprep.subr.bf16.mxu0 0
  %119 = vmatpush1.bf16.msra.mxu0 0
  %120 = vmatprep.subr.bf16.mxu0 0
  %121 = vmatpush1.bf16.msra.mxu0 0
  %122 = vmatprep.subr.bf16.mxu0 0
  %123 = vmatpush1.bf16.msra.mxu0 0
  %124 = vmatprep.mubr.bf16.mxu0 0
  %125 = vmatmul.mubr.bf16.gmra.mrb[0].mxu0 %v42
  %v126 = vpop.f32.mrb[0].mxu0
  %v127 = vadd.f32 0.0, %v126
  %v128 = vpop.f32.mrb[0].mxu0
  %v129 = vpop.f32.mrb[0].mxu0
  %v130 = vadd.f32 0.0, %v129
  %v131 = vpop.f32.mrb[0].mxu0
  %132 = vdwg.mxu0
  %v133 = vadd.f32 %v18, %v127
  %v134 = vadd.f32 %v19, %v130
  %v135 = vld [vmem:[%s3] sm:$0x1]
  %v137 = vlaneseq
  %v138 = vshrl.u32 %v137, 7
  %v139 = vsub.s32 0, %v138
  %v140 = vrot.slane %v135, %v139
  %v142 = vadd.f32 %v133, %v140
  %v143 = vadd.f32 %v134, %v140
  %144 = vst [vmem:[%s4] sm:$0xff] %v142
  %145 = vst [vmem:[%s4 + $0x8] sm:$0xff] %v143
  // Predicated region
  $region18: #{chatbot_forward.32} parent=0 // pred_check
    _
  $region19: #{chatbot_forward.32} parent=0 // pred_check_branch
    %147 = sbr.rel (0) target = $region21
  $region20: #{chatbot_forward.32} parent=0 // pred_region
    _
  $region21: #{chatbot_forward.32} parent=0 // pred_fallthru
    _
  // Predicated region
  $region22: #{chatbot_forward.32} parent=0 // pred_check
    _
  $region23: #{chatbot_forward.32} parent=0 // pred_check_branch
    %149 = sbr.rel (0) target = $region25
  $region24: #{chatbot_forward.32} parent=0 // pred_region
    _
  $region25: #{chatbot_forward.32} parent=0 // pred_fallthru
    _

// kernel: chatbot_forward.30
$region0: #{chatbot_forward.30}
  #allocation0 [shape = 'u32[]', space=smem, size = 0x4, offset = 0x4, fixed_abs, tag = 'smem constant byte address 0x4 - core index']
  #allocation1 [shape = 'u32[144,128]{1,0:T(1,128)}', space=vmem, size = 0x12000, scoped, tag = 'internal scratch']
  %s0 = inlined_call_operand.vmem [shape: f32[16,128], index: 0, kind: input, shape index: {}]
  %s1 = inlined_call_operand.vmem [shape: f32[1,128], index: 1, kind: input, shape index: {}]
  %s2 = inlined_call_operand.vmem [shape: f32[1,128], index: 2, kind: input, shape index: {}]
  %s3 = inlined_call_operand.vmem [shape: bf16[128,384], index: 3, kind: input, shape index: {}]
  %s4 = inlined_call_operand.vmem [shape: f32[1,384], index: 4, kind: input, shape index: {}]
  %s5 = inlined_call_operand.vmem [shape: bf16[16,384], index: 5, kind: output, shape index: {}]
  %s6 = sld [smem:[#allocation0]]
  $region30: #{chatbot_forward.30} parent=0
    _
  %s8 = ssub.s32 1, %s6
  %s9 = scalar_select 0, %s8, %s6
  // Predicated region
  $region2: #{chatbot_forward.30} parent=0 // pred_check
    _
  $region3: #{chatbot_forward.30} parent=0 // pred_check_branch
    %11 = sbr.rel (0) target = $region5
  $region4: #{chatbot_forward.30} parent=0 // pred_region
    _
  $region5: #{chatbot_forward.30} parent=0 // pred_fallthru
    _
  // Predicated region
  $region6: #{chatbot_forward.30} parent=0 // pred_check
    _
  $region7: #{chatbot_forward.30} parent=0 // pred_check_branch
    %13 = sbr.rel (0) target = $region9
  $region8: #{chatbot_forward.30} parent=0 // pred_region
    _
  $region9: #{chatbot_forward.30} parent=0 // pred_fallthru
    _
  // Predicated region
  $region10: #{chatbot_forward.30} parent=0 // pred_check
    _
  $region11: #{chatbot_forward.30} parent=0 // pred_check_branch
    %15 = sbr.rel (0) target = $region13
  $region12: #{chatbot_forward.30} parent=0 // pred_region
    _
  $region13: #{chatbot_forward.30} parent=0 // pred_fallthru
    _
  // Predicated region
  $region14: #{chatbot_forward.30} parent=0 // pred_check
    _
  $region15: #{chatbot_forward.30} parent=0 // pred_check_branch
    %17 = sbr.rel (0) target = $region17
  $region16: #{chatbot_forward.30} parent=0 // pred_region
    _
  $region17: #{chatbot_forward.30} parent=0 // pred_fallthru
    _
  // Predicated region
  $region18: #{chatbot_forward.30} parent=0 // pred_check
    _
  $region19: #{chatbot_forward.30} parent=0 // pred_check_branch
    %19 = sbr.rel (0) target = $region21
  $region20: #{chatbot_forward.30} parent=0 // pred_region
    _
  $region21: #{chatbot_forward.30} parent=0 // pred_fallthru
    _
  %v21 = vld [vmem:[%s0] sm:$0xff]
  %v22 = vld [vmem:[%s0 + $0x8] sm:$0xff]
  %v23 = vld [vmem:[%s1] sm:$0x1]
  %v24 = vld [vmem:[%s2] sm:$0x1]
  %25 = vadd.xlane.f32.xlu0 %v21
  %v26 = vpop.xlane.xlu0 %25
  %27 = vadd.xlane.f32.xlu0 %v22
  %v28 = vpop.xlane.xlu0 %27
  %v29 = vrcp.pop 128.0
  %v30 = vmul.f32 %v26, %v29
  %v31 = vmul.f32 %v28, %v29
  %v32 = vsub.f32 %v21, %v30
  %v33 = vsub.f32 %v22, %v31
  %v34 = vmul.f32 %v32, %v32
  %v35 = vmul.f32 %v33, %v33
  %36 = vadd.xlane.f32.xlu0 %v34
  %v37 = vpop.xlane.xlu0 %36
  %38 = vadd.xlane.f32.xlu0 %v35
  %v39 = vpop.xlane.xlu0 %38
  %v40 = vmul.f32 %v37, %v29
  %v41 = vmul.f32 %v39, %v29
  %v42 = vadd.f32 %v40, 1e-08
  %v43 = vadd.f32 %v41, 1e-08
  %v44 = vrsqrt.pop %v42
  %v45 = vrsqrt.pop %v43
  %v46 = vmul.f32 %v32, %v44
  %v47 = vmul.f32 %v33, %v45
  %v49 = vlaneseq
  %v50 = vshrl.u32 %v49, 7
  %v51 = vsub.s32 0, %v50
  %v52 = vrot.slane %v23, %v51
  %v54 = vmul.f32 %v46, %v52
  %v55 = vmul.f32 %v47, %v52
  %v57 = vlaneseq
  %v58 = vshrl.u32 %v57, 7
  %v59 = vsub.s32 0, %v58
  %v60 = vrot.slane %v24, %v59
  %v62 = vadd.f32 %v54, %v60
  %v63 = vadd.f32 %v55, %v60
  %v64 = vpack.c.bf16 %v63, %v62
  %v65 = vld [vmem:[%s3] sm:$0xff]
  %v66 = vld [vmem:[%s3 + $0x8] sm:$0xf]
  %v67 = vld [vmem:[%s3 + $0xc] sm:$0xff]
  %v68 = vld [vmem:[%s3 + $0x14] sm:$0xf]
  %v69 = vld [vmem:[%s3 + $0x18] sm:$0xff]
  %v70 = vld [vmem:[%s3 + $0x20] sm:$0xf]
  %v71 = vld [vmem:[%s3 + $0x24] sm:$0xff]
  %v72 = vld [vmem:[%s3 + $0x2c] sm:$0xf]
  %v73 = vld [vmem:[%s3 + $0x30] sm:$0xff]
  %v74 = vld [vmem:[%s3 + $0x38] sm:$0xf]
  %v75 = vld [vmem:[%s3 + $0x3c] sm:$0xff]
  %v76 = vld [vmem:[%s3 + $0x44] sm:$0xf]
  %v77 = vld [vmem:[%s3 + $0x48] sm:$0xff]
  %v78 = vld [vmem:[%s3 + $0x50] sm:$0xf]
  %v79 = vld [vmem:[%s3 + $0x54] sm:$0xff]
  %v80 = vld [vmem:[%s3 + $0x5c] sm:$0xf]
  %v81 = vld [vmem:[%s3 + $0x60] sm:$0xff]
  %v82 = vld [vmem:[%s3 + $0x68] sm:$0xf]
  %v83 = vld [vmem:[%s3 + $0x6c] sm:$0xff]
  %v84 = vld [vmem:[%s3 + $0x74] sm:$0xf]
  %v85 = vld [vmem:[%s3 + $0x78] sm:$0xff]
  %v86 = vld [vmem:[%s3 + $0x80] sm:$0xf]
  %v87 = vld [vmem:[%s3 + $0x84] sm:$0xff]
  %v88 = vld [vmem:[%s3 + $0x8c] sm:$0xf]
  %v89 = vld [vmem:[%s3 + $0x90] sm:$0xff]
  %v90 = vld [vmem:[%s3 + $0x98] sm:$0xf]
  %v91 = vld [vmem:[%s3 + $0x9c] sm:$0xff]
  %v92 = vld [vmem:[%s3 + $0xa4] sm:$0xf]
  %v93 = vld [vmem:[%s3 + $0xa8] sm:$0xff]
  %v94 = vld [vmem:[%s3 + $0xb0] sm:$0xf]
  %v95 = vld [vmem:[%s3 + $0xb4] sm:$0xff]
  %v96 = vld [vmem:[%s3 + $0xbc] sm:$0xf]
  %v97 = vld [vmem:[%s4] sm:$0x7]
  %v99 = vlaneseq
  %v100 = vshrl.u32 %v99, 7
  %v101 = vsub.s32 0, %v100
  %v102 = vrot.slane %v97, %v101
  %v103 = vlaneseq
  %v104 = vshrl.u32 %v103, 7
  %v105 = vsub.s32 1, %v104
  %v106 = vrot.slane %v97, %v105
  %v107 = vlaneseq
  %v108 = vshrl.u32 %v107, 7
  %v109 = vsub.s32 2, %v108
  %v110 = vrot.slane %v97, %v109
  %v146 = vunpack.c.l.b16 %v65
  %v147 = vunpack.c.h.b16 %v65
  %v148 = vunpack.c.l.b16 %v66
  %v149 = vunpack.c.l.b16 %v67
  %v150 = vunpack.c.h.b16 %v67
  %v151 = vunpack.c.l.b16 %v68
  %v152 = vunpack.c.l.b16 %v69
  %v153 = vunpack.c.h.b16 %v69
  %v154 = vunpack.c.l.b16 %v70
  %v155 = vunpack.c.l.b16 %v71
  %v156 = vunpack.c.h.b16 %v71
  %v157 = vunpack.c.l.b16 %v72
  %v158 = vunpack.c.l.b16 %v73
  %v159 = vunpack.c.h.b16 %v73
  %v160 = vunpack.c.l.b16 %v74
  %v161 = vunpack.c.l.b16 %v75
  %v162 = vunpack.c.h.b16 %v75
  %v163 = vunpack.c.l.b16 %v76
  %v164 = vunpack.c.l.b16 %v77
  %v165 = vunpack.c.h.b16 %v77
  %v166 = vunpack.c.l.b16 %v78
  %v167 = vunpack.c.l.b16 %v79
  %v168 = vunpack.c.h.b16 %v79
  %v169 = vunpack.c.l.b16 %v80
  %v170 = vunpack.c.l.b16 %v81
  %v171 = vunpack.c.h.b16 %v81
  %v172 = vunpack.c.l.b16 %v82
  %v173 = vunpack.c.l.b16 %v83
  %v174 = vunpack.c.h.b16 %v83
  %v175 = vunpack.c.l.b16 %v84
  %v176 = vunpack.c.l.b16 %v85
  %v177 = vunpack.c.h.b16 %v85
  %v178 = vunpack.c.l.b16 %v86
  %v179 = vunpack.c.l.b16 %v87
  %v180 = vunpack.c.h.b16 %v87
  %v181 = vunpack.c.l.b16 %v88
  %v182 = vunpack.c.l.b16 %v89
  %v183 = vunpack.c.h.b16 %v89
  %v184 = vunpack.c.l.b16 %v90
  %v185 = vunpack.c.l.b16 %v91
  %v186 = vunpack.c.h.b16 %v91
  %v187 = vunpack.c.l.b16 %v92
  %v188 = vunpack.c.l.b16 %v93
  %v189 = vunpack.c.h.b16 %v93
  %v190 = vunpack.c.l.b16 %v94
  %v191 = vunpack.c.l.b16 %v95
  %v192 = vunpack.c.h.b16 %v95
  %v193 = vunpack.c.l.b16 %v96
  %v194 = vpack.c.b16 %v149, %v146
  %v195 = vpack.c.b16 %v150, %v147
  %v196 = vpack.c.b16 %v151, %v148
  %v197 = vpack.c.b16 %v155, %v152
  %v198 = vpack.c.b16 %v156, %v153
  %v199 = vpack.c.b16 %v157, %v154
  %v200 = vpack.c.b16 %v161, %v158
  %v201 = vpack.c.b16 %v162, %v159
  %v202 = vpack.c.b16 %v163, %v160
  %v203 = vpack.c.b16 %v167, %v164
  %v204 = vpack.c.b16 %v168, %v165
  %v205 = vpack.c.b16 %v169, %v166
  %v206 = vpack.c.b16 %v173, %v170
  %v207 = vpack.c.b16 %v174, %v171
  %v208 = vpack.c.b16 %v175, %v172
  %v209 = vpack.c.b16 %v179, %v176
  %v210 = vpack.c.b16 %v180, %v177
  %v211 = vpack.c.b16 %v181, %v178
  %v212 = vpack.c.b16 %v185, %v182
  %v213 = vpack.c.b16 %v186, %v183
  %v214 = vpack.c.b16 %v187, %v184
  %v215 = vpack.c.b16 %v191, %v188
  %v216 = vpack.c.b16 %v192, %v189
  %v217 = vpack.c.b16 %v193, %v190
  %242 = vmatprep.subr.bf16.mxu0 %v195
  %243 = vmatpush1.bf16.msra.mxu0 %v194
  %244 = vmatprep.subr.bf16.mxu0 %v198
  %245 = vmatpush1.bf16.msra.mxu0 %v197
  %246 = vmatprep.subr.bf16.mxu0 %v201
  %247 = vmatpush1.bf16.msra.mxu0 %v200
  %248 = vmatprep.subr.bf16.mxu0 %v204
  %249 = vmatpush1.bf16.msra.mxu0 %v203
  %250 = vmatprep.subr.bf16.mxu0 %v207
  %251 = vmatpush1.bf16.msra.mxu0 %v206
  %252 = vmatprep.subr.bf16.mxu0 %v210
  %253 = vmatpush1.bf16.msra.mxu0 %v209
  %254 = vmatprep.subr.bf16.mxu0 %v213
  %255 = vmatpush1.bf16.msra.mxu0 %v212
  %256 = vmatprep.subr.bf16.mxu0 %v216
  %257 = vmatpush1.bf16.msra.mxu0 %v215
  %258 = vmatprep.subr.bf16.mxu0 0
  %259 = vmatpush1.bf16.msra.mxu0 0
  %260 = vmatprep.subr.bf16.mxu0 0
  %261 = vmatpush1.bf16.msra.mxu0 0
  %262 = vmatprep.subr.bf16.mxu0 0
  %263 = vmatpush1.bf16.msra.mxu0 0
  %264 = vmatprep.subr.bf16.mxu0 0
  %265 = vmatpush1.bf16.msra.mxu0 0
  %266 = vmatprep.subr.bf16.mxu0 0
  %267 = vmatpush1.bf16.msra.mxu0 0
  %268 = vmatprep.subr.bf16.mxu0 0
  %269 = vmatpush1.bf16.msra.mxu0 0
  %270 = vmatprep.subr.bf16.mxu0 0
  %271 = vmatpush1.bf16.msra.mxu0 0
  %272 = vmatprep.subr.bf16.mxu0 0
  %273 = vmatpush1.bf16.msra.mxu0 0
  %274 = vmatprep.mubr.bf16.mxu0 0
  %275 = vmatmul.mubr.bf16.gmra.mrb[0].mxu0 %v64
  %v276 = vpop.f32.mrb[0].mxu0
  %v277 = vadd.f32 %v102, %v276
  %v278 = vpop.f32.mrb[0].mxu0
  %v279 = vadd.f32 %v106, %v278
  %v280 = vpop.f32.mrb[0].mxu0
  %v281 = vadd.f32 %v102, %v280
  %v282 = vpop.f32.mrb[0].mxu0
  %v283 = vadd.f32 %v106, %v282
  %284 = vdwg.mxu0
  %285 = vmatprep.subr.bf16.mxu0 0
  %286 = vmatpush1.bf16.msra.mxu0 %v196
  %287 = vmatprep.subr.bf16.mxu0 0
  %288 = vmatpush1.bf16.msra.mxu0 %v199
  %289 = vmatprep.subr.bf16.mxu0 0
  %290 = vmatpush1.bf16.msra.mxu0 %v202
  %291 = vmatprep.subr.bf16.mxu0 0
  %292 = vmatpush1.bf16.msra.mxu0 %v205
  %293 = vmatprep.subr.bf16.mxu0 0
  %294 = vmatpush1.bf16.msra.mxu0 %v208
  %295 = vmatprep.subr.bf16.mxu0 0
  %296 = vmatpush1.bf16.msra.mxu0 %v211
  %297 = vmatprep.subr.bf16.mxu0 0
  %298 = vmatpush1.bf16.msra.mxu0 %v214
  %299 = vmatprep.subr.bf16.mxu0 0
  %300 = vmatpush1.bf16.msra.mxu0 %v217
  %301 = vmatprep.subr.bf16.mxu0 0
  %302 = vmatpush1.bf16.msra.mxu0 0
  %303 = vmatprep.subr.bf16.mxu0 0
  %304 = vmatpush1.bf16.msra.mxu0 0
  %305 = vmatprep.subr.bf16.mxu0 0
  %306 = vmatpush1.bf16.msra.mxu0 0
  %307 = vmatprep.subr.bf16.mxu0 0
  %308 = vmatpush1.bf16.msra.mxu0 0
  %309 = vmatprep.subr.bf16.mxu0 0
  %310 = vmatpush1.bf16.msra.mxu0 0
  %311 = vmatprep.subr.bf16.mxu0 0
  %312 = vmatpush1.bf16.msra.mxu0 0
  %313 = vmatprep.subr.bf16.mxu0 0
  %314 = vmatpush1.bf16.msra.mxu0 0
  %315 = vmatprep.subr.bf16.mxu0 0
  %316 = vmatpush1.bf16.msra.mxu0 0
  %317 = vmatprep.mubr.bf16.mxu0 0
  %318 = vmatmul.mubr.bf16.gmra.mrb[0].mxu0 %v64
  %v319 = vpop.f32.mrb[0].mxu0
  %v320 = vadd.f32 %v110, %v319
  %v321 = vpop.f32.mrb[0].mxu0
  %v322 = vpop.f32.mrb[0].mxu0
  %v323 = vadd.f32 %v110, %v322
  %v324 = vpop.f32.mrb[0].mxu0
  %325 = vdwg.mxu0
  %v326 = vpack.c.bf16 %v281, %v277
  %v327 = vpack.c.bf16 %v283, %v279
  %v328 = vpack.c.bf16 %v323, %v320
  %v332 = vunpack.c.l.b16 %v326
  %v333 = vunpack.c.l.b16 %v327
  %v334 = vunpack.c.l.b16 %v328
  %v335 = vunpack.c.h.b16 %v326
  %v336 = vunpack.c.h.b16 %v327
  %v337 = vunpack.c.h.b16 %v328
  %v338 = vpack.c.b16 %v333, %v332
  %v339 = vpack.c.b16 %v334, %v334
  %v340 = vpack.c.b16 %v336, %v335
  %v341 = vpack.c.b16 %v337, %v337
  %346 = vst [vmem:[%s5] sm:$0xff] %v338
  %347 = vst [vmem:[%s5 + $0x8] sm:$0xf] %v339
  %348 = vst [vmem:[%s5 + $0xc] sm:$0xff] %v340
  %349 = vst [vmem:[%s5 + $0x14] sm:$0xf] %v341
  // Predicated region
  $region22: #{chatbot_forward.30} parent=0 // pred_check
    _
  $region23: #{chatbot_forward.30} parent=0 // pred_check_branch
    %351 = sbr.rel (0) target = $region25
  $region24: #{chatbot_forward.30} parent=0 // pred_region
    _
  $region25: #{chatbot_forward.30} parent=0 // pred_fallthru
    _
  // Predicated region
  $region26: #{chatbot_forward.30} parent=0 // pred_check
    _
  $region27: #{chatbot_forward.30} parent=0 // pred_check_branch
    %353 = sbr.rel (0) target = $region29
  $region28: #{chatbot_forward.30} parent=0 // pred_region
    _
  $region29: #{chatbot_forward.30} parent=0 // pred_fallthru
    _

// kernel: chatbot_forward.33
$region0: #{chatbot_forward.33}
  #allocation0 [shape = 'u32[]', space=smem, size = 0x4, offset = 0x4, fixed_abs, tag = 'smem constant byte address 0x4 - core index']
  #allocation1 [shape = 'u32[144,128]{1,0:T(1,128)}', space=vmem, size = 0x12000, scoped, tag = 'internal scratch']
  %s0 = inlined_call_operand.vmem [shape: f32[16,128], index: 0, kind: input, shape index: {}]
  %s1 = inlined_call_operand.vmem [shape: f32[1,128], index: 1, kind: input, shape index: {}]
  %s2 = inlined_call_operand.vmem [shape: f32[1,128], index: 2, kind: input, shape index: {}]
  %s3 = inlined_call_operand.vmem [shape: bf16[128,256], index: 3, kind: input, shape index: {}]
  %s4 = inlined_call_operand.vmem [shape: f32[1,256], index: 4, kind: input, shape index: {}]
  %s5 = inlined_call_operand.vmem [shape: bf16[16,256], index: 5, kind: output, shape index: {}]
  %s6 = sld [smem:[#allocation0]]
  $region30: #{chatbot_forward.33} parent=0
    _
  %s8 = ssub.s32 1, %s6
  %s9 = scalar_select 0, %s8, %s6
  // Predicated region
  $region2: #{chatbot_forward.33} parent=0 // pred_check
    _
  $region3: #{chatbot_forward.33} parent=0 // pred_check_branch
    %11 = sbr.rel (0) target = $region5
  $region4: #{chatbot_forward.33} parent=0 // pred_region
    _
  $region5: #{chatbot_forward.33} parent=0 // pred_fallthru
    _
  // Predicated region
  $region6: #{chatbot_forward.33} parent=0 // pred_check
    _
  $region7: #{chatbot_forward.33} parent=0 // pred_check_branch
    %13 = sbr.rel (0) target = $region9
  $region8: #{chatbot_forward.33} parent=0 // pred_region
    _
  $region9: #{chatbot_forward.33} parent=0 // pred_fallthru
    _
  // Predicated region
  $region10: #{chatbot_forward.33} parent=0 // pred_check
    _
  $region11: #{chatbot_forward.33} parent=0 // pred_check_branch
    %15 = sbr.rel (0) target = $region13
  $region12: #{chatbot_forward.33} parent=0 // pred_region
    _
  $region13: #{chatbot_forward.33} parent=0 // pred_fallthru
    _
  // Predicated region
  $region14: #{chatbot_forward.33} parent=0 // pred_check
    _
  $region15: #{chatbot_forward.33} parent=0 // pred_check_branch
    %17 = sbr.rel (0) target = $region17
  $region16: #{chatbot_forward.33} parent=0 // pred_region
    _
  $region17: #{chatbot_forward.33} parent=0 // pred_fallthru
    _
  // Predicated region
  $region18: #{chatbot_forward.33} parent=0 // pred_check
    _
  $region19: #{chatbot_forward.33} parent=0 // pred_check_branch
    %19 = sbr.rel (0) target = $region21
  $region20: #{chatbot_forward.33} parent=0 // pred_region
    _
  $region21: #{chatbot_forward.33} parent=0 // pred_fallthru
    _
  %v21 = vld [vmem:[%s0] sm:$0xff]
  %v22 = vld [vmem:[%s0 + $0x8] sm:$0xff]
  %v23 = vld [vmem:[%s1] sm:$0x1]
  %v24 = vld [vmem:[%s2] sm:$0x1]
  %25 = vadd.xlane.f32.xlu0 %v21
  %v26 = vpop.xlane.xlu0 %25
  %27 = vadd.xlane.f32.xlu0 %v22
  %v28 = vpop.xlane.xlu0 %27
  %v29 = vrcp.pop 128.0
  %v30 = vmul.f32 %v26, %v29
  %v31 = vmul.f32 %v28, %v29
  %v32 = vsub.f32 %v21, %v30
  %v33 = vsub.f32 %v22, %v31
  %v34 = vmul.f32 %v32, %v32
  %v35 = vmul.f32 %v33, %v33
  %36 = vadd.xlane.f32.xlu0 %v34
  %v37 = vpop.xlane.xlu0 %36
  %38 = vadd.xlane.f32.xlu0 %v35
  %v39 = vpop.xlane.xlu0 %38
  %v40 = vmul.f32 %v37, %v29
  %v41 = vmul.f32 %v39, %v29
  %v42 = vadd.f32 %v40, 1e-08
  %v43 = vadd.f32 %v41, 1e-08
  %v44 = vrsqrt.pop %v42
  %v45 = vrsqrt.pop %v43
  %v46 = vmul.f32 %v32, %v44
  %v47 = vmul.f32 %v33, %v45
  %v49 = vlaneseq
  %v50 = vshrl.u32 %v49, 7
  %v51 = vsub.s32 0, %v50
  %v52 = vrot.slane %v23, %v51
  %v54 = vmul.f32 %v46, %v52
  %v55 = vmul.f32 %v47, %v52
  %v57 = vlaneseq
  %v58 = vshrl.u32 %v57, 7
  %v59 = vsub.s32 0, %v58
  %v60 = vrot.slane %v24, %v59
  %v62 = vadd.f32 %v54, %v60
  %v63 = vadd.f32 %v55, %v60
  %v64 = vpack.c.bf16 %v63, %v62
  %v65 = vld [vmem:[%s3] sm:$0xff]
  %v66 = vld [vmem:[%s3 + $0x8] sm:$0xff]
  %v67 = vld [vmem:[%s3 + $0x10] sm:$0xff]
  %v68 = vld [vmem:[%s3 + $0x18] sm:$0xff]
  %v69 = vld [vmem:[%s3 + $0x20] sm:$0xff]
  %v70 = vld [vmem:[%s3 + $0x28] sm:$0xff]
  %v71 = vld [vmem:[%s3 + $0x30] sm:$0xff]
  %v72 = vld [vmem:[%s3 + $0x38] sm:$0xff]
  %v73 = vld [vmem:[%s3 + $0x40] sm:$0xff]
  %v74 = vld [vmem:[%s3 + $0x48] sm:$0xff]
  %v75 = vld [vmem:[%s3 + $0x50] sm:$0xff]
  %v76 = vld [vmem:[%s3 + $0x58] sm:$0xff]
  %v77 = vld [vmem:[%s3 + $0x60] sm:$0xff]
  %v78 = vld [vmem:[%s3 + $0x68] sm:$0xff]
  %v79 = vld [vmem:[%s3 + $0x70] sm:$0xff]
  %v80 = vld [vmem:[%s3 + $0x78] sm:$0xff]
  %v81 = vld [vmem:[%s4] sm:$0x3]
  %v83 = vlaneseq
  %v84 = vshrl.u32 %v83, 7
  %v85 = vsub.s32 0, %v84
  %v86 = vrot.slane %v81, %v85
  %v87 = vlaneseq
  %v88 = vshrl.u32 %v87, 7
  %v89 = vsub.s32 1, %v88
  %v90 = vrot.slane %v81, %v89
  %v109 = vunpack.c.l.b16 %v65
  %v110 = vunpack.c.h.b16 %v65
  %v111 = vunpack.c.l.b16 %v66
  %v112 = vunpack.c.h.b16 %v66
  %v113 = vunpack.c.l.b16 %v67
  %v114 = vunpack.c.h.b16 %v67
  %v115 = vunpack.c.l.b16 %v68
  %v116 = vunpack.c.h.b16 %v68
  %v117 = vunpack.c.l.b16 %v69
  %v118 = vunpack.c.h.b16 %v69
  %v119 = vunpack.c.l.b16 %v70
  %v120 = vunpack.c.h.b16 %v70
  %v121 = vunpack.c.l.b16 %v71
  %v122 = vunpack.c.h.b16 %v71
  %v123 = vunpack.c.l.b16 %v72
  %v124 = vunpack.c.h.b16 %v72
  %v125 = vunpack.c.l.b16 %v73
  %v126 = vunpack.c.h.b16 %v73
  %v127 = vunpack.c.l.b16 %v74
  %v128 = vunpack.c.h.b16 %v74
  %v129 = vunpack.c.l.b16 %v75
  %v130 = vunpack.c.h.b16 %v75
  %v131 = vunpack.c.l.b16 %v76
  %v132 = vunpack.c.h.b16 %v76
  %v133 = vunpack.c.l.b16 %v77
  %v134 = vunpack.c.h.b16 %v77
  %v135 = vunpack.c.l.b16 %v78
  %v136 = vunpack.c.h.b16 %v78
  %v137 = vunpack.c.l.b16 %v79
  %v138 = vunpack.c.h.b16 %v79
  %v139 = vunpack.c.l.b16 %v80
  %v140 = vunpack.c.h.b16 %v80
  %v141 = vpack.c.b16 %v111, %v109
  %v142 = vpack.c.b16 %v112, %v110
  %v143 = vpack.c.b16 %v115, %v113
  %v144 = vpack.c.b16 %v116, %v114
  %v145 = vpack.c.b16 %v119, %v117
  %v146 = vpack.c.b16 %v120, %v118
  %v147 = vpack.c.b16 %v123, %v121
  %v148 = vpack.c.b16 %v124, %v122
  %v149 = vpack.c.b16 %v127, %v125
  %v150 = vpack.c.b16 %v128, %v126
  %v151 = vpack.c.b16 %v131, %v129
  %v152 = vpack.c.b16 %v132, %v130
  %v153 = vpack.c.b16 %v135, %v133
  %v154 = vpack.c.b16 %v136, %v134
  %v155 = vpack.c.b16 %v139, %v137
  %v156 = vpack.c.b16 %v140, %v138
  %173 = vmatprep.subr.bf16.mxu0 %v142
  %174 = vmatpush1.bf16.msra.mxu0 %v141
  %175 = vmatprep.subr.bf16.mxu0 %v144
  %176 = vmatpush1.bf16.msra.mxu0 %v143
  %177 = vmatprep.subr.bf16.mxu0 %v146
  %178 = vmatpush1.bf16.msra.mxu0 %v145
  %179 = vmatprep.subr.bf16.mxu0 %v148
  %180 = vmatpush1.bf16.msra.mxu0 %v147
  %181 = vmatprep.subr.bf16.mxu0 %v150
  %182 = vmatpush1.bf16.msra.mxu0 %v149
  %183 = vmatprep.subr.bf16.mxu0 %v152
  %184 = vmatpush1.bf16.msra.mxu0 %v151
  %185 = vmatprep.subr.bf16.mxu0 %v154
  %186 = vmatpush1.bf16.msra.mxu0 %v153
  %187 = vmatprep.subr.bf16.mxu0 %v156
  %188 = vmatpush1.bf16.msra.mxu0 %v155
  %189 = vmatprep.subr.bf16.mxu0 0
  %190 = vmatpush1.bf16.msra.mxu0 0
  %191 = vmatprep.subr.bf16.mxu0 0
  %192 = vmatpush1.bf16.msra.mxu0 0
  %193 = vmatprep.subr.bf16.mxu0 0
  %194 = vmatpush1.bf16.msra.mxu0 0
  %195 = vmatprep.subr.bf16.mxu0 0
  %196 = vmatpush1.bf16.msra.mxu0 0
  %197 = vmatprep.subr.bf16.mxu0 0
  %198 = vmatpush1.bf16.msra.mxu0 0
  %199 = vmatprep.subr.bf16.mxu0 0
  %200 = vmatpush1.bf16.msra.mxu0 0
  %201 = vmatprep.subr.bf16.mxu0 0
  %202 = vmatpush1.bf16.msra.mxu0 0
  %203 = vmatprep.subr.bf16.mxu0 0
  %204 = vmatpush1.bf16.msra.mxu0 0
  %205 = vmatprep.mubr.bf16.mxu0 0
  %206 = vmatmul.mubr.bf16.gmra.mrb[0].mxu0 %v64
  %v207 = vpop.f32.mrb[0].mxu0
  %v208 = vadd.f32 %v86, %v207
  %v209 = vpop.f32.mrb[0].mxu0
  %v210 = vadd.f32 %v90, %v209
  %v211 = vpop.f32.mrb[0].mxu0
  %v212 = vadd.f32 %v86, %v211
  %v213 = vpop.f32.mrb[0].mxu0
  %v214 = vadd.f32 %v90, %v213
  %215 = vdwg.mxu0
  %v216 = vmax.f32 %v208, 0.0
  %v217 = vmax.f32 %v210, 0.0
  %v218 = vmax.f32 %v212, 0.0
  %v219 = vmax.f32 %v214, 0.0
  %v220 = vpack.c.bf16 %v218, %v216
  %v221 = vpack.c.bf16 %v219, %v217
  %v224 = vunpack.c.l.b16 %v220
  %v225 = vunpack.c.l.b16 %v221
  %v226 = vunpack.c.h.b16 %v220
  %v227 = vunpack.c.h.b16 %v221
  %v228 = vpack.c.b16 %v225, %v224
  %v229 = vpack.c.b16 %v227, %v226
  %232 = vst [vmem:[%s5] sm:$0xff] %v228
  %233 = vst [vmem:[%s5 + $0x8] sm:$0xff] %v229
  // Predicated region
  $region22: #{chatbot_forward.33} parent=0 // pred_check
    _
  $region23: #{chatbot_forward.33} parent=0 // pred_check_branch
    %235 = sbr.rel (0) target = $region25
  $region24: #{chatbot_forward.33} parent=0 // pred_region
    _
  $region25: #{chatbot_forward.33} parent=0 // pred_fallthru
    _
  // Predicated region
  $region26: #{chatbot_forward.33} parent=0 // pred_check
    _
  $region27: #{chatbot_forward.33} parent=0 // pred_check_branch
    %237 = sbr.rel (0) target = $region29
  $region28: #{chatbot_forward.33} parent=0 // pred_region
    _
  $region29: #{chatbot_forward.33} parent=0 // pred_fallthru
    _

// kernel: chatbot_forward.31
$region0: #{chatbot_forward.31}
  #allocation0 [shape = 'u32[]', space=smem, size = 0x4, offset = 0x4, fixed_abs, tag = 'smem constant byte address 0x4 - core index']
  #allocation1 [shape = 'u32[144,128]{1,0:T(1,128)}', space=vmem, size = 0x12000, scoped, tag = 'internal scratch']
  %s0 = inlined_call_operand.vmem [shape: bf16[2,8,384], index: 0, kind: input, shape index: {}, may-alias: {0,1}]
  %s1 = inlined_call_operand.vmem [shape: bf16[2,8,384], index: 1, kind: input, shape index: {}, may-alias: {0,1}]
  %s2 = inlined_call_operand.vmem [shape: bf16[2,8,128], index: 2, kind: output, shape index: {}]
  %s3 = sld [smem:[#allocation0]]
  $region41: #{chatbot_forward.31} parent=0
    _
  %s5 = ssub.s32 1, %s3
  %s6 = scalar_select 0, %s5, %s3
  loop: start=0, step=1, limit=4
  $region2: #{chatbot_forward.31} parent=0 // loop_pre_header
    _
  $region3: #{chatbot_forward.31} parent=0 // loop_header
    %s8 = sphi 0, %s12
    %p9 = scmp.ge.s32.totalorder %s8, 4
    %s15 = sphi 0, %s27
    %s16 = sphi 0, %s23
    %s17 = sphi 0, %s15
    %s18 = sphi 0, %s16
    %s19 = sphi 0, %s17
    %s20 = sphi 0, %s18
    %s32 = sphi 0, %s34
    %s35 = sphi 0, %s32
    %s36 = sphi 0, %s35
    %s52 = sphi 0, %s36
    %s58 = sphi 0, %s60
    %s61 = sphi 0, %s58
    %s62 = sphi 0, %s61
    %s78 = sphi 0, %s62
    %s86 = sphi 0, %s88
    %s89 = sphi 0, %s86
    %s90 = sphi 0, %s89
    %s106 = sphi 0, %s90
  $region4: #{chatbot_forward.31} parent=0 // loop_header_branch
    %11 = sbr.rel (%p9) target = $region8
  $region5: #{chatbot_forward.31} parent=0 // loop_body
    %s13 = ssub.s32 %s8, 1
    %s14 = ssub.s32 %s8, 2
    %s21 = sadd.s32 1, %s16
    %p22 = scmp.ge.s32.totalorder %s21, 1
    %s23 = scalar_select %p22, 0, %s21
    %s24 = sadd.s32 1, %s15
    %s25 = scalar_select %p22, %s24, %s15
    %p26 = scmp.ge.s32.totalorder %s25, 2
    %s27 = scalar_select %p26, 0, %s25
    %s28 = ssub.s32 %s15, %s27
    %s29 = ssub.s32 %s16, %s23
    %s30 = sor.u32 %s28, %s29
    %p31 = scmp.eq.s32.totalorder %s30, 0
    %s33 = sadd.s32 %s32, 1
    %s34 = scalar_select %p31, %s32, %s33
    %p37 = pneg %p31
    %p38 = scmp.eq.s32.totalorder %s8, 1
    %p39 = por %p37, %p38
    %p40 = scmp.ne.s32.totalorder %s32, %s35
    %p41 = scmp.eq.s32.totalorder %s8, 0
    %p42 = por %p40, %p41
    %p43 = scmp.ne.s32.totalorder %s32, %s35
    %p44 = scmp.eq.s32.totalorder %s13, 1
    %p45 = por %p43, %p44
    %p46 = scmp.ne.s32.totalorder %s35, %s36
    %p47 = scmp.eq.s32.totalorder %s13, 0
    %p48 = por %p46, %p47
    %p49 = scmp.ne.s32.totalorder %s35, %s36
    %p50 = scmp.eq.s32.totalorder %s14, 1
    %p51 = por %p49, %p50
    %p53 = scmp.ne.s32.totalorder %s36, %s52
    %p54 = scmp.eq.s32.totalorder %s14, 0
    %p55 = por %p53, %p54
    %s56 = ssub.s32 %s15, %s27
    %p57 = scmp.eq.s32.totalorder %s56, 0
    %s59 = sadd.s32 %s58, 1
    %s60 = scalar_select %p57, %s58, %s59
    %p63 = pneg %p57
    %p64 = scmp.eq.s32.totalorder %s8, 1
    %p65 = por %p63, %p64
    %p66 = scmp.ne.s32.totalorder %s58, %s61
    %p67 = scmp.eq.s32.totalorder %s8, 0
    %p68 = por %p66, %p67
    %p69 = scmp.ne.s32.totalorder %s58, %s61
    %p70 = scmp.eq.s32.totalorder %s13, 1
    %p71 = por %p69, %p70
    %p72 = scmp.ne.s32.totalorder %s61, %s62
    %p73 = scmp.eq.s32.totalorder %s13, 0
    %p74 = por %p72, %p73
    %p75 = scmp.ne.s32.totalorder %s61, %s62
    %p76 = scmp.eq.s32.totalorder %s14, 1
    %p77 = por %p75, %p76
    %p79 = scmp.ne.s32.totalorder %s62, %s78
    %p80 = scmp.eq.s32.totalorder %s14, 0
    %p81 = por %p79, %p80
    %s82 = ssub.s32 %s15, %s27
    %s83 = ssub.s32 %s16, %s23
    %s84 = sor.u32 %s82, %s83
    %p85 = scmp.eq.s32.totalorder %s84, 0
    %s87 = sadd.s32 %s86, 1
    %s88 = scalar_select %p85, %s86, %s87
    %p91 = pneg %p85
    %p92 = scmp.eq.s32.totalorder %s8, 1
    %p93 = por %p91, %p92
    %p94 = scmp.ne.s32.totalorder %s86, %s89
    %p95 = scmp.eq.s32.totalorder %s8, 0
    %p96 = por %p94, %p95
    %p97 = scmp.ne.s32.totalorder %s86, %s89
    %p98 = scmp.eq.s32.totalorder %s13, 1
    %p99 = por %p97, %p98
    %p100 = scmp.ne.s32.totalorder %s89, %s90
    %p101 = scmp.eq.s32.totalorder %s13, 0
    %p102 = por %p100, %p101
    %p103 = scmp.ne.s32.totalorder %s89, %s90
    %p104 = scmp.eq.s32.totalorder %s14, 1
    %p105 = por %p103, %p104
    %p107 = scmp.ne.s32.totalorder %s90, %s106
    %p108 = scmp.eq.s32.totalorder %s14, 0
    %p109 = por %p107, %p108
    %p110 = scmp.le.s32.totalorder 1, %s8
    %p111 = scmp.lt.s32.totalorder %s8, 3
    %p112 = pnand %p110, %p111
    %p113 = pneg %p112
    // Predicated region
    $region9: #{chatbot_forward.31} parent=5 // pred_check
      _
    $region10: #{chatbot_forward.31} parent=5 // pred_check_branch
      %115 = sbr.rel (%p112) target = $region12
    $region11: #{chatbot_forward.31} parent=5 // pred_region
      %s116 = ssub.s32 %s8, 1
    $region12: #{chatbot_forward.31} parent=5 // pred_fallthru
      _
    %p117 = scmp.lt.s32.totalorder %s8, 2
    // Predicated region
    $region13: #{chatbot_forward.31} parent=5 // pred_check
      %p118 = pneg %p117
    $region14: #{chatbot_forward.31} parent=5 // pred_check_branch
      %120 = sbr.rel (%p118) target = $region16
    $region15: #{chatbot_forward.31} parent=5 // pred_region
      // Predicated region
      $region17: #{chatbot_forward.31} parent=15 // pred_check
        %p121 = pneg %p42
      $region18: #{chatbot_forward.31} parent=15 // pred_check_branch
        %123 = sbr.rel (%p121) target = $region20
      $region19: #{chatbot_forward.31} parent=15 // pred_region
        %p124 = scmp.lt.s32.totalorder %s15, 1
        %s125 = scalar_select %p124, %s15, 1
        %p126 = scmp.lt.s32.totalorder %s16, 0
        %s127 = scalar_select %p126, %s16, 0
        %s128 = smul.addr %s127, 3
        %s129 = smul.addr %s125, 3
        %s130 = sadd.s32 %s128, %s129
        %s131 = smul.addr %s130, 4
        %s132 = scalar_lea.vmem %s0, %s131
      $region20: #{chatbot_forward.31} parent=15 // pred_fallthru
        _
      // Predicated region
      $region21: #{chatbot_forward.31} parent=15 // pred_check
        %p133 = pneg %p68
      $region22: #{chatbot_forward.31} parent=15 // pred_check_branch
        %135 = sbr.rel (%p133) target = $region24
      $region23: #{chatbot_forward.31} parent=15 // pred_region
        %p136 = scmp.lt.s32.totalorder %s15, 1
        %s137 = scalar_select %p136, %s15, 1
        %s138 = smul.addr %s137, 3
        %s139 = smul.addr %s138, 4
        %s140 = scalar_lea.vmem %s1, %s139
      $region24: #{chatbot_forward.31} parent=15 // pred_fallthru
        _
    $region16: #{chatbot_forward.31} parent=5 // pred_fallthru
      _
    %p141 = scmp.le.s32.totalorder 1, %s8
    %p142 = scmp.lt.s32.totalorder %s8, 3
    %p143 = pnand %p141, %p142
    %p144 = pneg %p143
    // Predicated region
    $region25: #{chatbot_forward.31} parent=5 // pred_check
      _
    $region26: #{chatbot_forward.31} parent=5 // pred_check_branch
      %146 = sbr.rel (%p143) target = $region28
    $region27: #{chatbot_forward.31} parent=5 // pred_region
      %s147 = ssub.s32 %s8, 1
      %p148 = scmp.lt.s32.totalorder %s17, 1
      %s149 = scalar_select %p148, %s17, 1
      %p150 = scmp.lt.s32.totalorder %s18, 0
      %s151 = scalar_select %p150, %s18, 0
      %s152 = smul.addr %s151, 3
      %s153 = smul.addr %s149, 3
      %s154 = sadd.s32 %s152, %s153
      %s155 = smul.addr %s154, 4
      %s156 = scalar_lea.vmem %s0, %s155
      %p157 = pneg %p48
      %p158 = pneg %p45
      %p159 = scmp.lt.s32.totalorder %s17, 1
      %s160 = scalar_select %p159, %s17, 1
      %s161 = smul.addr %s160, 3
      %s162 = smul.addr %s161, 4
      %s163 = scalar_lea.vmem %s1, %s162
      %p164 = pneg %p74
      %p165 = pneg %p71
      %p166 = pneg %p102
      %p167 = pneg %p99
      %p168 = scmp.lt.s32.totalorder %s17, 1
      %s169 = scalar_select %p168, %s17, 1
      %p170 = scmp.lt.s32.totalorder %s18, 0
      %s171 = scalar_select %p170, %s18, 0
      %s172 = sadd.s32 %s171, %s169
      %s173 = smul.addr %s172, 4
      %s174 = scalar_lea.vmem %s2, %s173
      %p175 = scmp.lt.s32.totalorder %s17, 1
      %s176 = scalar_select %p175, %s17, 1
      %p177 = scmp.lt.s32.totalorder %s18, 0
      %s178 = scalar_select %p177, %s18, 0
      %s179 = smul.addr %s178, 3
      %s180 = smul.addr %s176, 3
      %s181 = sadd.s32 %s179, %s180
      %s182 = smul.addr %s181, 4
      %s183 = scalar_lea.vmem %s0, %s182
      %p184 = scmp.lt.s32.totalorder %s17, 1
      %s185 = scalar_select %p184, %s17, 1
      %s186 = smul.addr %s185, 3
      %s187 = smul.addr %s186, 4
      %s188 = scalar_lea.vmem %s1, %s187
      %p189 = scmp.lt.s32.totalorder %s17, 1
      %s190 = scalar_select %p189, %s17, 1
      %p191 = scmp.lt.s32.totalorder %s18, 0
      %s192 = scalar_select %p191, %s18, 0
      %s193 = sadd.s32 %s192, %s190
      %s194 = smul.addr %s193, 4
      %s195 = scalar_lea.vmem %s2, %s194
      %v197 = vld [vmem:[%s183] sm:$0xf]
      %v198 = vld [vmem:[%s188 + $0x4] sm:$0xf]
      %v199 = vld [vmem:[%s188 + $0x8] sm:$0xf]
      %201 = vrot.lane.b32.xlu0 %v197, 112
      %v202 = vpop.permute.xlu0 %201
      %204 = vrot.lane.b32.xlu0 %v197, 96
      %v205 = vpop.permute.xlu0 %204
      %207 = vrot.lane.b32.xlu0 %v197, 80
      %v208 = vpop.permute.xlu0 %207
      %210 = vrot.lane.b32.xlu0 %v197, 64
      %v211 = vpop.permute.xlu0 %210
      %213 = vrot.lane.b32.xlu0 %v197, 48
      %v214 = vpop.permute.xlu0 %213
      %216 = vrot.lane.b32.xlu0 %v197, 32
      %v217 = vpop.permute.xlu0 %216
      %219 = vrot.lane.b32.xlu0 %v197, 16
      %v220 = vpop.permute.xlu0 %219
      %v222 = vcombine.low %v197, %v211
      %v224 = vunpack.c.l.s4 1983009808
      %v225 = vunpack.c.0.s8 %v224
      %v226 = vlaneseq
      %v227 = vshrl.u32 %v226, 7
      %v228 = vsub.s32 %v225, %v227
      %v229 = vrot.slane %v222, %v228
      %v230 = vcombine.low %v205, %v217
      %v232 = vunpack.c.l.s4 1983009808
      %v233 = vunpack.c.0.s8 %v232
      %v234 = vlaneseq
      %v235 = vshrl.u32 %v234, 7
      %v236 = vsub.s32 %v233, %v235
      %v237 = vrot.slane %v230, %v236
      %v238 = vcombine.low %v229, %v237
      %v239 = vcombine.high %v229, %v237
      %v241 = vunpack.c.l.s4 1934713408
      %v242 = vunpack.c.0.s8 %v241
      %v243 = vlaneseq
      %v244 = vshrl.u32 %v243, 7
      %v245 = vsub.s32 %v242, %v244
      %v246 = vrot.slane %v238, %v245
      %v248 = vunpack.c.l.s4 1934713408
      %v249 = vunpack.c.0.s8 %v248
      %v250 = vlaneseq
      %v251 = vshrl.u32 %v250, 7
      %v252 = vsub.s32 %v249, %v251
      %v253 = vrot.slane %v239, %v252
      %v254 = vcombine.high %v246, 0
      %v255 = vcombine.high %v253, 0
      %v256 = vcombine.low %v202, %v214
      %v258 = vunpack.c.l.s4 1983009808
      %v259 = vunpack.c.0.s8 %v258
      %v260 = vlaneseq
      %v261 = vshrl.u32 %v260, 7
      %v262 = vsub.s32 %v259, %v261
      %v263 = vrot.slane %v256, %v262
      %v264 = vcombine.low %v208, %v220
      %v266 = vunpack.c.l.s4 1983009808
      %v267 = vunpack.c.0.s8 %v266
      %v268 = vlaneseq
      %v269 = vshrl.u32 %v268, 7
      %v270 = vsub.s32 %v267, %v269
      %v271 = vrot.slane %v264, %v270
      %v272 = vcombine.low %v263, %v271
      %v273 = vcombine.high %v263, %v271
      %v275 = vunpack.c.l.s4 1934713408
      %v276 = vunpack.c.0.s8 %v275
      %v277 = vlaneseq
      %v278 = vshrl.u32 %v277, 7
      %v279 = vsub.s32 %v276, %v278
      %v280 = vrot.slane %v272, %v279
      %v282 = vunpack.c.l.s4 1934713408
      %v283 = vunpack.c.0.s8 %v282
      %v284 = vlaneseq
      %v285 = vshrl.u32 %v284, 7
      %v286 = vsub.s32 %v283, %v285
      %v287 = vrot.slane %v273, %v286
      %v288 = vcombine.high %v280, 0
      %v289 = vcombine.high %v287, 0
      %v292 = vpack.i.b16 %v280, %v246
      %v294 = vshrl.u32 %v246, 16
      %v295 = vshrl.u32 %v280, 16
      %v296 = vpack.i.b16 %v295, %v294
      %v300 = vpack.i.b16 %v288, %v254
      %v302 = vshrl.u32 %v254, 16
      %v303 = vshrl.u32 %v288, 16
      %v304 = vpack.i.b16 %v303, %v302
      %v308 = vpack.i.b16 %v287, %v253
      %v310 = vshrl.u32 %v253, 16
      %v311 = vshrl.u32 %v287, 16
      %v312 = vpack.i.b16 %v311, %v310
      %v316 = vpack.i.b16 %v289, %v255
      %v318 = vshrl.u32 %v255, 16
      %v319 = vshrl.u32 %v289, 16
      %v320 = vpack.i.b16 %v319, %v318
      %v322 = vcombine.low %v292, %v308
      %v324 = vunpack.c.l.s4 1983009808
      %v325 = vunpack.c.0.s8 %v324
      %v326 = vlaneseq
      %v327 = vshrl.u32 %v326, 7
      %v328 = vsub.s32 %v325, %v327
      %v329 = vrot.slane %v322, %v328
      %v330 = vcombine.low %v300, %v316
      %v332 = vunpack.c.l.s4 1983009808
      %v333 = vunpack.c.0.s8 %v332
      %v334 = vlaneseq
      %v335 = vshrl.u32 %v334, 7
      %v336 = vsub.s32 %v333, %v335
      %v337 = vrot.slane %v330, %v336
      %v338 = vcombine.low %v329, %v337
      %v339 = vcombine.high %v329, %v337
      %v341 = vunpack.c.l.s4 1934713408
      %v342 = vunpack.c.0.s8 %v341
      %v343 = vlaneseq
      %v344 = vshrl.u32 %v343, 7
      %v345 = vsub.s32 %v342, %v344
      %v346 = vrot.slane %v338, %v345
      %v348 = vunpack.c.l.s4 1934713408
      %v349 = vunpack.c.0.s8 %v348
      %v350 = vlaneseq
      %v351 = vshrl.u32 %v350, 7
      %v352 = vsub.s32 %v349, %v351
      %v353 = vrot.slane %v339, %v352
      %v354 = vcombine.high %v346, 0
      %v355 = vcombine.high %v353, 0
      %v356 = vcombine.low %v296, %v312
      %v358 = vunpack.c.l.s4 1983009808
      %v359 = vunpack.c.0.s8 %v358
      %v360 = vlaneseq
      %v361 = vshrl.u32 %v360, 7
      %v362 = vsub.s32 %v359, %v361
      %v363 = vrot.slane %v356, %v362
      %v364 = vcombine.low %v304, %v320
      %v366 = vunpack.c.l.s4 1983009808
      %v367 = vunpack.c.0.s8 %v366
      %v368 = vlaneseq
      %v369 = vshrl.u32 %v368, 7
      %v370 = vsub.s32 %v367, %v369
      %v371 = vrot.slane %v364, %v370
      %v372 = vcombine.low %v363, %v371
      %v373 = vcombine.high %v363, %v371
      %v375 = vunpack.c.l.s4 1934713408
      %v376 = vunpack.c.0.s8 %v375
      %v377 = vlaneseq
      %v378 = vshrl.u32 %v377, 7
      %v379 = vsub.s32 %v376, %v378
      %v380 = vrot.slane %v372, %v379
      %v382 = vunpack.c.l.s4 1934713408
      %v383 = vunpack.c.0.s8 %v382
      %v384 = vlaneseq
      %v385 = vshrl.u32 %v384, 7
      %v386 = vsub.s32 %v383, %v385
      %v387 = vrot.slane %v373, %v386
      %v388 = vcombine.high %v380, 0
      %v389 = vcombine.high %v387, 0
      %v392 = vpack.i.b16 %v380, %v346
      %v393 = vshrl.u32 %v346, 16
      %v394 = vshrl.u32 %v380, 16
      %v395 = vpack.i.b16 %v394, %v393
      %v398 = vpack.i.b16 %v388, %v354
      %v399 = vshrl.u32 %v354, 16
      %v400 = vshrl.u32 %v388, 16
      %v401 = vpack.i.b16 %v400, %v399
      %v404 = vpack.i.b16 %v387, %v353
      %v405 = vshrl.u32 %v353, 16
      %v406 = vshrl.u32 %v387, 16
      %v407 = vpack.i.b16 %v406, %v405
      %v410 = vpack.i.b16 %v389, %v355
      %v411 = vshrl.u32 %v355, 16
      %v412 = vshrl.u32 %v389, 16
      %v413 = vpack.i.b16 %v412, %v411
      %415 = vrot.lane.b32.xlu0 %v198, 112
      %v416 = vpop.permute.xlu0 %415
      %418 = vrot.lane.b32.xlu0 %v198, 96
      %v419 = vpop.permute.xlu0 %418
      %421 = vrot.lane.b32.xlu0 %v198, 80
      %v422 = vpop.permute.xlu0 %421
      %424 = vrot.lane.b32.xlu0 %v198, 64
      %v425 = vpop.permute.xlu0 %424
      %427 = vrot.lane.b32.xlu0 %v198, 48
      %v428 = vpop.permute.xlu0 %427
      %430 = vrot.lane.b32.xlu0 %v198, 32
      %v431 = vpop.permute.xlu0 %430
      %433 = vrot.lane.b32.xlu0 %v198, 16
      %v434 = vpop.permute.xlu0 %433
      %v436 = vcombine.low %v198, %v425
      %v438 = vunpack.c.l.s4 1983009808
      %v439 = vunpack.c.0.s8 %v438
      %v440 = vlaneseq
      %v441 = vshrl.u32 %v440, 7
      %v442 = vsub.s32 %v439, %v441
      %v443 = vrot.slane %v436, %v442
      %v444 = vcombine.low %v419, %v431
      %v446 = vunpack.c.l.s4 1983009808
      %v447 = vunpack.c.0.s8 %v446
      %v448 = vlaneseq
      %v449 = vshrl.u32 %v448, 7
      %v450 = vsub.s32 %v447, %v449
      %v451 = vrot.slane %v444, %v450
      %v452 = vcombine.low %v443, %v451
      %v453 = vcombine.high %v443, %v451
      %v455 = vunpack.c.l.s4 1934713408
      %v456 = vunpack.c.0.s8 %v455
      %v457 = vlaneseq
      %v458 = vshrl.u32 %v457, 7
      %v459 = vsub.s32 %v456, %v458
      %v460 = vrot.slane %v452, %v459
      %v462 = vunpack.c.l.s4 1934713408
      %v463 = vunpack.c.0.s8 %v462
      %v464 = vlaneseq
      %v465 = vshrl.u32 %v464, 7
      %v466 = vsub.s32 %v463, %v465
      %v467 = vrot.slane %v453, %v466
      %v468 = vcombine.high %v460, 0
      %v469 = vcombine.high %v467, 0
      %v470 = vcombine.low %v416, %v428
      %v472 = vunpack.c.l.s4 1983009808
      %v473 = vunpack.c.0.s8 %v472
      %v474 = vlaneseq
      %v475 = vshrl.u32 %v474, 7
      %v476 = vsub.s32 %v473, %v475
      %v477 = vrot.slane %v470, %v476
      %v478 = vcombine.low %v422, %v434
      %v480 = vunpack.c.l.s4 1983009808
      %v481 = vunpack.c.0.s8 %v480
      %v482 = vlaneseq
      %v483 = vshrl.u32 %v482, 7
      %v484 = vsub.s32 %v481, %v483
      %v485 = vrot.slane %v478, %v484
      %v486 = vcombine.low %v477, %v485
      %v487 = vcombine.high %v477, %v485
      %v489 = vunpack.c.l.s4 1934713408
      %v490 = vunpack.c.0.s8 %v489
      %v491 = vlaneseq
      %v492 = vshrl.u32 %v491, 7
      %v493 = vsub.s32 %v490, %v492
      %v494 = vrot.slane %v486, %v493
      %v496 = vunpack.c.l.s4 1934713408
      %v497 = vunpack.c.0.s8 %v496
      %v498 = vlaneseq
      %v499 = vshrl.u32 %v498, 7
      %v500 = vsub.s32 %v497, %v499
      %v501 = vrot.slane %v487, %v500
      %v502 = vcombine.high %v494, 0
      %v503 = vcombine.high %v501, 0
      %v506 = vpack.i.b16 %v494, %v460
      %v508 = vshrl.u32 %v460, 16
      %v509 = vshrl.u32 %v494, 16
      %v510 = vpack.i.b16 %v509, %v508
      %v514 = vpack.i.b16 %v502, %v468
      %v516 = vshrl.u32 %v468, 16
      %v517 = vshrl.u32 %v502, 16
      %v518 = vpack.i.b16 %v517, %v516
      %v522 = vpack.i.b16 %v501, %v467
      %v524 = vshrl.u32 %v467, 16
      %v525 = vshrl.u32 %v501, 16
      %v526 = vpack.i.b16 %v525, %v524
      %v530 = vpack.i.b16 %v503, %v469
      %v532 = vshrl.u32 %v469, 16
      %v533 = vshrl.u32 %v503, 16
      %v534 = vpack.i.b16 %v533, %v532
      %v536 = vcombine.low %v506, %v522
      %v538 = vunpack.c.l.s4 1983009808
      %v539 = vunpack.c.0.s8 %v538
      %v540 = vlaneseq
      %v541 = vshrl.u32 %v540, 7
      %v542 = vsub.s32 %v539, %v541
      %v543 = vrot.slane %v536, %v542
      %v544 = vcombine.low %v514, %v530
      %v546 = vunpack.c.l.s4 1983009808
      %v547 = vunpack.c.0.s8 %v546
      %v548 = vlaneseq
      %v549 = vshrl.u32 %v548, 7
      %v550 = vsub.s32 %v547, %v549
      %v551 = vrot.slane %v544, %v550
      %v552 = vcombine.low %v543, %v551
      %v553 = vcombine.high %v543, %v551
      %v555 = vunpack.c.l.s4 1934713408
      %v556 = vunpack.c.0.s8 %v555
      %v557 = vlaneseq
      %v558 = vshrl.u32 %v557, 7
      %v559 = vsub.s32 %v556, %v558
      %v560 = vrot.slane %v552, %v559
      %v562 = vunpack.c.l.s4 1934713408
      %v563 = vunpack.c.0.s8 %v562
      %v564 = vlaneseq
      %v565 = vshrl.u32 %v564, 7
      %v566 = vsub.s32 %v563, %v565
      %v567 = vrot.slane %v553, %v566
      %v568 = vcombine.high %v560, 0
      %v569 = vcombine.high %v567, 0
      %v570 = vcombine.low %v510, %v526
      %v572 = vunpack.c.l.s4 1983009808
      %v573 = vunpack.c.0.s8 %v572
      %v574 = vlaneseq
      %v575 = vshrl.u32 %v574, 7
      %v576 = vsub.s32 %v573, %v575
      %v577 = vrot.slane %v570, %v576
      %v578 = vcombine.low %v518, %v534
      %v580 = vunpack.c.l.s4 1983009808
      %v581 = vunpack.c.0.s8 %v580
      %v582 = vlaneseq
      %v583 = vshrl.u32 %v582, 7
      %v584 = vsub.s32 %v581, %v583
      %v585 = vrot.slane %v578, %v584
      %v586 = vcombine.low %v577, %v585
      %v587 = vcombine.high %v577, %v585
      %v589 = vunpack.c.l.s4 1934713408
      %v590 = vunpack.c.0.s8 %v589
      %v591 = vlaneseq
      %v592 = vshrl.u32 %v591, 7
      %v593 = vsub.s32 %v590, %v592
      %v594 = vrot.slane %v586, %v593
      %v596 = vunpack.c.l.s4 1934713408
      %v597 = vunpack.c.0.s8 %v596
      %v598 = vlaneseq
      %v599 = vshrl.u32 %v598, 7
      %v600 = vsub.s32 %v597, %v599
      %v601 = vrot.slane %v587, %v600
      %v602 = vcombine.high %v594, 0
      %v603 = vcombine.high %v601, 0
      %v606 = vpack.i.b16 %v594, %v560
      %v607 = vshrl.u32 %v560, 16
      %v608 = vshrl.u32 %v594, 16
      %v609 = vpack.i.b16 %v608, %v607
      %v612 = vpack.i.b16 %v602, %v568
      %v613 = vshrl.u32 %v568, 16
      %v614 = vshrl.u32 %v602, 16
      %v615 = vpack.i.b16 %v614, %v613
      %v618 = vpack.i.b16 %v601, %v567
      %v619 = vshrl.u32 %v567, 16
      %v620 = vshrl.u32 %v601, 16
      %v621 = vpack.i.b16 %v620, %v619
      %v624 = vpack.i.b16 %v603, %v569
      %v625 = vshrl.u32 %v569, 16
      %v626 = vshrl.u32 %v603, 16
      %v627 = vpack.i.b16 %v626, %v625
      %629 = vrot.lane.b32.xlu0 %v199, 112
      %v630 = vpop.permute.xlu0 %629
      %632 = vrot.lane.b32.xlu0 %v199, 96
      %v633 = vpop.permute.xlu0 %632
      %635 = vrot.lane.b32.xlu0 %v199, 80
      %v636 = vpop.permute.xlu0 %635
      %638 = vrot.lane.b32.xlu0 %v199, 64
      %v639 = vpop.permute.xlu0 %638
      %641 = vrot.lane.b32.xlu0 %v199, 48
      %v642 = vpop.permute.xlu0 %641
      %644 = vrot.lane.b32.xlu0 %v199, 32
      %v645 = vpop.permute.xlu0 %644
      %647 = vrot.lane.b32.xlu0 %v199, 16
      %v648 = vpop.permute.xlu0 %647
      %v650 = vcombine.low %v199, %v639
      %v652 = vunpack.c.l.s4 1983009808
      %v653 = vunpack.c.0.s8 %v652
      %v654 = vlaneseq
      %v655 = vshrl.u32 %v654, 7
      %v656 = vsub.s32 %v653, %v655
      %v657 = vrot.slane %v650, %v656
      %v658 = vcombine.low %v633, %v645
      %v660 = vunpack.c.l.s4 1983009808
      %v661 = vunpack.c.0.s8 %v660
      %v662 = vlaneseq
      %v663 = vshrl.u32 %v662, 7
      %v664 = vsub.s32 %v661, %v663
      %v665 = vrot.slane %v658, %v664
      %v666 = vcombine.low %v657, %v665
      %v667 = vcombine.high %v657, %v665
      %v669 = vunpack.c.l.s4 1934713408
      %v670 = vunpack.c.0.s8 %v669
      %v671 = vlaneseq
      %v672 = vshrl.u32 %v671, 7
      %v673 = vsub.s32 %v670, %v672
      %v674 = vrot.slane %v666, %v673
      %v676 = vunpack.c.l.s4 1934713408
      %v677 = vunpack.c.0.s8 %v676
      %v678 = vlaneseq
      %v679 = vshrl.u32 %v678, 7
      %v680 = vsub.s32 %v677, %v679
      %v681 = vrot.slane %v667, %v680
      %v682 = vcombine.high %v674, 0
      %v683 = vcombine.high %v681, 0
      %v684 = vcombine.low %v630, %v642
      %v686 = vunpack.c.l.s4 1983009808
      %v687 = vunpack.c.0.s8 %v686
      %v688 = vlaneseq
      %v689 = vshrl.u32 %v688, 7
      %v690 = vsub.s32 %v687, %v689
      %v691 = vrot.slane %v684, %v690
      %v692 = vcombine.low %v636, %v648
      %v694 = vunpack.c.l.s4 1983009808
      %v695 = vunpack.c.0.s8 %v694
      %v696 = vlaneseq
      %v697 = vshrl.u32 %v696, 7
      %v698 = vsub.s32 %v695, %v697
      %v699 = vrot.slane %v692, %v698
      %v700 = vcombine.low %v691, %v699
      %v701 = vcombine.high %v691, %v699
      %v703 = vunpack.c.l.s4 1934713408
      %v704 = vunpack.c.0.s8 %v703
      %v705 = vlaneseq
      %v706 = vshrl.u32 %v705, 7
      %v707 = vsub.s32 %v704, %v706
      %v708 = vrot.slane %v700, %v707
      %v710 = vunpack.c.l.s4 1934713408
      %v711 = vunpack.c.0.s8 %v710
      %v712 = vlaneseq
      %v713 = vshrl.u32 %v712, 7
      %v714 = vsub.s32 %v711, %v713
      %v715 = vrot.slane %v701, %v714
      %v716 = vcombine.high %v708, 0
      %v717 = vcombine.high %v715, 0
      %v720 = vpack.i.b16 %v708, %v674
      %v722 = vshrl.u32 %v674, 16
      %v723 = vshrl.u32 %v708, 16
      %v724 = vpack.i.b16 %v723, %v722
      %v728 = vpack.i.b16 %v716, %v682
      %v730 = vshrl.u32 %v682, 16
      %v731 = vshrl.u32 %v716, 16
      %v732 = vpack.i.b16 %v731, %v730
      %v736 = vpack.i.b16 %v715, %v681
      %v738 = vshrl.u32 %v681, 16
      %v739 = vshrl.u32 %v715, 16
      %v740 = vpack.i.b16 %v739, %v738
      %v744 = vpack.i.b16 %v717, %v683
      %v746 = vshrl.u32 %v683, 16
      %v747 = vshrl.u32 %v717, 16
      %v748 = vpack.i.b16 %v747, %v746
      %v750 = vcombine.low %v720, %v736
      %v752 = vunpack.c.l.s4 1983009808
      %v753 = vunpack.c.0.s8 %v752
      %v754 = vlaneseq
      %v755 = vshrl.u32 %v754, 7
      %v756 = vsub.s32 %v753, %v755
      %v757 = vrot.slane %v750, %v756
      %v758 = vcombine.low %v728, %v744
      %v760 = vunpack.c.l.s4 1983009808
      %v761 = vunpack.c.0.s8 %v760
      %v762 = vlaneseq
      %v763 = vshrl.u32 %v762, 7
      %v764 = vsub.s32 %v761, %v763
      %v765 = vrot.slane %v758, %v764
      %v766 = vcombine.low %v757, %v765
      %v767 = vcombine.high %v757, %v765
      %v769 = vunpack.c.l.s4 1934713408
      %v770 = vunpack.c.0.s8 %v769
      %v771 = vlaneseq
      %v772 = vshrl.u32 %v771, 7
      %v773 = vsub.s32 %v770, %v772
      %v774 = vrot.slane %v766, %v773
      %v776 = vunpack.c.l.s4 1934713408
      %v777 = vunpack.c.0.s8 %v776
      %v778 = vlaneseq
      %v779 = vshrl.u32 %v778, 7
      %v780 = vsub.s32 %v777, %v779
      %v781 = vrot.slane %v767, %v780
      %v782 = vcombine.high %v774, 0
      %v783 = vcombine.high %v781, 0
      %v784 = vcombine.low %v724, %v740
      %v786 = vunpack.c.l.s4 1983009808
      %v787 = vunpack.c.0.s8 %v786
      %v788 = vlaneseq
      %v789 = vshrl.u32 %v788, 7
      %v790 = vsub.s32 %v787, %v789
      %v791 = vrot.slane %v784, %v790
      %v792 = vcombine.low %v732, %v748
      %v794 = vunpack.c.l.s4 1983009808
      %v795 = vunpack.c.0.s8 %v794
      %v796 = vlaneseq
      %v797 = vshrl.u32 %v796, 7
      %v798 = vsub.s32 %v795, %v797
      %v799 = vrot.slane %v792, %v798
      %v800 = vcombine.low %v791, %v799
      %v801 = vcombine.high %v791, %v799
      %v803 = vunpack.c.l.s4 1934713408
      %v804 = vunpack.c.0.s8 %v803
      %v805 = vlaneseq
      %v806 = vshrl.u32 %v805, 7
      %v807 = vsub.s32 %v804, %v806
      %v808 = vrot.slane %v800, %v807
      %v810 = vunpack.c.l.s4 1934713408
      %v811 = vunpack.c.0.s8 %v810
      %v812 = vlaneseq
      %v813 = vshrl.u32 %v812, 7
      %v814 = vsub.s32 %v811, %v813
      %v815 = vrot.slane %v801, %v814
      %v816 = vcombine.high %v808, 0
      %v817 = vcombine.high %v815, 0
      %v820 = vpack.i.b16 %v808, %v774
      %v821 = vshrl.u32 %v774, 16
      %v822 = vshrl.u32 %v808, 16
      %v823 = vpack.i.b16 %v822, %v821
      %v826 = vpack.i.b16 %v816, %v782
      %v827 = vshrl.u32 %v782, 16
      %v828 = vshrl.u32 %v816, 16
      %v829 = vpack.i.b16 %v828, %v827
      %v832 = vpack.i.b16 %v815, %v781
      %v833 = vshrl.u32 %v781, 16
      %v834 = vshrl.u32 %v815, 16
      %v835 = vpack.i.b16 %v834, %v833
      %v838 = vpack.i.b16 %v817, %v783
      %v839 = vshrl.u32 %v783, 16
      %v840 = vshrl.u32 %v817, 16
      %v841 = vpack.i.b16 %v840, %v839
      %vm842 = vcmask 130048
      %v844 = vsel %vm842, %v392, 0
      %v847 = vsel %vm842, %v606, 0
      %849 = vmatprep.subr.bf16.mxu0 0
      %850 = vmatpush1.bf16.xpose.msra.mxu0 %v847
      %851 = vmatprep.subr.bf16.mxu0 0
      %852 = vmatpush1.bf16.xpose.msra.mxu0 0
      %853 = vmatprep.subr.bf16.mxu0 0
      %854 = vmatpush1.bf16.xpose.msra.mxu0 0
      %855 = vmatprep.subr.bf16.mxu0 0
      %856 = vmatpush1.bf16.xpose.msra.mxu0 0
      %857 = vmatprep.subr.bf16.mxu0 0
      %858 = vmatpush1.bf16.xpose.msra.mxu0 0
      %859 = vmatprep.subr.bf16.mxu0 0
      %860 = vmatpush1.bf16.xpose.msra.mxu0 0
      %861 = vmatprep.subr.bf16.mxu0 0
      %862 = vmatpush1.bf16.xpose.msra.mxu0 0
      %863 = vmatprep.subr.bf16.mxu0 0
      %864 = vmatpush1.bf16.xpose.msra.mxu0 0
      %865 = vmatprep.subr.bf16.mxu0 0
      %866 = vmatpush1.bf16.xpose.msra.mxu0 0
      %867 = vmatprep.subr.bf16.mxu0 0
      %868 = vmatpush1.bf16.xpose.msra.mxu0 0
      %869 = vmatprep.subr.bf16.mxu0 0
      %870 = vmatpush1.bf16.xpose.msra.mxu0 0
      %871 = vmatprep.subr.bf16.mxu0 0
      %872 = vmatpush1.bf16.xpose.msra.mxu0 0
      %873 = vmatprep.subr.bf16.mxu0 0
      %874 = vmatpush1.bf16.xpose.msra.mxu0 0
      %875 = vmatprep.subr.bf16.mxu0 0
      %876 = vmatpush1.bf16.xpose.msra.mxu0 0
      %877 = vmatprep.subr.bf16.mxu0 0
      %878 = vmatpush1.bf16.xpose.msra.mxu0 0
      %879 = vmatprep.subr.bf16.mxu0 0
      %880 = vmatpush1.bf16.xpose.msra.mxu0 0
      %881 = vmatprep.mubr.bf16.mxu0 0
      %882 = vmatmul.mubr.bf16.gmra.mrb[0].mxu0 %v844
      %v883 = vpop.f32.mrb[0].mxu0
      %v884 = vadd.f32 0.0, %v883
      %v885 = vpop.f32.mrb[0].mxu0
      %v886 = vpop.f32.mrb[0].mxu0
      %v887 = vpop.f32.mrb[0].mxu0
      %888 = vdwg.mxu0
      %v890 = vsel %vm842, %v395, 0
      %v893 = vsel %vm842, %v609, 0
      %895 = vmatprep.subr.bf16.mxu0 0
      %896 = vmatpush1.bf16.xpose.msra.mxu0 %v893
      %897 = vmatprep.subr.bf16.mxu0 0
      %898 = vmatpush1.bf16.xpose.msra.mxu0 0
      %899 = vmatprep.subr.bf16.mxu0 0
      %900 = vmatpush1.bf16.xpose.msra.mxu0 0
      %901 = vmatprep.subr.bf16.mxu0 0
      %902 = vmatpush1.bf16.xpose.msra.mxu0 0
      %903 = vmatprep.subr.bf16.mxu0 0
      %904 = vmatpush1.bf16.xpose.msra.mxu0 0
      %905 = vmatprep.subr.bf16.mxu0 0
      %906 = vmatpush1.bf16.xpose.msra.mxu0 0
      %907 = vmatprep.subr.bf16.mxu0 0
      %908 = vmatpush1.bf16.xpose.msra.mxu0 0
      %909 = vmatprep.subr.bf16.mxu0 0
      %910 = vmatpush1.bf16.xpose.msra.mxu0 0
      %911 = vmatprep.subr.bf16.mxu0 0
      %912 = vmatpush1.bf16.xpose.msra.mxu0 0
      %913 = vmatprep.subr.bf16.mxu0 0
      %914 = vmatpush1.bf16.xpose.msra.mxu0 0
      %915 = vmatprep.subr.bf16.mxu0 0
      %916 = vmatpush1.bf16.xpose.msra.mxu0 0
      %917 = vmatprep.subr.bf16.mxu0 0
      %918 = vmatpush1.bf16.xpose.msra.mxu0 0
      %919 = vmatprep.subr.bf16.mxu0 0
      %920 = vmatpush1.bf16.xpose.msra.mxu0 0
      %921 = vmatprep.subr.bf16.mxu0 0
      %922 = vmatpush1.bf16.xpose.msra.mxu0 0
      %923 = vmatprep.subr.bf16.mxu0 0
      %924 = vmatpush1.bf16.xpose.msra.mxu0 0
      %925 = vmatprep.subr.bf16.mxu0 0
      %926 = vmatpush1.bf16.xpose.msra.mxu0 0
      %927 = vmatprep.mubr.bf16.mxu0 0
      %928 = vmatmul.mubr.bf16.gmra.mrb[0].mxu0 %v890
      %v929 = vpop.f32.mrb[0].mxu0
      %v930 = vadd.f32 0.0, %v929
      %v931 = vpop.f32.mrb[0].mxu0
      %v932 = vpop.f32.mrb[0].mxu0
      %v933 = vpop.f32.mrb[0].mxu0
      %934 = vdwg.mxu0
      %v936 = vsel %vm842, %v398, 0
      %v939 = vsel %vm842, %v612, 0
      %941 = vmatprep.subr.bf16.mxu0 0
      %942 = vmatpush1.bf16.xpose.msra.mxu0 %v939
      %943 = vmatprep.subr.bf16.mxu0 0
      %944 = vmatpush1.bf16.xpose.msra.mxu0 0
      %945 = vmatprep.subr.bf16.mxu0 0
      %946 = vmatpush1.bf16.xpose.msra.mxu0 0
      %947 = vmatprep.subr.bf16.mxu0 0
      %948 = vmatpush1.bf16.xpose.msra.mxu0 0
      %949 = vmatprep.subr.bf16.mxu0 0
      %950 = vmatpush1.bf16.xpose.msra.mxu0 0
      %951 = vmatprep.subr.bf16.mxu0 0
      %952 = vmatpush1.bf16.xpose.msra.mxu0 0
      %953 = vmatprep.subr.bf16.mxu0 0
      %954 = vmatpush1.bf16.xpose.msra.mxu0 0
      %955 = vmatprep.subr.bf16.mxu0 0
      %956 = vmatpush1.bf16.xpose.msra.mxu0 0
      %957 = vmatprep.subr.bf16.mxu0 0
      %958 = vmatpush1.bf16.xpose.msra.mxu0 0
      %959 = vmatprep.subr.bf16.mxu0 0
      %960 = vmatpush1.bf16.xpose.msra.mxu0 0
      %961 = vmatprep.subr.bf16.mxu0 0
      %962 = vmatpush1.bf16.xpose.msra.mxu0 0
      %963 = vmatprep.subr.bf16.mxu0 0
      %964 = vmatpush1.bf16.xpose.msra.mxu0 0
      %965 = vmatprep.subr.bf16.mxu0 0
      %966 = vmatpush1.bf16.xpose.msra.mxu0 0
      %967 = vmatprep.subr.bf16.mxu0 0
      %968 = vmatpush1.bf16.xpose.msra.mxu0 0
      %969 = vmatprep.subr.bf16.mxu0 0
      %970 = vmatpush1.bf16.xpose.msra.mxu0 0
      %971 = vmatprep.subr.bf16.mxu0 0
      %972 = vmatpush1.bf16.xpose.msra.mxu0 0
      %973 = vmatprep.mubr.bf16.mxu0 0
      %974 = vmatmul.mubr.bf16.gmra.mrb[0].mxu0 %v936
      %v975 = vpop.f32.mrb[0].mxu0
      %v976 = vadd.f32 0.0, %v975
      %v977 = vpop.f32.mrb[0].mxu0
      %v978 = vpop.f32.mrb[0].mxu0
      %v979 = vpop.f32.mrb[0].mxu0
      %980 = vdwg.mxu0
      %v982 = vsel %vm842, %v401, 0
      %v985 = vsel %vm842, %v615, 0
      %987 = vmatprep.subr.bf16.mxu0 0
      %988 = vmatpush1.bf16.xpose.msra.mxu0 %v985
      %989 = vmatprep.subr.bf16.mxu0 0
      %990 = vmatpush1.bf16.xpose.msra.mxu0 0
      %991 = vmatprep.subr.bf16.mxu0 0
      %992 = vmatpush1.bf16.xpose.msra.mxu0 0
      %993 = vmatprep.subr.bf16.mxu0 0
      %994 = vmatpush1.bf16.xpose.msra.mxu0 0
      %995 = vmatprep.subr.bf16.mxu0 0
      %996 = vmatpush1.bf16.xpose.msra.mxu0 0
      %997 = vmatprep.subr.bf16.mxu0 0
      %998 = vmatpush1.bf16.xpose.msra.mxu0 0
      %999 = vmatprep.subr.bf16.mxu0 0
      %1000 = vmatpush1.bf16.xpose.msra.mxu0 0
      %1001 = vmatprep.subr.bf16.mxu0 0
      %1002 = vmatpush1.bf16.xpose.msra.mxu0 0
      %1003 = vmatprep.subr.bf16.mxu0 0
      %1004 = vmatpush1.bf16.xpose.msra.mxu0 0
      %1005 = vmatprep.subr.bf16.mxu0 0
      %1006 = vmatpush1.bf16.xpose.msra.mxu0 0
      %1007 = vmatprep.subr.bf16.mxu0 0
      %1008 = vmatpush1.bf16.xpose.msra.mxu0 0
      %1009 = vmatprep.subr.bf16.mxu0 0
      %1010 = vmatpush1.bf16.xpose.msra.mxu0 0
      %1011 = vmatprep.subr.bf16.mxu0 0
      %1012 = vmatpush1.bf16.xpose.msra.mxu0 0
      %1013 = vmatprep.subr.bf16.mxu0 0
      %1014 = vmatpush1.bf16.xpose.msra.mxu0 0
      %1015 = vmatprep.subr.bf16.mxu0 0
      %1016 = vmatpush1.bf16.xpose.msra.mxu0 0
      %1017 = vmatprep.subr.bf16.mxu0 0
      %1018 = vmatpush1.bf16.xpose.msra.mxu0 0
      %1019 = vmatprep.mubr.bf16.mxu0 0
      %1020 = vmatmul.mubr.bf16.gmra.mrb[0].mxu0 %v982
      %v1021 = vpop.f32.mrb[0].mxu0
      %v1022 = vadd.f32 0.0, %v1021
      %v1023 = vpop.f32.mrb[0].mxu0
      %v1024 = vpop.f32.mrb[0].mxu0
      %v1025 = vpop.f32.mrb[0].mxu0
      %1026 = vdwg.mxu0
      %v1028 = vsel %vm842, %v404, 0
      %v1031 = vsel %vm842, %v618, 0
      %1033 = vmatprep.subr.bf16.mxu0 0
      %1034 = vmatpush1.bf16.xpose.msra.mxu0 %v1031
      %1035 = vmatprep.subr.bf16.mxu0 0
      %1036 = vmatpush1.bf16.xpose.msra.mxu0 0
      %1037 = vmatprep.subr.bf16.mxu0 0
      %1038 = vmatpush1.bf16.xpose.msra.mxu0 0
      %1039 = vmatprep.subr.bf16.mxu0 0
      %1040 = vmatpush1.bf16.xpose.msra.mxu0 0
      %1041 = vmatprep.subr.bf16.mxu0 0
      %1042 = vmatpush1.bf16.xpose.msra.mxu0 0
      %1043 = vmatprep.subr.bf16.mxu0 0
      %1044 = vmatpush1.bf16.xpose.msra.mxu0 0
      %1045 = vmatprep.subr.bf16.mxu0 0
      %1046 = vmatpush1.bf16.xpose.msra.mxu0 0
      %1047 = vmatprep.subr.bf16.mxu0 0
      %1048 = vmatpush1.bf16.xpose.msra.mxu0 0
      %1049 = vmatprep.subr.bf16.mxu0 0
      %1050 = vmatpush1.bf16.xpose.msra.mxu0 0
      %1051 = vmatprep.subr.bf16.mxu0 0
      %1052 = vmatpush1.bf16.xpose.msra.mxu0 0
      %1053 = vmatprep.subr.bf16.mxu0 0
      %1054 = vmatpush1.bf16.xpose.msra.mxu0 0
      %1055 = vmatprep.subr.bf16.mxu0 0
      %1056 = vmatpush1.bf16.xpose.msra.mxu0 0
      %1057 = vmatprep.subr.bf16.mxu0 0
      %1058 = vmatpush1.bf16.xpose.msra.mxu0 0
      %1059 = vmatprep.subr.bf16.mxu0 0
      %1060 = vmatpush1.bf16.xpose.msra.mxu0 0
      %1061 = vmatprep.subr.bf16.mxu0 0
      %1062 = vmatpush1.bf16.xpose.msra.mxu0 0
      %1063 = vmatprep.subr.bf16.mxu0 0
      %1064 = vmatpush1.bf16.xpose.msra.mxu0 0
      %1065 = vmatprep.mubr.bf16.mxu0 0
      %1066 = vmatmul.mubr.bf16.gmra.mrb[0].mxu0 %v1028
      %v1067 = vpop.f32.mrb[0].mxu0
      %v1068 = vadd.f32 0.0, %v1067
      %v1069 = vpop.f32.mrb[0].mxu0
      %v1070 = vpop.f32.mrb[0].mxu0
      %v1071 = vpop.f32.mrb[0].mxu0
      %1072 = vdwg.mxu0
      %v1074 = vsel %vm842, %v407, 0
      %v1077 = vsel %vm842, %v621, 0
      %1079 = vmatprep.subr.bf16.mxu0 0
      %1080 = vmatpush1.bf16.xpose.msra.mxu0 %v1077
      %1081 = vmatprep.subr.bf16.mxu0 0
      %1082 = vmatpush1.bf16.xpose.msra.mxu0 0
      %1083 = vmatprep.subr.bf16.mxu0 0
      %1084 = vmatpush1.bf16.xpose.msra.mxu0 0
      %1085 = vmatprep.subr.bf16.mxu0 0
      %1086 = vmatpush1.bf16.xpose.msra.mxu0 0
      %1087 = vmatprep.subr.bf16.mxu0 0
      %1088 = vmatpush1.bf16.xpose.msra.mxu0 0
      %1089 = vmatprep.subr.bf16.mxu0 0
      %1090 = vmatpush1.bf16.xpose.msra.mxu0 0
      %1091 = vmatprep.subr.bf16.mxu0 0
      %1092 = vmatpush1.bf16.xpose.msra.mxu0 0
      %1093 = vmatprep.subr.bf16.mxu0 0
      %1094 = vmatpush1.bf16.xpose.msra.mxu0 0
      %1095 = vmatprep.subr.bf16.mxu0 0
      %1096 = vmatpush1.bf16.xpose.msra.mxu0 0
      %1097 = vmatprep.subr.bf16.mxu0 0
      %1098 = vmatpush1.bf16.xpose.msra.mxu0 0
      %1099 = vmatprep.subr.bf16.mxu0 0
      %1100 = vmatpush1.bf16.xpose.msra.mxu0 0
      %1101 = vmatprep.subr.bf16.mxu0 0
      %1102 = vmatpush1.bf16.xpose.msra.mxu0 0
      %1103 = vmatprep.subr.bf16.mxu0 0
      %1104 = vmatpush1.bf16.xpose.msra.mxu0 0
      %1105 = vmatprep.subr.bf16.mxu0 0
      %1106 = vmatpush1.bf16.xpose.msra.mxu0 0
      %1107 = vmatprep.subr.bf16.mxu0 0
      %1108 = vmatpush1.bf16.xpose.msra.mxu0 0
      %1109 = vmatprep.subr.bf16.mxu0 0
      %1110 = vmatpush1.bf16.xpose.msra.mxu0 0
      %1111 = vmatprep.mubr.bf16.mxu0 0
      %1112 = vmatmul.mubr.bf16.gmra.mrb[0].mxu0 %v1074
      %v1113 = vpop.f32.mrb[0].mxu0
      %v1114 = vadd.f32 0.0, %v1113
      %v1115 = vpop.f32.mrb[0].mxu0
      %v1116 = vpop.f32.mrb[0].mxu0
      %v1117 = vpop.f32.mrb[0].mxu0
      %1118 = vdwg.mxu0
      %v1120 = vsel %vm842, %v410, 0
      %v1123 = vsel %vm842, %v624, 0
      %1125 = vmatprep.subr.bf16.mxu0 0
      %1126 = vmatpush1.bf16.xpose.msra.mxu0 %v1123
      %1127 = vmatprep.subr.bf16.mxu0 0
      %1128 = vmatpush1.bf16.xpose.msra.mxu0 0
      %1129 = vmatprep.subr.bf16.mxu0 0
      %1130 = vmatpush1.bf16.xpose.msra.mxu0 0
      %1131 = vmatprep.subr.bf16.mxu0 0
      %1132 = vmatpush1.bf16.xpose.msra.mxu0 0
      %1133 = vmatprep.subr.bf16.mxu0 0
      %1134 = vmatpush1.bf16.xpose.msra.mxu0 0
      %1135 = vmatprep.subr.bf16.mxu0 0
      %1136 = vmatpush1.bf16.xpose.msra.mxu0 0
      %1137 = vmatprep.subr.bf16.mxu0 0
      %1138 = vmatpush1.bf16.xpose.msra.mxu0 0
      %1139 = vmatprep.subr.bf16.mxu0 0
      %1140 = vmatpush1.bf16.xpose.msra.mxu0 0
      %1141 = vmatprep.subr.bf16.mxu0 0
      %1142 = vmatpush1.bf16.xpose.msra.mxu0 0
      %1143 = vmatprep.subr.bf16.mxu0 0
      %1144 = vmatpush1.bf16.xpose.msra.mxu0 0
      %1145 = vmatprep.subr.bf16.mxu0 0
      %1146 = vmatpush1.bf16.xpose.msra.mxu0 0
      %1147 = vmatprep.subr.bf16.mxu0 0
      %1148 = vmatpush1.bf16.xpose.msra.mxu0 0
      %1149 = vmatprep.subr.bf16.mxu0 0
      %1150 = vmatpush1.bf16.xpose.msra.mxu0 0
      %1151 = vmatprep.subr.bf16.mxu0 0
      %1152 = vmatpush1.bf16.xpose.msra.mxu0 0
      %1153 = vmatprep.subr.bf16.mxu0 0
      %1154 = vmatpush1.bf16.xpose.msra.mxu0 0
      %1155 = vmatprep.subr.bf16.mxu0 0
      %1156 = vmatpush1.bf16.xpose.msra.mxu0 0
      %1157 = vmatprep.mubr.bf16.mxu0 0
      %1158 = vmatmul.mubr.bf16.gmra.mrb[0].mxu0 %v1120
      %v1159 = vpop.f32.mrb[0].mxu0
      %v1160 = vadd.f32 0.0, %v1159
      %v1161 = vpop.f32.mrb[0].mxu0
      %v1162 = vpop.f32.mrb[0].mxu0
      %v1163 = vpop.f32.mrb[0].mxu0
      %1164 = vdwg.mxu0
      %v1166 = vsel %vm842, %v413, 0
      %v1169 = vsel %vm842, %v627, 0
      %1171 = vmatprep.subr.bf16.mxu0 0
      %1172 = vmatpush1.bf16.xpose.msra.mxu0 %v1169
      %1173 = vmatprep.subr.bf16.mxu0 0
      %1174 = vmatpush1.bf16.xpose.msra.mxu0 0
      %1175 = vmatprep.subr.bf16.mxu0 0
      %1176 = vmatpush1.bf16.xpose.msra.mxu0 0
      %1177 = vmatprep.subr.bf16.mxu0 0
      %1178 = vmatpush1.bf16.xpose.msra.mxu0 0
      %1179 = vmatprep.subr.bf16.mxu0 0
      %1180 = vmatpush1.bf16.xpose.msra.mxu0 0
      %1181 = vmatprep.subr.bf16.mxu0 0
      %1182 = vmatpush1.bf16.xpose.msra.mxu0 0
      %1183 = vmatprep.subr.bf16.mxu0 0
      %1184 = vmatpush1.bf16.xpose.msra.mxu0 0
      %1185 = vmatprep.subr.bf16.mxu0 0
      %1186 = vmatpush1.bf16.xpose.msra.mxu0 0
      %1187 = vmatprep.subr.bf16.mxu0 0
      %1188 = vmatpush1.bf16.xpose.msra.mxu0 0
      %1189 = vmatprep.subr.bf16.mxu0 0
      %1190 = vmatpush1.bf16.xpose.msra.mxu0 0
      %1191 = vmatprep.subr.bf16.mxu0 0
      %1192 = vmatpush1.bf16.xpose.msra.mxu0 0
      %1193 = vmatprep.subr.bf16.mxu0 0
      %1194 = vmatpush1.bf16.xpose.msra.mxu0 0
      %1195 = vmatprep.subr.bf16.mxu0 0
      %1196 = vmatpush1.bf16.xpose.msra.mxu0 0
      %1197 = vmatprep.subr.bf16.mxu0 0
      %1198 = vmatpush1.bf16.xpose.msra.mxu0 0
      %1199 = vmatprep.subr.bf16.mxu0 0
      %1200 = vmatpush1.bf16.xpose.msra.mxu0 0
      %1201 = vmatprep.subr.bf16.mxu0 0
      %1202 = vmatpush1.bf16.xpose.msra.mxu0 0
      %1203 = vmatprep.mubr.bf16.mxu0 0
      %1204 = vmatmul.mubr.bf16.gmra.mrb[0].mxu0 %v1166
      %v1205 = vpop.f32.mrb[0].mxu0
      %v1206 = vadd.f32 0.0, %v1205
      %v1207 = vpop.f32.mrb[0].mxu0
      %v1208 = vpop.f32.mrb[0].mxu0
      %v1209 = vpop.f32.mrb[0].mxu0
      %1210 = vdwg.mxu0
      %v1211 = vmul.f32 %v884, 0.25
      %v1212 = vmul.f32 %v930, 0.25
      %v1213 = vmul.f32 %v976, 0.25
      %v1214 = vmul.f32 %v1022, 0.25
      %v1215 = vmul.f32 %v1068, 0.25
      %v1216 = vmul.f32 %v1114, 0.25
      %v1217 = vmul.f32 %v1160, 0.25
      %v1218 = vmul.f32 %v1206, 0.25
      %vm1219 = vcmask 64512
      %v1220 = vsel %vm1219, %v1211, -inf
      %1221 = vmax.xlane.f32.xlu0 %v1220
      %v1222 = vpop.xlane.xlu0 %1221
      %v1223 = vsel %vm1219, %v1212, -inf
      %1224 = vmax.xlane.f32.xlu0 %v1223
      %v1225 = vpop.xlane.xlu0 %1224
      %v1226 = vsel %vm1219, %v1213, -inf
      %1227 = vmax.xlane.f32.xlu0 %v1226
      %v1228 = vpop.xlane.xlu0 %1227
      %v1229 = vsel %vm1219, %v1214, -inf
      %1230 = vmax.xlane.f32.xlu0 %v1229
      %v1231 = vpop.xlane.xlu0 %1230
      %v1232 = vsel %vm1219, %v1215, -inf
      %1233 = vmax.xlane.f32.xlu0 %v1232
      %v1234 = vpop.xlane.xlu0 %1233
      %v1235 = vsel %vm1219, %v1216, -inf
      %1236 = vmax.xlane.f32.xlu0 %v1235
      %v1237 = vpop.xlane.xlu0 %1236
      %v1238 = vsel %vm1219, %v1217, -inf
      %1239 = vmax.xlane.f32.xlu0 %v1238
      %v1240 = vpop.xlane.xlu0 %1239
      %v1241 = vsel %vm1219, %v1218, -inf
      %1242 = vmax.xlane.f32.xlu0 %v1241
      %v1243 = vpop.xlane.xlu0 %1242
      %v1244 = vsub.f32 %v1211, %v1222
      %v1245 = vsub.f32 %v1212, %v1225
      %v1246 = vsub.f32 %v1213, %v1228
      %v1247 = vsub.f32 %v1214, %v1231
      %v1248 = vsub.f32 %v1215, %v1234
      %v1249 = vsub.f32 %v1216, %v1237
      %v1250 = vsub.f32 %v1217, %v1240
      %v1251 = vsub.f32 %v1218, %v1243
      %v1252 = vmul.f32 %v1244, 1.442695
      %v1253 = vpow.pop %v1252
      %v1254 = vmul.f32 %v1245, 1.442695
      %v1255 = vpow.pop %v1254
      %v1256 = vmul.f32 %v1246, 1.442695
      %v1257 = vpow.pop %v1256
      %v1258 = vmul.f32 %v1247, 1.442695
      %v1259 = vpow.pop %v1258
      %v1260 = vmul.f32 %v1248, 1.442695
      %v1261 = vpow.pop %v1260
      %v1262 = vmul.f32 %v1249, 1.442695
      %v1263 = vpow.pop %v1262
      %v1264 = vmul.f32 %v1250, 1.442695
      %v1265 = vpow.pop %v1264
      %v1266 = vmul.f32 %v1251, 1.442695
      %v1267 = vpow.pop %v1266
      %v1268 = vsel %vm1219, %v1253, 0.0
      %1269 = vadd.xlane.f32.xlu0 %v1268
      %v1270 = vpop.xlane.xlu0 %1269
      %v1271 = vsel %vm1219, %v1255, 0.0
      %1272 = vadd.xlane.f32.xlu0 %v1271
      %v1273 = vpop.xlane.xlu0 %1272
      %v1274 = vsel %vm1219, %v1257, 0.0
      %1275 = vadd.xlane.f32.xlu0 %v1274
      %v1276 = vpop.xlane.xlu0 %1275
      %v1277 = vsel %vm1219, %v1259, 0.0
      %1278 = vadd.xlane.f32.xlu0 %v1277
      %v1279 = vpop.xlane.xlu0 %1278
      %v1280 = vsel %vm1219, %v1261, 0.0
      %1281 = vadd.xlane.f32.xlu0 %v1280
      %v1282 = vpop.xlane.xlu0 %1281
      %v1283 = vsel %vm1219, %v1263, 0.0
      %1284 = vadd.xlane.f32.xlu0 %v1283
      %v1285 = vpop.xlane.xlu0 %1284
      %v1286 = vsel %vm1219, %v1265, 0.0
      %1287 = vadd.xlane.f32.xlu0 %v1286
      %v1288 = vpop.xlane.xlu0 %1287
      %v1289 = vsel %vm1219, %v1267, 0.0
      %1290 = vadd.xlane.f32.xlu0 %v1289
      %v1291 = vpop.xlane.xlu0 %1290
      %v1292 = vrcp.pop %v1270
      %v1293 = vrcp.pop %v1273
      %v1294 = vrcp.pop %v1276
      %v1295 = vrcp.pop %v1279
      %v1296 = vrcp.pop %v1282
      %v1297 = vrcp.pop %v1285
      %v1298 = vrcp.pop %v1288
      %v1299 = vrcp.pop %v1291
      %v1300 = vmul.f32 %v1253, %v1292
      %v1301 = vmul.f32 %v1255, %v1293
      %v1302 = vmul.f32 %v1257, %v1294
      %v1303 = vmul.f32 %v1259, %v1295
      %v1304 = vmul.f32 %v1261, %v1296
      %v1305 = vmul.f32 %v1263, %v1297
      %v1306 = vmul.f32 %v1265, %v1298
      %v1307 = vmul.f32 %v1267, %v1299
      %v1308 = vpack.c.bf16 %v1300, %v1300
      %v1309 = vpack.c.bf16 %v1301, %v1301
      %v1310 = vpack.c.bf16 %v1302, %v1302
      %v1311 = vpack.c.bf16 %v1303, %v1303
      %v1312 = vpack.c.bf16 %v1304, %v1304
      %v1313 = vpack.c.bf16 %v1305, %v1305
      %v1314 = vpack.c.bf16 %v1306, %v1306
      %v1315 = vpack.c.bf16 %v1307, %v1307
      %v1317 = vsel %vm1219, %v1308, 0
      %vm1319 = vcmask 1043456
      %v1321 = vsel %vm1319, %v820, 0
      %1323 = vmatprep.subr.bf16.mxu0 0
      %1324 = vmatpush1.bf16.msra.mxu0 %v1321
      %1325 = vmatprep.subr.bf16.mxu0 0
      %1326 = vmatpush1.bf16.msra.mxu0 0
      %1327 = vmatprep.subr.bf16.mxu0 0
      %1328 = vmatpush1.bf16.msra.mxu0 0
      %1329 = vmatprep.subr.bf16.mxu0 0
      %1330 = vmatpush1.bf16.msra.mxu0 0
      %1331 = vmatprep.subr.bf16.mxu0 0
      %1332 = vmatpush1.bf16.msra.mxu0 0
      %1333 = vmatprep.subr.bf16.mxu0 0
      %1334 = vmatpush1.bf16.msra.mxu0 0
      %1335 = vmatprep.subr.bf16.mxu0 0
      %1336 = vmatpush1.bf16.msra.mxu0 0
      %1337 = vmatprep.subr.bf16.mxu0 0
      %1338 = vmatpush1.bf16.msra.mxu0 0
      %1339 = vmatprep.subr.bf16.mxu0 0
      %1340 = vmatpush1.bf16.msra.mxu0 0
      %1341 = vmatprep.subr.bf16.mxu0 0
      %1342 = vmatpush1.bf16.msra.mxu0 0
      %1343 = vmatprep.subr.bf16.mxu0 0
      %1344 = vmatpush1.bf16.msra.mxu0 0
      %1345 = vmatprep.subr.bf16.mxu0 0
      %1346 = vmatpush1.bf16.msra.mxu0 0
      %1347 = vmatprep.subr.bf16.mxu0 0
      %1348 = vmatpush1.bf16.msra.mxu0 0
      %1349 = vmatprep.subr.bf16.mxu0 0
      %1350 = vmatpush1.bf16.msra.mxu0 0
      %1351 = vmatprep.subr.bf16.mxu0 0
      %1352 = vmatpush1.bf16.msra.mxu0 0
      %1353 = vmatprep.subr.bf16.mxu0 0
      %1354 = vmatpush1.bf16.msra.mxu0 0
      %1355 = vmatprep.mubr.bf16.mxu0 0
      %1356 = vmatmul.mubr.bf16.gmra.mrb[0].mxu0 %v1317
      %v1357 = vpop.f32.mrb[0].mxu0
      %v1358 = vadd.f32 0.0, %v1357
      %v1359 = vpop.f32.mrb[0].mxu0
      %v1360 = vpop.f32.mrb[0].mxu0
      %v1361 = vpop.f32.mrb[0].mxu0
      %1362 = vdwg.mxu0
      %v1364 = vsel %vm1219, %v1309, 0
      %v1367 = vsel %vm1319, %v823, 0
      %1369 = vmatprep.subr.bf16.mxu0 0
      %1370 = vmatpush1.bf16.msra.mxu0 %v1367
      %1371 = vmatprep.subr.bf16.mxu0 0
      %1372 = vmatpush1.bf16.msra.mxu0 0
      %1373 = vmatprep.subr.bf16.mxu0 0
      %1374 = vmatpush1.bf16.msra.mxu0 0
      %1375 = vmatprep.subr.bf16.mxu0 0
      %1376 = vmatpush1.bf16.msra.mxu0 0
      %1377 = vmatprep.subr.bf16.mxu0 0
      %1378 = vmatpush1.bf16.msra.mxu0 0
      %1379 = vmatprep.subr.bf16.mxu0 0
      %1380 = vmatpush1.bf16.msra.mxu0 0
      %1381 = vmatprep.subr.bf16.mxu0 0
      %1382 = vmatpush1.bf16.msra.mxu0 0
      %1383 = vmatprep.subr.bf16.mxu0 0
      %1384 = vmatpush1.bf16.msra.mxu0 0
      %1385 = vmatprep.subr.bf16.mxu0 0
      %1386 = vmatpush1.bf16.msra.mxu0 0
      %1387 = vmatprep.subr.bf16.mxu0 0
      %1388 = vmatpush1.bf16.msra.mxu0 0
      %1389 = vmatprep.subr.bf16.mxu0 0
      %1390 = vmatpush1.bf16.msra.mxu0 0
      %1391 = vmatprep.subr.bf16.mxu0 0
      %1392 = vmatpush1.bf16.msra.mxu0 0
      %1393 = vmatprep.subr.bf16.mxu0 0
      %1394 = vmatpush1.bf16.msra.mxu0 0
      %1395 = vmatprep.subr.bf16.mxu0 0
      %1396 = vmatpush1.bf16.msra.mxu0 0
      %1397 = vmatprep.subr.bf16.mxu0 0
      %1398 = vmatpush1.bf16.msra.mxu0 0
      %1399 = vmatprep.subr.bf16.mxu0 0
      %1400 = vmatpush1.bf16.msra.mxu0 0
      %1401 = vmatprep.mubr.bf16.mxu0 0
      %1402 = vmatmul.mubr.bf16.gmra.mrb[0].mxu0 %v1364
      %v1403 = vpop.f32.mrb[0].mxu0
      %v1404 = vadd.f32 0.0, %v1403
      %v1405 = vpop.f32.mrb[0].mxu0
      %v1406 = vpop.f32.mrb[0].mxu0
      %v1407 = vpop.f32.mrb[0].mxu0
      %1408 = vdwg.mxu0
      %v1410 = vsel %vm1219, %v1310, 0
      %v1413 = vsel %vm1319, %v826, 0
      %1415 = vmatprep.subr.bf16.mxu0 0
      %1416 = vmatpush1.bf16.msra.mxu0 %v1413
      %1417 = vmatprep.subr.bf16.mxu0 0
      %1418 = vmatpush1.bf16.msra.mxu0 0
      %1419 = vmatprep.subr.bf16.mxu0 0
      %1420 = vmatpush1.bf16.msra.mxu0 0
      %1421 = vmatprep.subr.bf16.mxu0 0
      %1422 = vmatpush1.bf16.msra.mxu0 0
      %1423 = vmatprep.subr.bf16.mxu0 0
      %1424 = vmatpush1.bf16.msra.mxu0 0
      %1425 = vmatprep.subr.bf16.mxu0 0
      %1426 = vmatpush1.bf16.msra.mxu0 0
      %1427 = vmatprep.subr.bf16.mxu0 0
      %1428 = vmatpush1.bf16.msra.mxu0 0
      %1429 = vmatprep.subr.bf16.mxu0 0
      %1430 = vmatpush1.bf16.msra.mxu0 0
      %1431 = vmatprep.subr.bf16.mxu0 0
      %1432 = vmatpush1.bf16.msra.mxu0 0
      %1433 = vmatprep.subr.bf16.mxu0 0
      %1434 = vmatpush1.bf16.msra.mxu0 0
      %1435 = vmatprep.subr.bf16.mxu0 0
      %1436 = vmatpush1.bf16.msra.mxu0 0
      %1437 = vmatprep.subr.bf16.mxu0 0
      %1438 = vmatpush1.bf16.msra.mxu0 0
      %1439 = vmatprep.subr.bf16.mxu0 0
      %1440 = vmatpush1.bf16.msra.mxu0 0
      %1441 = vmatprep.subr.bf16.mxu0 0
      %1442 = vmatpush1.bf16.msra.mxu0 0
      %1443 = vmatprep.subr.bf16.mxu0 0
      %1444 = vmatpush1.bf16.msra.mxu0 0
      %1445 = vmatprep.subr.bf16.mxu0 0
      %1446 = vmatpush1.bf16.msra.mxu0 0
      %1447 = vmatprep.mubr.bf16.mxu0 0
      %1448 = vmatmul.mubr.bf16.gmra.mrb[0].mxu0 %v1410
      %v1449 = vpop.f32.mrb[0].mxu0
      %v1450 = vadd.f32 0.0, %v1449
      %v1451 = vpop.f32.mrb[0].mxu0
      %v1452 = vpop.f32.mrb[0].mxu0
      %v1453 = vpop.f32.mrb[0].mxu0
      %1454 = vdwg.mxu0
      %v1456 = vsel %vm1219, %v1311, 0
      %v1459 = vsel %vm1319, %v829, 0
      %1461 = vmatprep.subr.bf16.mxu0 0
      %1462 = vmatpush1.bf16.msra.mxu0 %v1459
      %1463 = vmatprep.subr.bf16.mxu0 0
      %1464 = vmatpush1.bf16.msra.mxu0 0
      %1465 = vmatprep.subr.bf16.mxu0 0
      %1466 = vmatpush1.bf16.msra.mxu0 0
      %1467 = vmatprep.subr.bf16.mxu0 0
      %1468 = vmatpush1.bf16.msra.mxu0 0
      %1469 = vmatprep.subr.bf16.mxu0 0
      %1470 = vmatpush1.bf16.msra.mxu0 0
      %1471 = vmatprep.subr.bf16.mxu0 0
      %1472 = vmatpush1.bf16.msra.mxu0 0
      %1473 = vmatprep.subr.bf16.mxu0 0
      %1474 = vmatpush1.bf16.msra.mxu0 0
      %1475 = vmatprep.subr.bf16.mxu0 0
      %1476 = vmatpush1.bf16.msra.mxu0 0
      %1477 = vmatprep.subr.bf16.mxu0 0
      %1478 = vmatpush1.bf16.msra.mxu0 0
      %1479 = vmatprep.subr.bf16.mxu0 0
      %1480 = vmatpush1.bf16.msra.mxu0 0
      %1481 = vmatprep.subr.bf16.mxu0 0
      %1482 = vmatpush1.bf16.msra.mxu0 0
      %1483 = vmatprep.subr.bf16.mxu0 0
      %1484 = vmatpush1.bf16.msra.mxu0 0
      %1485 = vmatprep.subr.bf16.mxu0 0
      %1486 = vmatpush1.bf16.msra.mxu0 0
      %1487 = vmatprep.subr.bf16.mxu0 0
      %1488 = vmatpush1.bf16.msra.mxu0 0
      %1489 = vmatprep.subr.bf16.mxu0 0
      %1490 = vmatpush1.bf16.msra.mxu0 0
      %1491 = vmatprep.subr.bf16.mxu0 0
      %1492 = vmatpush1.bf16.msra.mxu0 0
      %1493 = vmatprep.mubr.bf16.mxu0 0
      %1494 = vmatmul.mubr.bf16.gmra.mrb[0].mxu0 %v1456
      %v1495 = vpop.f32.mrb[0].mxu0
      %v1496 = vadd.f32 0.0, %v1495
      %v1497 = vpop.f32.mrb[0].mxu0
      %v1498 = vpop.f32.mrb[0].mxu0
      %v1499 = vpop.f32.mrb[0].mxu0
      %1500 = vdwg.mxu0
      %v1502 = vsel %vm1219, %v1312, 0
      %v1505 = vsel %vm1319, %v832, 0
      %1507 = vmatprep.subr.bf16.mxu0 0
      %1508 = vmatpush1.bf16.msra.mxu0 %v1505
      %1509 = vmatprep.subr.bf16.mxu0 0
      %1510 = vmatpush1.bf16.msra.mxu0 0
      %1511 = vmatprep.subr.bf16.mxu0 0
      %1512 = vmatpush1.bf16.msra.mxu0 0
      %1513 = vmatprep.subr.bf16.mxu0 0
      %1514 = vmatpush1.bf16.msra.mxu0 0
      %1515 = vmatprep.subr.bf16.mxu0 0
      %1516 = vmatpush1.bf16.msra.mxu0 0
      %1517 = vmatprep.subr.bf16.mxu0 0
      %1518 = vmatpush1.bf16.msra.mxu0 0
      %1519 = vmatprep.subr.bf16.mxu0 0
      %1520 = vmatpush1.bf16.msra.mxu0 0
      %1521 = vmatprep.subr.bf16.mxu0 0
      %1522 = vmatpush1.bf16.msra.mxu0 0
      %1523 = vmatprep.subr.bf16.mxu0 0
      %1524 = vmatpush1.bf16.msra.mxu0 0
      %1525 = vmatprep.subr.bf16.mxu0 0
      %1526 = vmatpush1.bf16.msra.mxu0 0
      %1527 = vmatprep.subr.bf16.mxu0 0
      %1528 = vmatpush1.bf16.msra.mxu0 0
      %1529 = vmatprep.subr.bf16.mxu0 0
      %1530 = vmatpush1.bf16.msra.mxu0 0
      %1531 = vmatprep.subr.bf16.mxu0 0
      %1532 = vmatpush1.bf16.msra.mxu0 0
      %1533 = vmatprep.subr.bf16.mxu0 0
      %1534 = vmatpush1.bf16.msra.mxu0 0
      %1535 = vmatprep.subr.bf16.mxu0 0
      %1536 = vmatpush1.bf16.msra.mxu0 0
      %1537 = vmatprep.subr.bf16.mxu0 0
      %1538 = vmatpush1.bf16.msra.mxu0 0
      %1539 = vmatprep.mubr.bf16.mxu0 0
      %1540 = vmatmul.mubr.bf16.gmra.mrb[0].mxu0 %v1502
      %v1541 = vpop.f32.mrb[0].mxu0
      %v1542 = vadd.f32 0.0, %v1541
      %v1543 = vpop.f32.mrb[0].mxu0
      %v1544 = vpop.f32.mrb[0].mxu0
      %v1545 = vpop.f32.mrb[0].mxu0
      %1546 = vdwg.mxu0
      %v1548 = vsel %vm1219, %v1313, 0
      %v1551 = vsel %vm1319, %v835, 0
      %1553 = vmatprep.subr.bf16.mxu0 0
      %1554 = vmatpush1.bf16.msra.mxu0 %v1551
      %1555 = vmatprep.subr.bf16.mxu0 0
      %1556 = vmatpush1.bf16.msra.mxu0 0
      %1557 = vmatprep.subr.bf16.mxu0 0
      %1558 = vmatpush1.bf16.msra.mxu0 0
      %1559 = vmatprep.subr.bf16.mxu0 0
      %1560 = vmatpush1.bf16.msra.mxu0 0
      %1561 = vmatprep.subr.bf16.mxu0 0
      %1562 = vmatpush1.bf16.msra.mxu0 0
      %1563 = vmatprep.subr.bf16.mxu0 0
      %1564 = vmatpush1.bf16.msra.mxu0 0
      %1565 = vmatprep.subr.bf16.mxu0 0
      %1566 = vmatpush1.bf16.msra.mxu0 0
      %1567 = vmatprep.subr.bf16.mxu0 0
      %1568 = vmatpush1.bf16.msra.mxu0 0
      %1569 = vmatprep.subr.bf16.mxu0 0
      %1570 = vmatpush1.bf16.msra.mxu0 0
      %1571 = vmatprep.subr.bf16.mxu0 0
      %1572 = vmatpush1.bf16.msra.mxu0 0
      %1573 = vmatprep.subr.bf16.mxu0 0
      %1574 = vmatpush1.bf16.msra.mxu0 0
      %1575 = vmatprep.subr.bf16.mxu0 0
      %1576 = vmatpush1.bf16.msra.mxu0 0
      %1577 = vmatprep.subr.bf16.mxu0 0
      %1578 = vmatpush1.bf16.msra.mxu0 0
      %1579 = vmatprep.subr.bf16.mxu0 0
      %1580 = vmatpush1.bf16.msra.mxu0 0
      %1581 = vmatprep.subr.bf16.mxu0 0
      %1582 = vmatpush1.bf16.msra.mxu0 0
      %1583 = vmatprep.subr.bf16.mxu0 0
      %1584 = vmatpush1.bf16.msra.mxu0 0
      %1585 = vmatprep.mubr.bf16.mxu0 0
      %1586 = vmatmul.mubr.bf16.gmra.mrb[0].mxu0 %v1548
      %v1587 = vpop.f32.mrb[0].mxu0
      %v1588 = vadd.f32 0.0, %v1587
      %v1589 = vpop.f32.mrb[0].mxu0
      %v1590 = vpop.f32.mrb[0].mxu0
      %v1591 = vpop.f32.mrb[0].mxu0
      %1592 = vdwg.mxu0
      %v1594 = vsel %vm1219, %v1314, 0
      %v1597 = vsel %vm1319, %v838, 0
      %1599 = vmatprep.subr.bf16.mxu0 0
      %1600 = vmatpush1.bf16.msra.mxu0 %v1597
      %1601 = vmatprep.subr.bf16.mxu0 0
      %1602 = vmatpush1.bf16.msra.mxu0 0
      %1603 = vmatprep.subr.bf16.mxu0 0
      %1604 = vmatpush1.bf16.msra.mxu0 0
      %1605 = vmatprep.subr.bf16.mxu0 0
      %1606 = vmatpush1.bf16.msra.mxu0 0
      %1607 = vmatprep.subr.bf16.mxu0 0
      %1608 = vmatpush1.bf16.msra.mxu0 0
      %1609 = vmatprep.subr.bf16.mxu0 0
      %1610 = vmatpush1.bf16.msra.mxu0 0
      %1611 = vmatprep.subr.bf16.mxu0 0
      %1612 = vmatpush1.bf16.msra.mxu0 0
      %1613 = vmatprep.subr.bf16.mxu0 0
      %1614 = vmatpush1.bf16.msra.mxu0 0
      %1615 = vmatprep.subr.bf16.mxu0 0
      %1616 = vmatpush1.bf16.msra.mxu0 0
      %1617 = vmatprep.subr.bf16.mxu0 0
      %1618 = vmatpush1.bf16.msra.mxu0 0
      %1619 = vmatprep.subr.bf16.mxu0 0
      %1620 = vmatpush1.bf16.msra.mxu0 0
      %1621 = vmatprep.subr.bf16.mxu0 0
      %1622 = vmatpush1.bf16.msra.mxu0 0
      %1623 = vmatprep.subr.bf16.mxu0 0
      %1624 = vmatpush1.bf16.msra.mxu0 0
      %1625 = vmatprep.subr.bf16.mxu0 0
      %1626 = vmatpush1.bf16.msra.mxu0 0
      %1627 = vmatprep.subr.bf16.mxu0 0
      %1628 = vmatpush1.bf16.msra.mxu0 0
      %1629 = vmatprep.subr.bf16.mxu0 0
      %1630 = vmatpush1.bf16.msra.mxu0 0
      %1631 = vmatprep.mubr.bf16.mxu0 0
      %1632 = vmatmul.mubr.bf16.gmra.mrb[0].mxu0 %v1594
      %v1633 = vpop.f32.mrb[0].mxu0
      %v1634 = vadd.f32 0.0, %v1633
      %v1635 = vpop.f32.mrb[0].mxu0
      %v1636 = vpop.f32.mrb[0].mxu0
      %v1637 = vpop.f32.mrb[0].mxu0
      %1638 = vdwg.mxu0
      %v1640 = vsel %vm1219, %v1315, 0
      %v1643 = vsel %vm1319, %v841, 0
      %1645 = vmatprep.subr.bf16.mxu0 0
      %1646 = vmatpush1.bf16.msra.mxu0 %v1643
      %1647 = vmatprep.subr.bf16.mxu0 0
      %1648 = vmatpush1.bf16.msra.mxu0 0
      %1649 = vmatprep.subr.bf16.mxu0 0
      %1650 = vmatpush1.bf16.msra.mxu0 0
      %1651 = vmatprep.subr.bf16.mxu0 0
      %1652 = vmatpush1.bf16.msra.mxu0 0
      %1653 = vmatprep.subr.bf16.mxu0 0
      %1654 = vmatpush1.bf16.msra.mxu0 0
      %1655 = vmatprep.subr.bf16.mxu0 0
      %1656 = vmatpush1.bf16.msra.mxu0 0
      %1657 = vmatprep.subr.bf16.mxu0 0
      %1658 = vmatpush1.bf16.msra.mxu0 0
      %1659 = vmatprep.subr.bf16.mxu0 0
      %1660 = vmatpush1.bf16.msra.mxu0 0
      %1661 = vmatprep.subr.bf16.mxu0 0
      %1662 = vmatpush1.bf16.msra.mxu0 0
      %1663 = vmatprep.subr.bf16.mxu0 0
      %1664 = vmatpush1.bf16.msra.mxu0 0
      %1665 = vmatprep.subr.bf16.mxu0 0
      %1666 = vmatpush1.bf16.msra.mxu0 0
      %1667 = vmatprep.subr.bf16.mxu0 0
      %1668 = vmatpush1.bf16.msra.mxu0 0
      %1669 = vmatprep.subr.bf16.mxu0 0
      %1670 = vmatpush1.bf16.msra.mxu0 0
      %1671 = vmatprep.subr.bf16.mxu0 0
      %1672 = vmatpush1.bf16.msra.mxu0 0
      %1673 = vmatprep.subr.bf16.mxu0 0
      %1674 = vmatpush1.bf16.msra.mxu0 0
      %1675 = vmatprep.subr.bf16.mxu0 0
      %1676 = vmatpush1.bf16.msra.mxu0 0
      %1677 = vmatprep.mubr.bf16.mxu0 0
      %1678 = vmatmul.mubr.bf16.gmra.mrb[0].mxu0 %v1640
      %v1679 = vpop.f32.mrb[0].mxu0
      %v1680 = vadd.f32 0.0, %v1679
      %v1681 = vpop.f32.mrb[0].mxu0
      %v1682 = vpop.f32.mrb[0].mxu0
      %v1683 = vpop.f32.mrb[0].mxu0
      %1684 = vdwg.mxu0
      %v1685 = vcombine.low %v1358, %v1450
      %v1686 = vcombine.high %v1358, %v1450
      %v1688 = vunpack.c.l.s4 1983009808
      %v1689 = vunpack.c.0.s8 %v1688
      %v1690 = vlaneseq
      %v1691 = vshrl.u32 %v1690, 7
      %v1692 = vsub.s32 %v1689, %v1691
      %v1693 = vrot.slane %v1685, %v1692
      %v1695 = vunpack.c.l.s4 1983009808
      %v1696 = vunpack.c.0.s8 %v1695
      %v1697 = vlaneseq
      %v1698 = vshrl.u32 %v1697, 7
      %v1699 = vsub.s32 %v1696, %v1698
      %v1700 = vrot.slane %v1686, %v1699
      %v1701 = vcombine.low %v1404, %v1496
      %v1702 = vcombine.high %v1404, %v1496
      %v1704 = vunpack.c.l.s4 1983009808
      %v1705 = vunpack.c.0.s8 %v1704
      %v1706 = vlaneseq
      %v1707 = vshrl.u32 %v1706, 7
      %v1708 = vsub.s32 %v1705, %v1707
      %v1709 = vrot.slane %v1701, %v1708
      %v1711 = vunpack.c.l.s4 1983009808
      %v1712 = vunpack.c.0.s8 %v1711
      %v1713 = vlaneseq
      %v1714 = vshrl.u32 %v1713, 7
      %v1715 = vsub.s32 %v1712, %v1714
      %v1716 = vrot.slane %v1702, %v1715
      %v1717 = vcombine.low %v1542, %v1634
      %v1718 = vcombine.high %v1542, %v1634
      %v1720 = vunpack.c.l.s4 1983009808
      %v1721 = vunpack.c.0.s8 %v1720
      %v1722 = vlaneseq
      %v1723 = vshrl.u32 %v1722, 7
      %v1724 = vsub.s32 %v1721, %v1723
      %v1725 = vrot.slane %v1717, %v1724
      %v1727 = vunpack.c.l.s4 1983009808
      %v1728 = vunpack.c.0.s8 %v1727
      %v1729 = vlaneseq
      %v1730 = vshrl.u32 %v1729, 7
      %v1731 = vsub.s32 %v1728, %v1730
      %v1732 = vrot.slane %v1718, %v1731
      %v1733 = vcombine.low %v1588, %v1680
      %v1734 = vcombine.high %v1588, %v1680
      %v1736 = vunpack.c.l.s4 1983009808
      %v1737 = vunpack.c.0.s8 %v1736
      %v1738 = vlaneseq
      %v1739 = vshrl.u32 %v1738, 7
      %v1740 = vsub.s32 %v1737, %v1739
      %v1741 = vrot.slane %v1733, %v1740
      %v1743 = vunpack.c.l.s4 1983009808
      %v1744 = vunpack.c.0.s8 %v1743
      %v1745 = vlaneseq
      %v1746 = vshrl.u32 %v1745, 7
      %v1747 = vsub.s32 %v1744, %v1746
      %v1748 = vrot.slane %v1734, %v1747
      %v1749 = vcombine.low %v1693, %v1709
      %v1750 = vcombine.high %v1693, %v1709
      %v1752 = vunpack.c.l.s4 1934713408
      %v1753 = vunpack.c.0.s8 %v1752
      %v1754 = vlaneseq
      %v1755 = vshrl.u32 %v1754, 7
      %v1756 = vsub.s32 %v1753, %v1755
      %v1757 = vrot.slane %v1749, %v1756
      %v1759 = vunpack.c.l.s4 1934713408
      %v1760 = vunpack.c.0.s8 %v1759
      %v1761 = vlaneseq
      %v1762 = vshrl.u32 %v1761, 7
      %v1763 = vsub.s32 %v1760, %v1762
      %v1764 = vrot.slane %v1750, %v1763
      %v1765 = vcombine.low %v1700, %v1716
      %v1766 = vcombine.high %v1700, %v1716
      %v1768 = vunpack.c.l.s4 1934713408
      %v1769 = vunpack.c.0.s8 %v1768
      %v1770 = vlaneseq
      %v1771 = vshrl.u32 %v1770, 7
      %v1772 = vsub.s32 %v1769, %v1771
      %v1773 = vrot.slane %v1765, %v1772
      %v1775 = vunpack.c.l.s4 1934713408
      %v1776 = vunpack.c.0.s8 %v1775
      %v1777 = vlaneseq
      %v1778 = vshrl.u32 %v1777, 7
      %v1779 = vsub.s32 %v1776, %v1778
      %v1780 = vrot.slane %v1766, %v1779
      %v1781 = vcombine.low %v1725, %v1741
      %v1782 = vcombine.high %v1725, %v1741
      %v1784 = vunpack.c.l.s4 1934713408
      %v1785 = vunpack.c.0.s8 %v1784
      %v1786 = vlaneseq
      %v1787 = vshrl.u32 %v1786, 7
      %v1788 = vsub.s32 %v1785, %v1787
      %v1789 = vrot.slane %v1781, %v1788
      %v1791 = vunpack.c.l.s4 1934713408
      %v1792 = vunpack.c.0.s8 %v1791
      %v1793 = vlaneseq
      %v1794 = vshrl.u32 %v1793, 7
      %v1795 = vsub.s32 %v1792, %v1794
      %v1796 = vrot.slane %v1782, %v1795
      %v1797 = vcombine.low %v1732, %v1748
      %v1798 = vcombine.high %v1732, %v1748
      %v1800 = vunpack.c.l.s4 1934713408
      %v1801 = vunpack.c.0.s8 %v1800
      %v1802 = vlaneseq
      %v1803 = vshrl.u32 %v1802, 7
      %v1804 = vsub.s32 %v1801, %v1803
      %v1805 = vrot.slane %v1797, %v1804
      %v1807 = vunpack.c.l.s4 1934713408
      %v1808 = vunpack.c.0.s8 %v1807
      %v1809 = vlaneseq
      %v1810 = vshrl.u32 %v1809, 7
      %v1811 = vsub.s32 %v1808, %v1810
      %v1812 = vrot.slane %v1798, %v1811
      %v1813 = vcombine.low %v1757, %v1789
      %v1814 = vcombine.high %v1757, %v1789
      %v1815 = vcombine.low %v1764, %v1796
      %v1816 = vcombine.high %v1764, %v1796
      %v1817 = vcombine.low %v1773, %v1805
      %v1818 = vcombine.high %v1773, %v1805
      %v1819 = vcombine.low %v1780, %v1812
      %v1820 = vcombine.high %v1780, %v1812
      %v1821 = vcombine.low %v1813, %v1815
      %v1822 = vcombine.high %v1813, %v1815
      %v1824 = vunpack.c.l.s4 1983009808
      %v1825 = vunpack.c.0.s8 %v1824
      %v1826 = vlaneseq
      %v1827 = vshrl.u32 %v1826, 7
      %v1828 = vsub.s32 %v1825, %v1827
      %v1829 = vrot.slane %v1821, %v1828
      %v1831 = vunpack.c.l.s4 1983009808
      %v1832 = vunpack.c.0.s8 %v1831
      %v1833 = vlaneseq
      %v1834 = vshrl.u32 %v1833, 7
      %v1835 = vsub.s32 %v1832, %v1834
      %v1836 = vrot.slane %v1822, %v1835
      %v1837 = vcombine.low %v1814, %v1816
      %v1838 = vcombine.high %v1814, %v1816
      %v1840 = vunpack.c.l.s4 1983009808
      %v1841 = vunpack.c.0.s8 %v1840
      %v1842 = vlaneseq
      %v1843 = vshrl.u32 %v1842, 7
      %v1844 = vsub.s32 %v1841, %v1843
      %v1845 = vrot.slane %v1837, %v1844
      %v1847 = vunpack.c.l.s4 1983009808
      %v1848 = vunpack.c.0.s8 %v1847
      %v1849 = vlaneseq
      %v1850 = vshrl.u32 %v1849, 7
      %v1851 = vsub.s32 %v1848, %v1850
      %v1852 = vrot.slane %v1838, %v1851
      %v1853 = vcombine.low %v1817, %v1819
      %v1854 = vcombine.high %v1817, %v1819
      %v1856 = vunpack.c.l.s4 1983009808
      %v1857 = vunpack.c.0.s8 %v1856
      %v1858 = vlaneseq
      %v1859 = vshrl.u32 %v1858, 7
      %v1860 = vsub.s32 %v1857, %v1859
      %v1861 = vrot.slane %v1853, %v1860
      %v1863 = vunpack.c.l.s4 1983009808
      %v1864 = vunpack.c.0.s8 %v1863
      %v1865 = vlaneseq
      %v1866 = vshrl.u32 %v1865, 7
      %v1867 = vsub.s32 %v1864, %v1866
      %v1868 = vrot.slane %v1854, %v1867
      %v1869 = vcombine.low %v1818, %v1820
      %v1870 = vcombine.high %v1818, %v1820
      %v1872 = vunpack.c.l.s4 1983009808
      %v1873 = vunpack.c.0.s8 %v1872
      %v1874 = vlaneseq
      %v1875 = vshrl.u32 %v1874, 7
      %v1876 = vsub.s32 %v1873, %v1875
      %v1877 = vrot.slane %v1869, %v1876
      %v1879 = vunpack.c.l.s4 1983009808
      %v1880 = vunpack.c.0.s8 %v1879
      %v1881 = vlaneseq
      %v1882 = vshrl.u32 %v1881, 7
      %v1883 = vsub.s32 %v1880, %v1882
      %v1884 = vrot.slane %v1870, %v1883
      %v1885 = vcombine.low %v1829, %v1845
      %v1886 = vcombine.high %v1829, %v1845
      %v1888 = vunpack.c.l.s4 1934713408
      %v1889 = vunpack.c.0.s8 %v1888
      %v1890 = vlaneseq
      %v1891 = vshrl.u32 %v1890, 7
      %v1892 = vsub.s32 %v1889, %v1891
      %v1893 = vrot.slane %v1885, %v1892
      %v1895 = vunpack.c.l.s4 1934713408
      %v1896 = vunpack.c.0.s8 %v1895
      %v1897 = vlaneseq
      %v1898 = vshrl.u32 %v1897, 7
      %v1899 = vsub.s32 %v1896, %v1898
      %v1900 = vrot.slane %v1886, %v1899
      %v1901 = vcombine.low %v1836, %v1852
      %v1902 = vcombine.high %v1836, %v1852
      %v1904 = vunpack.c.l.s4 1934713408
      %v1905 = vunpack.c.0.s8 %v1904
      %v1906 = vlaneseq
      %v1907 = vshrl.u32 %v1906, 7
      %v1908 = vsub.s32 %v1905, %v1907
      %v1909 = vrot.slane %v1901, %v1908
      %v1911 = vunpack.c.l.s4 1934713408
      %v1912 = vunpack.c.0.s8 %v1911
      %v1913 = vlaneseq
      %v1914 = vshrl.u32 %v1913, 7
      %v1915 = vsub.s32 %v1912, %v1914
      %v1916 = vrot.slane %v1902, %v1915
      %v1917 = vcombine.low %v1861, %v1877
      %v1918 = vcombine.high %v1861, %v1877
      %v1920 = vunpack.c.l.s4 1934713408
      %v1921 = vunpack.c.0.s8 %v1920
      %v1922 = vlaneseq
      %v1923 = vshrl.u32 %v1922, 7
      %v1924 = vsub.s32 %v1921, %v1923
      %v1925 = vrot.slane %v1917, %v1924
      %v1927 = vunpack.c.l.s4 1934713408
      %v1928 = vunpack.c.0.s8 %v1927
      %v1929 = vlaneseq
      %v1930 = vshrl.u32 %v1929, 7
      %v1931 = vsub.s32 %v1928, %v1930
      %v1932 = vrot.slane %v1918, %v1931
      %v1933 = vcombine.low %v1868, %v1884
      %v1934 = vcombine.high %v1868, %v1884
      %v1936 = vunpack.c.l.s4 1934713408
      %v1937 = vunpack.c.0.s8 %v1936
      %v1938 = vlaneseq
      %v1939 = vshrl.u32 %v1938, 7
      %v1940 = vsub.s32 %v1937, %v1939
      %v1941 = vrot.slane %v1933, %v1940
      %v1943 = vunpack.c.l.s4 1934713408
      %v1944 = vunpack.c.0.s8 %v1943
      %v1945 = vlaneseq
      %v1946 = vshrl.u32 %v1945, 7
      %v1947 = vsub.s32 %v1944, %v1946
      %v1948 = vrot.slane %v1934, %v1947
      %v1949 = vcombine.low %v1893, %v1925
      %v1950 = vcombine.high %v1893, %v1925
      %v1951 = vcombine.low %v1900, %v1932
      %v1952 = vcombine.high %v1900, %v1932
      %v1953 = vcombine.low %v1909, %v1941
      %v1954 = vcombine.high %v1909, %v1941
      %v1955 = vcombine.low %v1916, %v1948
      %v1956 = vcombine.high %v1916, %v1948
      %1958 = vrot.lane.b32.xlu0 %v1950, 16
      %v1959 = vpop.permute.xlu0 %1958
      %1962 = vrot.lane.b32.xlu0 %v1951, 32
      %v1963 = vpop.permute.xlu0 %1962
      %1966 = vrot.lane.b32.xlu0 %v1952, 48
      %v1967 = vpop.permute.xlu0 %1966
      %1970 = vrot.lane.b32.xlu0 %v1953, 64
      %v1971 = vpop.permute.xlu0 %1970
      %1974 = vrot.lane.b32.xlu0 %v1954, 80
      %v1975 = vpop.permute.xlu0 %1974
      %1978 = vrot.lane.b32.xlu0 %v1955, 96
      %v1979 = vpop.permute.xlu0 %1978
      %1982 = vrot.lane.b32.xlu0 %v1956, 112
      %v1983 = vpop.permute.xlu0 %1982
      %v1985 = vsel %vm842, %v1949, %v1959
      %vm1986 = vcmask 261120
      %v1987 = vsel %vm1986, %v1985, %v1963
      %vm1988 = vcmask 392192
      %v1989 = vsel %vm1988, %v1987, %v1967
      %vm1990 = vcmask 523264
      %v1991 = vsel %vm1990, %v1989, %v1971
      %vm1992 = vcmask 654336
      %v1993 = vsel %vm1992, %v1991, %v1975
      %vm1994 = vcmask 785408
      %v1995 = vsel %vm1994, %v1993, %v1979
      %vm1996 = vcmask 916480
      %v1997 = vsel %vm1996, %v1995, %v1983
      %v1998 = vpack.c.bf16 %v1997, %v1997
      %1999 = vst [vmem:[%s195] sm:$0xf] %v1998
      %p2000 = scmp.lt.s32.totalorder %s17, 1
      %s2001 = scalar_select %p2000, %s17, 1
      %p2002 = scmp.lt.s32.totalorder %s18, 0
      %s2003 = scalar_select %p2002, %s18, 0
      %s2004 = sadd.s32 %s2003, %s2001
      %s2005 = smul.addr %s2004, 4
      %s2006 = scalar_lea.vmem %s2, %s2005
      // Predicated region
      $region29: #{chatbot_forward.31} parent=27 // pred_check
        %p2007 = pneg %p99
      $region30: #{chatbot_forward.31} parent=27 // pred_check_branch
        %2009 = sbr.rel (%p2007) target = $region32
      $region31: #{chatbot_forward.31} parent=27 // pred_region
        _
      $region32: #{chatbot_forward.31} parent=27 // pred_fallthru
        _
    $region28: #{chatbot_forward.31} parent=5 // pred_fallthru
      _
    %p2010 = scmp.le.s32.totalorder 2, %s8
    // Predicated region
    $region33: #{chatbot_forward.31} parent=5 // pred_check
      %p2011 = pneg %p2010
    $region34: #{chatbot_forward.31} parent=5 // pred_check_branch
      %2013 = sbr.rel (%p2011) target = $region36
    $region35: #{chatbot_forward.31} parent=5 // pred_region
      %s2014 = ssub.s32 %s8, 2
      // Predicated region
      $region37: #{chatbot_forward.31} parent=35 // pred_check
        %p2015 = pneg %p105
      $region38: #{chatbot_forward.31} parent=35 // pred_check_branch
        %2017 = sbr.rel (%p2015) target = $region40
      $region39: #{chatbot_forward.31} parent=35 // pred_region
        %p2018 = scmp.lt.s32.totalorder %s19, 1
        %s2019 = scalar_select %p2018, %s19, 1
        %p2020 = scmp.lt.s32.totalorder %s20, 0
        %s2021 = scalar_select %p2020, %s20, 0
        %s2022 = sadd.s32 %s2021, %s2019
        %s2023 = smul.addr %s2022, 4
        %s2024 = scalar_lea.vmem %s2, %s2023
      $region40: #{chatbot_forward.31} parent=35 // pred_fallthru
        _
    $region36: #{chatbot_forward.31} parent=5 // pred_fallthru
      _
  $region6: #{chatbot_forward.31} parent=0 // loop_footer
    %s12 = sadd.s32 1, %s8
  $region7: #{chatbot_forward.31} parent=0 // loop_footer_branch
    %7 = sbr.rel target = $region3
  $region8: #{chatbot_forward.31} parent=0 // loop_exit
    _

// kernel: chatbot_forward.34
$region0: #{chatbot_forward.34}
  #allocation0 [shape = 'u32[]', space=smem, size = 0x4, offset = 0x4, fixed_abs, tag = 'smem constant byte address 0x4 - core index']
  #allocation1 [shape = 'u32[144,128]{1,0:T(1,128)}', space=vmem, size = 0x12000, scoped, tag = 'internal scratch']
  %s0 = inlined_call_operand.vmem [shape: bf16[16,256], index: 0, kind: input, shape index: {}]
  %s1 = inlined_call_operand.vmem [shape: f32[16,128], index: 1, kind: input, shape index: {}, may-alias: {1,4}]
  %s2 = inlined_call_operand.vmem [shape: bf16[256,128], index: 2, kind: input, shape index: {}]
  %s3 = inlined_call_operand.vmem [shape: f32[1,128], index: 3, kind: input, shape index: {}]
  %s4 = inlined_call_operand.vmem [shape: f32[16,128], index: 4, kind: output, shape index: {}, may-alias: {1,4}]
  %s5 = sld [smem:[#allocation0]]
  $region26: #{chatbot_forward.34} parent=0
    _
  %s7 = ssub.s32 1, %s5
  %s8 = scalar_select 0, %s7, %s5
  // Predicated region
  $region2: #{chatbot_forward.34} parent=0 // pred_check
    _
  $region3: #{chatbot_forward.34} parent=0 // pred_check_branch
    %10 = sbr.rel (0) target = $region5
  $region4: #{chatbot_forward.34} parent=0 // pred_region
    _
  $region5: #{chatbot_forward.34} parent=0 // pred_fallthru
    _
  // Predicated region
  $region6: #{chatbot_forward.34} parent=0 // pred_check
    _
  $region7: #{chatbot_forward.34} parent=0 // pred_check_branch
    %12 = sbr.rel (0) target = $region9
  $region8: #{chatbot_forward.34} parent=0 // pred_region
    _
  $region9: #{chatbot_forward.34} parent=0 // pred_fallthru
    _
  // Predicated region
  $region10: #{chatbot_forward.34} parent=0 // pred_check
    _
  $region11: #{chatbot_forward.34} parent=0 // pred_check_branch
    %14 = sbr.rel (0) target = $region13
  $region12: #{chatbot_forward.34} parent=0 // pred_region
    _
  $region13: #{chatbot_forward.34} parent=0 // pred_fallthru
    _
  // Predicated region
  $region14: #{chatbot_forward.34} parent=0 // pred_check
    _
  $region15: #{chatbot_forward.34} parent=0 // pred_check_branch
    %16 = sbr.rel (0) target = $region17
  $region16: #{chatbot_forward.34} parent=0 // pred_region
    _
  $region17: #{chatbot_forward.34} parent=0 // pred_fallthru
    _
  %v18 = vld [vmem:[%s1] sm:$0xff]
  %v19 = vld [vmem:[%s1 + $0x8] sm:$0xff]
  %v20 = vld [vmem:[%s0] sm:$0xff]
  %v21 = vld [vmem:[%s0 + $0x8] sm:$0xff]
  %v22 = vld [vmem:[%s2] sm:$0xf]
  %v23 = vld [vmem:[%s2 + $0x4] sm:$0xf]
  %v24 = vld [vmem:[%s2 + $0x8] sm:$0xf]
  %v25 = vld [vmem:[%s2 + $0xc] sm:$0xf]
  %v26 = vld [vmem:[%s2 + $0x10] sm:$0xf]
  %v27 = vld [vmem:[%s2 + $0x14] sm:$0xf]
  %v28 = vld [vmem:[%s2 + $0x18] sm:$0xf]
  %v29 = vld [vmem:[%s2 + $0x1c] sm:$0xf]
  %v30 = vld [vmem:[%s2 + $0x20] sm:$0xf]
  %v31 = vld [vmem:[%s2 + $0x24] sm:$0xf]
  %v32 = vld [vmem:[%s2 + $0x28] sm:$0xf]
  %v33 = vld [vmem:[%s2 + $0x2c] sm:$0xf]
  %v34 = vld [vmem:[%s2 + $0x30] sm:$0xf]
  %v35 = vld [vmem:[%s2 + $0x34] sm:$0xf]
  %v36 = vld [vmem:[%s2 + $0x38] sm:$0xf]
  %v37 = vld [vmem:[%s2 + $0x3c] sm:$0xf]
  %v38 = vld [vmem:[%s2 + $0x40] sm:$0xf]
  %v39 = vld [vmem:[%s2 + $0x44] sm:$0xf]
  %v40 = vld [vmem:[%s2 + $0x48] sm:$0xf]
  %v41 = vld [vmem:[%s2 + $0x4c] sm:$0xf]
  %v42 = vld [vmem:[%s2 + $0x50] sm:$0xf]
  %v43 = vld [vmem:[%s2 + $0x54] sm:$0xf]
  %v44 = vld [vmem:[%s2 + $0x58] sm:$0xf]
  %v45 = vld [vmem:[%s2 + $0x5c] sm:$0xf]
  %v46 = vld [vmem:[%s2 + $0x60] sm:$0xf]
  %v47 = vld [vmem:[%s2 + $0x64] sm:$0xf]
  %v48 = vld [vmem:[%s2 + $0x68] sm:$0xf]
  %v49 = vld [vmem:[%s2 + $0x6c] sm:$0xf]
  %v50 = vld [vmem:[%s2 + $0x70] sm:$0xf]
  %v51 = vld [vmem:[%s2 + $0x74] sm:$0xf]
  %v52 = vld [vmem:[%s2 + $0x78] sm:$0xf]
  %v53 = vld [vmem:[%s2 + $0x7c] sm:$0xf]
  %v56 = vunpack.c.l.b16 %v20
  %v57 = vunpack.c.h.b16 %v20
  %v58 = vunpack.c.l.b16 %v21
  %v59 = vunpack.c.h.b16 %v21
  %v60 = vpack.c.b16 %v58, %v56
  %v61 = vpack.c.b16 %v59, %v57
  %v96 = vunpack.c.l.b16 %v22
  %v97 = vunpack.c.l.b16 %v23
  %v98 = vunpack.c.l.b16 %v24
  %v99 = vunpack.c.l.b16 %v25
  %v100 = vunpack.c.l.b16 %v26
  %v101 = vunpack.c.l.b16 %v27
  %v102 = vunpack.c.l.b16 %v28
  %v103 = vunpack.c.l.b16 %v29
  %v104 = vunpack.c.l.b16 %v30
  %v105 = vunpack.c.l.b16 %v31
  %v106 = vunpack.c.l.b16 %v32
  %v107 = vunpack.c.l.b16 %v33
  %v108 = vunpack.c.l.b16 %v34
  %v109 = vunpack.c.l.b16 %v35
  %v110 = vunpack.c.l.b16 %v36
  %v111 = vunpack.c.l.b16 %v37
  %v112 = vunpack.c.l.b16 %v38
  %v113 = vunpack.c.l.b16 %v39
  %v114 = vunpack.c.l.b16 %v40
  %v115 = vunpack.c.l.b16 %v41
  %v116 = vunpack.c.l.b16 %v42
  %v117 = vunpack.c.l.b16 %v43
  %v118 = vunpack.c.l.b16 %v44
  %v119 = vunpack.c.l.b16 %v45
  %v120 = vunpack.c.l.b16 %v46
  %v121 = vunpack.c.l.b16 %v47
  %v122 = vunpack.c.l.b16 %v48
  %v123 = vunpack.c.l.b16 %v49
  %v124 = vunpack.c.l.b16 %v50
  %v125 = vunpack.c.l.b16 %v51
  %v126 = vunpack.c.l.b16 %v52
  %v127 = vunpack.c.l.b16 %v53
  %v128 = vpack.c.b16 %v97, %v96
  %v129 = vpack.c.b16 %v99, %v98
  %v130 = vpack.c.b16 %v101, %v100
  %v131 = vpack.c.b16 %v103, %v102
  %v132 = vpack.c.b16 %v105, %v104
  %v133 = vpack.c.b16 %v107, %v106
  %v134 = vpack.c.b16 %v109, %v108
  %v135 = vpack.c.b16 %v111, %v110
  %v136 = vpack.c.b16 %v113, %v112
  %v137 = vpack.c.b16 %v115, %v114
  %v138 = vpack.c.b16 %v117, %v116
  %v139 = vpack.c.b16 %v119, %v118
  %v140 = vpack.c.b16 %v121, %v120
  %v141 = vpack.c.b16 %v123, %v122
  %v142 = vpack.c.b16 %v125, %v124
  %v143 = vpack.c.b16 %v127, %v126
  %160 = vmatprep.subr.bf16.mxu0 0
  %161 = vmatpush1.bf16.msra.mxu0 %v128
  %162 = vmatprep.subr.bf16.mxu0 0
  %163 = vmatpush1.bf16.msra.mxu0 %v129
  %164 = vmatprep.subr.bf16.mxu0 0
  %165 = vmatpush1.bf16.msra.mxu0 %v130
  %166 = vmatprep.subr.bf16.mxu0 0
  %167 = vmatpush1.bf16.msra.mxu0 %v131
  %168 = vmatprep.subr.bf16.mxu0 0
  %169 = vmatpush1.bf16.msra.mxu0 %v132
  %170 = vmatprep.subr.bf16.mxu0 0
  %171 = vmatpush1.bf16.msra.mxu0 %v133
  %172 = vmatprep.subr.bf16.mxu0 0
  %173 = vmatpush1.bf16.msra.mxu0 %v134
  %174 = vmatprep.subr.bf16.mxu0 0
  %175 = vmatpush1.bf16.msra.mxu0 %v135
  %176 = vmatprep.subr.bf16.mxu0 0
  %177 = vmatpush1.bf16.msra.mxu0 %v136
  %178 = vmatprep.subr.bf16.mxu0 0
  %179 = vmatpush1.bf16.msra.mxu0 %v137
  %180 = vmatprep.subr.bf16.mxu0 0
  %181 = vmatpush1.bf16.msra.mxu0 %v138
  %182 = vmatprep.subr.bf16.mxu0 0
  %183 = vmatpush1.bf16.msra.mxu0 %v139
  %184 = vmatprep.subr.bf16.mxu0 0
  %185 = vmatpush1.bf16.msra.mxu0 %v140
  %186 = vmatprep.subr.bf16.mxu0 0
  %187 = vmatpush1.bf16.msra.mxu0 %v141
  %188 = vmatprep.subr.bf16.mxu0 0
  %189 = vmatpush1.bf16.msra.mxu0 %v142
  %190 = vmatprep.subr.bf16.mxu0 0
  %191 = vmatpush1.bf16.msra.mxu0 %v143
  %192 = vmatprep.mubr.bf16.mxu0 %v61
  %193 = vmatmul.mubr.bf16.gmra.mrb[0].mxu0 %v60
  %v194 = vpop.f32.mrb[0].mxu0
  %v195 = vadd.f32 0.0, %v194
  %v196 = vpop.f32.mrb[0].mxu0
  %v197 = vpop.f32.mrb[0].mxu0
  %v198 = vadd.f32 0.0, %v197
  %v199 = vpop.f32.mrb[0].mxu0
  %200 = vdwg.mxu0
  %v201 = vadd.f32 %v18, %v195
  %v202 = vadd.f32 %v19, %v198
  %v203 = vld [vmem:[%s3] sm:$0x1]
  %v205 = vlaneseq
  %v206 = vshrl.u32 %v205, 7
  %v207 = vsub.s32 0, %v206
  %v208 = vrot.slane %v203, %v207
  %v210 = vadd.f32 %v201, %v208
  %v211 = vadd.f32 %v202, %v208
  %212 = vst [vmem:[%s4] sm:$0xff] %v210
  %213 = vst [vmem:[%s4 + $0x8] sm:$0xff] %v211
  // Predicated region
  $region18: #{chatbot_forward.34} parent=0 // pred_check
    _
  $region19: #{chatbot_forward.34} parent=0 // pred_check_branch
    %215 = sbr.rel (0) target = $region21
  $region20: #{chatbot_forward.34} parent=0 // pred_region
    _
  $region21: #{chatbot_forward.34} parent=0 // pred_fallthru
    _
  // Predicated region
  $region22: #{chatbot_forward.34} parent=0 // pred_check
    _
  $region23: #{chatbot_forward.34} parent=0 // pred_check_branch
    %217 = sbr.rel (0) target = $region25
  $region24: #{chatbot_forward.34} parent=0 // pred_region
    _
  $region25: #{chatbot_forward.34} parent=0 // pred_fallthru
    _

// kernel: chatbot_forward.53
$region0: #{chatbot_forward.53}
  #allocation0 [shape = 'u32[]', space=smem, size = 0x4, offset = 0x4, fixed_abs, tag = 'smem constant byte address 0x4 - core index']
  #allocation1 [shape = 'u32[144,128]{1,0:T(1,128)}', space=vmem, size = 0x12000, scoped, tag = 'internal scratch']
  %s0 = inlined_call_operand.vmem [shape: f32[16,128], index: 0, kind: input, shape index: {}]
  %s1 = inlined_call_operand.vmem [shape: f32[1,128], index: 1, kind: input, shape index: {}]
  %s2 = inlined_call_operand.vmem [shape: f32[1,128], index: 2, kind: input, shape index: {}]
  %s3 = inlined_call_operand.vmem [shape: bf16[128,256], index: 3, kind: input, shape index: {}]
  %s4 = inlined_call_operand.vmem [shape: f32[1,256], index: 4, kind: input, shape index: {}]
  %s5 = inlined_call_operand.vmem [shape: bf16[16,256], index: 5, kind: output, shape index: {}]
  %s6 = sld [smem:[#allocation0]]
  $region30: #{chatbot_forward.53} parent=0
    _
  %s8 = ssub.s32 1, %s6
  %s9 = scalar_select 0, %s8, %s6
  // Predicated region
  $region2: #{chatbot_forward.53} parent=0 // pred_check
    _
  $region3: #{chatbot_forward.53} parent=0 // pred_check_branch
    %11 = sbr.rel (0) target = $region5
  $region4: #{chatbot_forward.53} parent=0 // pred_region
    _
  $region5: #{chatbot_forward.53} parent=0 // pred_fallthru
    _
  // Predicated region
  $region6: #{chatbot_forward.53} parent=0 // pred_check
    _
  $region7: #{chatbot_forward.53} parent=0 // pred_check_branch
    %13 = sbr.rel (0) target = $region9
  $region8: #{chatbot_forward.53} parent=0 // pred_region
    _
  $region9: #{chatbot_forward.53} parent=0 // pred_fallthru
    _
  // Predicated region
  $region10: #{chatbot_forward.53} parent=0 // pred_check
    _
  $region11: #{chatbot_forward.53} parent=0 // pred_check_branch
    %15 = sbr.rel (0) target = $region13
  $region12: #{chatbot_forward.53} parent=0 // pred_region
    _
  $region13: #{chatbot_forward.53} parent=0 // pred_fallthru
    _
  // Predicated region
  $region14: #{chatbot_forward.53} parent=0 // pred_check
    _
  $region15: #{chatbot_forward.53} parent=0 // pred_check_branch
    %17 = sbr.rel (0) target = $region17
  $region16: #{chatbot_forward.53} parent=0 // pred_region
    _
  $region17: #{chatbot_forward.53} parent=0 // pred_fallthru
    _
  // Predicated region
  $region18: #{chatbot_forward.53} parent=0 // pred_check
    _
  $region19: #{chatbot_forward.53} parent=0 // pred_check_branch
    %19 = sbr.rel (0) target = $region21
  $region20: #{chatbot_forward.53} parent=0 // pred_region
    _
  $region21: #{chatbot_forward.53} parent=0 // pred_fallthru
    _
  %v21 = vld [vmem:[%s0] sm:$0xff]
  %v22 = vld [vmem:[%s0 + $0x8] sm:$0xff]
  %v23 = vld [vmem:[%s1] sm:$0x1]
  %v24 = vld [vmem:[%s2] sm:$0x1]
  %25 = vadd.xlane.f32.xlu0 %v21
  %v26 = vpop.xlane.xlu0 %25
  %27 = vadd.xlane.f32.xlu0 %v22
  %v28 = vpop.xlane.xlu0 %27
  %v29 = vrcp.pop 128.0
  %v30 = vmul.f32 %v26, %v29
  %v31 = vmul.f32 %v28, %v29
  %v32 = vsub.f32 %v21, %v30
  %v33 = vsub.f32 %v22, %v31
  %v34 = vmul.f32 %v32, %v32
  %v35 = vmul.f32 %v33, %v33
  %36 = vadd.xlane.f32.xlu0 %v34
  %v37 = vpop.xlane.xlu0 %36
  %38 = vadd.xlane.f32.xlu0 %v35
  %v39 = vpop.xlane.xlu0 %38
  %v40 = vmul.f32 %v37, %v29
  %v41 = vmul.f32 %v39, %v29
  %v42 = vadd.f32 %v40, 1e-08
  %v43 = vadd.f32 %v41, 1e-08
  %v44 = vrsqrt.pop %v42
  %v45 = vrsqrt.pop %v43
  %v46 = vmul.f32 %v32, %v44
  %v47 = vmul.f32 %v33, %v45
  %v49 = vlaneseq
  %v50 = vshrl.u32 %v49, 7
  %v51 = vsub.s32 0, %v50
  %v52 = vrot.slane %v23, %v51
  %v54 = vmul.f32 %v46, %v52
  %v55 = vmul.f32 %v47, %v52
  %v57 = vlaneseq
  %v58 = vshrl.u32 %v57, 7
  %v59 = vsub.s32 0, %v58
  %v60 = vrot.slane %v24, %v59
  %v62 = vadd.f32 %v54, %v60
  %v63 = vadd.f32 %v55, %v60
  %v64 = vpack.c.bf16 %v63, %v62
  %v65 = vld [vmem:[%s3] sm:$0xff]
  %v66 = vld [vmem:[%s3 + $0x8] sm:$0xff]
  %v67 = vld [vmem:[%s3 + $0x10] sm:$0xff]
  %v68 = vld [vmem:[%s3 + $0x18] sm:$0xff]
  %v69 = vld [vmem:[%s3 + $0x20] sm:$0xff]
  %v70 = vld [vmem:[%s3 + $0x28] sm:$0xff]
  %v71 = vld [vmem:[%s3 + $0x30] sm:$0xff]
  %v72 = vld [vmem:[%s3 + $0x38] sm:$0xff]
  %v73 = vld [vmem:[%s3 + $0x40] sm:$0xff]
  %v74 = vld [vmem:[%s3 + $0x48] sm:$0xff]
  %v75 = vld [vmem:[%s3 + $0x50] sm:$0xff]
  %v76 = vld [vmem:[%s3 + $0x58] sm:$0xff]
  %v77 = vld [vmem:[%s3 + $0x60] sm:$0xff]
  %v78 = vld [vmem:[%s3 + $0x68] sm:$0xff]
  %v79 = vld [vmem:[%s3 + $0x70] sm:$0xff]
  %v80 = vld [vmem:[%s3 + $0x78] sm:$0xff]
  %v81 = vld [vmem:[%s4] sm:$0x3]
  %v83 = vlaneseq
  %v84 = vshrl.u32 %v83, 7
  %v85 = vsub.s32 0, %v84
  %v86 = vrot.slane %v81, %v85
  %v87 = vlaneseq
  %v88 = vshrl.u32 %v87, 7
  %v89 = vsub.s32 1, %v88
  %v90 = vrot.slane %v81, %v89
  %v109 = vunpack.c.l.b16 %v65
  %v110 = vunpack.c.h.b16 %v65
  %v111 = vunpack.c.l.b16 %v66
  %v112 = vunpack.c.h.b16 %v66
  %v113 = vunpack.c.l.b16 %v67
  %v114 = vunpack.c.h.b16 %v67
  %v115 = vunpack.c.l.b16 %v68
  %v116 = vunpack.c.h.b16 %v68
  %v117 = vunpack.c.l.b16 %v69
  %v118 = vunpack.c.h.b16 %v69
  %v119 = vunpack.c.l.b16 %v70
  %v120 = vunpack.c.h.b16 %v70
  %v121 = vunpack.c.l.b16 %v71
  %v122 = vunpack.c.h.b16 %v71
  %v123 = vunpack.c.l.b16 %v72
  %v124 = vunpack.c.h.b16 %v72
  %v125 = vunpack.c.l.b16 %v73
  %v126 = vunpack.c.h.b16 %v73
  %v127 = vunpack.c.l.b16 %v74
  %v128 = vunpack.c.h.b16 %v74
  %v129 = vunpack.c.l.b16 %v75
  %v130 = vunpack.c.h.b16 %v75
  %v131 = vunpack.c.l.b16 %v76
  %v132 = vunpack.c.h.b16 %v76
  %v133 = vunpack.c.l.b16 %v77
  %v134 = vunpack.c.h.b16 %v77
  %v135 = vunpack.c.l.b16 %v78
  %v136 = vunpack.c.h.b16 %v78
  %v137 = vunpack.c.l.b16 %v79
  %v138 = vunpack.c.h.b16 %v79
  %v139 = vunpack.c.l.b16 %v80
  %v140 = vunpack.c.h.b16 %v80
  %v141 = vpack.c.b16 %v111, %v109
  %v142 = vpack.c.b16 %v112, %v110
  %v143 = vpack.c.b16 %v115, %v113
  %v144 = vpack.c.b16 %v116, %v114
  %v145 = vpack.c.b16 %v119, %v117
  %v146 = vpack.c.b16 %v120, %v118
  %v147 = vpack.c.b16 %v123, %v121
  %v148 = vpack.c.b16 %v124, %v122
  %v149 = vpack.c.b16 %v127, %v125
  %v150 = vpack.c.b16 %v128, %v126
  %v151 = vpack.c.b16 %v131, %v129
  %v152 = vpack.c.b16 %v132, %v130
  %v153 = vpack.c.b16 %v135, %v133
  %v154 = vpack.c.b16 %v136, %v134
  %v155 = vpack.c.b16 %v139, %v137
  %v156 = vpack.c.b16 %v140, %v138
  %173 = vmatprep.subr.bf16.mxu0 %v142
  %174 = vmatpush1.bf16.msra.mxu0 %v141
  %175 = vmatprep.subr.bf16.mxu0 %v144
  %176 = vmatpush1.bf16.msra.mxu0 %v143
  %177 = vmatprep.subr.bf16.mxu0 %v146
  %178 = vmatpush1.bf16.msra.mxu0 %v145
  %179 = vmatprep.subr.bf16.mxu0 %v148
  %180 = vmatpush1.bf16.msra.mxu0 %v147
  %181 = vmatprep.subr.bf16.mxu0 %v150
  %182 = vmatpush1.bf16.msra.mxu0 %v149
  %183 = vmatprep.subr.bf16.mxu0 %v152
  %184 = vmatpush1.bf16.msra.mxu0 %v151
  %185 = vmatprep.subr.bf16.mxu0 %v154
  %186 = vmatpush1.bf16.msra.mxu0 %v153
  %187 = vmatprep.subr.bf16.mxu0 %v156
  %188 = vmatpush1.bf16.msra.mxu0 %v155
  %189 = vmatprep.subr.bf16.mxu0 0
  %190 = vmatpush1.bf16.msra.mxu0 0
  %191 = vmatprep.subr.bf16.mxu0 0
  %192 = vmatpush1.bf16.msra.mxu0 0
  %193 = vmatprep.subr.bf16.mxu0 0
  %194 = vmatpush1.bf16.msra.mxu0 0
  %195 = vmatprep.subr.bf16.mxu0 0
  %196 = vmatpush1.bf16.msra.mxu0 0
  %197 = vmatprep.subr.bf16.mxu0 0
  %198 = vmatpush1.bf16.msra.mxu0 0
  %199 = vmatprep.subr.bf16.mxu0 0
  %200 = vmatpush1.bf16.msra.mxu0 0
  %201 = vmatprep.subr.bf16.mxu0 0
  %202 = vmatpush1.bf16.msra.mxu0 0
  %203 = vmatprep.subr.bf16.mxu0 0
  %204 = vmatpush1.bf16.msra.mxu0 0
  %205 = vmatprep.mubr.bf16.mxu0 0
  %206 = vmatmul.mubr.bf16.gmra.mrb[0].mxu0 %v64
  %v207 = vpop.f32.mrb[0].mxu0
  %v208 = vadd.f32 %v86, %v207
  %v209 = vpop.f32.mrb[0].mxu0
  %v210 = vadd.f32 %v90, %v209
  %v211 = vpop.f32.mrb[0].mxu0
  %v212 = vadd.f32 %v86, %v211
  %v213 = vpop.f32.mrb[0].mxu0
  %v214 = vadd.f32 %v90, %v213
  %215 = vdwg.mxu0
  %v216 = vpack.c.bf16 %v212, %v208
  %v217 = vpack.c.bf16 %v214, %v210
  %v220 = vunpack.c.l.b16 %v216
  %v221 = vunpack.c.l.b16 %v217
  %v222 = vunpack.c.h.b16 %v216
  %v223 = vunpack.c.h.b16 %v217
  %v224 = vpack.c.b16 %v221, %v220
  %v225 = vpack.c.b16 %v223, %v222
  %228 = vst [vmem:[%s5] sm:$0xff] %v224
  %229 = vst [vmem:[%s5 + $0x8] sm:$0xff] %v225
  // Predicated region
  $region22: #{chatbot_forward.53} parent=0 // pred_check
    _
  $region23: #{chatbot_forward.53} parent=0 // pred_check_branch
    %231 = sbr.rel (0) target = $region25
  $region24: #{chatbot_forward.53} parent=0 // pred_region
    _
  $region25: #{chatbot_forward.53} parent=0 // pred_fallthru
    _
  // Predicated region
  $region26: #{chatbot_forward.53} parent=0 // pred_check
    _
  $region27: #{chatbot_forward.53} parent=0 // pred_check_branch
    %233 = sbr.rel (0) target = $region29
  $region28: #{chatbot_forward.53} parent=0 // pred_region
    _
  $region29: #{chatbot_forward.53} parent=0 // pred_fallthru
    _

// kernel: chatbot_forward.43
$region0: #{chatbot_forward.43}
  #allocation0 [shape = 'u32[]', space=smem, size = 0x4, offset = 0x4, fixed_abs, tag = 'smem constant byte address 0x4 - core index']
  #allocation1 [shape = 'u32[144,128]{1,0:T(1,128)}', space=vmem, size = 0x12000, scoped, tag = 'internal scratch']
  %s0 = inlined_call_operand.vmem [shape: f32[16,128], index: 0, kind: input, shape index: {}]
  %s1 = inlined_call_operand.vmem [shape: f32[1,128], index: 1, kind: input, shape index: {}]
  %s2 = inlined_call_operand.vmem [shape: f32[1,128], index: 2, kind: input, shape index: {}]
  %s3 = inlined_call_operand.vmem [shape: bf16[128,128], index: 3, kind: input, shape index: {}]
  %s4 = inlined_call_operand.vmem [shape: f32[1,128], index: 4, kind: input, shape index: {}]
  %s5 = inlined_call_operand.vmem [shape: bf16[16,128], index: 5, kind: output, shape index: {}]
  %s6 = sld [smem:[#allocation0]]
  $region30: #{chatbot_forward.43} parent=0
    _
  %s8 = ssub.s32 1, %s6
  %s9 = scalar_select 0, %s8, %s6
  // Predicated region
  $region2: #{chatbot_forward.43} parent=0 // pred_check
    _
  $region3: #{chatbot_forward.43} parent=0 // pred_check_branch
    %11 = sbr.rel (0) target = $region5
  $region4: #{chatbot_forward.43} parent=0 // pred_region
    _
  $region5: #{chatbot_forward.43} parent=0 // pred_fallthru
    _
  // Predicated region
  $region6: #{chatbot_forward.43} parent=0 // pred_check
    _
  $region7: #{chatbot_forward.43} parent=0 // pred_check_branch
    %13 = sbr.rel (0) target = $region9
  $region8: #{chatbot_forward.43} parent=0 // pred_region
    _
  $region9: #{chatbot_forward.43} parent=0 // pred_fallthru
    _
  // Predicated region
  $region10: #{chatbot_forward.43} parent=0 // pred_check
    _
  $region11: #{chatbot_forward.43} parent=0 // pred_check_branch
    %15 = sbr.rel (0) target = $region13
  $region12: #{chatbot_forward.43} parent=0 // pred_region
    _
  $region13: #{chatbot_forward.43} parent=0 // pred_fallthru
    _
  // Predicated region
  $region14: #{chatbot_forward.43} parent=0 // pred_check
    _
  $region15: #{chatbot_forward.43} parent=0 // pred_check_branch
    %17 = sbr.rel (0) target = $region17
  $region16: #{chatbot_forward.43} parent=0 // pred_region
    _
  $region17: #{chatbot_forward.43} parent=0 // pred_fallthru
    _
  // Predicated region
  $region18: #{chatbot_forward.43} parent=0 // pred_check
    _
  $region19: #{chatbot_forward.43} parent=0 // pred_check_branch
    %19 = sbr.rel (0) target = $region21
  $region20: #{chatbot_forward.43} parent=0 // pred_region
    _
  $region21: #{chatbot_forward.43} parent=0 // pred_fallthru
    _
  %v21 = vld [vmem:[%s0] sm:$0xff]
  %v22 = vld [vmem:[%s0 + $0x8] sm:$0xff]
  %v23 = vld [vmem:[%s1] sm:$0x1]
  %v24 = vld [vmem:[%s2] sm:$0x1]
  %25 = vadd.xlane.f32.xlu0 %v21
  %v26 = vpop.xlane.xlu0 %25
  %27 = vadd.xlane.f32.xlu0 %v22
  %v28 = vpop.xlane.xlu0 %27
  %v29 = vrcp.pop 128.0
  %v30 = vmul.f32 %v26, %v29
  %v31 = vmul.f32 %v28, %v29
  %v32 = vsub.f32 %v21, %v30
  %v33 = vsub.f32 %v22, %v31
  %v34 = vmul.f32 %v32, %v32
  %v35 = vmul.f32 %v33, %v33
  %36 = vadd.xlane.f32.xlu0 %v34
  %v37 = vpop.xlane.xlu0 %36
  %38 = vadd.xlane.f32.xlu0 %v35
  %v39 = vpop.xlane.xlu0 %38
  %v40 = vmul.f32 %v37, %v29
  %v41 = vmul.f32 %v39, %v29
  %v42 = vadd.f32 %v40, 1e-08
  %v43 = vadd.f32 %v41, 1e-08
  %v44 = vrsqrt.pop %v42
  %v45 = vrsqrt.pop %v43
  %v46 = vmul.f32 %v32, %v44
  %v47 = vmul.f32 %v33, %v45
  %v49 = vlaneseq
  %v50 = vshrl.u32 %v49, 7
  %v51 = vsub.s32 0, %v50
  %v52 = vrot.slane %v23, %v51
  %v54 = vmul.f32 %v46, %v52
  %v55 = vmul.f32 %v47, %v52
  %v57 = vlaneseq
  %v58 = vshrl.u32 %v57, 7
  %v59 = vsub.s32 0, %v58
  %v60 = vrot.slane %v24, %v59
  %v62 = vadd.f32 %v54, %v60
  %v63 = vadd.f32 %v55, %v60
  %v64 = vpack.c.bf16 %v63, %v62
  %v65 = vld [vmem:[%s3] sm:$0xf]
  %v66 = vld [vmem:[%s3 + $0x4] sm:$0xf]
  %v67 = vld [vmem:[%s3 + $0x8] sm:$0xf]
  %v68 = vld [vmem:[%s3 + $0xc] sm:$0xf]
  %v69 = vld [vmem:[%s3 + $0x10] sm:$0xf]
  %v70 = vld [vmem:[%s3 + $0x14] sm:$0xf]
  %v71 = vld [vmem:[%s3 + $0x18] sm:$0xf]
  %v72 = vld [vmem:[%s3 + $0x1c] sm:$0xf]
  %v73 = vld [vmem:[%s3 + $0x20] sm:$0xf]
  %v74 = vld [vmem:[%s3 + $0x24] sm:$0xf]
  %v75 = vld [vmem:[%s3 + $0x28] sm:$0xf]
  %v76 = vld [vmem:[%s3 + $0x2c] sm:$0xf]
  %v77 = vld [vmem:[%s3 + $0x30] sm:$0xf]
  %v78 = vld [vmem:[%s3 + $0x34] sm:$0xf]
  %v79 = vld [vmem:[%s3 + $0x38] sm:$0xf]
  %v80 = vld [vmem:[%s3 + $0x3c] sm:$0xf]
  %v81 = vld [vmem:[%s4] sm:$0x1]
  %v83 = vlaneseq
  %v84 = vshrl.u32 %v83, 7
  %v85 = vsub.s32 0, %v84
  %v86 = vrot.slane %v81, %v85
  %v104 = vunpack.c.l.b16 %v65
  %v105 = vunpack.c.l.b16 %v66
  %v106 = vunpack.c.l.b16 %v67
  %v107 = vunpack.c.l.b16 %v68
  %v108 = vunpack.c.l.b16 %v69
  %v109 = vunpack.c.l.b16 %v70
  %v110 = vunpack.c.l.b16 %v71
  %v111 = vunpack.c.l.b16 %v72
  %v112 = vunpack.c.l.b16 %v73
  %v113 = vunpack.c.l.b16 %v74
  %v114 = vunpack.c.l.b16 %v75
  %v115 = vunpack.c.l.b16 %v76
  %v116 = vunpack.c.l.b16 %v77
  %v117 = vunpack.c.l.b16 %v78
  %v118 = vunpack.c.l.b16 %v79
  %v119 = vunpack.c.l.b16 %v80
  %v120 = vpack.c.b16 %v105, %v104
  %v121 = vpack.c.b16 %v107, %v106
  %v122 = vpack.c.b16 %v109, %v108
  %v123 = vpack.c.b16 %v111, %v110
  %v124 = vpack.c.b16 %v113, %v112
  %v125 = vpack.c.b16 %v115, %v114
  %v126 = vpack.c.b16 %v117, %v116
  %v127 = vpack.c.b16 %v119, %v118
  %136 = vmatprep.subr.bf16.mxu0 0
  %137 = vmatpush1.bf16.msra.mxu0 %v120
  %138 = vmatprep.subr.bf16.mxu0 0
  %139 = vmatpush1.bf16.msra.mxu0 %v121
  %140 = vmatprep.subr.bf16.mxu0 0
  %141 = vmatpush1.bf16.msra.mxu0 %v122
  %142 = vmatprep.subr.bf16.mxu0 0
  %143 = vmatpush1.bf16.msra.mxu0 %v123
  %144 = vmatprep.subr.bf16.mxu0 0
  %145 = vmatpush1.bf16.msra.mxu0 %v124
  %146 = vmatprep.subr.bf16.mxu0 0
  %147 = vmatpush1.bf16.msra.mxu0 %v125
  %148 = vmatprep.subr.bf16.mxu0 0
  %149 = vmatpush1.bf16.msra.mxu0 %v126
  %150 = vmatprep.subr.bf16.mxu0 0
  %151 = vmatpush1.bf16.msra.mxu0 %v127
  %152 = vmatprep.subr.bf16.mxu0 0
  %153 = vmatpush1.bf16.msra.mxu0 0
  %154 = vmatprep.subr.bf16.mxu0 0
  %155 = vmatpush1.bf16.msra.mxu0 0
  %156 = vmatprep.subr.bf16.mxu0 0
  %157 = vmatpush1.bf16.msra.mxu0 0
  %158 = vmatprep.subr.bf16.mxu0 0
  %159 = vmatpush1.bf16.msra.mxu0 0
  %160 = vmatprep.subr.bf16.mxu0 0
  %161 = vmatpush1.bf16.msra.mxu0 0
  %162 = vmatprep.subr.bf16.mxu0 0
  %163 = vmatpush1.bf16.msra.mxu0 0
  %164 = vmatprep.subr.bf16.mxu0 0
  %165 = vmatpush1.bf16.msra.mxu0 0
  %166 = vmatprep.subr.bf16.mxu0 0
  %167 = vmatpush1.bf16.msra.mxu0 0
  %168 = vmatprep.mubr.bf16.mxu0 0
  %169 = vmatmul.mubr.bf16.gmra.mrb[0].mxu0 %v64
  %v170 = vpop.f32.mrb[0].mxu0
  %v171 = vadd.f32 %v86, %v170
  %v172 = vpop.f32.mrb[0].mxu0
  %v173 = vpop.f32.mrb[0].mxu0
  %v174 = vadd.f32 %v86, %v173
  %v175 = vpop.f32.mrb[0].mxu0
  %176 = vdwg.mxu0
  %v177 = vpack.c.bf16 %v174, %v171
  %v179 = vunpack.c.l.b16 %v177
  %v180 = vunpack.c.h.b16 %v177
  %v181 = vpack.c.b16 %v179, %v179
  %v182 = vpack.c.b16 %v180, %v180
  %185 = vst [vmem:[%s5] sm:$0xf] %v181
  %186 = vst [vmem:[%s5 + $0x4] sm:$0xf] %v182
  // Predicated region
  $region22: #{chatbot_forward.43} parent=0 // pred_check
    _
  $region23: #{chatbot_forward.43} parent=0 // pred_check_branch
    %188 = sbr.rel (0) target = $region25
  $region24: #{chatbot_forward.43} parent=0 // pred_region
    _
  $region25: #{chatbot_forward.43} parent=0 // pred_fallthru
    _
  // Predicated region
  $region26: #{chatbot_forward.43} parent=0 // pred_check
    _
  $region27: #{chatbot_forward.43} parent=0 // pred_check_branch
    %190 = sbr.rel (0) target = $region29
  $region28: #{chatbot_forward.43} parent=0 // pred_region
    _
  $region29: #{chatbot_forward.43} parent=0 // pred_fallthru
    _

// kernel: chatbot_forward.41
$region0: #{chatbot_forward.41}
  #allocation0 [shape = 'u32[]', space=smem, size = 0x4, offset = 0x4, fixed_abs, tag = 'smem constant byte address 0x4 - core index']
  #allocation1 [shape = 'u32[144,128]{1,0:T(1,128)}', space=vmem, size = 0x12000, scoped, tag = 'internal scratch']
  %s0 = inlined_call_operand.vmem [shape: bf16[2,8,384], index: 0, kind: input, shape index: {}, may-alias: {0,1}]
  %s1 = inlined_call_operand.vmem [shape: bf16[2,8,384], index: 1, kind: input, shape index: {}, may-alias: {0,1}]
  %s2 = inlined_call_operand.vmem [shape: bf16[2,8,128], index: 2, kind: output, shape index: {}]
  %s3 = sld [smem:[#allocation0]]
  $region41: #{chatbot_forward.41} parent=0
    _
  %s5 = ssub.s32 1, %s3
  %s6 = scalar_select 0, %s5, %s3
  loop: start=0, step=1, limit=4
  $region2: #{chatbot_forward.41} parent=0 // loop_pre_header
    _
  $region3: #{chatbot_forward.41} parent=0 // loop_header
    %s8 = sphi 0, %s12
    %p9 = scmp.ge.s32.totalorder %s8, 4
    %s15 = sphi 0, %s27
    %s16 = sphi 0, %s23
    %s17 = sphi 0, %s15
    %s18 = sphi 0, %s16
    %s19 = sphi 0, %s17
    %s20 = sphi 0, %s18
    %s32 = sphi 0, %s34
    %s35 = sphi 0, %s32
    %s36 = sphi 0, %s35
    %s52 = sphi 0, %s36
    %s58 = sphi 0, %s60
    %s61 = sphi 0, %s58
    %s62 = sphi 0, %s61
    %s78 = sphi 0, %s62
    %s86 = sphi 0, %s88
    %s89 = sphi 0, %s86
    %s90 = sphi 0, %s89
    %s106 = sphi 0, %s90
  $region4: #{chatbot_forward.41} parent=0 // loop_header_branch
    %11 = sbr.rel (%p9) target = $region8
  $region5: #{chatbot_forward.41} parent=0 // loop_body
    %s13 = ssub.s32 %s8, 1
    %s14 = ssub.s32 %s8, 2
    %s21 = sadd.s32 1, %s16
    %p22 = scmp.ge.s32.totalorder %s21, 1
    %s23 = scalar_select %p22, 0, %s21
    %s24 = sadd.s32 1, %s15
    %s25 = scalar_select %p22, %s24, %s15
    %p26 = scmp.ge.s32.totalorder %s25, 2
    %s27 = scalar_select %p26, 0, %s25
    %s28 = ssub.s32 %s15, %s27
    %s29 = ssub.s32 %s16, %s23
    %s30 = sor.u32 %s28, %s29
    %p31 = scmp.eq.s32.totalorder %s30, 0
    %s33 = sadd.s32 %s32, 1
    %s34 = scalar_select %p31, %s32, %s33
    %p37 = pneg %p31
    %p38 = scmp.eq.s32.totalorder %s8, 1
    %p39 = por %p37, %p38
    %p40 = scmp.ne.s32.totalorder %s32, %s35
    %p41 = scmp.eq.s32.totalorder %s8, 0
    %p42 = por %p40, %p41
    %p43 = scmp.ne.s32.totalorder %s32, %s35
    %p44 = scmp.eq.s32.totalorder %s13, 1
    %p45 = por %p43, %p44
    %p46 = scmp.ne.s32.totalorder %s35, %s36
    %p47 = scmp.eq.s32.totalorder %s13, 0
    %p48 = por %p46, %p47
    %p49 = scmp.ne.s32.totalorder %s35, %s36
    %p50 = scmp.eq.s32.totalorder %s14, 1
    %p51 = por %p49, %p50
    %p53 = scmp.ne.s32.totalorder %s36, %s52
    %p54 = scmp.eq.s32.totalorder %s14, 0
    %p55 = por %p53, %p54
    %s56 = ssub.s32 %s15, %s27
    %p57 = scmp.eq.s32.totalorder %s56, 0
    %s59 = sadd.s32 %s58, 1
    %s60 = scalar_select %p57, %s58, %s59
    %p63 = pneg %p57
    %p64 = scmp.eq.s32.totalorder %s8, 1
    %p65 = por %p63, %p64
    %p66 = scmp.ne.s32.totalorder %s58, %s61
    %p67 = scmp.eq.s32.totalorder %s8, 0
    %p68 = por %p66, %p67
    %p69 = scmp.ne.s32.totalorder %s58, %s61
    %p70 = scmp.eq.s32.totalorder %s13, 1
    %p71 = por %p69, %p70
    %p72 = scmp.ne.s32.totalorder %s61, %s62
    %p73 = scmp.eq.s32.totalorder %s13, 0
    %p74 = por %p72, %p73
    %p75 = scmp.ne.s32.totalorder %s61, %s62
    %p76 = scmp.eq.s32.totalorder %s14, 1
    %p77 = por %p75, %p76
    %p79 = scmp.ne.s32.totalorder %s62, %s78
    %p80 = scmp.eq.s32.totalorder %s14, 0
    %p81 = por %p79, %p80
    %s82 = ssub.s32 %s15, %s27
    %s83 = ssub.s32 %s16, %s23
    %s84 = sor.u32 %s82, %s83
    %p85 = scmp.eq.s32.totalorder %s84, 0
    %s87 = sadd.s32 %s86, 1
    %s88 = scalar_select %p85, %s86, %s87
    %p91 = pneg %p85
    %p92 = scmp.eq.s32.totalorder %s8, 1
    %p93 = por %p91, %p92
    %p94 = scmp.ne.s32.totalorder %s86, %s89
    %p95 = scmp.eq.s32.totalorder %s8, 0
    %p96 = por %p94, %p95
    %p97 = scmp.ne.s32.totalorder %s86, %s89
    %p98 = scmp.eq.s32.totalorder %s13, 1
    %p99 = por %p97, %p98
    %p100 = scmp.ne.s32.totalorder %s89, %s90
    %p101 = scmp.eq.s32.totalorder %s13, 0
    %p102 = por %p100, %p101
    %p103 = scmp.ne.s32.totalorder %s89, %s90
    %p104 = scmp.eq.s32.totalorder %s14, 1
    %p105 = por %p103, %p104
    %p107 = scmp.ne.s32.totalorder %s90, %s106
    %p108 = scmp.eq.s32.totalorder %s14, 0
    %p109 = por %p107, %p108
    %p110 = scmp.le.s32.totalorder 1, %s8
    %p111 = scmp.lt.s32.totalorder %s8, 3
    %p112 = pnand %p110, %p111
    %p113 = pneg %p112
    // Predicated region
    $region9: #{chatbot_forward.41} parent=5 // pred_check
      _
    $region10: #{chatbot_forward.41} parent=5 // pred_check_branch
      %115 = sbr.rel (%p112) target = $region12
    $region11: #{chatbot_forward.41} parent=5 // pred_region
      %s116 = ssub.s32 %s8, 1
    $region12: #{chatbot_forward.41} parent=5 // pred_fallthru
      _
    %p117 = scmp.lt.s32.totalorder %s8, 2
    // Predicated region
    $region13: #{chatbot_forward.41} parent=5 // pred_check
      %p118 = pneg %p117
    $region14: #{chatbot_forward.41} parent=5 // pred_check_branch
      %120 = sbr.rel (%p118) target = $region16
    $region15: #{chatbot_forward.41} parent=5 // pred_region
      // Predicated region
      $region17: #{chatbot_forward.41} parent=15 // pred_check
        %p121 = pneg %p42
      $region18: #{chatbot_forward.41} parent=15 // pred_check_branch
        %123 = sbr.rel (%p121) target = $region20
      $region19: #{chatbot_forward.41} parent=15 // pred_region
        %p124 = scmp.lt.s32.totalorder %s15, 1
        %s125 = scalar_select %p124, %s15, 1
        %p126 = scmp.lt.s32.totalorder %s16, 0
        %s127 = scalar_select %p126, %s16, 0
        %s128 = smul.addr %s127, 3
        %s129 = smul.addr %s125, 3
        %s130 = sadd.s32 %s128, %s129
        %s131 = smul.addr %s130, 4
        %s132 = scalar_lea.vmem %s0, %s131
      $region20: #{chatbot_forward.41} parent=15 // pred_fallthru
        _
      // Predicated region
      $region21: #{chatbot_forward.41} parent=15 // pred_check
        %p133 = pneg %p68
      $region22: #{chatbot_forward.41} parent=15 // pred_check_branch
        %135 = sbr.rel (%p133) target = $region24
      $region23: #{chatbot_forward.41} parent=15 // pred_region
        %p136 = scmp.lt.s32.totalorder %s15, 1
        %s137 = scalar_select %p136, %s15, 1
        %s138 = smul.addr %s137, 3
        %s139 = smul.addr %s138, 4
        %s140 = scalar_lea.vmem %s1, %s139
      $region24: #{chatbot_forward.41} parent=15 // pred_fallthru
        _
    $region16: #{chatbot_forward.41} parent=5 // pred_fallthru
      _
    %p141 = scmp.le.s32.totalorder 1, %s8
    %p142 = scmp.lt.s32.totalorder %s8, 3
    %p143 = pnand %p141, %p142
    %p144 = pneg %p143
    // Predicated region
    $region25: #{chatbot_forward.41} parent=5 // pred_check
      _
    $region26: #{chatbot_forward.41} parent=5 // pred_check_branch
      %146 = sbr.rel (%p143) target = $region28
    $region27: #{chatbot_forward.41} parent=5 // pred_region
      %s147 = ssub.s32 %s8, 1
      %p148 = scmp.lt.s32.totalorder %s17, 1
      %s149 = scalar_select %p148, %s17, 1
      %p150 = scmp.lt.s32.totalorder %s18, 0
      %s151 = scalar_select %p150, %s18, 0
      %s152 = smul.addr %s151, 3
      %s153 = smul.addr %s149, 3
      %s154 = sadd.s32 %s152, %s153
      %s155 = smul.addr %s154, 4
      %s156 = scalar_lea.vmem %s0, %s155
      %p157 = pneg %p48
      %p158 = pneg %p45
      %p159 = scmp.lt.s32.totalorder %s17, 1
      %s160 = scalar_select %p159, %s17, 1
      %s161 = smul.addr %s160, 3
      %s162 = smul.addr %s161, 4
      %s163 = scalar_lea.vmem %s1, %s162
      %p164 = pneg %p74
      %p165 = pneg %p71
      %p166 = pneg %p102
      %p167 = pneg %p99
      %p168 = scmp.lt.s32.totalorder %s17, 1
      %s169 = scalar_select %p168, %s17, 1
      %p170 = scmp.lt.s32.totalorder %s18, 0
      %s171 = scalar_select %p170, %s18, 0
      %s172 = sadd.s32 %s171, %s169
      %s173 = smul.addr %s172, 4
      %s174 = scalar_lea.vmem %s2, %s173
      %p175 = scmp.lt.s32.totalorder %s17, 1
      %s176 = scalar_select %p175, %s17, 1
      %p177 = scmp.lt.s32.totalorder %s18, 0
      %s178 = scalar_select %p177, %s18, 0
      %s179 = smul.addr %s178, 3
      %s180 = smul.addr %s176, 3
      %s181 = sadd.s32 %s179, %s180
      %s182 = smul.addr %s181, 4
      %s183 = scalar_lea.vmem %s0, %s182
      %p184 = scmp.lt.s32.totalorder %s17, 1
      %s185 = scalar_select %p184, %s17, 1
      %s186 = smul.addr %s185, 3
      %s187 = smul.addr %s186, 4
      %s188 = scalar_lea.vmem %s1, %s187
      %p189 = scmp.lt.s32.totalorder %s17, 1
      %s190 = scalar_select %p189, %s17, 1
      %p191 = scmp.lt.s32.totalorder %s18, 0
      %s192 = scalar_select %p191, %s18, 0
      %s193 = sadd.s32 %s192, %s190
      %s194 = smul.addr %s193, 4
      %s195 = scalar_lea.vmem %s2, %s194
      %v197 = vld [vmem:[%s183] sm:$0xf]
      %v198 = vld [vmem:[%s188 + $0x4] sm:$0xf]
      %v199 = vld [vmem:[%s188 + $0x8] sm:$0xf]
      %s200 = smul.u32 %s18, 8
      %202 = vrot.lane.b32.xlu0 %v197, 112
      %v203 = vpop.permute.xlu0 %202
      %205 = vrot.lane.b32.xlu0 %v197, 96
      %v206 = vpop.permute.xlu0 %205
      %208 = vrot.lane.b32.xlu0 %v197, 80
      %v209 = vpop.permute.xlu0 %208
      %211 = vrot.lane.b32.xlu0 %v197, 64
      %v212 = vpop.permute.xlu0 %211
      %214 = vrot.lane.b32.xlu0 %v197, 48
      %v215 = vpop.permute.xlu0 %214
      %217 = vrot.lane.b32.xlu0 %v197, 32
      %v218 = vpop.permute.xlu0 %217
      %220 = vrot.lane.b32.xlu0 %v197, 16
      %v221 = vpop.permute.xlu0 %220
      %v223 = vcombine.low %v197, %v212
      %v225 = vunpack.c.l.s4 1983009808
      %v226 = vunpack.c.0.s8 %v225
      %v227 = vlaneseq
      %v228 = vshrl.u32 %v227, 7
      %v229 = vsub.s32 %v226, %v228
      %v230 = vrot.slane %v223, %v229
      %v231 = vcombine.low %v206, %v218
      %v233 = vunpack.c.l.s4 1983009808
      %v234 = vunpack.c.0.s8 %v233
      %v235 = vlaneseq
      %v236 = vshrl.u32 %v235, 7
      %v237 = vsub.s32 %v234, %v236
      %v238 = vrot.slane %v231, %v237
      %v239 = vcombine.low %v230, %v238
      %v240 = vcombine.high %v230, %v238
      %v242 = vunpack.c.l.s4 1934713408
      %v243 = vunpack.c.0.s8 %v242
      %v244 = vlaneseq
      %v245 = vshrl.u32 %v244, 7
      %v246 = vsub.s32 %v243, %v245
      %v247 = vrot.slane %v239, %v246
      %v249 = vunpack.c.l.s4 1934713408
      %v250 = vunpack.c.0.s8 %v249
      %v251 = vlaneseq
      %v252 = vshrl.u32 %v251, 7
      %v253 = vsub.s32 %v250, %v252
      %v254 = vrot.slane %v240, %v253
      %v255 = vcombine.high %v247, 0
      %v256 = vcombine.high %v254, 0
      %v257 = vcombine.low %v203, %v215
      %v259 = vunpack.c.l.s4 1983009808
      %v260 = vunpack.c.0.s8 %v259
      %v261 = vlaneseq
      %v262 = vshrl.u32 %v261, 7
      %v263 = vsub.s32 %v260, %v262
      %v264 = vrot.slane %v257, %v263
      %v265 = vcombine.low %v209, %v221
      %v267 = vunpack.c.l.s4 1983009808
      %v268 = vunpack.c.0.s8 %v267
      %v269 = vlaneseq
      %v270 = vshrl.u32 %v269, 7
      %v271 = vsub.s32 %v268, %v270
      %v272 = vrot.slane %v265, %v271
      %v273 = vcombine.low %v264, %v272
      %v274 = vcombine.high %v264, %v272
      %v276 = vunpack.c.l.s4 1934713408
      %v277 = vunpack.c.0.s8 %v276
      %v278 = vlaneseq
      %v279 = vshrl.u32 %v278, 7
      %v280 = vsub.s32 %v277, %v279
      %v281 = vrot.slane %v273, %v280
      %v283 = vunpack.c.l.s4 1934713408
      %v284 = vunpack.c.0.s8 %v283
      %v285 = vlaneseq
      %v286 = vshrl.u32 %v285, 7
      %v287 = vsub.s32 %v284, %v286
      %v288 = vrot.slane %v274, %v287
      %v289 = vcombine.high %v281, 0
      %v290 = vcombine.high %v288, 0
      %v293 = vpack.i.b16 %v281, %v247
      %v295 = vshrl.u32 %v247, 16
      %v296 = vshrl.u32 %v281, 16
      %v297 = vpack.i.b16 %v296, %v295
      %v301 = vpack.i.b16 %v289, %v255
      %v303 = vshrl.u32 %v255, 16
      %v304 = vshrl.u32 %v289, 16
      %v305 = vpack.i.b16 %v304, %v303
      %v309 = vpack.i.b16 %v288, %v254
      %v311 = vshrl.u32 %v254, 16
      %v312 = vshrl.u32 %v288, 16
      %v313 = vpack.i.b16 %v312, %v311
      %v317 = vpack.i.b16 %v290, %v256
      %v319 = vshrl.u32 %v256, 16
      %v320 = vshrl.u32 %v290, 16
      %v321 = vpack.i.b16 %v320, %v319
      %v323 = vcombine.low %v293, %v309
      %v325 = vunpack.c.l.s4 1983009808
      %v326 = vunpack.c.0.s8 %v325
      %v327 = vlaneseq
      %v328 = vshrl.u32 %v327, 7
      %v329 = vsub.s32 %v326, %v328
      %v330 = vrot.slane %v323, %v329
      %v331 = vcombine.low %v301, %v317
      %v333 = vunpack.c.l.s4 1983009808
      %v334 = vunpack.c.0.s8 %v333
      %v335 = vlaneseq
      %v336 = vshrl.u32 %v335, 7
      %v337 = vsub.s32 %v334, %v336
      %v338 = vrot.slane %v331, %v337
      %v339 = vcombine.low %v330, %v338
      %v340 = vcombine.high %v330, %v338
      %v342 = vunpack.c.l.s4 1934713408
      %v343 = vunpack.c.0.s8 %v342
      %v344 = vlaneseq
      %v345 = vshrl.u32 %v344, 7
      %v346 = vsub.s32 %v343, %v345
      %v347 = vrot.slane %v339, %v346
      %v349 = vunpack.c.l.s4 1934713408
      %v350 = vunpack.c.0.s8 %v349
      %v351 = vlaneseq
      %v352 = vshrl.u32 %v351, 7
      %v353 = vsub.s32 %v350, %v352
      %v354 = vrot.slane %v340, %v353
      %v355 = vcombine.high %v347, 0
      %v356 = vcombine.high %v354, 0
      %v357 = vcombine.low %v297, %v313
      %v359 = vunpack.c.l.s4 1983009808
      %v360 = vunpack.c.0.s8 %v359
      %v361 = vlaneseq
      %v362 = vshrl.u32 %v361, 7
      %v363 = vsub.s32 %v360, %v362
      %v364 = vrot.slane %v357, %v363
      %v365 = vcombine.low %v305, %v321
      %v367 = vunpack.c.l.s4 1983009808
      %v368 = vunpack.c.0.s8 %v367
      %v369 = vlaneseq
      %v370 = vshrl.u32 %v369, 7
      %v371 = vsub.s32 %v368, %v370
      %v372 = vrot.slane %v365, %v371
      %v373 = vcombine.low %v364, %v372
      %v374 = vcombine.high %v364, %v372
      %v376 = vunpack.c.l.s4 1934713408
      %v377 = vunpack.c.0.s8 %v376
      %v378 = vlaneseq
      %v379 = vshrl.u32 %v378, 7
      %v380 = vsub.s32 %v377, %v379
      %v381 = vrot.slane %v373, %v380
      %v383 = vunpack.c.l.s4 1934713408
      %v384 = vunpack.c.0.s8 %v383
      %v385 = vlaneseq
      %v386 = vshrl.u32 %v385, 7
      %v387 = vsub.s32 %v384, %v386
      %v388 = vrot.slane %v374, %v387
      %v389 = vcombine.high %v381, 0
      %v390 = vcombine.high %v388, 0
      %v393 = vpack.i.b16 %v381, %v347
      %v394 = vshrl.u32 %v347, 16
      %v395 = vshrl.u32 %v381, 16
      %v396 = vpack.i.b16 %v395, %v394
      %v399 = vpack.i.b16 %v389, %v355
      %v400 = vshrl.u32 %v355, 16
      %v401 = vshrl.u32 %v389, 16
      %v402 = vpack.i.b16 %v401, %v400
      %v405 = vpack.i.b16 %v388, %v354
      %v406 = vshrl.u32 %v354, 16
      %v407 = vshrl.u32 %v388, 16
      %v408 = vpack.i.b16 %v407, %v406
      %v411 = vpack.i.b16 %v390, %v356
      %v412 = vshrl.u32 %v356, 16
      %v413 = vshrl.u32 %v390, 16
      %v414 = vpack.i.b16 %v413, %v412
      %416 = vrot.lane.b32.xlu0 %v198, 112
      %v417 = vpop.permute.xlu0 %416
      %419 = vrot.lane.b32.xlu0 %v198, 96
      %v420 = vpop.permute.xlu0 %419
      %422 = vrot.lane.b32.xlu0 %v198, 80
      %v423 = vpop.permute.xlu0 %422
      %425 = vrot.lane.b32.xlu0 %v198, 64
      %v426 = vpop.permute.xlu0 %425
      %428 = vrot.lane.b32.xlu0 %v198, 48
      %v429 = vpop.permute.xlu0 %428
      %431 = vrot.lane.b32.xlu0 %v198, 32
      %v432 = vpop.permute.xlu0 %431
      %434 = vrot.lane.b32.xlu0 %v198, 16
      %v435 = vpop.permute.xlu0 %434
      %v437 = vcombine.low %v198, %v426
      %v439 = vunpack.c.l.s4 1983009808
      %v440 = vunpack.c.0.s8 %v439
      %v441 = vlaneseq
      %v442 = vshrl.u32 %v441, 7
      %v443 = vsub.s32 %v440, %v442
      %v444 = vrot.slane %v437, %v443
      %v445 = vcombine.low %v420, %v432
      %v447 = vunpack.c.l.s4 1983009808
      %v448 = vunpack.c.0.s8 %v447
      %v449 = vlaneseq
      %v450 = vshrl.u32 %v449, 7
      %v451 = vsub.s32 %v448, %v450
      %v452 = vrot.slane %v445, %v451
      %v453 = vcombine.low %v444, %v452
      %v454 = vcombine.high %v444, %v452
      %v456 = vunpack.c.l.s4 1934713408
      %v457 = vunpack.c.0.s8 %v456
      %v458 = vlaneseq
      %v459 = vshrl.u32 %v458, 7
      %v460 = vsub.s32 %v457, %v459
      %v461 = vrot.slane %v453, %v460
      %v463 = vunpack.c.l.s4 1934713408
      %v464 = vunpack.c.0.s8 %v463
      %v465 = vlaneseq
      %v466 = vshrl.u32 %v465, 7
      %v467 = vsub.s32 %v464, %v466
      %v468 = vrot.slane %v454, %v467
      %v469 = vcombine.high %v461, 0
      %v470 = vcombine.high %v468, 0
      %v471 = vcombine.low %v417, %v429
      %v473 = vunpack.c.l.s4 1983009808
      %v474 = vunpack.c.0.s8 %v473
      %v475 = vlaneseq
      %v476 = vshrl.u32 %v475, 7
      %v477 = vsub.s32 %v474, %v476
      %v478 = vrot.slane %v471, %v477
      %v479 = vcombine.low %v423, %v435
      %v481 = vunpack.c.l.s4 1983009808
      %v482 = vunpack.c.0.s8 %v481
      %v483 = vlaneseq
      %v484 = vshrl.u32 %v483, 7
      %v485 = vsub.s32 %v482, %v484
      %v486 = vrot.slane %v479, %v485
      %v487 = vcombine.low %v478, %v486
      %v488 = vcombine.high %v478, %v486
      %v490 = vunpack.c.l.s4 1934713408
      %v491 = vunpack.c.0.s8 %v490
      %v492 = vlaneseq
      %v493 = vshrl.u32 %v492, 7
      %v494 = vsub.s32 %v491, %v493
      %v495 = vrot.slane %v487, %v494
      %v497 = vunpack.c.l.s4 1934713408
      %v498 = vunpack.c.0.s8 %v497
      %v499 = vlaneseq
      %v500 = vshrl.u32 %v499, 7
      %v501 = vsub.s32 %v498, %v500
      %v502 = vrot.slane %v488, %v501
      %v503 = vcombine.high %v495, 0
      %v504 = vcombine.high %v502, 0
      %v507 = vpack.i.b16 %v495, %v461
      %v509 = vshrl.u32 %v461, 16
      %v510 = vshrl.u32 %v495, 16
      %v511 = vpack.i.b16 %v510, %v509
      %v515 = vpack.i.b16 %v503, %v469
      %v517 = vshrl.u32 %v469, 16
      %v518 = vshrl.u32 %v503, 16
      %v519 = vpack.i.b16 %v518, %v517
      %v523 = vpack.i.b16 %v502, %v468
      %v525 = vshrl.u32 %v468, 16
      %v526 = vshrl.u32 %v502, 16
      %v527 = vpack.i.b16 %v526, %v525
      %v531 = vpack.i.b16 %v504, %v470
      %v533 = vshrl.u32 %v470, 16
      %v534 = vshrl.u32 %v504, 16
      %v535 = vpack.i.b16 %v534, %v533
      %v537 = vcombine.low %v507, %v523
      %v539 = vunpack.c.l.s4 1983009808
      %v540 = vunpack.c.0.s8 %v539
      %v541 = vlaneseq
      %v542 = vshrl.u32 %v541, 7
      %v543 = vsub.s32 %v540, %v542
      %v544 = vrot.slane %v537, %v543
      %v545 = vcombine.low %v515, %v531
      %v547 = vunpack.c.l.s4 1983009808
      %v548 = vunpack.c.0.s8 %v547
      %v549 = vlaneseq
      %v550 = vshrl.u32 %v549, 7
      %v551 = vsub.s32 %v548, %v550
      %v552 = vrot.slane %v545, %v551
      %v553 = vcombine.low %v544, %v552
      %v554 = vcombine.high %v544, %v552
      %v556 = vunpack.c.l.s4 1934713408
      %v557 = vunpack.c.0.s8 %v556
      %v558 = vlaneseq
      %v559 = vshrl.u32 %v558, 7
      %v560 = vsub.s32 %v557, %v559
      %v561 = vrot.slane %v553, %v560
      %v563 = vunpack.c.l.s4 1934713408
      %v564 = vunpack.c.0.s8 %v563
      %v565 = vlaneseq
      %v566 = vshrl.u32 %v565, 7
      %v567 = vsub.s32 %v564, %v566
      %v568 = vrot.slane %v554, %v567
      %v569 = vcombine.high %v561, 0
      %v570 = vcombine.high %v568, 0
      %v571 = vcombine.low %v511, %v527
      %v573 = vunpack.c.l.s4 1983009808
      %v574 = vunpack.c.0.s8 %v573
      %v575 = vlaneseq
      %v576 = vshrl.u32 %v575, 7
      %v577 = vsub.s32 %v574, %v576
      %v578 = vrot.slane %v571, %v577
      %v579 = vcombine.low %v519, %v535
      %v581 = vunpack.c.l.s4 1983009808
      %v582 = vunpack.c.0.s8 %v581
      %v583 = vlaneseq
      %v584 = vshrl.u32 %v583, 7
      %v585 = vsub.s32 %v582, %v584
      %v586 = vrot.slane %v579, %v585
      %v587 = vcombine.low %v578, %v586
      %v588 = vcombine.high %v578, %v586
      %v590 = vunpack.c.l.s4 1934713408
      %v591 = vunpack.c.0.s8 %v590
      %v592 = vlaneseq
      %v593 = vshrl.u32 %v592, 7
      %v594 = vsub.s32 %v591, %v593
      %v595 = vrot.slane %v587, %v594
      %v597 = vunpack.c.l.s4 1934713408
      %v598 = vunpack.c.0.s8 %v597
      %v599 = vlaneseq
      %v600 = vshrl.u32 %v599, 7
      %v601 = vsub.s32 %v598, %v600
      %v602 = vrot.slane %v588, %v601
      %v603 = vcombine.high %v595, 0
      %v604 = vcombine.high %v602, 0
      %v607 = vpack.i.b16 %v595, %v561
      %v608 = vshrl.u32 %v561, 16
      %v609 = vshrl.u32 %v595, 16
      %v610 = vpack.i.b16 %v609, %v608
      %v613 = vpack.i.b16 %v603, %v569
      %v614 = vshrl.u32 %v569, 16
      %v615 = vshrl.u32 %v603, 16
      %v616 = vpack.i.b16 %v615, %v614
      %v619 = vpack.i.b16 %v602, %v568
      %v620 = vshrl.u32 %v568, 16
      %v621 = vshrl.u32 %v602, 16
      %v622 = vpack.i.b16 %v621, %v620
      %v625 = vpack.i.b16 %v604, %v570
      %v626 = vshrl.u32 %v570, 16
      %v627 = vshrl.u32 %v604, 16
      %v628 = vpack.i.b16 %v627, %v626
      %630 = vrot.lane.b32.xlu0 %v199, 112
      %v631 = vpop.permute.xlu0 %630
      %633 = vrot.lane.b32.xlu0 %v199, 96
      %v634 = vpop.permute.xlu0 %633
      %636 = vrot.lane.b32.xlu0 %v199, 80
      %v637 = vpop.permute.xlu0 %636
      %639 = vrot.lane.b32.xlu0 %v199, 64
      %v640 = vpop.permute.xlu0 %639
      %642 = vrot.lane.b32.xlu0 %v199, 48
      %v643 = vpop.permute.xlu0 %642
      %645 = vrot.lane.b32.xlu0 %v199, 32
      %v646 = vpop.permute.xlu0 %645
      %648 = vrot.lane.b32.xlu0 %v199, 16
      %v649 = vpop.permute.xlu0 %648
      %v651 = vcombine.low %v199, %v640
      %v653 = vunpack.c.l.s4 1983009808
      %v654 = vunpack.c.0.s8 %v653
      %v655 = vlaneseq
      %v656 = vshrl.u32 %v655, 7
      %v657 = vsub.s32 %v654, %v656
      %v658 = vrot.slane %v651, %v657
      %v659 = vcombine.low %v634, %v646
      %v661 = vunpack.c.l.s4 1983009808
      %v662 = vunpack.c.0.s8 %v661
      %v663 = vlaneseq
      %v664 = vshrl.u32 %v663, 7
      %v665 = vsub.s32 %v662, %v664
      %v666 = vrot.slane %v659, %v665
      %v667 = vcombine.low %v658, %v666
      %v668 = vcombine.high %v658, %v666
      %v670 = vunpack.c.l.s4 1934713408
      %v671 = vunpack.c.0.s8 %v670
      %v672 = vlaneseq
      %v673 = vshrl.u32 %v672, 7
      %v674 = vsub.s32 %v671, %v673
      %v675 = vrot.slane %v667, %v674
      %v677 = vunpack.c.l.s4 1934713408
      %v678 = vunpack.c.0.s8 %v677
      %v679 = vlaneseq
      %v680 = vshrl.u32 %v679, 7
      %v681 = vsub.s32 %v678, %v680
      %v682 = vrot.slane %v668, %v681
      %v683 = vcombine.high %v675, 0
      %v684 = vcombine.high %v682, 0
      %v685 = vcombine.low %v631, %v643
      %v687 = vunpack.c.l.s4 1983009808
      %v688 = vunpack.c.0.s8 %v687
      %v689 = vlaneseq
      %v690 = vshrl.u32 %v689, 7
      %v691 = vsub.s32 %v688, %v690
      %v692 = vrot.slane %v685, %v691
      %v693 = vcombine.low %v637, %v649
      %v695 = vunpack.c.l.s4 1983009808
      %v696 = vunpack.c.0.s8 %v695
      %v697 = vlaneseq
      %v698 = vshrl.u32 %v697, 7
      %v699 = vsub.s32 %v696, %v698
      %v700 = vrot.slane %v693, %v699
      %v701 = vcombine.low %v692, %v700
      %v702 = vcombine.high %v692, %v700
      %v704 = vunpack.c.l.s4 1934713408
      %v705 = vunpack.c.0.s8 %v704
      %v706 = vlaneseq
      %v707 = vshrl.u32 %v706, 7
      %v708 = vsub.s32 %v705, %v707
      %v709 = vrot.slane %v701, %v708
      %v711 = vunpack.c.l.s4 1934713408
      %v712 = vunpack.c.0.s8 %v711
      %v713 = vlaneseq
      %v714 = vshrl.u32 %v713, 7
      %v715 = vsub.s32 %v712, %v714
      %v716 = vrot.slane %v702, %v715
      %v717 = vcombine.high %v709, 0
      %v718 = vcombine.high %v716, 0
      %v721 = vpack.i.b16 %v709, %v675
      %v723 = vshrl.u32 %v675, 16
      %v724 = vshrl.u32 %v709, 16
      %v725 = vpack.i.b16 %v724, %v723
      %v729 = vpack.i.b16 %v717, %v683
      %v731 = vshrl.u32 %v683, 16
      %v732 = vshrl.u32 %v717, 16
      %v733 = vpack.i.b16 %v732, %v731
      %v737 = vpack.i.b16 %v716, %v682
      %v739 = vshrl.u32 %v682, 16
      %v740 = vshrl.u32 %v716, 16
      %v741 = vpack.i.b16 %v740, %v739
      %v745 = vpack.i.b16 %v718, %v684
      %v747 = vshrl.u32 %v684, 16
      %v748 = vshrl.u32 %v718, 16
      %v749 = vpack.i.b16 %v748, %v747
      %v751 = vcombine.low %v721, %v737
      %v753 = vunpack.c.l.s4 1983009808
      %v754 = vunpack.c.0.s8 %v753
      %v755 = vlaneseq
      %v756 = vshrl.u32 %v755, 7
      %v757 = vsub.s32 %v754, %v756
      %v758 = vrot.slane %v751, %v757
      %v759 = vcombine.low %v729, %v745
      %v761 = vunpack.c.l.s4 1983009808
      %v762 = vunpack.c.0.s8 %v761
      %v763 = vlaneseq
      %v764 = vshrl.u32 %v763, 7
      %v765 = vsub.s32 %v762, %v764
      %v766 = vrot.slane %v759, %v765
      %v767 = vcombine.low %v758, %v766
      %v768 = vcombine.high %v758, %v766
      %v770 = vunpack.c.l.s4 1934713408
      %v771 = vunpack.c.0.s8 %v770
      %v772 = vlaneseq
      %v773 = vshrl.u32 %v772, 7
      %v774 = vsub.s32 %v771, %v773
      %v775 = vrot.slane %v767, %v774
      %v777 = vunpack.c.l.s4 1934713408
      %v778 = vunpack.c.0.s8 %v777
      %v779 = vlaneseq
      %v780 = vshrl.u32 %v779, 7
      %v781 = vsub.s32 %v778, %v780
      %v782 = vrot.slane %v768, %v781
      %v783 = vcombine.high %v775, 0
      %v784 = vcombine.high %v782, 0
      %v785 = vcombine.low %v725, %v741
      %v787 = vunpack.c.l.s4 1983009808
      %v788 = vunpack.c.0.s8 %v787
      %v789 = vlaneseq
      %v790 = vshrl.u32 %v789, 7
      %v791 = vsub.s32 %v788, %v790
      %v792 = vrot.slane %v785, %v791
      %v793 = vcombine.low %v733, %v749
      %v795 = vunpack.c.l.s4 1983009808
      %v796 = vunpack.c.0.s8 %v795
      %v797 = vlaneseq
      %v798 = vshrl.u32 %v797, 7
      %v799 = vsub.s32 %v796, %v798
      %v800 = vrot.slane %v793, %v799
      %v801 = vcombine.low %v792, %v800
      %v802 = vcombine.high %v792, %v800
      %v804 = vunpack.c.l.s4 1934713408
      %v805 = vunpack.c.0.s8 %v804
      %v806 = vlaneseq
      %v807 = vshrl.u32 %v806, 7
      %v808 = vsub.s32 %v805, %v807
      %v809 = vrot.slane %v801, %v808
      %v811 = vunpack.c.l.s4 1934713408
      %v812 = vunpack.c.0.s8 %v811
      %v813 = vlaneseq
      %v814 = vshrl.u32 %v813, 7
      %v815 = vsub.s32 %v812, %v814
      %v816 = vrot.slane %v802, %v815
      %v817 = vcombine.high %v809, 0
      %v818 = vcombine.high %v816, 0
      %v821 = vpack.i.b16 %v809, %v775
      %v822 = vshrl.u32 %v775, 16
      %v823 = vshrl.u32 %v809, 16
      %v824 = vpack.i.b16 %v823, %v822
      %v827 = vpack.i.b16 %v817, %v783
      %v828 = vshrl.u32 %v783, 16
      %v829 = vshrl.u32 %v817, 16
      %v830 = vpack.i.b16 %v829, %v828
      %v833 = vpack.i.b16 %v816, %v782
      %v834 = vshrl.u32 %v782, 16
      %v835 = vshrl.u32 %v816, 16
      %v836 = vpack.i.b16 %v835, %v834
      %v839 = vpack.i.b16 %v818, %v784
      %v840 = vshrl.u32 %v784, 16
      %v841 = vshrl.u32 %v818, 16
      %v842 = vpack.i.b16 %v841, %v840
      %vm843 = vcmask 130048
      %v845 = vsel %vm843, %v393, 0
      %v848 = vsel %vm843, %v607, 0
      %850 = vmatprep.subr.bf16.mxu0 0
      %851 = vmatpush1.bf16.xpose.msra.mxu0 %v848
      %852 = vmatprep.subr.bf16.mxu0 0
      %853 = vmatpush1.bf16.xpose.msra.mxu0 0
      %854 = vmatprep.subr.bf16.mxu0 0
      %855 = vmatpush1.bf16.xpose.msra.mxu0 0
      %856 = vmatprep.subr.bf16.mxu0 0
      %857 = vmatpush1.bf16.xpose.msra.mxu0 0
      %858 = vmatprep.subr.bf16.mxu0 0
      %859 = vmatpush1.bf16.xpose.msra.mxu0 0
      %860 = vmatprep.subr.bf16.mxu0 0
      %861 = vmatpush1.bf16.xpose.msra.mxu0 0
      %862 = vmatprep.subr.bf16.mxu0 0
      %863 = vmatpush1.bf16.xpose.msra.mxu0 0
      %864 = vmatprep.subr.bf16.mxu0 0
      %865 = vmatpush1.bf16.xpose.msra.mxu0 0
      %866 = vmatprep.subr.bf16.mxu0 0
      %867 = vmatpush1.bf16.xpose.msra.mxu0 0
      %868 = vmatprep.subr.bf16.mxu0 0
      %869 = vmatpush1.bf16.xpose.msra.mxu0 0
      %870 = vmatprep.subr.bf16.mxu0 0
      %871 = vmatpush1.bf16.xpose.msra.mxu0 0
      %872 = vmatprep.subr.bf16.mxu0 0
      %873 = vmatpush1.bf16.xpose.msra.mxu0 0
      %874 = vmatprep.subr.bf16.mxu0 0
      %875 = vmatpush1.bf16.xpose.msra.mxu0 0
      %876 = vmatprep.subr.bf16.mxu0 0
      %877 = vmatpush1.bf16.xpose.msra.mxu0 0
      %878 = vmatprep.subr.bf16.mxu0 0
      %879 = vmatpush1.bf16.xpose.msra.mxu0 0
      %880 = vmatprep.subr.bf16.mxu0 0
      %881 = vmatpush1.bf16.xpose.msra.mxu0 0
      %882 = vmatprep.mubr.bf16.mxu0 0
      %883 = vmatmul.mubr.bf16.gmra.mrb[0].mxu0 %v845
      %v884 = vpop.f32.mrb[0].mxu0
      %v885 = vadd.f32 0.0, %v884
      %v886 = vpop.f32.mrb[0].mxu0
      %v887 = vpop.f32.mrb[0].mxu0
      %v888 = vpop.f32.mrb[0].mxu0
      %889 = vdwg.mxu0
      %v891 = vsel %vm843, %v396, 0
      %v894 = vsel %vm843, %v610, 0
      %896 = vmatprep.subr.bf16.mxu0 0
      %897 = vmatpush1.bf16.xpose.msra.mxu0 %v894
      %898 = vmatprep.subr.bf16.mxu0 0
      %899 = vmatpush1.bf16.xpose.msra.mxu0 0
      %900 = vmatprep.subr.bf16.mxu0 0
      %901 = vmatpush1.bf16.xpose.msra.mxu0 0
      %902 = vmatprep.subr.bf16.mxu0 0
      %903 = vmatpush1.bf16.xpose.msra.mxu0 0
      %904 = vmatprep.subr.bf16.mxu0 0
      %905 = vmatpush1.bf16.xpose.msra.mxu0 0
      %906 = vmatprep.subr.bf16.mxu0 0
      %907 = vmatpush1.bf16.xpose.msra.mxu0 0
      %908 = vmatprep.subr.bf16.mxu0 0
      %909 = vmatpush1.bf16.xpose.msra.mxu0 0
      %910 = vmatprep.subr.bf16.mxu0 0
      %911 = vmatpush1.bf16.xpose.msra.mxu0 0
      %912 = vmatprep.subr.bf16.mxu0 0
      %913 = vmatpush1.bf16.xpose.msra.mxu0 0
      %914 = vmatprep.subr.bf16.mxu0 0
      %915 = vmatpush1.bf16.xpose.msra.mxu0 0
      %916 = vmatprep.subr.bf16.mxu0 0
      %917 = vmatpush1.bf16.xpose.msra.mxu0 0
      %918 = vmatprep.subr.bf16.mxu0 0
      %919 = vmatpush1.bf16.xpose.msra.mxu0 0
      %920 = vmatprep.subr.bf16.mxu0 0
      %921 = vmatpush1.bf16.xpose.msra.mxu0 0
      %922 = vmatprep.subr.bf16.mxu0 0
      %923 = vmatpush1.bf16.xpose.msra.mxu0 0
      %924 = vmatprep.subr.bf16.mxu0 0
      %925 = vmatpush1.bf16.xpose.msra.mxu0 0
      %926 = vmatprep.subr.bf16.mxu0 0
      %927 = vmatpush1.bf16.xpose.msra.mxu0 0
      %928 = vmatprep.mubr.bf16.mxu0 0
      %929 = vmatmul.mubr.bf16.gmra.mrb[0].mxu0 %v891
      %v930 = vpop.f32.mrb[0].mxu0
      %v931 = vadd.f32 0.0, %v930
      %v932 = vpop.f32.mrb[0].mxu0
      %v933 = vpop.f32.mrb[0].mxu0
      %v934 = vpop.f32.mrb[0].mxu0
      %935 = vdwg.mxu0
      %v937 = vsel %vm843, %v399, 0
      %v940 = vsel %vm843, %v613, 0
      %942 = vmatprep.subr.bf16.mxu0 0
      %943 = vmatpush1.bf16.xpose.msra.mxu0 %v940
      %944 = vmatprep.subr.bf16.mxu0 0
      %945 = vmatpush1.bf16.xpose.msra.mxu0 0
      %946 = vmatprep.subr.bf16.mxu0 0
      %947 = vmatpush1.bf16.xpose.msra.mxu0 0
      %948 = vmatprep.subr.bf16.mxu0 0
      %949 = vmatpush1.bf16.xpose.msra.mxu0 0
      %950 = vmatprep.subr.bf16.mxu0 0
      %951 = vmatpush1.bf16.xpose.msra.mxu0 0
      %952 = vmatprep.subr.bf16.mxu0 0
      %953 = vmatpush1.bf16.xpose.msra.mxu0 0
      %954 = vmatprep.subr.bf16.mxu0 0
      %955 = vmatpush1.bf16.xpose.msra.mxu0 0
      %956 = vmatprep.subr.bf16.mxu0 0
      %957 = vmatpush1.bf16.xpose.msra.mxu0 0
      %958 = vmatprep.subr.bf16.mxu0 0
      %959 = vmatpush1.bf16.xpose.msra.mxu0 0
      %960 = vmatprep.subr.bf16.mxu0 0
      %961 = vmatpush1.bf16.xpose.msra.mxu0 0
      %962 = vmatprep.subr.bf16.mxu0 0
      %963 = vmatpush1.bf16.xpose.msra.mxu0 0
      %964 = vmatprep.subr.bf16.mxu0 0
      %965 = vmatpush1.bf16.xpose.msra.mxu0 0
      %966 = vmatprep.subr.bf16.mxu0 0
      %967 = vmatpush1.bf16.xpose.msra.mxu0 0
      %968 = vmatprep.subr.bf16.mxu0 0
      %969 = vmatpush1.bf16.xpose.msra.mxu0 0
      %970 = vmatprep.subr.bf16.mxu0 0
      %971 = vmatpush1.bf16.xpose.msra.mxu0 0
      %972 = vmatprep.subr.bf16.mxu0 0
      %973 = vmatpush1.bf16.xpose.msra.mxu0 0
      %974 = vmatprep.mubr.bf16.mxu0 0
      %975 = vmatmul.mubr.bf16.gmra.mrb[0].mxu0 %v937
      %v976 = vpop.f32.mrb[0].mxu0
      %v977 = vadd.f32 0.0, %v976
      %v978 = vpop.f32.mrb[0].mxu0
      %v979 = vpop.f32.mrb[0].mxu0
      %v980 = vpop.f32.mrb[0].mxu0
      %981 = vdwg.mxu0
      %v983 = vsel %vm843, %v402, 0
      %v986 = vsel %vm843, %v616, 0
      %988 = vmatprep.subr.bf16.mxu0 0
      %989 = vmatpush1.bf16.xpose.msra.mxu0 %v986
      %990 = vmatprep.subr.bf16.mxu0 0
      %991 = vmatpush1.bf16.xpose.msra.mxu0 0
      %992 = vmatprep.subr.bf16.mxu0 0
      %993 = vmatpush1.bf16.xpose.msra.mxu0 0
      %994 = vmatprep.subr.bf16.mxu0 0
      %995 = vmatpush1.bf16.xpose.msra.mxu0 0
      %996 = vmatprep.subr.bf16.mxu0 0
      %997 = vmatpush1.bf16.xpose.msra.mxu0 0
      %998 = vmatprep.subr.bf16.mxu0 0
      %999 = vmatpush1.bf16.xpose.msra.mxu0 0
      %1000 = vmatprep.subr.bf16.mxu0 0
      %1001 = vmatpush1.bf16.xpose.msra.mxu0 0
      %1002 = vmatprep.subr.bf16.mxu0 0
      %1003 = vmatpush1.bf16.xpose.msra.mxu0 0
      %1004 = vmatprep.subr.bf16.mxu0 0
      %1005 = vmatpush1.bf16.xpose.msra.mxu0 0
      %1006 = vmatprep.subr.bf16.mxu0 0
      %1007 = vmatpush1.bf16.xpose.msra.mxu0 0
      %1008 = vmatprep.subr.bf16.mxu0 0
      %1009 = vmatpush1.bf16.xpose.msra.mxu0 0
      %1010 = vmatprep.subr.bf16.mxu0 0
      %1011 = vmatpush1.bf16.xpose.msra.mxu0 0
      %1012 = vmatprep.subr.bf16.mxu0 0
      %1013 = vmatpush1.bf16.xpose.msra.mxu0 0
      %1014 = vmatprep.subr.bf16.mxu0 0
      %1015 = vmatpush1.bf16.xpose.msra.mxu0 0
      %1016 = vmatprep.subr.bf16.mxu0 0
      %1017 = vmatpush1.bf16.xpose.msra.mxu0 0
      %1018 = vmatprep.subr.bf16.mxu0 0
      %1019 = vmatpush1.bf16.xpose.msra.mxu0 0
      %1020 = vmatprep.mubr.bf16.mxu0 0
      %1021 = vmatmul.mubr.bf16.gmra.mrb[0].mxu0 %v983
      %v1022 = vpop.f32.mrb[0].mxu0
      %v1023 = vadd.f32 0.0, %v1022
      %v1024 = vpop.f32.mrb[0].mxu0
      %v1025 = vpop.f32.mrb[0].mxu0
      %v1026 = vpop.f32.mrb[0].mxu0
      %1027 = vdwg.mxu0
      %v1029 = vsel %vm843, %v405, 0
      %v1032 = vsel %vm843, %v619, 0
      %1034 = vmatprep.subr.bf16.mxu0 0
      %1035 = vmatpush1.bf16.xpose.msra.mxu0 %v1032
      %1036 = vmatprep.subr.bf16.mxu0 0
      %1037 = vmatpush1.bf16.xpose.msra.mxu0 0
      %1038 = vmatprep.subr.bf16.mxu0 0
      %1039 = vmatpush1.bf16.xpose.msra.mxu0 0
      %1040 = vmatprep.subr.bf16.mxu0 0
      %1041 = vmatpush1.bf16.xpose.msra.mxu0 0
      %1042 = vmatprep.subr.bf16.mxu0 0
      %1043 = vmatpush1.bf16.xpose.msra.mxu0 0
      %1044 = vmatprep.subr.bf16.mxu0 0
      %1045 = vmatpush1.bf16.xpose.msra.mxu0 0
      %1046 = vmatprep.subr.bf16.mxu0 0
      %1047 = vmatpush1.bf16.xpose.msra.mxu0 0
      %1048 = vmatprep.subr.bf16.mxu0 0
      %1049 = vmatpush1.bf16.xpose.msra.mxu0 0
      %1050 = vmatprep.subr.bf16.mxu0 0
      %1051 = vmatpush1.bf16.xpose.msra.mxu0 0
      %1052 = vmatprep.subr.bf16.mxu0 0
      %1053 = vmatpush1.bf16.xpose.msra.mxu0 0
      %1054 = vmatprep.subr.bf16.mxu0 0
      %1055 = vmatpush1.bf16.xpose.msra.mxu0 0
      %1056 = vmatprep.subr.bf16.mxu0 0
      %1057 = vmatpush1.bf16.xpose.msra.mxu0 0
      %1058 = vmatprep.subr.bf16.mxu0 0
      %1059 = vmatpush1.bf16.xpose.msra.mxu0 0
      %1060 = vmatprep.subr.bf16.mxu0 0
      %1061 = vmatpush1.bf16.xpose.msra.mxu0 0
      %1062 = vmatprep.subr.bf16.mxu0 0
      %1063 = vmatpush1.bf16.xpose.msra.mxu0 0
      %1064 = vmatprep.subr.bf16.mxu0 0
      %1065 = vmatpush1.bf16.xpose.msra.mxu0 0
      %1066 = vmatprep.mubr.bf16.mxu0 0
      %1067 = vmatmul.mubr.bf16.gmra.mrb[0].mxu0 %v1029
      %v1068 = vpop.f32.mrb[0].mxu0
      %v1069 = vadd.f32 0.0, %v1068
      %v1070 = vpop.f32.mrb[0].mxu0
      %v1071 = vpop.f32.mrb[0].mxu0
      %v1072 = vpop.f32.mrb[0].mxu0
      %1073 = vdwg.mxu0
      %v1075 = vsel %vm843, %v408, 0
      %v1078 = vsel %vm843, %v622, 0
      %1080 = vmatprep.subr.bf16.mxu0 0
      %1081 = vmatpush1.bf16.xpose.msra.mxu0 %v1078
      %1082 = vmatprep.subr.bf16.mxu0 0
      %1083 = vmatpush1.bf16.xpose.msra.mxu0 0
      %1084 = vmatprep.subr.bf16.mxu0 0
      %1085 = vmatpush1.bf16.xpose.msra.mxu0 0
      %1086 = vmatprep.subr.bf16.mxu0 0
      %1087 = vmatpush1.bf16.xpose.msra.mxu0 0
      %1088 = vmatprep.subr.bf16.mxu0 0
      %1089 = vmatpush1.bf16.xpose.msra.mxu0 0
      %1090 = vmatprep.subr.bf16.mxu0 0
      %1091 = vmatpush1.bf16.xpose.msra.mxu0 0
      %1092 = vmatprep.subr.bf16.mxu0 0
      %1093 = vmatpush1.bf16.xpose.msra.mxu0 0
      %1094 = vmatprep.subr.bf16.mxu0 0
      %1095 = vmatpush1.bf16.xpose.msra.mxu0 0
      %1096 = vmatprep.subr.bf16.mxu0 0
      %1097 = vmatpush1.bf16.xpose.msra.mxu0 0
      %1098 = vmatprep.subr.bf16.mxu0 0
      %1099 = vmatpush1.bf16.xpose.msra.mxu0 0
      %1100 = vmatprep.subr.bf16.mxu0 0
      %1101 = vmatpush1.bf16.xpose.msra.mxu0 0
      %1102 = vmatprep.subr.bf16.mxu0 0
      %1103 = vmatpush1.bf16.xpose.msra.mxu0 0
      %1104 = vmatprep.subr.bf16.mxu0 0
      %1105 = vmatpush1.bf16.xpose.msra.mxu0 0
      %1106 = vmatprep.subr.bf16.mxu0 0
      %1107 = vmatpush1.bf16.xpose.msra.mxu0 0
      %1108 = vmatprep.subr.bf16.mxu0 0
      %1109 = vmatpush1.bf16.xpose.msra.mxu0 0
      %1110 = vmatprep.subr.bf16.mxu0 0
      %1111 = vmatpush1.bf16.xpose.msra.mxu0 0
      %1112 = vmatprep.mubr.bf16.mxu0 0
      %1113 = vmatmul.mubr.bf16.gmra.mrb[0].mxu0 %v1075
      %v1114 = vpop.f32.mrb[0].mxu0
      %v1115 = vadd.f32 0.0, %v1114
      %v1116 = vpop.f32.mrb[0].mxu0
      %v1117 = vpop.f32.mrb[0].mxu0
      %v1118 = vpop.f32.mrb[0].mxu0
      %1119 = vdwg.mxu0
      %v1121 = vsel %vm843, %v411, 0
      %v1124 = vsel %vm843, %v625, 0
      %1126 = vmatprep.subr.bf16.mxu0 0
      %1127 = vmatpush1.bf16.xpose.msra.mxu0 %v1124
      %1128 = vmatprep.subr.bf16.mxu0 0
      %1129 = vmatpush1.bf16.xpose.msra.mxu0 0
      %1130 = vmatprep.subr.bf16.mxu0 0
      %1131 = vmatpush1.bf16.xpose.msra.mxu0 0
      %1132 = vmatprep.subr.bf16.mxu0 0
      %1133 = vmatpush1.bf16.xpose.msra.mxu0 0
      %1134 = vmatprep.subr.bf16.mxu0 0
      %1135 = vmatpush1.bf16.xpose.msra.mxu0 0
      %1136 = vmatprep.subr.bf16.mxu0 0
      %1137 = vmatpush1.bf16.xpose.msra.mxu0 0
      %1138 = vmatprep.subr.bf16.mxu0 0
      %1139 = vmatpush1.bf16.xpose.msra.mxu0 0
      %1140 = vmatprep.subr.bf16.mxu0 0
      %1141 = vmatpush1.bf16.xpose.msra.mxu0 0
      %1142 = vmatprep.subr.bf16.mxu0 0
      %1143 = vmatpush1.bf16.xpose.msra.mxu0 0
      %1144 = vmatprep.subr.bf16.mxu0 0
      %1145 = vmatpush1.bf16.xpose.msra.mxu0 0
      %1146 = vmatprep.subr.bf16.mxu0 0
      %1147 = vmatpush1.bf16.xpose.msra.mxu0 0
      %1148 = vmatprep.subr.bf16.mxu0 0
      %1149 = vmatpush1.bf16.xpose.msra.mxu0 0
      %1150 = vmatprep.subr.bf16.mxu0 0
      %1151 = vmatpush1.bf16.xpose.msra.mxu0 0
      %1152 = vmatprep.subr.bf16.mxu0 0
      %1153 = vmatpush1.bf16.xpose.msra.mxu0 0
      %1154 = vmatprep.subr.bf16.mxu0 0
      %1155 = vmatpush1.bf16.xpose.msra.mxu0 0
      %1156 = vmatprep.subr.bf16.mxu0 0
      %1157 = vmatpush1.bf16.xpose.msra.mxu0 0
      %1158 = vmatprep.mubr.bf16.mxu0 0
      %1159 = vmatmul.mubr.bf16.gmra.mrb[0].mxu0 %v1121
      %v1160 = vpop.f32.mrb[0].mxu0
      %v1161 = vadd.f32 0.0, %v1160
      %v1162 = vpop.f32.mrb[0].mxu0
      %v1163 = vpop.f32.mrb[0].mxu0
      %v1164 = vpop.f32.mrb[0].mxu0
      %1165 = vdwg.mxu0
      %v1167 = vsel %vm843, %v414, 0
      %v1170 = vsel %vm843, %v628, 0
      %1172 = vmatprep.subr.bf16.mxu0 0
      %1173 = vmatpush1.bf16.xpose.msra.mxu0 %v1170
      %1174 = vmatprep.subr.bf16.mxu0 0
      %1175 = vmatpush1.bf16.xpose.msra.mxu0 0
      %1176 = vmatprep.subr.bf16.mxu0 0
      %1177 = vmatpush1.bf16.xpose.msra.mxu0 0
      %1178 = vmatprep.subr.bf16.mxu0 0
      %1179 = vmatpush1.bf16.xpose.msra.mxu0 0
      %1180 = vmatprep.subr.bf16.mxu0 0
      %1181 = vmatpush1.bf16.xpose.msra.mxu0 0
      %1182 = vmatprep.subr.bf16.mxu0 0
      %1183 = vmatpush1.bf16.xpose.msra.mxu0 0
      %1184 = vmatprep.subr.bf16.mxu0 0
      %1185 = vmatpush1.bf16.xpose.msra.mxu0 0
      %1186 = vmatprep.subr.bf16.mxu0 0
      %1187 = vmatpush1.bf16.xpose.msra.mxu0 0
      %1188 = vmatprep.subr.bf16.mxu0 0
      %1189 = vmatpush1.bf16.xpose.msra.mxu0 0
      %1190 = vmatprep.subr.bf16.mxu0 0
      %1191 = vmatpush1.bf16.xpose.msra.mxu0 0
      %1192 = vmatprep.subr.bf16.mxu0 0
      %1193 = vmatpush1.bf16.xpose.msra.mxu0 0
      %1194 = vmatprep.subr.bf16.mxu0 0
      %1195 = vmatpush1.bf16.xpose.msra.mxu0 0
      %1196 = vmatprep.subr.bf16.mxu0 0
      %1197 = vmatpush1.bf16.xpose.msra.mxu0 0
      %1198 = vmatprep.subr.bf16.mxu0 0
      %1199 = vmatpush1.bf16.xpose.msra.mxu0 0
      %1200 = vmatprep.subr.bf16.mxu0 0
      %1201 = vmatpush1.bf16.xpose.msra.mxu0 0
      %1202 = vmatprep.subr.bf16.mxu0 0
      %1203 = vmatpush1.bf16.xpose.msra.mxu0 0
      %1204 = vmatprep.mubr.bf16.mxu0 0
      %1205 = vmatmul.mubr.bf16.gmra.mrb[0].mxu0 %v1167
      %v1206 = vpop.f32.mrb[0].mxu0
      %v1207 = vadd.f32 0.0, %v1206
      %v1208 = vpop.f32.mrb[0].mxu0
      %v1209 = vpop.f32.mrb[0].mxu0
      %v1210 = vpop.f32.mrb[0].mxu0
      %1211 = vdwg.mxu0
      %v1212 = vmul.f32 %v885, 0.25
      %v1213 = vmul.f32 %v931, 0.25
      %v1214 = vmul.f32 %v977, 0.25
      %v1215 = vmul.f32 %v1023, 0.25
      %v1216 = vmul.f32 %v1069, 0.25
      %v1217 = vmul.f32 %v1115, 0.25
      %v1218 = vmul.f32 %v1161, 0.25
      %v1219 = vmul.f32 %v1207, 0.25
      %v1220 = vlaneseq
      %v1221 = vshrl.u32 %v1220, 7
      %v1222 = vstv %s200
      %v1223 = vadd.s32 %v1221, %v1222
      %v1224 = vlaneseq
      %v1225 = vand.u32 %v1224, 127
      %vm1226 = vcmp.le.s32.totalorder %v1225, %v1223
      %v1227 = vsel %vm1226, 1, 0
      %vm1228 = vcmp.eq.s32.totalorder %v1227, 1
      %v1229 = vsel %vm1228, %v1212, -1e+30
      %v1230 = vsel %vm1228, %v1213, -1e+30
      %v1231 = vsel %vm1228, %v1214, -1e+30
      %v1232 = vsel %vm1228, %v1215, -1e+30
      %v1233 = vsel %vm1228, %v1216, -1e+30
      %v1234 = vsel %vm1228, %v1217, -1e+30
      %v1235 = vsel %vm1228, %v1218, -1e+30
      %v1236 = vsel %vm1228, %v1219, -1e+30
      %vm1237 = vcmask 64512
      %v1238 = vsel %vm1237, %v1229, -inf
      %1239 = vmax.xlane.f32.xlu0 %v1238
      %v1240 = vpop.xlane.xlu0 %1239
      %v1241 = vsel %vm1237, %v1230, -inf
      %1242 = vmax.xlane.f32.xlu0 %v1241
      %v1243 = vpop.xlane.xlu0 %1242
      %v1244 = vsel %vm1237, %v1231, -inf
      %1245 = vmax.xlane.f32.xlu0 %v1244
      %v1246 = vpop.xlane.xlu0 %1245
      %v1247 = vsel %vm1237, %v1232, -inf
      %1248 = vmax.xlane.f32.xlu0 %v1247
      %v1249 = vpop.xlane.xlu0 %1248
      %v1250 = vsel %vm1237, %v1233, -inf
      %1251 = vmax.xlane.f32.xlu0 %v1250
      %v1252 = vpop.xlane.xlu0 %1251
      %v1253 = vsel %vm1237, %v1234, -inf
      %1254 = vmax.xlane.f32.xlu0 %v1253
      %v1255 = vpop.xlane.xlu0 %1254
      %v1256 = vsel %vm1237, %v1235, -inf
      %1257 = vmax.xlane.f32.xlu0 %v1256
      %v1258 = vpop.xlane.xlu0 %1257
      %v1259 = vsel %vm1237, %v1236, -inf
      %1260 = vmax.xlane.f32.xlu0 %v1259
      %v1261 = vpop.xlane.xlu0 %1260
      %v1262 = vsub.f32 %v1229, %v1240
      %v1263 = vsub.f32 %v1230, %v1243
      %v1264 = vsub.f32 %v1231, %v1246
      %v1265 = vsub.f32 %v1232, %v1249
      %v1266 = vsub.f32 %v1233, %v1252
      %v1267 = vsub.f32 %v1234, %v1255
      %v1268 = vsub.f32 %v1235, %v1258
      %v1269 = vsub.f32 %v1236, %v1261
      %v1270 = vmul.f32 %v1262, 1.442695
      %v1271 = vpow.pop %v1270
      %v1272 = vmul.f32 %v1263, 1.442695
      %v1273 = vpow.pop %v1272
      %v1274 = vmul.f32 %v1264, 1.442695
      %v1275 = vpow.pop %v1274
      %v1276 = vmul.f32 %v1265, 1.442695
      %v1277 = vpow.pop %v1276
      %v1278 = vmul.f32 %v1266, 1.442695
      %v1279 = vpow.pop %v1278
      %v1280 = vmul.f32 %v1267, 1.442695
      %v1281 = vpow.pop %v1280
      %v1282 = vmul.f32 %v1268, 1.442695
      %v1283 = vpow.pop %v1282
      %v1284 = vmul.f32 %v1269, 1.442695
      %v1285 = vpow.pop %v1284
      %v1286 = vsel %vm1237, %v1271, 0.0
      %1287 = vadd.xlane.f32.xlu0 %v1286
      %v1288 = vpop.xlane.xlu0 %1287
      %v1289 = vsel %vm1237, %v1273, 0.0
      %1290 = vadd.xlane.f32.xlu0 %v1289
      %v1291 = vpop.xlane.xlu0 %1290
      %v1292 = vsel %vm1237, %v1275, 0.0
      %1293 = vadd.xlane.f32.xlu0 %v1292
      %v1294 = vpop.xlane.xlu0 %1293
      %v1295 = vsel %vm1237, %v1277, 0.0
      %1296 = vadd.xlane.f32.xlu0 %v1295
      %v1297 = vpop.xlane.xlu0 %1296
      %v1298 = vsel %vm1237, %v1279, 0.0
      %1299 = vadd.xlane.f32.xlu0 %v1298
      %v1300 = vpop.xlane.xlu0 %1299
      %v1301 = vsel %vm1237, %v1281, 0.0
      %1302 = vadd.xlane.f32.xlu0 %v1301
      %v1303 = vpop.xlane.xlu0 %1302
      %v1304 = vsel %vm1237, %v1283, 0.0
      %1305 = vadd.xlane.f32.xlu0 %v1304
      %v1306 = vpop.xlane.xlu0 %1305
      %v1307 = vsel %vm1237, %v1285, 0.0
      %1308 = vadd.xlane.f32.xlu0 %v1307
      %v1309 = vpop.xlane.xlu0 %1308
      %v1310 = vrcp.pop %v1288
      %v1311 = vrcp.pop %v1291
      %v1312 = vrcp.pop %v1294
      %v1313 = vrcp.pop %v1297
      %v1314 = vrcp.pop %v1300
      %v1315 = vrcp.pop %v1303
      %v1316 = vrcp.pop %v1306
      %v1317 = vrcp.pop %v1309
      %v1318 = vmul.f32 %v1271, %v1310
      %v1319 = vmul.f32 %v1273, %v1311
      %v1320 = vmul.f32 %v1275, %v1312
      %v1321 = vmul.f32 %v1277, %v1313
      %v1322 = vmul.f32 %v1279, %v1314
      %v1323 = vmul.f32 %v1281, %v1315
      %v1324 = vmul.f32 %v1283, %v1316
      %v1325 = vmul.f32 %v1285, %v1317
      %v1326 = vpack.c.bf16 %v1318, %v1318
      %v1327 = vpack.c.bf16 %v1319, %v1319
      %v1328 = vpack.c.bf16 %v1320, %v1320
      %v1329 = vpack.c.bf16 %v1321, %v1321
      %v1330 = vpack.c.bf16 %v1322, %v1322
      %v1331 = vpack.c.bf16 %v1323, %v1323
      %v1332 = vpack.c.bf16 %v1324, %v1324
      %v1333 = vpack.c.bf16 %v1325, %v1325
      %v1335 = vsel %vm1237, %v1326, 0
      %vm1337 = vcmask 1043456
      %v1339 = vsel %vm1337, %v821, 0
      %1341 = vmatprep.subr.bf16.mxu0 0
      %1342 = vmatpush1.bf16.msra.mxu0 %v1339
      %1343 = vmatprep.subr.bf16.mxu0 0
      %1344 = vmatpush1.bf16.msra.mxu0 0
      %1345 = vmatprep.subr.bf16.mxu0 0
      %1346 = vmatpush1.bf16.msra.mxu0 0
      %1347 = vmatprep.subr.bf16.mxu0 0
      %1348 = vmatpush1.bf16.msra.mxu0 0
      %1349 = vmatprep.subr.bf16.mxu0 0
      %1350 = vmatpush1.bf16.msra.mxu0 0
      %1351 = vmatprep.subr.bf16.mxu0 0
      %1352 = vmatpush1.bf16.msra.mxu0 0
      %1353 = vmatprep.subr.bf16.mxu0 0
      %1354 = vmatpush1.bf16.msra.mxu0 0
      %1355 = vmatprep.subr.bf16.mxu0 0
      %1356 = vmatpush1.bf16.msra.mxu0 0
      %1357 = vmatprep.subr.bf16.mxu0 0
      %1358 = vmatpush1.bf16.msra.mxu0 0
      %1359 = vmatprep.subr.bf16.mxu0 0
      %1360 = vmatpush1.bf16.msra.mxu0 0
      %1361 = vmatprep.subr.bf16.mxu0 0
      %1362 = vmatpush1.bf16.msra.mxu0 0
      %1363 = vmatprep.subr.bf16.mxu0 0
      %1364 = vmatpush1.bf16.msra.mxu0 0
      %1365 = vmatprep.subr.bf16.mxu0 0
      %1366 = vmatpush1.bf16.msra.mxu0 0
      %1367 = vmatprep.subr.bf16.mxu0 0
      %1368 = vmatpush1.bf16.msra.mxu0 0
      %1369 = vmatprep.subr.bf16.mxu0 0
      %1370 = vmatpush1.bf16.msra.mxu0 0
      %1371 = vmatprep.subr.bf16.mxu0 0
      %1372 = vmatpush1.bf16.msra.mxu0 0
      %1373 = vmatprep.mubr.bf16.mxu0 0
      %1374 = vmatmul.mubr.bf16.gmra.mrb[0].mxu0 %v1335
      %v1375 = vpop.f32.mrb[0].mxu0
      %v1376 = vadd.f32 0.0, %v1375
      %v1377 = vpop.f32.mrb[0].mxu0
      %v1378 = vpop.f32.mrb[0].mxu0
      %v1379 = vpop.f32.mrb[0].mxu0
      %1380 = vdwg.mxu0
      %v1382 = vsel %vm1237, %v1327, 0
      %v1385 = vsel %vm1337, %v824, 0
      %1387 = vmatprep.subr.bf16.mxu0 0
      %1388 = vmatpush1.bf16.msra.mxu0 %v1385
      %1389 = vmatprep.subr.bf16.mxu0 0
      %1390 = vmatpush1.bf16.msra.mxu0 0
      %1391 = vmatprep.subr.bf16.mxu0 0
      %1392 = vmatpush1.bf16.msra.mxu0 0
      %1393 = vmatprep.subr.bf16.mxu0 0
      %1394 = vmatpush1.bf16.msra.mxu0 0
      %1395 = vmatprep.subr.bf16.mxu0 0
      %1396 = vmatpush1.bf16.msra.mxu0 0
      %1397 = vmatprep.subr.bf16.mxu0 0
      %1398 = vmatpush1.bf16.msra.mxu0 0
      %1399 = vmatprep.subr.bf16.mxu0 0
      %1400 = vmatpush1.bf16.msra.mxu0 0
      %1401 = vmatprep.subr.bf16.mxu0 0
      %1402 = vmatpush1.bf16.msra.mxu0 0
      %1403 = vmatprep.subr.bf16.mxu0 0
      %1404 = vmatpush1.bf16.msra.mxu0 0
      %1405 = vmatprep.subr.bf16.mxu0 0
      %1406 = vmatpush1.bf16.msra.mxu0 0
      %1407 = vmatprep.subr.bf16.mxu0 0
      %1408 = vmatpush1.bf16.msra.mxu0 0
      %1409 = vmatprep.subr.bf16.mxu0 0
      %1410 = vmatpush1.bf16.msra.mxu0 0
      %1411 = vmatprep.subr.bf16.mxu0 0
      %1412 = vmatpush1.bf16.msra.mxu0 0
      %1413 = vmatprep.subr.bf16.mxu0 0
      %1414 = vmatpush1.bf16.msra.mxu0 0
      %1415 = vmatprep.subr.bf16.mxu0 0
      %1416 = vmatpush1.bf16.msra.mxu0 0
      %1417 = vmatprep.subr.bf16.mxu0 0
      %1418 = vmatpush1.bf16.msra.mxu0 0
      %1419 = vmatprep.mubr.bf16.mxu0 0
      %1420 = vmatmul.mubr.bf16.gmra.mrb[0].mxu0 %v1382
      %v1421 = vpop.f32.mrb[0].mxu0
      %v1422 = vadd.f32 0.0, %v1421
      %v1423 = vpop.f32.mrb[0].mxu0
      %v1424 = vpop.f32.mrb[0].mxu0
      %v1425 = vpop.f32.mrb[0].mxu0
      %1426 = vdwg.mxu0
      %v1428 = vsel %vm1237, %v1328, 0
      %v1431 = vsel %vm1337, %v827, 0
      %1433 = vmatprep.subr.bf16.mxu0 0
      %1434 = vmatpush1.bf16.msra.mxu0 %v1431
      %1435 = vmatprep.subr.bf16.mxu0 0
      %1436 = vmatpush1.bf16.msra.mxu0 0
      %1437 = vmatprep.subr.bf16.mxu0 0
      %1438 = vmatpush1.bf16.msra.mxu0 0
      %1439 = vmatprep.subr.bf16.mxu0 0
      %1440 = vmatpush1.bf16.msra.mxu0 0
      %1441 = vmatprep.subr.bf16.mxu0 0
      %1442 = vmatpush1.bf16.msra.mxu0 0
      %1443 = vmatprep.subr.bf16.mxu0 0
      %1444 = vmatpush1.bf16.msra.mxu0 0
      %1445 = vmatprep.subr.bf16.mxu0 0
      %1446 = vmatpush1.bf16.msra.mxu0 0
      %1447 = vmatprep.subr.bf16.mxu0 0
      %1448 = vmatpush1.bf16.msra.mxu0 0
      %1449 = vmatprep.subr.bf16.mxu0 0
      %1450 = vmatpush1.bf16.msra.mxu0 0
      %1451 = vmatprep.subr.bf16.mxu0 0
      %1452 = vmatpush1.bf16.msra.mxu0 0
      %1453 = vmatprep.subr.bf16.mxu0 0
      %1454 = vmatpush1.bf16.msra.mxu0 0
      %1455 = vmatprep.subr.bf16.mxu0 0
      %1456 = vmatpush1.bf16.msra.mxu0 0
      %1457 = vmatprep.subr.bf16.mxu0 0
      %1458 = vmatpush1.bf16.msra.mxu0 0
      %1459 = vmatprep.subr.bf16.mxu0 0
      %1460 = vmatpush1.bf16.msra.mxu0 0
      %1461 = vmatprep.subr.bf16.mxu0 0
      %1462 = vmatpush1.bf16.msra.mxu0 0
      %1463 = vmatprep.subr.bf16.mxu0 0
      %1464 = vmatpush1.bf16.msra.mxu0 0
      %1465 = vmatprep.mubr.bf16.mxu0 0
      %1466 = vmatmul.mubr.bf16.gmra.mrb[0].mxu0 %v1428
      %v1467 = vpop.f32.mrb[0].mxu0
      %v1468 = vadd.f32 0.0, %v1467
      %v1469 = vpop.f32.mrb[0].mxu0
      %v1470 = vpop.f32.mrb[0].mxu0
      %v1471 = vpop.f32.mrb[0].mxu0
      %1472 = vdwg.mxu0
      %v1474 = vsel %vm1237, %v1329, 0
      %v1477 = vsel %vm1337, %v830, 0
      %1479 = vmatprep.subr.bf16.mxu0 0
      %1480 = vmatpush1.bf16.msra.mxu0 %v1477
      %1481 = vmatprep.subr.bf16.mxu0 0
      %1482 = vmatpush1.bf16.msra.mxu0 0
      %1483 = vmatprep.subr.bf16.mxu0 0
      %1484 = vmatpush1.bf16.msra.mxu0 0
      %1485 = vmatprep.subr.bf16.mxu0 0
      %1486 = vmatpush1.bf16.msra.mxu0 0
      %1487 = vmatprep.subr.bf16.mxu0 0
      %1488 = vmatpush1.bf16.msra.mxu0 0
      %1489 = vmatprep.subr.bf16.mxu0 0
      %1490 = vmatpush1.bf16.msra.mxu0 0
      %1491 = vmatprep.subr.bf16.mxu0 0
      %1492 = vmatpush1.bf16.msra.mxu0 0
      %1493 = vmatprep.subr.bf16.mxu0 0
      %1494 = vmatpush1.bf16.msra.mxu0 0
      %1495 = vmatprep.subr.bf16.mxu0 0
      %1496 = vmatpush1.bf16.msra.mxu0 0
      %1497 = vmatprep.subr.bf16.mxu0 0
      %1498 = vmatpush1.bf16.msra.mxu0 0
      %1499 = vmatprep.subr.bf16.mxu0 0
      %1500 = vmatpush1.bf16.msra.mxu0 0
      %1501 = vmatprep.subr.bf16.mxu0 0
      %1502 = vmatpush1.bf16.msra.mxu0 0
      %1503 = vmatprep.subr.bf16.mxu0 0
      %1504 = vmatpush1.bf16.msra.mxu0 0
      %1505 = vmatprep.subr.bf16.mxu0 0
      %1506 = vmatpush1.bf16.msra.mxu0 0
      %1507 = vmatprep.subr.bf16.mxu0 0
      %1508 = vmatpush1.bf16.msra.mxu0 0
      %1509 = vmatprep.subr.bf16.mxu0 0
      %1510 = vmatpush1.bf16.msra.mxu0 0
      %1511 = vmatprep.mubr.bf16.mxu0 0
      %1512 = vmatmul.mubr.bf16.gmra.mrb[0].mxu0 %v1474
      %v1513 = vpop.f32.mrb[0].mxu0
      %v1514 = vadd.f32 0.0, %v1513
      %v1515 = vpop.f32.mrb[0].mxu0
      %v1516 = vpop.f32.mrb[0].mxu0
      %v1517 = vpop.f32.mrb[0].mxu0
      %1518 = vdwg.mxu0
      %v1520 = vsel %vm1237, %v1330, 0
      %v1523 = vsel %vm1337, %v833, 0
      %1525 = vmatprep.subr.bf16.mxu0 0
      %1526 = vmatpush1.bf16.msra.mxu0 %v1523
      %1527 = vmatprep.subr.bf16.mxu0 0
      %1528 = vmatpush1.bf16.msra.mxu0 0
      %1529 = vmatprep.subr.bf16.mxu0 0
      %1530 = vmatpush1.bf16.msra.mxu0 0
      %1531 = vmatprep.subr.bf16.mxu0 0
      %1532 = vmatpush1.bf16.msra.mxu0 0
      %1533 = vmatprep.subr.bf16.mxu0 0
      %1534 = vmatpush1.bf16.msra.mxu0 0
      %1535 = vmatprep.subr.bf16.mxu0 0
      %1536 = vmatpush1.bf16.msra.mxu0 0
      %1537 = vmatprep.subr.bf16.mxu0 0
      %1538 = vmatpush1.bf16.msra.mxu0 0
      %1539 = vmatprep.subr.bf16.mxu0 0
      %1540 = vmatpush1.bf16.msra.mxu0 0
      %1541 = vmatprep.subr.bf16.mxu0 0
      %1542 = vmatpush1.bf16.msra.mxu0 0
      %1543 = vmatprep.subr.bf16.mxu0 0
      %1544 = vmatpush1.bf16.msra.mxu0 0
      %1545 = vmatprep.subr.bf16.mxu0 0
      %1546 = vmatpush1.bf16.msra.mxu0 0
      %1547 = vmatprep.subr.bf16.mxu0 0
      %1548 = vmatpush1.bf16.msra.mxu0 0
      %1549 = vmatprep.subr.bf16.mxu0 0
      %1550 = vmatpush1.bf16.msra.mxu0 0
      %1551 = vmatprep.subr.bf16.mxu0 0
      %1552 = vmatpush1.bf16.msra.mxu0 0
      %1553 = vmatprep.subr.bf16.mxu0 0
      %1554 = vmatpush1.bf16.msra.mxu0 0
      %1555 = vmatprep.subr.bf16.mxu0 0
      %1556 = vmatpush1.bf16.msra.mxu0 0
      %1557 = vmatprep.mubr.bf16.mxu0 0
      %1558 = vmatmul.mubr.bf16.gmra.mrb[0].mxu0 %v1520
      %v1559 = vpop.f32.mrb[0].mxu0
      %v1560 = vadd.f32 0.0, %v1559
      %v1561 = vpop.f32.mrb[0].mxu0
      %v1562 = vpop.f32.mrb[0].mxu0
      %v1563 = vpop.f32.mrb[0].mxu0
      %1564 = vdwg.mxu0
      %v1566 = vsel %vm1237, %v1331, 0
      %v1569 = vsel %vm1337, %v836, 0
      %1571 = vmatprep.subr.bf16.mxu0 0
      %1572 = vmatpush1.bf16.msra.mxu0 %v1569
      %1573 = vmatprep.subr.bf16.mxu0 0
      %1574 = vmatpush1.bf16.msra.mxu0 0
      %1575 = vmatprep.subr.bf16.mxu0 0
      %1576 = vmatpush1.bf16.msra.mxu0 0
      %1577 = vmatprep.subr.bf16.mxu0 0
      %1578 = vmatpush1.bf16.msra.mxu0 0
      %1579 = vmatprep.subr.bf16.mxu0 0
      %1580 = vmatpush1.bf16.msra.mxu0 0
      %1581 = vmatprep.subr.bf16.mxu0 0
      %1582 = vmatpush1.bf16.msra.mxu0 0
      %1583 = vmatprep.subr.bf16.mxu0 0
      %1584 = vmatpush1.bf16.msra.mxu0 0
      %1585 = vmatprep.subr.bf16.mxu0 0
      %1586 = vmatpush1.bf16.msra.mxu0 0
      %1587 = vmatprep.subr.bf16.mxu0 0
      %1588 = vmatpush1.bf16.msra.mxu0 0
      %1589 = vmatprep.subr.bf16.mxu0 0
      %1590 = vmatpush1.bf16.msra.mxu0 0
      %1591 = vmatprep.subr.bf16.mxu0 0
      %1592 = vmatpush1.bf16.msra.mxu0 0
      %1593 = vmatprep.subr.bf16.mxu0 0
      %1594 = vmatpush1.bf16.msra.mxu0 0
      %1595 = vmatprep.subr.bf16.mxu0 0
      %1596 = vmatpush1.bf16.msra.mxu0 0
      %1597 = vmatprep.subr.bf16.mxu0 0
      %1598 = vmatpush1.bf16.msra.mxu0 0
      %1599 = vmatprep.subr.bf16.mxu0 0
      %1600 = vmatpush1.bf16.msra.mxu0 0
      %1601 = vmatprep.subr.bf16.mxu0 0
      %1602 = vmatpush1.bf16.msra.mxu0 0
      %1603 = vmatprep.mubr.bf16.mxu0 0
      %1604 = vmatmul.mubr.bf16.gmra.mrb[0].mxu0 %v1566
      %v1605 = vpop.f32.mrb[0].mxu0
      %v1606 = vadd.f32 0.0, %v1605
      %v1607 = vpop.f32.mrb[0].mxu0
      %v1608 = vpop.f32.mrb[0].mxu0
      %v1609 = vpop.f32.mrb[0].mxu0
      %1610 = vdwg.mxu0
      %v1612 = vsel %vm1237, %v1332, 0
      %v1615 = vsel %vm1337, %v839, 0
      %1617 = vmatprep.subr.bf16.mxu0 0
      %1618 = vmatpush1.bf16.msra.mxu0 %v1615
      %1619 = vmatprep.subr.bf16.mxu0 0
      %1620 = vmatpush1.bf16.msra.mxu0 0
      %1621 = vmatprep.subr.bf16.mxu0 0
      %1622 = vmatpush1.bf16.msra.mxu0 0
      %1623 = vmatprep.subr.bf16.mxu0 0
      %1624 = vmatpush1.bf16.msra.mxu0 0
      %1625 = vmatprep.subr.bf16.mxu0 0
      %1626 = vmatpush1.bf16.msra.mxu0 0
      %1627 = vmatprep.subr.bf16.mxu0 0
      %1628 = vmatpush1.bf16.msra.mxu0 0
      %1629 = vmatprep.subr.bf16.mxu0 0
      %1630 = vmatpush1.bf16.msra.mxu0 0
      %1631 = vmatprep.subr.bf16.mxu0 0
      %1632 = vmatpush1.bf16.msra.mxu0 0
      %1633 = vmatprep.subr.bf16.mxu0 0
      %1634 = vmatpush1.bf16.msra.mxu0 0
      %1635 = vmatprep.subr.bf16.mxu0 0
      %1636 = vmatpush1.bf16.msra.mxu0 0
      %1637 = vmatprep.subr.bf16.mxu0 0
      %1638 = vmatpush1.bf16.msra.mxu0 0
      %1639 = vmatprep.subr.bf16.mxu0 0
      %1640 = vmatpush1.bf16.msra.mxu0 0
      %1641 = vmatprep.subr.bf16.mxu0 0
      %1642 = vmatpush1.bf16.msra.mxu0 0
      %1643 = vmatprep.subr.bf16.mxu0 0
      %1644 = vmatpush1.bf16.msra.mxu0 0
      %1645 = vmatprep.subr.bf16.mxu0 0
      %1646 = vmatpush1.bf16.msra.mxu0 0
      %1647 = vmatprep.subr.bf16.mxu0 0
      %1648 = vmatpush1.bf16.msra.mxu0 0
      %1649 = vmatprep.mubr.bf16.mxu0 0
      %1650 = vmatmul.mubr.bf16.gmra.mrb[0].mxu0 %v1612
      %v1651 = vpop.f32.mrb[0].mxu0
      %v1652 = vadd.f32 0.0, %v1651
      %v1653 = vpop.f32.mrb[0].mxu0
      %v1654 = vpop.f32.mrb[0].mxu0
      %v1655 = vpop.f32.mrb[0].mxu0
      %1656 = vdwg.mxu0
      %v1658 = vsel %vm1237, %v1333, 0
      %v1661 = vsel %vm1337, %v842, 0
      %1663 = vmatprep.subr.bf16.mxu0 0
      %1664 = vmatpush1.bf16.msra.mxu0 %v1661
      %1665 = vmatprep.subr.bf16.mxu0 0
      %1666 = vmatpush1.bf16.msra.mxu0 0
      %1667 = vmatprep.subr.bf16.mxu0 0
      %1668 = vmatpush1.bf16.msra.mxu0 0
      %1669 = vmatprep.subr.bf16.mxu0 0
      %1670 = vmatpush1.bf16.msra.mxu0 0
      %1671 = vmatprep.subr.bf16.mxu0 0
      %1672 = vmatpush1.bf16.msra.mxu0 0
      %1673 = vmatprep.subr.bf16.mxu0 0
      %1674 = vmatpush1.bf16.msra.mxu0 0
      %1675 = vmatprep.subr.bf16.mxu0 0
      %1676 = vmatpush1.bf16.msra.mxu0 0
      %1677 = vmatprep.subr.bf16.mxu0 0
      %1678 = vmatpush1.bf16.msra.mxu0 0
      %1679 = vmatprep.subr.bf16.mxu0 0
      %1680 = vmatpush1.bf16.msra.mxu0 0
      %1681 = vmatprep.subr.bf16.mxu0 0
      %1682 = vmatpush1.bf16.msra.mxu0 0
      %1683 = vmatprep.subr.bf16.mxu0 0
      %1684 = vmatpush1.bf16.msra.mxu0 0
      %1685 = vmatprep.subr.bf16.mxu0 0
      %1686 = vmatpush1.bf16.msra.mxu0 0
      %1687 = vmatprep.subr.bf16.mxu0 0
      %1688 = vmatpush1.bf16.msra.mxu0 0
      %1689 = vmatprep.subr.bf16.mxu0 0
      %1690 = vmatpush1.bf16.msra.mxu0 0
      %1691 = vmatprep.subr.bf16.mxu0 0
      %1692 = vmatpush1.bf16.msra.mxu0 0
      %1693 = vmatprep.subr.bf16.mxu0 0
      %1694 = vmatpush1.bf16.msra.mxu0 0
      %1695 = vmatprep.mubr.bf16.mxu0 0
      %1696 = vmatmul.mubr.bf16.gmra.mrb[0].mxu0 %v1658
      %v1697 = vpop.f32.mrb[0].mxu0
      %v1698 = vadd.f32 0.0, %v1697
      %v1699 = vpop.f32.mrb[0].mxu0
      %v1700 = vpop.f32.mrb[0].mxu0
      %v1701 = vpop.f32.mrb[0].mxu0
      %1702 = vdwg.mxu0
      %v1703 = vcombine.low %v1376, %v1468
      %v1704 = vcombine.high %v1376, %v1468
      %v1706 = vunpack.c.l.s4 1983009808
      %v1707 = vunpack.c.0.s8 %v1706
      %v1708 = vlaneseq
      %v1709 = vshrl.u32 %v1708, 7
      %v1710 = vsub.s32 %v1707, %v1709
      %v1711 = vrot.slane %v1703, %v1710
      %v1713 = vunpack.c.l.s4 1983009808
      %v1714 = vunpack.c.0.s8 %v1713
      %v1715 = vlaneseq
      %v1716 = vshrl.u32 %v1715, 7
      %v1717 = vsub.s32 %v1714, %v1716
      %v1718 = vrot.slane %v1704, %v1717
      %v1719 = vcombine.low %v1422, %v1514
      %v1720 = vcombine.high %v1422, %v1514
      %v1722 = vunpack.c.l.s4 1983009808
      %v1723 = vunpack.c.0.s8 %v1722
      %v1724 = vlaneseq
      %v1725 = vshrl.u32 %v1724, 7
      %v1726 = vsub.s32 %v1723, %v1725
      %v1727 = vrot.slane %v1719, %v1726
      %v1729 = vunpack.c.l.s4 1983009808
      %v1730 = vunpack.c.0.s8 %v1729
      %v1731 = vlaneseq
      %v1732 = vshrl.u32 %v1731, 7
      %v1733 = vsub.s32 %v1730, %v1732
      %v1734 = vrot.slane %v1720, %v1733
      %v1735 = vcombine.low %v1560, %v1652
      %v1736 = vcombine.high %v1560, %v1652
      %v1738 = vunpack.c.l.s4 1983009808
      %v1739 = vunpack.c.0.s8 %v1738
      %v1740 = vlaneseq
      %v1741 = vshrl.u32 %v1740, 7
      %v1742 = vsub.s32 %v1739, %v1741
      %v1743 = vrot.slane %v1735, %v1742
      %v1745 = vunpack.c.l.s4 1983009808
      %v1746 = vunpack.c.0.s8 %v1745
      %v1747 = vlaneseq
      %v1748 = vshrl.u32 %v1747, 7
      %v1749 = vsub.s32 %v1746, %v1748
      %v1750 = vrot.slane %v1736, %v1749
      %v1751 = vcombine.low %v1606, %v1698
      %v1752 = vcombine.high %v1606, %v1698
      %v1754 = vunpack.c.l.s4 1983009808
      %v1755 = vunpack.c.0.s8 %v1754
      %v1756 = vlaneseq
      %v1757 = vshrl.u32 %v1756, 7
      %v1758 = vsub.s32 %v1755, %v1757
      %v1759 = vrot.slane %v1751, %v1758
      %v1761 = vunpack.c.l.s4 1983009808
      %v1762 = vunpack.c.0.s8 %v1761
      %v1763 = vlaneseq
      %v1764 = vshrl.u32 %v1763, 7
      %v1765 = vsub.s32 %v1762, %v1764
      %v1766 = vrot.slane %v1752, %v1765
      %v1767 = vcombine.low %v1711, %v1727
      %v1768 = vcombine.high %v1711, %v1727
      %v1770 = vunpack.c.l.s4 1934713408
      %v1771 = vunpack.c.0.s8 %v1770
      %v1772 = vlaneseq
      %v1773 = vshrl.u32 %v1772, 7
      %v1774 = vsub.s32 %v1771, %v1773
      %v1775 = vrot.slane %v1767, %v1774
      %v1777 = vunpack.c.l.s4 1934713408
      %v1778 = vunpack.c.0.s8 %v1777
      %v1779 = vlaneseq
      %v1780 = vshrl.u32 %v1779, 7
      %v1781 = vsub.s32 %v1778, %v1780
      %v1782 = vrot.slane %v1768, %v1781
      %v1783 = vcombine.low %v1718, %v1734
      %v1784 = vcombine.high %v1718, %v1734
      %v1786 = vunpack.c.l.s4 1934713408
      %v1787 = vunpack.c.0.s8 %v1786
      %v1788 = vlaneseq
      %v1789 = vshrl.u32 %v1788, 7
      %v1790 = vsub.s32 %v1787, %v1789
      %v1791 = vrot.slane %v1783, %v1790
      %v1793 = vunpack.c.l.s4 1934713408
      %v1794 = vunpack.c.0.s8 %v1793
      %v1795 = vlaneseq
      %v1796 = vshrl.u32 %v1795, 7
      %v1797 = vsub.s32 %v1794, %v1796
      %v1798 = vrot.slane %v1784, %v1797
      %v1799 = vcombine.low %v1743, %v1759
      %v1800 = vcombine.high %v1743, %v1759
      %v1802 = vunpack.c.l.s4 1934713408
      %v1803 = vunpack.c.0.s8 %v1802
      %v1804 = vlaneseq
      %v1805 = vshrl.u32 %v1804, 7
      %v1806 = vsub.s32 %v1803, %v1805
      %v1807 = vrot.slane %v1799, %v1806
      %v1809 = vunpack.c.l.s4 1934713408
      %v1810 = vunpack.c.0.s8 %v1809
      %v1811 = vlaneseq
      %v1812 = vshrl.u32 %v1811, 7
      %v1813 = vsub.s32 %v1810, %v1812
      %v1814 = vrot.slane %v1800, %v1813
      %v1815 = vcombine.low %v1750, %v1766
      %v1816 = vcombine.high %v1750, %v1766
      %v1818 = vunpack.c.l.s4 1934713408
      %v1819 = vunpack.c.0.s8 %v1818
      %v1820 = vlaneseq
      %v1821 = vshrl.u32 %v1820, 7
      %v1822 = vsub.s32 %v1819, %v1821
      %v1823 = vrot.slane %v1815, %v1822
      %v1825 = vunpack.c.l.s4 1934713408
      %v1826 = vunpack.c.0.s8 %v1825
      %v1827 = vlaneseq
      %v1828 = vshrl.u32 %v1827, 7
      %v1829 = vsub.s32 %v1826, %v1828
      %v1830 = vrot.slane %v1816, %v1829
      %v1831 = vcombine.low %v1775, %v1807
      %v1832 = vcombine.high %v1775, %v1807
      %v1833 = vcombine.low %v1782, %v1814
      %v1834 = vcombine.high %v1782, %v1814
      %v1835 = vcombine.low %v1791, %v1823
      %v1836 = vcombine.high %v1791, %v1823
      %v1837 = vcombine.low %v1798, %v1830
      %v1838 = vcombine.high %v1798, %v1830
      %v1839 = vcombine.low %v1831, %v1833
      %v1840 = vcombine.high %v1831, %v1833
      %v1842 = vunpack.c.l.s4 1983009808
      %v1843 = vunpack.c.0.s8 %v1842
      %v1844 = vlaneseq
      %v1845 = vshrl.u32 %v1844, 7
      %v1846 = vsub.s32 %v1843, %v1845
      %v1847 = vrot.slane %v1839, %v1846
      %v1849 = vunpack.c.l.s4 1983009808
      %v1850 = vunpack.c.0.s8 %v1849
      %v1851 = vlaneseq
      %v1852 = vshrl.u32 %v1851, 7
      %v1853 = vsub.s32 %v1850, %v1852
      %v1854 = vrot.slane %v1840, %v1853
      %v1855 = vcombine.low %v1832, %v1834
      %v1856 = vcombine.high %v1832, %v1834
      %v1858 = vunpack.c.l.s4 1983009808
      %v1859 = vunpack.c.0.s8 %v1858
      %v1860 = vlaneseq
      %v1861 = vshrl.u32 %v1860, 7
      %v1862 = vsub.s32 %v1859, %v1861
      %v1863 = vrot.slane %v1855, %v1862
      %v1865 = vunpack.c.l.s4 1983009808
      %v1866 = vunpack.c.0.s8 %v1865
      %v1867 = vlaneseq
      %v1868 = vshrl.u32 %v1867, 7
      %v1869 = vsub.s32 %v1866, %v1868
      %v1870 = vrot.slane %v1856, %v1869
      %v1871 = vcombine.low %v1835, %v1837
      %v1872 = vcombine.high %v1835, %v1837
      %v1874 = vunpack.c.l.s4 1983009808
      %v1875 = vunpack.c.0.s8 %v1874
      %v1876 = vlaneseq
      %v1877 = vshrl.u32 %v1876, 7
      %v1878 = vsub.s32 %v1875, %v1877
      %v1879 = vrot.slane %v1871, %v1878
      %v1881 = vunpack.c.l.s4 1983009808
      %v1882 = vunpack.c.0.s8 %v1881
      %v1883 = vlaneseq
      %v1884 = vshrl.u32 %v1883, 7
      %v1885 = vsub.s32 %v1882, %v1884
      %v1886 = vrot.slane %v1872, %v1885
      %v1887 = vcombine.low %v1836, %v1838
      %v1888 = vcombine.high %v1836, %v1838
      %v1890 = vunpack.c.l.s4 1983009808
      %v1891 = vunpack.c.0.s8 %v1890
      %v1892 = vlaneseq
      %v1893 = vshrl.u32 %v1892, 7
      %v1894 = vsub.s32 %v1891, %v1893
      %v1895 = vrot.slane %v1887, %v1894
      %v1897 = vunpack.c.l.s4 1983009808
      %v1898 = vunpack.c.0.s8 %v1897
      %v1899 = vlaneseq
      %v1900 = vshrl.u32 %v1899, 7
      %v1901 = vsub.s32 %v1898, %v1900
      %v1902 = vrot.slane %v1888, %v1901
      %v1903 = vcombine.low %v1847, %v1863
      %v1904 = vcombine.high %v1847, %v1863
      %v1906 = vunpack.c.l.s4 1934713408
      %v1907 = vunpack.c.0.s8 %v1906
      %v1908 = vlaneseq
      %v1909 = vshrl.u32 %v1908, 7
      %v1910 = vsub.s32 %v1907, %v1909
      %v1911 = vrot.slane %v1903, %v1910
      %v1913 = vunpack.c.l.s4 1934713408
      %v1914 = vunpack.c.0.s8 %v1913
      %v1915 = vlaneseq
      %v1916 = vshrl.u32 %v1915, 7
      %v1917 = vsub.s32 %v1914, %v1916
      %v1918 = vrot.slane %v1904, %v1917
      %v1919 = vcombine.low %v1854, %v1870
      %v1920 = vcombine.high %v1854, %v1870
      %v1922 = vunpack.c.l.s4 1934713408
      %v1923 = vunpack.c.0.s8 %v1922
      %v1924 = vlaneseq
      %v1925 = vshrl.u32 %v1924, 7
      %v1926 = vsub.s32 %v1923, %v1925
      %v1927 = vrot.slane %v1919, %v1926
      %v1929 = vunpack.c.l.s4 1934713408
      %v1930 = vunpack.c.0.s8 %v1929
      %v1931 = vlaneseq
      %v1932 = vshrl.u32 %v1931, 7
      %v1933 = vsub.s32 %v1930, %v1932
      %v1934 = vrot.slane %v1920, %v1933
      %v1935 = vcombine.low %v1879, %v1895
      %v1936 = vcombine.high %v1879, %v1895
      %v1938 = vunpack.c.l.s4 1934713408
      %v1939 = vunpack.c.0.s8 %v1938
      %v1940 = vlaneseq
      %v1941 = vshrl.u32 %v1940, 7
      %v1942 = vsub.s32 %v1939, %v1941
      %v1943 = vrot.slane %v1935, %v1942
      %v1945 = vunpack.c.l.s4 1934713408
      %v1946 = vunpack.c.0.s8 %v1945
      %v1947 = vlaneseq
      %v1948 = vshrl.u32 %v1947, 7
      %v1949 = vsub.s32 %v1946, %v1948
      %v1950 = vrot.slane %v1936, %v1949
      %v1951 = vcombine.low %v1886, %v1902
      %v1952 = vcombine.high %v1886, %v1902
      %v1954 = vunpack.c.l.s4 1934713408
      %v1955 = vunpack.c.0.s8 %v1954
      %v1956 = vlaneseq
      %v1957 = vshrl.u32 %v1956, 7
      %v1958 = vsub.s32 %v1955, %v1957
      %v1959 = vrot.slane %v1951, %v1958
      %v1961 = vunpack.c.l.s4 1934713408
      %v1962 = vunpack.c.0.s8 %v1961
      %v1963 = vlaneseq
      %v1964 = vshrl.u32 %v1963, 7
      %v1965 = vsub.s32 %v1962, %v1964
      %v1966 = vrot.slane %v1952, %v1965
      %v1967 = vcombine.low %v1911, %v1943
      %v1968 = vcombine.high %v1911, %v1943
      %v1969 = vcombine.low %v1918, %v1950
      %v1970 = vcombine.high %v1918, %v1950
      %v1971 = vcombine.low %v1927, %v1959
      %v1972 = vcombine.high %v1927, %v1959
      %v1973 = vcombine.low %v1934, %v1966
      %v1974 = vcombine.high %v1934, %v1966
      %1976 = vrot.lane.b32.xlu0 %v1968, 16
      %v1977 = vpop.permute.xlu0 %1976
      %1980 = vrot.lane.b32.xlu0 %v1969, 32
      %v1981 = vpop.permute.xlu0 %1980
      %1984 = vrot.lane.b32.xlu0 %v1970, 48
      %v1985 = vpop.permute.xlu0 %1984
      %1988 = vrot.lane.b32.xlu0 %v1971, 64
      %v1989 = vpop.permute.xlu0 %1988
      %1992 = vrot.lane.b32.xlu0 %v1972, 80
      %v1993 = vpop.permute.xlu0 %1992
      %1996 = vrot.lane.b32.xlu0 %v1973, 96
      %v1997 = vpop.permute.xlu0 %1996
      %2000 = vrot.lane.b32.xlu0 %v1974, 112
      %v2001 = vpop.permute.xlu0 %2000
      %v2003 = vsel %vm843, %v1967, %v1977
      %vm2004 = vcmask 261120
      %v2005 = vsel %vm2004, %v2003, %v1981
      %vm2006 = vcmask 392192
      %v2007 = vsel %vm2006, %v2005, %v1985
      %vm2008 = vcmask 523264
      %v2009 = vsel %vm2008, %v2007, %v1989
      %vm2010 = vcmask 654336
      %v2011 = vsel %vm2010, %v2009, %v1993
      %vm2012 = vcmask 785408
      %v2013 = vsel %vm2012, %v2011, %v1997
      %vm2014 = vcmask 916480
      %v2015 = vsel %vm2014, %v2013, %v2001
      %v2016 = vpack.c.bf16 %v2015, %v2015
      %2017 = vst [vmem:[%s195] sm:$0xf] %v2016
      %p2018 = scmp.lt.s32.totalorder %s17, 1
      %s2019 = scalar_select %p2018, %s17, 1
      %p2020 = scmp.lt.s32.totalorder %s18, 0
      %s2021 = scalar_select %p2020, %s18, 0
      %s2022 = sadd.s32 %s2021, %s2019
      %s2023 = smul.addr %s2022, 4
      %s2024 = scalar_lea.vmem %s2, %s2023
      // Predicated region
      $region29: #{chatbot_forward.41} parent=27 // pred_check
        %p2025 = pneg %p99
      $region30: #{chatbot_forward.41} parent=27 // pred_check_branch
        %2027 = sbr.rel (%p2025) target = $region32
      $region31: #{chatbot_forward.41} parent=27 // pred_region
        _
      $region32: #{chatbot_forward.41} parent=27 // pred_fallthru
        _
    $region28: #{chatbot_forward.41} parent=5 // pred_fallthru
      _
    %p2028 = scmp.le.s32.totalorder 2, %s8
    // Predicated region
    $region33: #{chatbot_forward.41} parent=5 // pred_check
      %p2029 = pneg %p2028
    $region34: #{chatbot_forward.41} parent=5 // pred_check_branch
      %2031 = sbr.rel (%p2029) target = $region36
    $region35: #{chatbot_forward.41} parent=5 // pred_region
      %s2032 = ssub.s32 %s8, 2
      // Predicated region
      $region37: #{chatbot_forward.41} parent=35 // pred_check
        %p2033 = pneg %p105
      $region38: #{chatbot_forward.41} parent=35 // pred_check_branch
        %2035 = sbr.rel (%p2033) target = $region40
      $region39: #{chatbot_forward.41} parent=35 // pred_region
        %p2036 = scmp.lt.s32.totalorder %s19, 1
        %s2037 = scalar_select %p2036, %s19, 1
        %p2038 = scmp.lt.s32.totalorder %s20, 0
        %s2039 = scalar_select %p2038, %s20, 0
        %s2040 = sadd.s32 %s2039, %s2037
        %s2041 = smul.addr %s2040, 4
        %s2042 = scalar_lea.vmem %s2, %s2041
      $region40: #{chatbot_forward.41} parent=35 // pred_fallthru
        _
    $region36: #{chatbot_forward.41} parent=5 // pred_fallthru
      _
  $region6: #{chatbot_forward.41} parent=0 // loop_footer
    %s12 = sadd.s32 1, %s8
  $region7: #{chatbot_forward.41} parent=0 // loop_footer_branch
    %7 = sbr.rel target = $region3
  $region8: #{chatbot_forward.41} parent=0 // loop_exit
    _

// kernel: chatbot_forward.58
$region0: #{chatbot_forward.58}
  #allocation0 [shape = 'u32[]', space=smem, size = 0x4, offset = 0x4, fixed_abs, tag = 'smem constant byte address 0x4 - core index']
  #allocation1 [shape = 'u32[144,128]{1,0:T(1,128)}', space=vmem, size = 0x12000, scoped, tag = 'internal scratch']
  #allocation2 [shape = 'bf16[16,128]{1,0:T(16,128)(2,1)}', space=vmem, size = 0x1000, scoped, tag = 'scratch operand']
  %s0 = inlined_call_operand.vmem [shape: f32[16,128], index: 0, kind: input, shape index: {}]
  %s1 = inlined_call_operand.vmem [shape: f32[1,128], index: 1, kind: input, shape index: {}]
  %s2 = inlined_call_operand.vmem [shape: f32[1,128], index: 2, kind: input, shape index: {}]
  %s3 = inlined_call_operand.vmem [shape: bf16[128,512], index: 3, kind: input, shape index: {}]
  %s4 = inlined_call_operand.vmem [shape: f32[1,512], index: 4, kind: input, shape index: {}]
  %s5 = inlined_call_operand.vmem [shape: f32[16,512], index: 5, kind: output, shape index: {0}]
  %s6 = inlined_call_operand.vmem [shape: f32[16,1], index: 6, kind: output, shape index: {1}]
  %s7 = inlined_call_operand.vmem [shape: f32[16,1], index: 7, kind: output, shape index: {2}]
  %8 = xla_tuple %s5, %s6, %s7
  %s9 = sld [smem:[#allocation0]]
  $region50: #{chatbot_forward.58} parent=0
    _
  %s11 = ssub.s32 1, %s9
  %s12 = scalar_select 0, %s11, %s9
  // Predicated region
  $region2: #{chatbot_forward.58} parent=0 // pred_check
    _
  $region3: #{chatbot_forward.58} parent=0 // pred_check_branch
    %14 = sbr.rel (0) target = $region5
  $region4: #{chatbot_forward.58} parent=0 // pred_region
    _
  $region5: #{chatbot_forward.58} parent=0 // pred_fallthru
    _
  // Predicated region
  $region6: #{chatbot_forward.58} parent=0 // pred_check
    _
  $region7: #{chatbot_forward.58} parent=0 // pred_check_branch
    %16 = sbr.rel (0) target = $region9
  $region8: #{chatbot_forward.58} parent=0 // pred_region
    _
  $region9: #{chatbot_forward.58} parent=0 // pred_fallthru
    _
  // Predicated region
  $region10: #{chatbot_forward.58} parent=0 // pred_check
    _
  $region11: #{chatbot_forward.58} parent=0 // pred_check_branch
    %18 = sbr.rel (0) target = $region13
  $region12: #{chatbot_forward.58} parent=0 // pred_region
    _
  $region13: #{chatbot_forward.58} parent=0 // pred_fallthru
    _
  // Predicated region
  $region14: #{chatbot_forward.58} parent=0 // pred_check
    _
  $region15: #{chatbot_forward.58} parent=0 // pred_check_branch
    %20 = sbr.rel (0) target = $region17
  $region16: #{chatbot_forward.58} parent=0 // pred_region
    _
  $region17: #{chatbot_forward.58} parent=0 // pred_fallthru
    _
  // Predicated region
  $region18: #{chatbot_forward.58} parent=0 // pred_check
    _
  $region19: #{chatbot_forward.58} parent=0 // pred_check_branch
    %22 = sbr.rel (0) target = $region21
  $region20: #{chatbot_forward.58} parent=0 // pred_region
    _
  $region21: #{chatbot_forward.58} parent=0 // pred_fallthru
    _
  %p24 = scmp.eq.s32.totalorder 0, 0
  // Predicated region
  $region22: #{chatbot_forward.58} parent=0 // pred_check
    %p25 = pneg %p24
  $region23: #{chatbot_forward.58} parent=0 // pred_check_branch
    %27 = sbr.rel (%p25) target = $region25
  $region24: #{chatbot_forward.58} parent=0 // pred_region
    %v28 = vld [vmem:[%s0] sm:$0xff]
    %v29 = vld [vmem:[%s0 + $0x8] sm:$0xff]
    %v30 = vld [vmem:[%s1] sm:$0x1]
    %v31 = vld [vmem:[%s2] sm:$0x1]
    %32 = vadd.xlane.f32.xlu0 %v28
    %v33 = vpop.xlane.xlu0 %32
    %34 = vadd.xlane.f32.xlu0 %v29
    %v35 = vpop.xlane.xlu0 %34
    %v36 = vrcp.pop 128.0
    %v37 = vmul.f32 %v33, %v36
    %v38 = vmul.f32 %v35, %v36
    %v39 = vsub.f32 %v28, %v37
    %v40 = vsub.f32 %v29, %v38
    %v41 = vmul.f32 %v39, %v39
    %v42 = vmul.f32 %v40, %v40
    %43 = vadd.xlane.f32.xlu0 %v41
    %v44 = vpop.xlane.xlu0 %43
    %45 = vadd.xlane.f32.xlu0 %v42
    %v46 = vpop.xlane.xlu0 %45
    %v47 = vmul.f32 %v44, %v36
    %v48 = vmul.f32 %v46, %v36
    %v49 = vadd.f32 %v47, 1e-08
    %v50 = vadd.f32 %v48, 1e-08
    %v51 = vrsqrt.pop %v49
    %v52 = vrsqrt.pop %v50
    %v53 = vmul.f32 %v39, %v51
    %v54 = vmul.f32 %v40, %v52
    %v56 = vlaneseq
    %v57 = vshrl.u32 %v56, 7
    %v58 = vsub.s32 0, %v57
    %v59 = vrot.slane %v30, %v58
    %v61 = vmul.f32 %v53, %v59
    %v62 = vmul.f32 %v54, %v59
    %v64 = vlaneseq
    %v65 = vshrl.u32 %v64, 7
    %v66 = vsub.s32 0, %v65
    %v67 = vrot.slane %v31, %v66
    %v69 = vadd.f32 %v61, %v67
    %v70 = vadd.f32 %v62, %v67
    %v71 = vpack.c.bf16 %v70, %v69
    %72 = vst [vmem:[#allocation2] sm:$0xff] %v71
    %vm73 = vcmask 7168
    %74 = vst.msk [vmem:[%s6] sm:$0xff] %vm73, -inf
    %75 = vst.msk [vmem:[%s6 + $0x8] sm:$0xff] %vm73, -inf
    %76 = vst.msk [vmem:[%s7] sm:$0xff] %vm73, 0.0
    %77 = vst.msk [vmem:[%s7 + $0x8] sm:$0xff] %vm73, 0.0
  $region25: #{chatbot_forward.58} parent=0 // pred_fallthru
    _
  %v78 = vld [vmem:[#allocation2] sm:$0xff]
  %v79 = vld [vmem:[%s3] sm:$0xff]
  %v80 = vld [vmem:[%s3 + $0x8] sm:$0xff]
  %v81 = vld [vmem:[%s3 + $0x10] sm:$0xff]
  %v82 = vld [vmem:[%s3 + $0x18] sm:$0xff]
  %v83 = vld [vmem:[%s3 + $0x20] sm:$0xff]
  %v84 = vld [vmem:[%s3 + $0x28] sm:$0xff]
  %v85 = vld [vmem:[%s3 + $0x30] sm:$0xff]
  %v86 = vld [vmem:[%s3 + $0x38] sm:$0xff]
  %v87 = vld [vmem:[%s3 + $0x40] sm:$0xff]
  %v88 = vld [vmem:[%s3 + $0x48] sm:$0xff]
  %v89 = vld [vmem:[%s3 + $0x50] sm:$0xff]
  %v90 = vld [vmem:[%s3 + $0x58] sm:$0xff]
  %v91 = vld [vmem:[%s3 + $0x60] sm:$0xff]
  %v92 = vld [vmem:[%s3 + $0x68] sm:$0xff]
  %v93 = vld [vmem:[%s3 + $0x70] sm:$0xff]
  %v94 = vld [vmem:[%s3 + $0x78] sm:$0xff]
  %v95 = vld [vmem:[%s3 + $0x80] sm:$0xff]
  %v96 = vld [vmem:[%s3 + $0x88] sm:$0xff]
  %v97 = vld [vmem:[%s3 + $0x90] sm:$0xff]
  %v98 = vld [vmem:[%s3 + $0x98] sm:$0xff]
  %v99 = vld [vmem:[%s3 + $0xa0] sm:$0xff]
  %v100 = vld [vmem:[%s3 + $0xa8] sm:$0xff]
  %v101 = vld [vmem:[%s3 + $0xb0] sm:$0xff]
  %v102 = vld [vmem:[%s3 + $0xb8] sm:$0xff]
  %v103 = vld [vmem:[%s3 + $0xc0] sm:$0xff]
  %v104 = vld [vmem:[%s3 + $0xc8] sm:$0xff]
  %v105 = vld [vmem:[%s3 + $0xd0] sm:$0xff]
  %v106 = vld [vmem:[%s3 + $0xd8] sm:$0xff]
  %v107 = vld [vmem:[%s3 + $0xe0] sm:$0xff]
  %v108 = vld [vmem:[%s3 + $0xe8] sm:$0xff]
  %v109 = vld [vmem:[%s3 + $0xf0] sm:$0xff]
  %v110 = vld [vmem:[%s3 + $0xf8] sm:$0xff]
  %v111 = vld [vmem:[%s4] sm:$0xf]
  %v113 = vlaneseq
  %v114 = vshrl.u32 %v113, 7
  %v115 = vsub.s32 0, %v114
  %v116 = vrot.slane %v111, %v115
  %v117 = vlaneseq
  %v118 = vshrl.u32 %v117, 7
  %v119 = vsub.s32 1, %v118
  %v120 = vrot.slane %v111, %v119
  %v121 = vlaneseq
  %v122 = vshrl.u32 %v121, 7
  %v123 = vsub.s32 2, %v122
  %v124 = vrot.slane %v111, %v123
  %v125 = vlaneseq
  %v126 = vshrl.u32 %v125, 7
  %v127 = vsub.s32 3, %v126
  %v128 = vrot.slane %v111, %v127
  %v165 = vunpack.c.l.b16 %v79
  %v166 = vunpack.c.h.b16 %v79
  %v167 = vunpack.c.l.b16 %v80
  %v168 = vunpack.c.h.b16 %v80
  %v169 = vunpack.c.l.b16 %v81
  %v170 = vunpack.c.h.b16 %v81
  %v171 = vunpack.c.l.b16 %v82
  %v172 = vunpack.c.h.b16 %v82
  %v173 = vunpack.c.l.b16 %v83
  %v174 = vunpack.c.h.b16 %v83
  %v175 = vunpack.c.l.b16 %v84
  %v176 = vunpack.c.h.b16 %v84
  %v177 = vunpack.c.l.b16 %v85
  %v178 = vunpack.c.h.b16 %v85
  %v179 = vunpack.c.l.b16 %v86
  %v180 = vunpack.c.h.b16 %v86
  %v181 = vunpack.c.l.b16 %v87
  %v182 = vunpack.c.h.b16 %v87
  %v183 = vunpack.c.l.b16 %v88
  %v184 = vunpack.c.h.b16 %v88
  %v185 = vunpack.c.l.b16 %v89
  %v186 = vunpack.c.h.b16 %v89
  %v187 = vunpack.c.l.b16 %v90
  %v188 = vunpack.c.h.b16 %v90
  %v189 = vunpack.c.l.b16 %v91
  %v190 = vunpack.c.h.b16 %v91
  %v191 = vunpack.c.l.b16 %v92
  %v192 = vunpack.c.h.b16 %v92
  %v193 = vunpack.c.l.b16 %v93
  %v194 = vunpack.c.h.b16 %v93
  %v195 = vunpack.c.l.b16 %v94
  %v196 = vunpack.c.h.b16 %v94
  %v197 = vunpack.c.l.b16 %v95
  %v198 = vunpack.c.h.b16 %v95
  %v199 = vunpack.c.l.b16 %v96
  %v200 = vunpack.c.h.b16 %v96
  %v201 = vunpack.c.l.b16 %v97
  %v202 = vunpack.c.h.b16 %v97
  %v203 = vunpack.c.l.b16 %v98
  %v204 = vunpack.c.h.b16 %v98
  %v205 = vunpack.c.l.b16 %v99
  %v206 = vunpack.c.h.b16 %v99
  %v207 = vunpack.c.l.b16 %v100
  %v208 = vunpack.c.h.b16 %v100
  %v209 = vunpack.c.l.b16 %v101
  %v210 = vunpack.c.h.b16 %v101
  %v211 = vunpack.c.l.b16 %v102
  %v212 = vunpack.c.h.b16 %v102
  %v213 = vunpack.c.l.b16 %v103
  %v214 = vunpack.c.h.b16 %v103
  %v215 = vunpack.c.l.b16 %v104
  %v216 = vunpack.c.h.b16 %v104
  %v217 = vunpack.c.l.b16 %v105
  %v218 = vunpack.c.h.b16 %v105
  %v219 = vunpack.c.l.b16 %v106
  %v220 = vunpack.c.h.b16 %v106
  %v221 = vunpack.c.l.b16 %v107
  %v222 = vunpack.c.h.b16 %v107
  %v223 = vunpack.c.l.b16 %v108
  %v224 = vunpack.c.h.b16 %v108
  %v225 = vunpack.c.l.b16 %v109
  %v226 = vunpack.c.h.b16 %v109
  %v227 = vunpack.c.l.b16 %v110
  %v228 = vunpack.c.h.b16 %v110
  %v229 = vpack.c.b16 %v169, %v165
  %v230 = vpack.c.b16 %v170, %v166
  %v231 = vpack.c.b16 %v171, %v167
  %v232 = vpack.c.b16 %v172, %v168
  %v233 = vpack.c.b16 %v177, %v173
  %v234 = vpack.c.b16 %v178, %v174
  %v235 = vpack.c.b16 %v179, %v175
  %v236 = vpack.c.b16 %v180, %v176
  %v237 = vpack.c.b16 %v185, %v181
  %v238 = vpack.c.b16 %v186, %v182
  %v239 = vpack.c.b16 %v187, %v183
  %v240 = vpack.c.b16 %v188, %v184
  %v241 = vpack.c.b16 %v193, %v189
  %v242 = vpack.c.b16 %v194, %v190
  %v243 = vpack.c.b16 %v195, %v191
  %v244 = vpack.c.b16 %v196, %v192
  %v245 = vpack.c.b16 %v201, %v197
  %v246 = vpack.c.b16 %v202, %v198
  %v247 = vpack.c.b16 %v203, %v199
  %v248 = vpack.c.b16 %v204, %v200
  %v249 = vpack.c.b16 %v209, %v205
  %v250 = vpack.c.b16 %v210, %v206
  %v251 = vpack.c.b16 %v211, %v207
  %v252 = vpack.c.b16 %v212, %v208
  %v253 = vpack.c.b16 %v217, %v213
  %v254 = vpack.c.b16 %v218, %v214
  %v255 = vpack.c.b16 %v219, %v215
  %v256 = vpack.c.b16 %v220, %v216
  %v257 = vpack.c.b16 %v225, %v221
  %v258 = vpack.c.b16 %v226, %v222
  %v259 = vpack.c.b16 %v227, %v223
  %v260 = vpack.c.b16 %v228, %v224
  %293 = vmatprep.subr.bf16.mxu0 %v230
  %294 = vmatpush1.bf16.msra.mxu0 %v229
  %295 = vmatprep.subr.bf16.mxu0 %v234
  %296 = vmatpush1.bf16.msra.mxu0 %v233
  %297 = vmatprep.subr.bf16.mxu0 %v238
  %298 = vmatpush1.bf16.msra.mxu0 %v237
  %299 = vmatprep.subr.bf16.mxu0 %v242
  %300 = vmatpush1.bf16.msra.mxu0 %v241
  %301 = vmatprep.subr.bf16.mxu0 %v246
  %302 = vmatpush1.bf16.msra.mxu0 %v245
  %303 = vmatprep.subr.bf16.mxu0 %v250
  %304 = vmatpush1.bf16.msra.mxu0 %v249
  %305 = vmatprep.subr.bf16.mxu0 %v254
  %306 = vmatpush1.bf16.msra.mxu0 %v253
  %307 = vmatprep.subr.bf16.mxu0 %v258
  %308 = vmatpush1.bf16.msra.mxu0 %v257
  %309 = vmatprep.subr.bf16.mxu0 0
  %310 = vmatpush1.bf16.msra.mxu0 0
  %311 = vmatprep.subr.bf16.mxu0 0
  %312 = vmatpush1.bf16.msra.mxu0 0
  %313 = vmatprep.subr.bf16.mxu0 0
  %314 = vmatpush1.bf16.msra.mxu0 0
  %315 = vmatprep.subr.bf16.mxu0 0
  %316 = vmatpush1.bf16.msra.mxu0 0
  %317 = vmatprep.subr.bf16.mxu0 0
  %318 = vmatpush1.bf16.msra.mxu0 0
  %319 = vmatprep.subr.bf16.mxu0 0
  %320 = vmatpush1.bf16.msra.mxu0 0
  %321 = vmatprep.subr.bf16.mxu0 0
  %322 = vmatpush1.bf16.msra.mxu0 0
  %323 = vmatprep.subr.bf16.mxu0 0
  %324 = vmatpush1.bf16.msra.mxu0 0
  %325 = vmatprep.mubr.bf16.mxu0 0
  %326 = vmatmul.mubr.bf16.gmra.mrb[0].mxu0 %v78
  %v327 = vpop.f32.mrb[0].mxu0
  %v328 = vadd.f32 %v116, %v327
  %v329 = vpop.f32.mrb[0].mxu0
  %v330 = vadd.f32 %v120, %v329
  %v331 = vpop.f32.mrb[0].mxu0
  %v332 = vadd.f32 %v116, %v331
  %v333 = vpop.f32.mrb[0].mxu0
  %v334 = vadd.f32 %v120, %v333
  %335 = vdwg.mxu0
  %336 = vmatprep.subr.bf16.mxu0 %v232
  %337 = vmatpush1.bf16.msra.mxu0 %v231
  %338 = vmatprep.subr.bf16.mxu0 %v236
  %339 = vmatpush1.bf16.msra.mxu0 %v235
  %340 = vmatprep.subr.bf16.mxu0 %v240
  %341 = vmatpush1.bf16.msra.mxu0 %v239
  %342 = vmatprep.subr.bf16.mxu0 %v244
  %343 = vmatpush1.bf16.msra.mxu0 %v243
  %344 = vmatprep.subr.bf16.mxu0 %v248
  %345 = vmatpush1.bf16.msra.mxu0 %v247
  %346 = vmatprep.subr.bf16.mxu0 %v252
  %347 = vmatpush1.bf16.msra.mxu0 %v251
  %348 = vmatprep.subr.bf16.mxu0 %v256
  %349 = vmatpush1.bf16.msra.mxu0 %v255
  %350 = vmatprep.subr.bf16.mxu0 %v260
  %351 = vmatpush1.bf16.msra.mxu0 %v259
  %352 = vmatprep.subr.bf16.mxu0 0
  %353 = vmatpush1.bf16.msra.mxu0 0
  %354 = vmatprep.subr.bf16.mxu0 0
  %355 = vmatpush1.bf16.msra.mxu0 0
  %356 = vmatprep.subr.bf16.mxu0 0
  %357 = vmatpush1.bf16.msra.mxu0 0
  %358 = vmatprep.subr.bf16.mxu0 0
  %359 = vmatpush1.bf16.msra.mxu0 0
  %360 = vmatprep.subr.bf16.mxu0 0
  %361 = vmatpush1.bf16.msra.mxu0 0
  %362 = vmatprep.subr.bf16.mxu0 0
  %363 = vmatpush1.bf16.msra.mxu0 0
  %364 = vmatprep.subr.bf16.mxu0 0
  %365 = vmatpush1.bf16.msra.mxu0 0
  %366 = vmatprep.subr.bf16.mxu0 0
  %367 = vmatpush1.bf16.msra.mxu0 0
  %368 = vmatprep.mubr.bf16.mxu0 0
  %369 = vmatmul.mubr.bf16.gmra.mrb[0].mxu0 %v78
  %v370 = vpop.f32.mrb[0].mxu0
  %v371 = vadd.f32 %v124, %v370
  %v372 = vpop.f32.mrb[0].mxu0
  %v373 = vadd.f32 %v128, %v372
  %v374 = vpop.f32.mrb[0].mxu0
  %v375 = vadd.f32 %v124, %v374
  %v376 = vpop.f32.mrb[0].mxu0
  %v377 = vadd.f32 %v128, %v376
  %378 = vdwg.mxu0
  %379 = vst [vmem:[%s5] sm:$0xff] %v328
  %380 = vst [vmem:[%s5 + $0x8] sm:$0xff] %v330
  %381 = vst [vmem:[%s5 + $0x10] sm:$0xff] %v371
  %382 = vst [vmem:[%s5 + $0x18] sm:$0xff] %v373
  %383 = vst [vmem:[%s5 + $0x20] sm:$0xff] %v332
  %384 = vst [vmem:[%s5 + $0x28] sm:$0xff] %v334
  %385 = vst [vmem:[%s5 + $0x30] sm:$0xff] %v375
  %386 = vst [vmem:[%s5 + $0x38] sm:$0xff] %v377
  %v387 = vld [vmem:[%s6] sm:$0xff]
  %v388 = vld [vmem:[%s6 + $0x8] sm:$0xff]
  %v389 = vmax.f32 %v328, %v371
  %v390 = vmax.f32 %v330, %v373
  %v391 = vmax.f32 %v389, %v390
  %392 = vmax.xlane.f32.xlu0 %v391
  %v393 = vpop.xlane.xlu0 %392
  %v394 = vmax.f32 %v332, %v375
  %v395 = vmax.f32 %v334, %v377
  %v396 = vmax.f32 %v394, %v395
  %397 = vmax.xlane.f32.xlu0 %v396
  %v398 = vpop.xlane.xlu0 %397
  %v399 = vmax.f32 %v387, %v393
  %v400 = vmax.f32 %v388, %v398
  %v401 = vld [vmem:[%s7] sm:$0xff]
  %v402 = vld [vmem:[%s7 + $0x8] sm:$0xff]
  %v403 = vsub.f32 %v387, %v399
  %v404 = vsub.f32 %v388, %v400
  %v405 = vmul.f32 %v403, 1.442695
  %v406 = vpow.pop %v405
  %v407 = vmul.f32 %v404, 1.442695
  %v408 = vpow.pop %v407
  %v409 = vmul.f32 %v401, %v406
  %v410 = vmul.f32 %v402, %v408
  %412 = vset.pattern.permute.xlu0 0
  %413 = vperm.xlu0 %412, %v399
  %v414 = vpop.permute.xlu0 %413
  %417 = vset.pattern.permute.xlu0 0
  %418 = vperm.xlu0 %417, %v400
  %v419 = vpop.permute.xlu0 %418
  %v421 = vsub.f32 %v328, %v414
  %v422 = vsub.f32 %v330, %v414
  %v423 = vsub.f32 %v371, %v414
  %v424 = vsub.f32 %v373, %v414
  %v425 = vsub.f32 %v332, %v419
  %v426 = vsub.f32 %v334, %v419
  %v427 = vsub.f32 %v375, %v419
  %v428 = vsub.f32 %v377, %v419
  %v429 = vmul.f32 %v421, 1.442695
  %v430 = vpow.pop %v429
  %v431 = vmul.f32 %v422, 1.442695
  %v432 = vpow.pop %v431
  %v433 = vmul.f32 %v423, 1.442695
  %v434 = vpow.pop %v433
  %v435 = vmul.f32 %v424, 1.442695
  %v436 = vpow.pop %v435
  %v437 = vmul.f32 %v425, 1.442695
  %v438 = vpow.pop %v437
  %v439 = vmul.f32 %v426, 1.442695
  %v440 = vpow.pop %v439
  %v441 = vmul.f32 %v427, 1.442695
  %v442 = vpow.pop %v441
  %v443 = vmul.f32 %v428, 1.442695
  %v444 = vpow.pop %v443
  %v445 = vadd.f32 %v430, %v432
  %v446 = vadd.f32 %v445, %v434
  %v447 = vadd.f32 %v446, %v436
  %448 = vadd.xlane.f32.xlu0 %v447
  %v449 = vpop.xlane.xlu0 %448
  %v450 = vadd.f32 %v438, %v440
  %v451 = vadd.f32 %v450, %v442
  %v452 = vadd.f32 %v451, %v444
  %453 = vadd.xlane.f32.xlu0 %v452
  %v454 = vpop.xlane.xlu0 %453
  %v455 = vadd.f32 %v409, %v449
  %v456 = vadd.f32 %v410, %v454
  %vm457 = vcmask 7168
  %458 = vst.msk [vmem:[%s7] sm:$0xff] %vm457, %v455
  %459 = vst.msk [vmem:[%s7 + $0x8] sm:$0xff] %vm457, %v456
  %460 = vst.msk [vmem:[%s6] sm:$0xff] %vm457, %v399
  %461 = vst.msk [vmem:[%s6 + $0x8] sm:$0xff] %vm457, %v400
  // Predicated region
  $region26: #{chatbot_forward.58} parent=0 // pred_check
    _
  $region27: #{chatbot_forward.58} parent=0 // pred_check_branch
    %463 = sbr.rel (0) target = $region29
  $region28: #{chatbot_forward.58} parent=0 // pred_region
    _
  $region29: #{chatbot_forward.58} parent=0 // pred_fallthru
    _
  // Predicated region
  $region30: #{chatbot_forward.58} parent=0 // pred_check
    _
  $region31: #{chatbot_forward.58} parent=0 // pred_check_branch
    %465 = sbr.rel (0) target = $region33
  $region32: #{chatbot_forward.58} parent=0 // pred_region
    _
  $region33: #{chatbot_forward.58} parent=0 // pred_fallthru
    _
  // Predicated region
  $region34: #{chatbot_forward.58} parent=0 // pred_check
    _
  $region35: #{chatbot_forward.58} parent=0 // pred_check_branch
    %467 = sbr.rel (0) target = $region37
  $region36: #{chatbot_forward.58} parent=0 // pred_region
    _
  $region37: #{chatbot_forward.58} parent=0 // pred_fallthru
    _
  // Predicated region
  $region38: #{chatbot_forward.58} parent=0 // pred_check
    _
  $region39: #{chatbot_forward.58} parent=0 // pred_check_branch
    %469 = sbr.rel (0) target = $region41
  $region40: #{chatbot_forward.58} parent=0 // pred_region
    _
  $region41: #{chatbot_forward.58} parent=0 // pred_fallthru
    _
  // Predicated region
  $region42: #{chatbot_forward.58} parent=0 // pred_check
    _
  $region43: #{chatbot_forward.58} parent=0 // pred_check_branch
    %471 = sbr.rel (0) target = $region45
  $region44: #{chatbot_forward.58} parent=0 // pred_region
    _
  $region45: #{chatbot_forward.58} parent=0 // pred_fallthru
    _
  // Predicated region
  $region46: #{chatbot_forward.58} parent=0 // pred_check
    _
  $region47: #{chatbot_forward.58} parent=0 // pred_check_branch
    %473 = sbr.rel (0) target = $region49
  $region48: #{chatbot_forward.58} parent=0 // pred_region
    _
  $region49: #{chatbot_forward.58} parent=0 // pred_fallthru
    _

// kernel: chatbot_forward.59
$region0: #{chatbot_forward.59}
  #allocation0 [shape = 'u32[]', space=smem, size = 0x4, offset = 0x4, fixed_abs, tag = 'smem constant byte address 0x4 - core index']
  #allocation1 [shape = 'u32[144,128]{1,0:T(1,128)}', space=vmem, size = 0x12000, scoped, tag = 'internal scratch']
  %s0 = inlined_call_operand.vmem [shape: f32[16,512], index: 0, kind: input, shape index: {}]
  %s1 = inlined_call_operand.vmem [shape: f32[16,1], index: 1, kind: input, shape index: {}]
  %s2 = inlined_call_operand.vmem [shape: f32[16,1], index: 2, kind: input, shape index: {}]
  %s3 = inlined_call_operand.hbm [shape: f32[16,512], index: 3, kind: output, shape index: {}]
  %s4 = sld [smem:[#allocation0]]
  $region22: #{chatbot_forward.59} parent=0
    _
  %s6 = ssub.s32 1, %s4
  %s7 = scalar_select 0, %s6, %s4
  $region1: #{chatbot_forward.59} parent=0
    #allocation2 [shape = 'u8[32768]{0}', space=vmem, size = 0x8000, scoped, tag = 'output window, operand 0, single buffered']
    #allocation3 [shape = 's32[1]{0}', space=sflag, size = 0x4, scoped, tag = 'scoped memory for chatbot_forward.59']
    %8 = vsyncpa [#allocation3], 0
    // Predicated region
    $region2: #{chatbot_forward.59} parent=1 // pred_check
      _
    $region3: #{chatbot_forward.59} parent=1 // pred_check_branch
      %10 = sbr.rel (0) target = $region5
    $region4: #{chatbot_forward.59} parent=1 // pred_region
      _
    $region5: #{chatbot_forward.59} parent=1 // pred_fallthru
      _
    // Predicated region
    $region6: #{chatbot_forward.59} parent=1 // pred_check
      _
    $region7: #{chatbot_forward.59} parent=1 // pred_check_branch
      %12 = sbr.rel (0) target = $region9
    $region8: #{chatbot_forward.59} parent=1 // pred_region
      _
    $region9: #{chatbot_forward.59} parent=1 // pred_fallthru
      _
    // Predicated region
    $region10: #{chatbot_forward.59} parent=1 // pred_check
      _
    $region11: #{chatbot_forward.59} parent=1 // pred_check_branch
      %14 = sbr.rel (0) target = $region13
    $region12: #{chatbot_forward.59} parent=1 // pred_region
      _
    $region13: #{chatbot_forward.59} parent=1 // pred_fallthru
      _
    %v15 = vld [vmem:[%s0] sm:$0xff]
    %v16 = vld [vmem:[%s0 + $0x8] sm:$0xff]
    %v17 = vld [vmem:[%s0 + $0x10] sm:$0xff]
    %v18 = vld [vmem:[%s0 + $0x18] sm:$0xff]
    %v19 = vld [vmem:[%s0 + $0x20] sm:$0xff]
    %v20 = vld [vmem:[%s0 + $0x28] sm:$0xff]
    %v21 = vld [vmem:[%s0 + $0x30] sm:$0xff]
    %v22 = vld [vmem:[%s0 + $0x38] sm:$0xff]
    %v23 = vld [vmem:[%s1] sm:$0xff]
    %v24 = vld [vmem:[%s1 + $0x8] sm:$0xff]
    %v25 = vld [vmem:[%s2] sm:$0xff]
    %v26 = vld [vmem:[%s2 + $0x8] sm:$0xff]
    %v27 = vlog2.pop %v25
    %v28 = vmul.f32 %v27, 0.6931472
    %v29 = vlog2.pop %v26
    %v30 = vmul.f32 %v29, 0.6931472
    %v31 = vadd.f32 %v23, %v28
    %v32 = vadd.f32 %v24, %v30
    %34 = vset.pattern.permute.xlu0 0
    %35 = vperm.xlu0 %34, %v31
    %v36 = vpop.permute.xlu0 %35
    %39 = vset.pattern.permute.xlu0 0
    %40 = vperm.xlu0 %39, %v32
    %v41 = vpop.permute.xlu0 %40
    %v43 = vsub.f32 %v15, %v36
    %v44 = vsub.f32 %v16, %v36
    %v45 = vsub.f32 %v17, %v36
    %v46 = vsub.f32 %v18, %v36
    %v47 = vsub.f32 %v19, %v41
    %v48 = vsub.f32 %v20, %v41
    %v49 = vsub.f32 %v21, %v41
    %v50 = vsub.f32 %v22, %v41
    %51 = vst [vmem:[#allocation2] sm:$0xff] %v43
    %52 = vst [vmem:[#allocation2 + $0x8] sm:$0xff] %v44
    %53 = vst [vmem:[#allocation2 + $0x10] sm:$0xff] %v45
    %54 = vst [vmem:[#allocation2 + $0x18] sm:$0xff] %v46
    %55 = vst [vmem:[#allocation2 + $0x20] sm:$0xff] %v47
    %56 = vst [vmem:[#allocation2 + $0x28] sm:$0xff] %v48
    %57 = vst [vmem:[#allocation2 + $0x30] sm:$0xff] %v49
    %58 = vst [vmem:[#allocation2 + $0x38] sm:$0xff] %v50
    // Predicated region
    $region14: #{chatbot_forward.59} parent=1 // pred_check
      _
    $region15: #{chatbot_forward.59} parent=1 // pred_check_branch
      %60 = sbr.rel (0) target = $region17
    $region16: #{chatbot_forward.59} parent=1 // pred_region
      %s62 = ssub.s32 1024, 1024
      %63 = vsyncadd [#allocation3], %s62
      %s64 = sshll.u32 [#allocation2], 4
      %s65 = int_to_ptr.vmem [resolvable:$true] %s64
      %70 = dma.vmem_to_hbm [thread:$0]  %s65, 1024, %s3, [#allocation3], 512, 512, 32
    $region17: #{chatbot_forward.59} parent=1 // pred_fallthru
      _
    // Predicated region
    $region18: #{chatbot_forward.59} parent=1 // pred_check
      _
    $region19: #{chatbot_forward.59} parent=1 // pred_check_branch
      %72 = sbr.rel (0) target = $region21
    $region20: #{chatbot_forward.59} parent=1 // pred_region
      %73 = dma.done [#allocation3], 1024
    $region21: #{chatbot_forward.59} parent=1 // pred_fallthru
      _
    %74 = vsyncpa [#allocation3], 1

// kernel: chatbot_forward.45
$region0: #{chatbot_forward.45}
  #allocation0 [shape = 'u32[]', space=smem, size = 0x4, offset = 0x4, fixed_abs, tag = 'smem constant byte address 0x4 - core index']
  #allocation1 [shape = 'u32[144,128]{1,0:T(1,128)}', space=vmem, size = 0x12000, scoped, tag = 'internal scratch']
  %s0 = inlined_call_operand.vmem [shape: bf16[2,8,128], index: 0, kind: input, shape index: {}]
  %s1 = inlined_call_operand.vmem [shape: bf16[2,8,256], index: 1, kind: input, shape index: {}]
  %s2 = inlined_call_operand.vmem [shape: bf16[2,8,128], index: 2, kind: output, shape index: {}]
  %s3 = sld [smem:[#allocation0]]
  $region41: #{chatbot_forward.45} parent=0
    _
  %s5 = ssub.s32 1, %s3
  %s6 = scalar_select 0, %s5, %s3
  loop: start=0, step=1, limit=4
  $region2: #{chatbot_forward.45} parent=0 // loop_pre_header
    _
  $region3: #{chatbot_forward.45} parent=0 // loop_header
    %s8 = sphi 0, %s12
    %p9 = scmp.ge.s32.totalorder %s8, 4
    %s15 = sphi 0, %s27
    %s16 = sphi 0, %s23
    %s17 = sphi 0, %s15
    %s18 = sphi 0, %s16
    %s19 = sphi 0, %s17
    %s20 = sphi 0, %s18
    %s32 = sphi 0, %s34
    %s35 = sphi 0, %s32
    %s36 = sphi 0, %s35
    %s52 = sphi 0, %s36
    %s58 = sphi 0, %s60
    %s61 = sphi 0, %s58
    %s62 = sphi 0, %s61
    %s78 = sphi 0, %s62
    %s86 = sphi 0, %s88
    %s89 = sphi 0, %s86
    %s90 = sphi 0, %s89
    %s106 = sphi 0, %s90
  $region4: #{chatbot_forward.45} parent=0 // loop_header_branch
    %11 = sbr.rel (%p9) target = $region8
  $region5: #{chatbot_forward.45} parent=0 // loop_body
    %s13 = ssub.s32 %s8, 1
    %s14 = ssub.s32 %s8, 2
    %s21 = sadd.s32 1, %s16
    %p22 = scmp.ge.s32.totalorder %s21, 1
    %s23 = scalar_select %p22, 0, %s21
    %s24 = sadd.s32 1, %s15
    %s25 = scalar_select %p22, %s24, %s15
    %p26 = scmp.ge.s32.totalorder %s25, 2
    %s27 = scalar_select %p26, 0, %s25
    %s28 = ssub.s32 %s15, %s27
    %s29 = ssub.s32 %s16, %s23
    %s30 = sor.u32 %s28, %s29
    %p31 = scmp.eq.s32.totalorder %s30, 0
    %s33 = sadd.s32 %s32, 1
    %s34 = scalar_select %p31, %s32, %s33
    %p37 = pneg %p31
    %p38 = scmp.eq.s32.totalorder %s8, 1
    %p39 = por %p37, %p38
    %p40 = scmp.ne.s32.totalorder %s32, %s35
    %p41 = scmp.eq.s32.totalorder %s8, 0
    %p42 = por %p40, %p41
    %p43 = scmp.ne.s32.totalorder %s32, %s35
    %p44 = scmp.eq.s32.totalorder %s13, 1
    %p45 = por %p43, %p44
    %p46 = scmp.ne.s32.totalorder %s35, %s36
    %p47 = scmp.eq.s32.totalorder %s13, 0
    %p48 = por %p46, %p47
    %p49 = scmp.ne.s32.totalorder %s35, %s36
    %p50 = scmp.eq.s32.totalorder %s14, 1
    %p51 = por %p49, %p50
    %p53 = scmp.ne.s32.totalorder %s36, %s52
    %p54 = scmp.eq.s32.totalorder %s14, 0
    %p55 = por %p53, %p54
    %s56 = ssub.s32 %s15, %s27
    %p57 = scmp.eq.s32.totalorder %s56, 0
    %s59 = sadd.s32 %s58, 1
    %s60 = scalar_select %p57, %s58, %s59
    %p63 = pneg %p57
    %p64 = scmp.eq.s32.totalorder %s8, 1
    %p65 = por %p63, %p64
    %p66 = scmp.ne.s32.totalorder %s58, %s61
    %p67 = scmp.eq.s32.totalorder %s8, 0
    %p68 = por %p66, %p67
    %p69 = scmp.ne.s32.totalorder %s58, %s61
    %p70 = scmp.eq.s32.totalorder %s13, 1
    %p71 = por %p69, %p70
    %p72 = scmp.ne.s32.totalorder %s61, %s62
    %p73 = scmp.eq.s32.totalorder %s13, 0
    %p74 = por %p72, %p73
    %p75 = scmp.ne.s32.totalorder %s61, %s62
    %p76 = scmp.eq.s32.totalorder %s14, 1
    %p77 = por %p75, %p76
    %p79 = scmp.ne.s32.totalorder %s62, %s78
    %p80 = scmp.eq.s32.totalorder %s14, 0
    %p81 = por %p79, %p80
    %s82 = ssub.s32 %s15, %s27
    %s83 = ssub.s32 %s16, %s23
    %s84 = sor.u32 %s82, %s83
    %p85 = scmp.eq.s32.totalorder %s84, 0
    %s87 = sadd.s32 %s86, 1
    %s88 = scalar_select %p85, %s86, %s87
    %p91 = pneg %p85
    %p92 = scmp.eq.s32.totalorder %s8, 1
    %p93 = por %p91, %p92
    %p94 = scmp.ne.s32.totalorder %s86, %s89
    %p95 = scmp.eq.s32.totalorder %s8, 0
    %p96 = por %p94, %p95
    %p97 = scmp.ne.s32.totalorder %s86, %s89
    %p98 = scmp.eq.s32.totalorder %s13, 1
    %p99 = por %p97, %p98
    %p100 = scmp.ne.s32.totalorder %s89, %s90
    %p101 = scmp.eq.s32.totalorder %s13, 0
    %p102 = por %p100, %p101
    %p103 = scmp.ne.s32.totalorder %s89, %s90
    %p104 = scmp.eq.s32.totalorder %s14, 1
    %p105 = por %p103, %p104
    %p107 = scmp.ne.s32.totalorder %s90, %s106
    %p108 = scmp.eq.s32.totalorder %s14, 0
    %p109 = por %p107, %p108
    %p110 = scmp.le.s32.totalorder 1, %s8
    %p111 = scmp.lt.s32.totalorder %s8, 3
    %p112 = pnand %p110, %p111
    %p113 = pneg %p112
    // Predicated region
    $region9: #{chatbot_forward.45} parent=5 // pred_check
      _
    $region10: #{chatbot_forward.45} parent=5 // pred_check_branch
      %115 = sbr.rel (%p112) target = $region12
    $region11: #{chatbot_forward.45} parent=5 // pred_region
      %s116 = ssub.s32 %s8, 1
    $region12: #{chatbot_forward.45} parent=5 // pred_fallthru
      _
    %p117 = scmp.lt.s32.totalorder %s8, 2
    // Predicated region
    $region13: #{chatbot_forward.45} parent=5 // pred_check
      %p118 = pneg %p117
    $region14: #{chatbot_forward.45} parent=5 // pred_check_branch
      %120 = sbr.rel (%p118) target = $region16
    $region15: #{chatbot_forward.45} parent=5 // pred_region
      // Predicated region
      $region17: #{chatbot_forward.45} parent=15 // pred_check
        %p121 = pneg %p42
      $region18: #{chatbot_forward.45} parent=15 // pred_check_branch
        %123 = sbr.rel (%p121) target = $region20
      $region19: #{chatbot_forward.45} parent=15 // pred_region
        %p124 = scmp.lt.s32.totalorder %s15, 1
        %s125 = scalar_select %p124, %s15, 1
        %p126 = scmp.lt.s32.totalorder %s16, 0
        %s127 = scalar_select %p126, %s16, 0
        %s128 = sadd.s32 %s127, %s125
        %s129 = smul.addr %s128, 4
        %s130 = scalar_lea.vmem %s0, %s129
      $region20: #{chatbot_forward.45} parent=15 // pred_fallthru
        _
      // Predicated region
      $region21: #{chatbot_forward.45} parent=15 // pred_check
        %p131 = pneg %p68
      $region22: #{chatbot_forward.45} parent=15 // pred_check_branch
        %133 = sbr.rel (%p131) target = $region24
      $region23: #{chatbot_forward.45} parent=15 // pred_region
        %p134 = scmp.lt.s32.totalorder %s15, 1
        %s135 = scalar_select %p134, %s15, 1
        %s136 = smul.addr %s135, 2
        %s137 = smul.addr %s136, 4
        %s138 = scalar_lea.vmem %s1, %s137
      $region24: #{chatbot_forward.45} parent=15 // pred_fallthru
        _
    $region16: #{chatbot_forward.45} parent=5 // pred_fallthru
      _
    %p139 = scmp.le.s32.totalorder 1, %s8
    %p140 = scmp.lt.s32.totalorder %s8, 3
    %p141 = pnand %p139, %p140
    %p142 = pneg %p141
    // Predicated region
    $region25: #{chatbot_forward.45} parent=5 // pred_check
      _
    $region26: #{chatbot_forward.45} parent=5 // pred_check_branch
      %144 = sbr.rel (%p141) target = $region28
    $region27: #{chatbot_forward.45} parent=5 // pred_region
      %s145 = ssub.s32 %s8, 1
      %p146 = scmp.lt.s32.totalorder %s17, 1
      %s147 = scalar_select %p146, %s17, 1
      %p148 = scmp.lt.s32.totalorder %s18, 0
      %s149 = scalar_select %p148, %s18, 0
      %s150 = sadd.s32 %s149, %s147
      %s151 = smul.addr %s150, 4
      %s152 = scalar_lea.vmem %s0, %s151
      %p153 = pneg %p48
      %p154 = pneg %p45
      %p155 = scmp.lt.s32.totalorder %s17, 1
      %s156 = scalar_select %p155, %s17, 1
      %s157 = smul.addr %s156, 2
      %s158 = smul.addr %s157, 4
      %s159 = scalar_lea.vmem %s1, %s158
      %p160 = pneg %p74
      %p161 = pneg %p71
      %p162 = pneg %p102
      %p163 = pneg %p99
      %p164 = scmp.lt.s32.totalorder %s17, 1
      %s165 = scalar_select %p164, %s17, 1
      %p166 = scmp.lt.s32.totalorder %s18, 0
      %s167 = scalar_select %p166, %s18, 0
      %s168 = sadd.s32 %s167, %s165
      %s169 = smul.addr %s168, 4
      %s170 = scalar_lea.vmem %s2, %s169
      %p171 = scmp.lt.s32.totalorder %s17, 1
      %s172 = scalar_select %p171, %s17, 1
      %p173 = scmp.lt.s32.totalorder %s18, 0
      %s174 = scalar_select %p173, %s18, 0
      %s175 = sadd.s32 %s174, %s172
      %s176 = smul.addr %s175, 4
      %s177 = scalar_lea.vmem %s0, %s176
      %p178 = scmp.lt.s32.totalorder %s17, 1
      %s179 = scalar_select %p178, %s17, 1
      %s180 = smul.addr %s179, 2
      %s181 = smul.addr %s180, 4
      %s182 = scalar_lea.vmem %s1, %s181
      %p183 = scmp.lt.s32.totalorder %s17, 1
      %s184 = scalar_select %p183, %s17, 1
      %p185 = scmp.lt.s32.totalorder %s18, 0
      %s186 = scalar_select %p185, %s18, 0
      %s187 = sadd.s32 %s186, %s184
      %s188 = smul.addr %s187, 4
      %s189 = scalar_lea.vmem %s2, %s188
      %v191 = vld [vmem:[%s182] sm:$0xff]
      %v192 = vld [vmem:[%s177] sm:$0xf]
      %194 = vrot.lane.b32.xlu0 %v192, 112
      %v195 = vpop.permute.xlu0 %194
      %197 = vrot.lane.b32.xlu0 %v192, 96
      %v198 = vpop.permute.xlu0 %197
      %200 = vrot.lane.b32.xlu0 %v192, 80
      %v201 = vpop.permute.xlu0 %200
      %203 = vrot.lane.b32.xlu0 %v192, 64
      %v204 = vpop.permute.xlu0 %203
      %206 = vrot.lane.b32.xlu0 %v192, 48
      %v207 = vpop.permute.xlu0 %206
      %209 = vrot.lane.b32.xlu0 %v192, 32
      %v210 = vpop.permute.xlu0 %209
      %212 = vrot.lane.b32.xlu0 %v192, 16
      %v213 = vpop.permute.xlu0 %212
      %v215 = vcombine.low %v192, %v204
      %v217 = vunpack.c.l.s4 1983009808
      %v218 = vunpack.c.0.s8 %v217
      %v219 = vlaneseq
      %v220 = vshrl.u32 %v219, 7
      %v221 = vsub.s32 %v218, %v220
      %v222 = vrot.slane %v215, %v221
      %v223 = vcombine.low %v198, %v210
      %v225 = vunpack.c.l.s4 1983009808
      %v226 = vunpack.c.0.s8 %v225
      %v227 = vlaneseq
      %v228 = vshrl.u32 %v227, 7
      %v229 = vsub.s32 %v226, %v228
      %v230 = vrot.slane %v223, %v229
      %v231 = vcombine.low %v222, %v230
      %v232 = vcombine.high %v222, %v230
      %v234 = vunpack.c.l.s4 1934713408
      %v235 = vunpack.c.0.s8 %v234
      %v236 = vlaneseq
      %v237 = vshrl.u32 %v236, 7
      %v238 = vsub.s32 %v235, %v237
      %v239 = vrot.slane %v231, %v238
      %v241 = vunpack.c.l.s4 1934713408
      %v242 = vunpack.c.0.s8 %v241
      %v243 = vlaneseq
      %v244 = vshrl.u32 %v243, 7
      %v245 = vsub.s32 %v242, %v244
      %v246 = vrot.slane %v232, %v245
      %v247 = vcombine.high %v239, 0
      %v248 = vcombine.high %v246, 0
      %v249 = vcombine.low %v195, %v207
      %v251 = vunpack.c.l.s4 1983009808
      %v252 = vunpack.c.0.s8 %v251
      %v253 = vlaneseq
      %v254 = vshrl.u32 %v253, 7
      %v255 = vsub.s32 %v252, %v254
      %v256 = vrot.slane %v249, %v255
      %v257 = vcombine.low %v201, %v213
      %v259 = vunpack.c.l.s4 1983009808
      %v260 = vunpack.c.0.s8 %v259
      %v261 = vlaneseq
      %v262 = vshrl.u32 %v261, 7
      %v263 = vsub.s32 %v260, %v262
      %v264 = vrot.slane %v257, %v263
      %v265 = vcombine.low %v256, %v264
      %v266 = vcombine.high %v256, %v264
      %v268 = vunpack.c.l.s4 1934713408
      %v269 = vunpack.c.0.s8 %v268
      %v270 = vlaneseq
      %v271 = vshrl.u32 %v270, 7
      %v272 = vsub.s32 %v269, %v271
      %v273 = vrot.slane %v265, %v272
      %v275 = vunpack.c.l.s4 1934713408
      %v276 = vunpack.c.0.s8 %v275
      %v277 = vlaneseq
      %v278 = vshrl.u32 %v277, 7
      %v279 = vsub.s32 %v276, %v278
      %v280 = vrot.slane %v266, %v279
      %v281 = vcombine.high %v273, 0
      %v282 = vcombine.high %v280, 0
      %v285 = vpack.i.b16 %v273, %v239
      %v287 = vshrl.u32 %v239, 16
      %v288 = vshrl.u32 %v273, 16
      %v289 = vpack.i.b16 %v288, %v287
      %v293 = vpack.i.b16 %v281, %v247
      %v295 = vshrl.u32 %v247, 16
      %v296 = vshrl.u32 %v281, 16
      %v297 = vpack.i.b16 %v296, %v295
      %v301 = vpack.i.b16 %v280, %v246
      %v303 = vshrl.u32 %v246, 16
      %v304 = vshrl.u32 %v280, 16
      %v305 = vpack.i.b16 %v304, %v303
      %v309 = vpack.i.b16 %v282, %v248
      %v311 = vshrl.u32 %v248, 16
      %v312 = vshrl.u32 %v282, 16
      %v313 = vpack.i.b16 %v312, %v311
      %v315 = vcombine.low %v285, %v301
      %v317 = vunpack.c.l.s4 1983009808
      %v318 = vunpack.c.0.s8 %v317
      %v319 = vlaneseq
      %v320 = vshrl.u32 %v319, 7
      %v321 = vsub.s32 %v318, %v320
      %v322 = vrot.slane %v315, %v321
      %v323 = vcombine.low %v293, %v309
      %v325 = vunpack.c.l.s4 1983009808
      %v326 = vunpack.c.0.s8 %v325
      %v327 = vlaneseq
      %v328 = vshrl.u32 %v327, 7
      %v329 = vsub.s32 %v326, %v328
      %v330 = vrot.slane %v323, %v329
      %v331 = vcombine.low %v322, %v330
      %v332 = vcombine.high %v322, %v330
      %v334 = vunpack.c.l.s4 1934713408
      %v335 = vunpack.c.0.s8 %v334
      %v336 = vlaneseq
      %v337 = vshrl.u32 %v336, 7
      %v338 = vsub.s32 %v335, %v337
      %v339 = vrot.slane %v331, %v338
      %v341 = vunpack.c.l.s4 1934713408
      %v342 = vunpack.c.0.s8 %v341
      %v343 = vlaneseq
      %v344 = vshrl.u32 %v343, 7
      %v345 = vsub.s32 %v342, %v344
      %v346 = vrot.slane %v332, %v345
      %v347 = vcombine.high %v339, 0
      %v348 = vcombine.high %v346, 0
      %v349 = vcombine.low %v289, %v305
      %v351 = vunpack.c.l.s4 1983009808
      %v352 = vunpack.c.0.s8 %v351
      %v353 = vlaneseq
      %v354 = vshrl.u32 %v353, 7
      %v355 = vsub.s32 %v352, %v354
      %v356 = vrot.slane %v349, %v355
      %v357 = vcombine.low %v297, %v313
      %v359 = vunpack.c.l.s4 1983009808
      %v360 = vunpack.c.0.s8 %v359
      %v361 = vlaneseq
      %v362 = vshrl.u32 %v361, 7
      %v363 = vsub.s32 %v360, %v362
      %v364 = vrot.slane %v357, %v363
      %v365 = vcombine.low %v356, %v364
      %v366 = vcombine.high %v356, %v364
      %v368 = vunpack.c.l.s4 1934713408
      %v369 = vunpack.c.0.s8 %v368
      %v370 = vlaneseq
      %v371 = vshrl.u32 %v370, 7
      %v372 = vsub.s32 %v369, %v371
      %v373 = vrot.slane %v365, %v372
      %v375 = vunpack.c.l.s4 1934713408
      %v376 = vunpack.c.0.s8 %v375
      %v377 = vlaneseq
      %v378 = vshrl.u32 %v377, 7
      %v379 = vsub.s32 %v376, %v378
      %v380 = vrot.slane %v366, %v379
      %v381 = vcombine.high %v373, 0
      %v382 = vcombine.high %v380, 0
      %v385 = vpack.i.b16 %v373, %v339
      %v386 = vshrl.u32 %v339, 16
      %v387 = vshrl.u32 %v373, 16
      %v388 = vpack.i.b16 %v387, %v386
      %v391 = vpack.i.b16 %v381, %v347
      %v392 = vshrl.u32 %v347, 16
      %v393 = vshrl.u32 %v381, 16
      %v394 = vpack.i.b16 %v393, %v392
      %v397 = vpack.i.b16 %v380, %v346
      %v398 = vshrl.u32 %v346, 16
      %v399 = vshrl.u32 %v380, 16
      %v400 = vpack.i.b16 %v399, %v398
      %v403 = vpack.i.b16 %v382, %v348
      %v404 = vshrl.u32 %v348, 16
      %v405 = vshrl.u32 %v382, 16
      %v406 = vpack.i.b16 %v405, %v404
      %408 = vrot.lane.b32.xlu0 %v191, 112
      %v409 = vpop.permute.xlu0 %408
      %411 = vrot.lane.b32.xlu0 %v191, 96
      %v412 = vpop.permute.xlu0 %411
      %414 = vrot.lane.b32.xlu0 %v191, 80
      %v415 = vpop.permute.xlu0 %414
      %417 = vrot.lane.b32.xlu0 %v191, 64
      %v418 = vpop.permute.xlu0 %417
      %420 = vrot.lane.b32.xlu0 %v191, 48
      %v421 = vpop.permute.xlu0 %420
      %423 = vrot.lane.b32.xlu0 %v191, 32
      %v424 = vpop.permute.xlu0 %423
      %426 = vrot.lane.b32.xlu0 %v191, 16
      %v427 = vpop.permute.xlu0 %426
      %v429 = vcombine.low %v191, %v418
      %v431 = vunpack.c.l.s4 1983009808
      %v432 = vunpack.c.0.s8 %v431
      %v433 = vlaneseq
      %v434 = vshrl.u32 %v433, 7
      %v435 = vsub.s32 %v432, %v434
      %v436 = vrot.slane %v429, %v435
      %v437 = vcombine.low %v412, %v424
      %v439 = vunpack.c.l.s4 1983009808
      %v440 = vunpack.c.0.s8 %v439
      %v441 = vlaneseq
      %v442 = vshrl.u32 %v441, 7
      %v443 = vsub.s32 %v440, %v442
      %v444 = vrot.slane %v437, %v443
      %v445 = vcombine.low %v436, %v444
      %v446 = vcombine.high %v436, %v444
      %v448 = vunpack.c.l.s4 1934713408
      %v449 = vunpack.c.0.s8 %v448
      %v450 = vlaneseq
      %v451 = vshrl.u32 %v450, 7
      %v452 = vsub.s32 %v449, %v451
      %v453 = vrot.slane %v445, %v452
      %v455 = vunpack.c.l.s4 1934713408
      %v456 = vunpack.c.0.s8 %v455
      %v457 = vlaneseq
      %v458 = vshrl.u32 %v457, 7
      %v459 = vsub.s32 %v456, %v458
      %v460 = vrot.slane %v446, %v459
      %v461 = vcombine.high %v453, 0
      %v462 = vcombine.high %v460, 0
      %v463 = vcombine.low %v409, %v421
      %v465 = vunpack.c.l.s4 1983009808
      %v466 = vunpack.c.0.s8 %v465
      %v467 = vlaneseq
      %v468 = vshrl.u32 %v467, 7
      %v469 = vsub.s32 %v466, %v468
      %v470 = vrot.slane %v463, %v469
      %v471 = vcombine.low %v415, %v427
      %v473 = vunpack.c.l.s4 1983009808
      %v474 = vunpack.c.0.s8 %v473
      %v475 = vlaneseq
      %v476 = vshrl.u32 %v475, 7
      %v477 = vsub.s32 %v474, %v476
      %v478 = vrot.slane %v471, %v477
      %v479 = vcombine.low %v470, %v478
      %v480 = vcombine.high %v470, %v478
      %v482 = vunpack.c.l.s4 1934713408
      %v483 = vunpack.c.0.s8 %v482
      %v484 = vlaneseq
      %v485 = vshrl.u32 %v484, 7
      %v486 = vsub.s32 %v483, %v485
      %v487 = vrot.slane %v479, %v486
      %v489 = vunpack.c.l.s4 1934713408
      %v490 = vunpack.c.0.s8 %v489
      %v491 = vlaneseq
      %v492 = vshrl.u32 %v491, 7
      %v493 = vsub.s32 %v490, %v492
      %v494 = vrot.slane %v480, %v493
      %v495 = vcombine.high %v487, 0
      %v496 = vcombine.high %v494, 0
      %v499 = vpack.i.b16 %v487, %v453
      %v501 = vshrl.u32 %v453, 16
      %v502 = vshrl.u32 %v487, 16
      %v503 = vpack.i.b16 %v502, %v501
      %v507 = vpack.i.b16 %v495, %v461
      %v509 = vshrl.u32 %v461, 16
      %v510 = vshrl.u32 %v495, 16
      %v511 = vpack.i.b16 %v510, %v509
      %v515 = vpack.i.b16 %v494, %v460
      %v517 = vshrl.u32 %v460, 16
      %v518 = vshrl.u32 %v494, 16
      %v519 = vpack.i.b16 %v518, %v517
      %v523 = vpack.i.b16 %v496, %v462
      %v525 = vshrl.u32 %v462, 16
      %v526 = vshrl.u32 %v496, 16
      %v527 = vpack.i.b16 %v526, %v525
      %v529 = vcombine.low %v499, %v515
      %v531 = vunpack.c.l.s4 1983009808
      %v532 = vunpack.c.0.s8 %v531
      %v533 = vlaneseq
      %v534 = vshrl.u32 %v533, 7
      %v535 = vsub.s32 %v532, %v534
      %v536 = vrot.slane %v529, %v535
      %v537 = vcombine.low %v507, %v523
      %v539 = vunpack.c.l.s4 1983009808
      %v540 = vunpack.c.0.s8 %v539
      %v541 = vlaneseq
      %v542 = vshrl.u32 %v541, 7
      %v543 = vsub.s32 %v540, %v542
      %v544 = vrot.slane %v537, %v543
      %v545 = vcombine.low %v536, %v544
      %v546 = vcombine.high %v536, %v544
      %v548 = vunpack.c.l.s4 1934713408
      %v549 = vunpack.c.0.s8 %v548
      %v550 = vlaneseq
      %v551 = vshrl.u32 %v550, 7
      %v552 = vsub.s32 %v549, %v551
      %v553 = vrot.slane %v545, %v552
      %v555 = vunpack.c.l.s4 1934713408
      %v556 = vunpack.c.0.s8 %v555
      %v557 = vlaneseq
      %v558 = vshrl.u32 %v557, 7
      %v559 = vsub.s32 %v556, %v558
      %v560 = vrot.slane %v546, %v559
      %v561 = vcombine.high %v553, 0
      %v562 = vcombine.high %v560, 0
      %v563 = vcombine.low %v503, %v519
      %v565 = vunpack.c.l.s4 1983009808
      %v566 = vunpack.c.0.s8 %v565
      %v567 = vlaneseq
      %v568 = vshrl.u32 %v567, 7
      %v569 = vsub.s32 %v566, %v568
      %v570 = vrot.slane %v563, %v569
      %v571 = vcombine.low %v511, %v527
      %v573 = vunpack.c.l.s4 1983009808
      %v574 = vunpack.c.0.s8 %v573
      %v575 = vlaneseq
      %v576 = vshrl.u32 %v575, 7
      %v577 = vsub.s32 %v574, %v576
      %v578 = vrot.slane %v571, %v577
      %v579 = vcombine.low %v570, %v578
      %v580 = vcombine.high %v570, %v578
      %v582 = vunpack.c.l.s4 1934713408
      %v583 = vunpack.c.0.s8 %v582
      %v584 = vlaneseq
      %v585 = vshrl.u32 %v584, 7
      %v586 = vsub.s32 %v583, %v585
      %v587 = vrot.slane %v579, %v586
      %v589 = vunpack.c.l.s4 1934713408
      %v590 = vunpack.c.0.s8 %v589
      %v591 = vlaneseq
      %v592 = vshrl.u32 %v591, 7
      %v593 = vsub.s32 %v590, %v592
      %v594 = vrot.slane %v580, %v593
      %v595 = vcombine.high %v587, 0
      %v596 = vcombine.high %v594, 0
      %v599 = vpack.i.b16 %v587, %v553
      %v600 = vshrl.u32 %v553, 16
      %v601 = vshrl.u32 %v587, 16
      %v602 = vpack.i.b16 %v601, %v600
      %v605 = vpack.i.b16 %v595, %v561
      %v606 = vshrl.u32 %v561, 16
      %v607 = vshrl.u32 %v595, 16
      %v608 = vpack.i.b16 %v607, %v606
      %v611 = vpack.i.b16 %v594, %v560
      %v612 = vshrl.u32 %v560, 16
      %v613 = vshrl.u32 %v594, 16
      %v614 = vpack.i.b16 %v613, %v612
      %v617 = vpack.i.b16 %v596, %v562
      %v618 = vshrl.u32 %v562, 16
      %v619 = vshrl.u32 %v596, 16
      %v620 = vpack.i.b16 %v619, %v618
      %v621 = vrot.slane %v191, 4
      %v623 = vrot.slane %v409, 4
      %v625 = vrot.slane %v412, 4
      %v627 = vrot.slane %v415, 4
      %v629 = vrot.slane %v418, 4
      %v631 = vrot.slane %v421, 4
      %v633 = vrot.slane %v424, 4
      %v635 = vrot.slane %v427, 4
      %v637 = vcombine.low %v621, %v629
      %v639 = vunpack.c.l.s4 1983009808
      %v640 = vunpack.c.0.s8 %v639
      %v641 = vlaneseq
      %v642 = vshrl.u32 %v641, 7
      %v643 = vsub.s32 %v640, %v642
      %v644 = vrot.slane %v637, %v643
      %v645 = vcombine.low %v625, %v633
      %v647 = vunpack.c.l.s4 1983009808
      %v648 = vunpack.c.0.s8 %v647
      %v649 = vlaneseq
      %v650 = vshrl.u32 %v649, 7
      %v651 = vsub.s32 %v648, %v650
      %v652 = vrot.slane %v645, %v651
      %v653 = vcombine.low %v644, %v652
      %v654 = vcombine.high %v644, %v652
      %v656 = vunpack.c.l.s4 1934713408
      %v657 = vunpack.c.0.s8 %v656
      %v658 = vlaneseq
      %v659 = vshrl.u32 %v658, 7
      %v660 = vsub.s32 %v657, %v659
      %v661 = vrot.slane %v653, %v660
      %v663 = vunpack.c.l.s4 1934713408
      %v664 = vunpack.c.0.s8 %v663
      %v665 = vlaneseq
      %v666 = vshrl.u32 %v665, 7
      %v667 = vsub.s32 %v664, %v666
      %v668 = vrot.slane %v654, %v667
      %v669 = vcombine.high %v661, 0
      %v670 = vcombine.high %v668, 0
      %v671 = vcombine.low %v623, %v631
      %v673 = vunpack.c.l.s4 1983009808
      %v674 = vunpack.c.0.s8 %v673
      %v675 = vlaneseq
      %v676 = vshrl.u32 %v675, 7
      %v677 = vsub.s32 %v674, %v676
      %v678 = vrot.slane %v671, %v677
      %v679 = vcombine.low %v627, %v635
      %v681 = vunpack.c.l.s4 1983009808
      %v682 = vunpack.c.0.s8 %v681
      %v683 = vlaneseq
      %v684 = vshrl.u32 %v683, 7
      %v685 = vsub.s32 %v682, %v684
      %v686 = vrot.slane %v679, %v685
      %v687 = vcombine.low %v678, %v686
      %v688 = vcombine.high %v678, %v686
      %v690 = vunpack.c.l.s4 1934713408
      %v691 = vunpack.c.0.s8 %v690
      %v692 = vlaneseq
      %v693 = vshrl.u32 %v692, 7
      %v694 = vsub.s32 %v691, %v693
      %v695 = vrot.slane %v687, %v694
      %v697 = vunpack.c.l.s4 1934713408
      %v698 = vunpack.c.0.s8 %v697
      %v699 = vlaneseq
      %v700 = vshrl.u32 %v699, 7
      %v701 = vsub.s32 %v698, %v700
      %v702 = vrot.slane %v688, %v701
      %v703 = vcombine.high %v695, 0
      %v704 = vcombine.high %v702, 0
      %v707 = vpack.i.b16 %v695, %v661
      %v709 = vshrl.u32 %v661, 16
      %v710 = vshrl.u32 %v695, 16
      %v711 = vpack.i.b16 %v710, %v709
      %v715 = vpack.i.b16 %v703, %v669
      %v717 = vshrl.u32 %v669, 16
      %v718 = vshrl.u32 %v703, 16
      %v719 = vpack.i.b16 %v718, %v717
      %v723 = vpack.i.b16 %v702, %v668
      %v725 = vshrl.u32 %v668, 16
      %v726 = vshrl.u32 %v702, 16
      %v727 = vpack.i.b16 %v726, %v725
      %v731 = vpack.i.b16 %v704, %v670
      %v733 = vshrl.u32 %v670, 16
      %v734 = vshrl.u32 %v704, 16
      %v735 = vpack.i.b16 %v734, %v733
      %v737 = vcombine.low %v707, %v723
      %v739 = vunpack.c.l.s4 1983009808
      %v740 = vunpack.c.0.s8 %v739
      %v741 = vlaneseq
      %v742 = vshrl.u32 %v741, 7
      %v743 = vsub.s32 %v740, %v742
      %v744 = vrot.slane %v737, %v743
      %v745 = vcombine.low %v715, %v731
      %v747 = vunpack.c.l.s4 1983009808
      %v748 = vunpack.c.0.s8 %v747
      %v749 = vlaneseq
      %v750 = vshrl.u32 %v749, 7
      %v751 = vsub.s32 %v748, %v750
      %v752 = vrot.slane %v745, %v751
      %v753 = vcombine.low %v744, %v752
      %v754 = vcombine.high %v744, %v752
      %v756 = vunpack.c.l.s4 1934713408
      %v757 = vunpack.c.0.s8 %v756
      %v758 = vlaneseq
      %v759 = vshrl.u32 %v758, 7
      %v760 = vsub.s32 %v757, %v759
      %v761 = vrot.slane %v753, %v760
      %v763 = vunpack.c.l.s4 1934713408
      %v764 = vunpack.c.0.s8 %v763
      %v765 = vlaneseq
      %v766 = vshrl.u32 %v765, 7
      %v767 = vsub.s32 %v764, %v766
      %v768 = vrot.slane %v754, %v767
      %v769 = vcombine.high %v761, 0
      %v770 = vcombine.high %v768, 0
      %v771 = vcombine.low %v711, %v727
      %v773 = vunpack.c.l.s4 1983009808
      %v774 = vunpack.c.0.s8 %v773
      %v775 = vlaneseq
      %v776 = vshrl.u32 %v775, 7
      %v777 = vsub.s32 %v774, %v776
      %v778 = vrot.slane %v771, %v777
      %v779 = vcombine.low %v719, %v735
      %v781 = vunpack.c.l.s4 1983009808
      %v782 = vunpack.c.0.s8 %v781
      %v783 = vlaneseq
      %v784 = vshrl.u32 %v783, 7
      %v785 = vsub.s32 %v782, %v784
      %v786 = vrot.slane %v779, %v785
      %v787 = vcombine.low %v778, %v786
      %v788 = vcombine.high %v778, %v786
      %v790 = vunpack.c.l.s4 1934713408
      %v791 = vunpack.c.0.s8 %v790
      %v792 = vlaneseq
      %v793 = vshrl.u32 %v792, 7
      %v794 = vsub.s32 %v791, %v793
      %v795 = vrot.slane %v787, %v794
      %v797 = vunpack.c.l.s4 1934713408
      %v798 = vunpack.c.0.s8 %v797
      %v799 = vlaneseq
      %v800 = vshrl.u32 %v799, 7
      %v801 = vsub.s32 %v798, %v800
      %v802 = vrot.slane %v788, %v801
      %v803 = vcombine.high %v795, 0
      %v804 = vcombine.high %v802, 0
      %v807 = vpack.i.b16 %v795, %v761
      %v808 = vshrl.u32 %v761, 16
      %v809 = vshrl.u32 %v795, 16
      %v810 = vpack.i.b16 %v809, %v808
      %v813 = vpack.i.b16 %v803, %v769
      %v814 = vshrl.u32 %v769, 16
      %v815 = vshrl.u32 %v803, 16
      %v816 = vpack.i.b16 %v815, %v814
      %v819 = vpack.i.b16 %v802, %v768
      %v820 = vshrl.u32 %v768, 16
      %v821 = vshrl.u32 %v802, 16
      %v822 = vpack.i.b16 %v821, %v820
      %v825 = vpack.i.b16 %v804, %v770
      %v826 = vshrl.u32 %v770, 16
      %v827 = vshrl.u32 %v804, 16
      %v828 = vpack.i.b16 %v827, %v826
      %vm829 = vcmask 130048
      %v831 = vsel %vm829, %v385, 0
      %v834 = vsel %vm829, %v599, 0
      %836 = vmatprep.subr.bf16.mxu0 0
      %837 = vmatpush1.bf16.xpose.msra.mxu0 %v834
      %838 = vmatprep.subr.bf16.mxu0 0
      %839 = vmatpush1.bf16.xpose.msra.mxu0 0
      %840 = vmatprep.subr.bf16.mxu0 0
      %841 = vmatpush1.bf16.xpose.msra.mxu0 0
      %842 = vmatprep.subr.bf16.mxu0 0
      %843 = vmatpush1.bf16.xpose.msra.mxu0 0
      %844 = vmatprep.subr.bf16.mxu0 0
      %845 = vmatpush1.bf16.xpose.msra.mxu0 0
      %846 = vmatprep.subr.bf16.mxu0 0
      %847 = vmatpush1.bf16.xpose.msra.mxu0 0
      %848 = vmatprep.subr.bf16.mxu0 0
      %849 = vmatpush1.bf16.xpose.msra.mxu0 0
      %850 = vmatprep.subr.bf16.mxu0 0
      %851 = vmatpush1.bf16.xpose.msra.mxu0 0
      %852 = vmatprep.subr.bf16.mxu0 0
      %853 = vmatpush1.bf16.xpose.msra.mxu0 0
      %854 = vmatprep.subr.bf16.mxu0 0
      %855 = vmatpush1.bf16.xpose.msra.mxu0 0
      %856 = vmatprep.subr.bf16.mxu0 0
      %857 = vmatpush1.bf16.xpose.msra.mxu0 0
      %858 = vmatprep.subr.bf16.mxu0 0
      %859 = vmatpush1.bf16.xpose.msra.mxu0 0
      %860 = vmatprep.subr.bf16.mxu0 0
      %861 = vmatpush1.bf16.xpose.msra.mxu0 0
      %862 = vmatprep.subr.bf16.mxu0 0
      %863 = vmatpush1.bf16.xpose.msra.mxu0 0
      %864 = vmatprep.subr.bf16.mxu0 0
      %865 = vmatpush1.bf16.xpose.msra.mxu0 0
      %866 = vmatprep.subr.bf16.mxu0 0
      %867 = vmatpush1.bf16.xpose.msra.mxu0 0
      %868 = vmatprep.mubr.bf16.mxu0 0
      %869 = vmatmul.mubr.bf16.gmra.mrb[0].mxu0 %v831
      %v870 = vpop.f32.mrb[0].mxu0
      %v871 = vadd.f32 0.0, %v870
      %v872 = vpop.f32.mrb[0].mxu0
      %v873 = vpop.f32.mrb[0].mxu0
      %v874 = vpop.f32.mrb[0].mxu0
      %875 = vdwg.mxu0
      %v877 = vsel %vm829, %v388, 0
      %v880 = vsel %vm829, %v602, 0
      %882 = vmatprep.subr.bf16.mxu0 0
      %883 = vmatpush1.bf16.xpose.msra.mxu0 %v880
      %884 = vmatprep.subr.bf16.mxu0 0
      %885 = vmatpush1.bf16.xpose.msra.mxu0 0
      %886 = vmatprep.subr.bf16.mxu0 0
      %887 = vmatpush1.bf16.xpose.msra.mxu0 0
      %888 = vmatprep.subr.bf16.mxu0 0
      %889 = vmatpush1.bf16.xpose.msra.mxu0 0
      %890 = vmatprep.subr.bf16.mxu0 0
      %891 = vmatpush1.bf16.xpose.msra.mxu0 0
      %892 = vmatprep.subr.bf16.mxu0 0
      %893 = vmatpush1.bf16.xpose.msra.mxu0 0
      %894 = vmatprep.subr.bf16.mxu0 0
      %895 = vmatpush1.bf16.xpose.msra.mxu0 0
      %896 = vmatprep.subr.bf16.mxu0 0
      %897 = vmatpush1.bf16.xpose.msra.mxu0 0
      %898 = vmatprep.subr.bf16.mxu0 0
      %899 = vmatpush1.bf16.xpose.msra.mxu0 0
      %900 = vmatprep.subr.bf16.mxu0 0
      %901 = vmatpush1.bf16.xpose.msra.mxu0 0
      %902 = vmatprep.subr.bf16.mxu0 0
      %903 = vmatpush1.bf16.xpose.msra.mxu0 0
      %904 = vmatprep.subr.bf16.mxu0 0
      %905 = vmatpush1.bf16.xpose.msra.mxu0 0
      %906 = vmatprep.subr.bf16.mxu0 0
      %907 = vmatpush1.bf16.xpose.msra.mxu0 0
      %908 = vmatprep.subr.bf16.mxu0 0
      %909 = vmatpush1.bf16.xpose.msra.mxu0 0
      %910 = vmatprep.subr.bf16.mxu0 0
      %911 = vmatpush1.bf16.xpose.msra.mxu0 0
      %912 = vmatprep.subr.bf16.mxu0 0
      %913 = vmatpush1.bf16.xpose.msra.mxu0 0
      %914 = vmatprep.mubr.bf16.mxu0 0
      %915 = vmatmul.mubr.bf16.gmra.mrb[0].mxu0 %v877
      %v916 = vpop.f32.mrb[0].mxu0
      %v917 = vadd.f32 0.0, %v916
      %v918 = vpop.f32.mrb[0].mxu0
      %v919 = vpop.f32.mrb[0].mxu0
      %v920 = vpop.f32.mrb[0].mxu0
      %921 = vdwg.mxu0
      %v923 = vsel %vm829, %v391, 0
      %v926 = vsel %vm829, %v605, 0
      %928 = vmatprep.subr.bf16.mxu0 0
      %929 = vmatpush1.bf16.xpose.msra.mxu0 %v926
      %930 = vmatprep.subr.bf16.mxu0 0
      %931 = vmatpush1.bf16.xpose.msra.mxu0 0
      %932 = vmatprep.subr.bf16.mxu0 0
      %933 = vmatpush1.bf16.xpose.msra.mxu0 0
      %934 = vmatprep.subr.bf16.mxu0 0
      %935 = vmatpush1.bf16.xpose.msra.mxu0 0
      %936 = vmatprep.subr.bf16.mxu0 0
      %937 = vmatpush1.bf16.xpose.msra.mxu0 0
      %938 = vmatprep.subr.bf16.mxu0 0
      %939 = vmatpush1.bf16.xpose.msra.mxu0 0
      %940 = vmatprep.subr.bf16.mxu0 0
      %941 = vmatpush1.bf16.xpose.msra.mxu0 0
      %942 = vmatprep.subr.bf16.mxu0 0
      %943 = vmatpush1.bf16.xpose.msra.mxu0 0
      %944 = vmatprep.subr.bf16.mxu0 0
      %945 = vmatpush1.bf16.xpose.msra.mxu0 0
      %946 = vmatprep.subr.bf16.mxu0 0
      %947 = vmatpush1.bf16.xpose.msra.mxu0 0
      %948 = vmatprep.subr.bf16.mxu0 0
      %949 = vmatpush1.bf16.xpose.msra.mxu0 0
      %950 = vmatprep.subr.bf16.mxu0 0
      %951 = vmatpush1.bf16.xpose.msra.mxu0 0
      %952 = vmatprep.subr.bf16.mxu0 0
      %953 = vmatpush1.bf16.xpose.msra.mxu0 0
      %954 = vmatprep.subr.bf16.mxu0 0
      %955 = vmatpush1.bf16.xpose.msra.mxu0 0
      %956 = vmatprep.subr.bf16.mxu0 0
      %957 = vmatpush1.bf16.xpose.msra.mxu0 0
      %958 = vmatprep.subr.bf16.mxu0 0
      %959 = vmatpush1.bf16.xpose.msra.mxu0 0
      %960 = vmatprep.mubr.bf16.mxu0 0
      %961 = vmatmul.mubr.bf16.gmra.mrb[0].mxu0 %v923
      %v962 = vpop.f32.mrb[0].mxu0
      %v963 = vadd.f32 0.0, %v962
      %v964 = vpop.f32.mrb[0].mxu0
      %v965 = vpop.f32.mrb[0].mxu0
      %v966 = vpop.f32.mrb[0].mxu0
      %967 = vdwg.mxu0
      %v969 = vsel %vm829, %v394, 0
      %v972 = vsel %vm829, %v608, 0
      %974 = vmatprep.subr.bf16.mxu0 0
      %975 = vmatpush1.bf16.xpose.msra.mxu0 %v972
      %976 = vmatprep.subr.bf16.mxu0 0
      %977 = vmatpush1.bf16.xpose.msra.mxu0 0
      %978 = vmatprep.subr.bf16.mxu0 0
      %979 = vmatpush1.bf16.xpose.msra.mxu0 0
      %980 = vmatprep.subr.bf16.mxu0 0
      %981 = vmatpush1.bf16.xpose.msra.mxu0 0
      %982 = vmatprep.subr.bf16.mxu0 0
      %983 = vmatpush1.bf16.xpose.msra.mxu0 0
      %984 = vmatprep.subr.bf16.mxu0 0
      %985 = vmatpush1.bf16.xpose.msra.mxu0 0
      %986 = vmatprep.subr.bf16.mxu0 0
      %987 = vmatpush1.bf16.xpose.msra.mxu0 0
      %988 = vmatprep.subr.bf16.mxu0 0
      %989 = vmatpush1.bf16.xpose.msra.mxu0 0
      %990 = vmatprep.subr.bf16.mxu0 0
      %991 = vmatpush1.bf16.xpose.msra.mxu0 0
      %992 = vmatprep.subr.bf16.mxu0 0
      %993 = vmatpush1.bf16.xpose.msra.mxu0 0
      %994 = vmatprep.subr.bf16.mxu0 0
      %995 = vmatpush1.bf16.xpose.msra.mxu0 0
      %996 = vmatprep.subr.bf16.mxu0 0
      %997 = vmatpush1.bf16.xpose.msra.mxu0 0
      %998 = vmatprep.subr.bf16.mxu0 0
      %999 = vmatpush1.bf16.xpose.msra.mxu0 0
      %1000 = vmatprep.subr.bf16.mxu0 0
      %1001 = vmatpush1.bf16.xpose.msra.mxu0 0
      %1002 = vmatprep.subr.bf16.mxu0 0
      %1003 = vmatpush1.bf16.xpose.msra.mxu0 0
      %1004 = vmatprep.subr.bf16.mxu0 0
      %1005 = vmatpush1.bf16.xpose.msra.mxu0 0
      %1006 = vmatprep.mubr.bf16.mxu0 0
      %1007 = vmatmul.mubr.bf16.gmra.mrb[0].mxu0 %v969
      %v1008 = vpop.f32.mrb[0].mxu0
      %v1009 = vadd.f32 0.0, %v1008
      %v1010 = vpop.f32.mrb[0].mxu0
      %v1011 = vpop.f32.mrb[0].mxu0
      %v1012 = vpop.f32.mrb[0].mxu0
      %1013 = vdwg.mxu0
      %v1015 = vsel %vm829, %v397, 0
      %v1018 = vsel %vm829, %v611, 0
      %1020 = vmatprep.subr.bf16.mxu0 0
      %1021 = vmatpush1.bf16.xpose.msra.mxu0 %v1018
      %1022 = vmatprep.subr.bf16.mxu0 0
      %1023 = vmatpush1.bf16.xpose.msra.mxu0 0
      %1024 = vmatprep.subr.bf16.mxu0 0
      %1025 = vmatpush1.bf16.xpose.msra.mxu0 0
      %1026 = vmatprep.subr.bf16.mxu0 0
      %1027 = vmatpush1.bf16.xpose.msra.mxu0 0
      %1028 = vmatprep.subr.bf16.mxu0 0
      %1029 = vmatpush1.bf16.xpose.msra.mxu0 0
      %1030 = vmatprep.subr.bf16.mxu0 0
      %1031 = vmatpush1.bf16.xpose.msra.mxu0 0
      %1032 = vmatprep.subr.bf16.mxu0 0
      %1033 = vmatpush1.bf16.xpose.msra.mxu0 0
      %1034 = vmatprep.subr.bf16.mxu0 0
      %1035 = vmatpush1.bf16.xpose.msra.mxu0 0
      %1036 = vmatprep.subr.bf16.mxu0 0
      %1037 = vmatpush1.bf16.xpose.msra.mxu0 0
      %1038 = vmatprep.subr.bf16.mxu0 0
      %1039 = vmatpush1.bf16.xpose.msra.mxu0 0
      %1040 = vmatprep.subr.bf16.mxu0 0
      %1041 = vmatpush1.bf16.xpose.msra.mxu0 0
      %1042 = vmatprep.subr.bf16.mxu0 0
      %1043 = vmatpush1.bf16.xpose.msra.mxu0 0
      %1044 = vmatprep.subr.bf16.mxu0 0
      %1045 = vmatpush1.bf16.xpose.msra.mxu0 0
      %1046 = vmatprep.subr.bf16.mxu0 0
      %1047 = vmatpush1.bf16.xpose.msra.mxu0 0
      %1048 = vmatprep.subr.bf16.mxu0 0
      %1049 = vmatpush1.bf16.xpose.msra.mxu0 0
      %1050 = vmatprep.subr.bf16.mxu0 0
      %1051 = vmatpush1.bf16.xpose.msra.mxu0 0
      %1052 = vmatprep.mubr.bf16.mxu0 0
      %1053 = vmatmul.mubr.bf16.gmra.mrb[0].mxu0 %v1015
      %v1054 = vpop.f32.mrb[0].mxu0
      %v1055 = vadd.f32 0.0, %v1054
      %v1056 = vpop.f32.mrb[0].mxu0
      %v1057 = vpop.f32.mrb[0].mxu0
      %v1058 = vpop.f32.mrb[0].mxu0
      %1059 = vdwg.mxu0
      %v1061 = vsel %vm829, %v400, 0
      %v1064 = vsel %vm829, %v614, 0
      %1066 = vmatprep.subr.bf16.mxu0 0
      %1067 = vmatpush1.bf16.xpose.msra.mxu0 %v1064
      %1068 = vmatprep.subr.bf16.mxu0 0
      %1069 = vmatpush1.bf16.xpose.msra.mxu0 0
      %1070 = vmatprep.subr.bf16.mxu0 0
      %1071 = vmatpush1.bf16.xpose.msra.mxu0 0
      %1072 = vmatprep.subr.bf16.mxu0 0
      %1073 = vmatpush1.bf16.xpose.msra.mxu0 0
      %1074 = vmatprep.subr.bf16.mxu0 0
      %1075 = vmatpush1.bf16.xpose.msra.mxu0 0
      %1076 = vmatprep.subr.bf16.mxu0 0
      %1077 = vmatpush1.bf16.xpose.msra.mxu0 0
      %1078 = vmatprep.subr.bf16.mxu0 0
      %1079 = vmatpush1.bf16.xpose.msra.mxu0 0
      %1080 = vmatprep.subr.bf16.mxu0 0
      %1081 = vmatpush1.bf16.xpose.msra.mxu0 0
      %1082 = vmatprep.subr.bf16.mxu0 0
      %1083 = vmatpush1.bf16.xpose.msra.mxu0 0
      %1084 = vmatprep.subr.bf16.mxu0 0
      %1085 = vmatpush1.bf16.xpose.msra.mxu0 0
      %1086 = vmatprep.subr.bf16.mxu0 0
      %1087 = vmatpush1.bf16.xpose.msra.mxu0 0
      %1088 = vmatprep.subr.bf16.mxu0 0
      %1089 = vmatpush1.bf16.xpose.msra.mxu0 0
      %1090 = vmatprep.subr.bf16.mxu0 0
      %1091 = vmatpush1.bf16.xpose.msra.mxu0 0
      %1092 = vmatprep.subr.bf16.mxu0 0
      %1093 = vmatpush1.bf16.xpose.msra.mxu0 0
      %1094 = vmatprep.subr.bf16.mxu0 0
      %1095 = vmatpush1.bf16.xpose.msra.mxu0 0
      %1096 = vmatprep.subr.bf16.mxu0 0
      %1097 = vmatpush1.bf16.xpose.msra.mxu0 0
      %1098 = vmatprep.mubr.bf16.mxu0 0
      %1099 = vmatmul.mubr.bf16.gmra.mrb[0].mxu0 %v1061
      %v1100 = vpop.f32.mrb[0].mxu0
      %v1101 = vadd.f32 0.0, %v1100
      %v1102 = vpop.f32.mrb[0].mxu0
      %v1103 = vpop.f32.mrb[0].mxu0
      %v1104 = vpop.f32.mrb[0].mxu0
      %1105 = vdwg.mxu0
      %v1107 = vsel %vm829, %v403, 0
      %v1110 = vsel %vm829, %v617, 0
      %1112 = vmatprep.subr.bf16.mxu0 0
      %1113 = vmatpush1.bf16.xpose.msra.mxu0 %v1110
      %1114 = vmatprep.subr.bf16.mxu0 0
      %1115 = vmatpush1.bf16.xpose.msra.mxu0 0
      %1116 = vmatprep.subr.bf16.mxu0 0
      %1117 = vmatpush1.bf16.xpose.msra.mxu0 0
      %1118 = vmatprep.subr.bf16.mxu0 0
      %1119 = vmatpush1.bf16.xpose.msra.mxu0 0
      %1120 = vmatprep.subr.bf16.mxu0 0
      %1121 = vmatpush1.bf16.xpose.msra.mxu0 0
      %1122 = vmatprep.subr.bf16.mxu0 0
      %1123 = vmatpush1.bf16.xpose.msra.mxu0 0
      %1124 = vmatprep.subr.bf16.mxu0 0
      %1125 = vmatpush1.bf16.xpose.msra.mxu0 0
      %1126 = vmatprep.subr.bf16.mxu0 0
      %1127 = vmatpush1.bf16.xpose.msra.mxu0 0
      %1128 = vmatprep.subr.bf16.mxu0 0
      %1129 = vmatpush1.bf16.xpose.msra.mxu0 0
      %1130 = vmatprep.subr.bf16.mxu0 0
      %1131 = vmatpush1.bf16.xpose.msra.mxu0 0
      %1132 = vmatprep.subr.bf16.mxu0 0
      %1133 = vmatpush1.bf16.xpose.msra.mxu0 0
      %1134 = vmatprep.subr.bf16.mxu0 0
      %1135 = vmatpush1.bf16.xpose.msra.mxu0 0
      %1136 = vmatprep.subr.bf16.mxu0 0
      %1137 = vmatpush1.bf16.xpose.msra.mxu0 0
      %1138 = vmatprep.subr.bf16.mxu0 0
      %1139 = vmatpush1.bf16.xpose.msra.mxu0 0
      %1140 = vmatprep.subr.bf16.mxu0 0
      %1141 = vmatpush1.bf16.xpose.msra.mxu0 0
      %1142 = vmatprep.subr.bf16.mxu0 0
      %1143 = vmatpush1.bf16.xpose.msra.mxu0 0
      %1144 = vmatprep.mubr.bf16.mxu0 0
      %1145 = vmatmul.mubr.bf16.gmra.mrb[0].mxu0 %v1107
      %v1146 = vpop.f32.mrb[0].mxu0
      %v1147 = vadd.f32 0.0, %v1146
      %v1148 = vpop.f32.mrb[0].mxu0
      %v1149 = vpop.f32.mrb[0].mxu0
      %v1150 = vpop.f32.mrb[0].mxu0
      %1151 = vdwg.mxu0
      %v1153 = vsel %vm829, %v406, 0
      %v1156 = vsel %vm829, %v620, 0
      %1158 = vmatprep.subr.bf16.mxu0 0
      %1159 = vmatpush1.bf16.xpose.msra.mxu0 %v1156
      %1160 = vmatprep.subr.bf16.mxu0 0
      %1161 = vmatpush1.bf16.xpose.msra.mxu0 0
      %1162 = vmatprep.subr.bf16.mxu0 0
      %1163 = vmatpush1.bf16.xpose.msra.mxu0 0
      %1164 = vmatprep.subr.bf16.mxu0 0
      %1165 = vmatpush1.bf16.xpose.msra.mxu0 0
      %1166 = vmatprep.subr.bf16.mxu0 0
      %1167 = vmatpush1.bf16.xpose.msra.mxu0 0
      %1168 = vmatprep.subr.bf16.mxu0 0
      %1169 = vmatpush1.bf16.xpose.msra.mxu0 0
      %1170 = vmatprep.subr.bf16.mxu0 0
      %1171 = vmatpush1.bf16.xpose.msra.mxu0 0
      %1172 = vmatprep.subr.bf16.mxu0 0
      %1173 = vmatpush1.bf16.xpose.msra.mxu0 0
      %1174 = vmatprep.subr.bf16.mxu0 0
      %1175 = vmatpush1.bf16.xpose.msra.mxu0 0
      %1176 = vmatprep.subr.bf16.mxu0 0
      %1177 = vmatpush1.bf16.xpose.msra.mxu0 0
      %1178 = vmatprep.subr.bf16.mxu0 0
      %1179 = vmatpush1.bf16.xpose.msra.mxu0 0
      %1180 = vmatprep.subr.bf16.mxu0 0
      %1181 = vmatpush1.bf16.xpose.msra.mxu0 0
      %1182 = vmatprep.subr.bf16.mxu0 0
      %1183 = vmatpush1.bf16.xpose.msra.mxu0 0
      %1184 = vmatprep.subr.bf16.mxu0 0
      %1185 = vmatpush1.bf16.xpose.msra.mxu0 0
      %1186 = vmatprep.subr.bf16.mxu0 0
      %1187 = vmatpush1.bf16.xpose.msra.mxu0 0
      %1188 = vmatprep.subr.bf16.mxu0 0
      %1189 = vmatpush1.bf16.xpose.msra.mxu0 0
      %1190 = vmatprep.mubr.bf16.mxu0 0
      %1191 = vmatmul.mubr.bf16.gmra.mrb[0].mxu0 %v1153
      %v1192 = vpop.f32.mrb[0].mxu0
      %v1193 = vadd.f32 0.0, %v1192
      %v1194 = vpop.f32.mrb[0].mxu0
      %v1195 = vpop.f32.mrb[0].mxu0
      %v1196 = vpop.f32.mrb[0].mxu0
      %1197 = vdwg.mxu0
      %v1198 = vmul.f32 %v871, 0.25
      %v1199 = vmul.f32 %v917, 0.25
      %v1200 = vmul.f32 %v963, 0.25
      %v1201 = vmul.f32 %v1009, 0.25
      %v1202 = vmul.f32 %v1055, 0.25
      %v1203 = vmul.f32 %v1101, 0.25
      %v1204 = vmul.f32 %v1147, 0.25
      %v1205 = vmul.f32 %v1193, 0.25
      %vm1206 = vcmask 64512
      %v1207 = vsel %vm1206, %v1198, -inf
      %1208 = vmax.xlane.f32.xlu0 %v1207
      %v1209 = vpop.xlane.xlu0 %1208
      %v1210 = vsel %vm1206, %v1199, -inf
      %1211 = vmax.xlane.f32.xlu0 %v1210
      %v1212 = vpop.xlane.xlu0 %1211
      %v1213 = vsel %vm1206, %v1200, -inf
      %1214 = vmax.xlane.f32.xlu0 %v1213
      %v1215 = vpop.xlane.xlu0 %1214
      %v1216 = vsel %vm1206, %v1201, -inf
      %1217 = vmax.xlane.f32.xlu0 %v1216
      %v1218 = vpop.xlane.xlu0 %1217
      %v1219 = vsel %vm1206, %v1202, -inf
      %1220 = vmax.xlane.f32.xlu0 %v1219
      %v1221 = vpop.xlane.xlu0 %1220
      %v1222 = vsel %vm1206, %v1203, -inf
      %1223 = vmax.xlane.f32.xlu0 %v1222
      %v1224 = vpop.xlane.xlu0 %1223
      %v1225 = vsel %vm1206, %v1204, -inf
      %1226 = vmax.xlane.f32.xlu0 %v1225
      %v1227 = vpop.xlane.xlu0 %1226
      %v1228 = vsel %vm1206, %v1205, -inf
      %1229 = vmax.xlane.f32.xlu0 %v1228
      %v1230 = vpop.xlane.xlu0 %1229
      %v1231 = vsub.f32 %v1198, %v1209
      %v1232 = vsub.f32 %v1199, %v1212
      %v1233 = vsub.f32 %v1200, %v1215
      %v1234 = vsub.f32 %v1201, %v1218
      %v1235 = vsub.f32 %v1202, %v1221
      %v1236 = vsub.f32 %v1203, %v1224
      %v1237 = vsub.f32 %v1204, %v1227
      %v1238 = vsub.f32 %v1205, %v1230
      %v1239 = vmul.f32 %v1231, 1.442695
      %v1240 = vpow.pop %v1239
      %v1241 = vmul.f32 %v1232, 1.442695
      %v1242 = vpow.pop %v1241
      %v1243 = vmul.f32 %v1233, 1.442695
      %v1244 = vpow.pop %v1243
      %v1245 = vmul.f32 %v1234, 1.442695
      %v1246 = vpow.pop %v1245
      %v1247 = vmul.f32 %v1235, 1.442695
      %v1248 = vpow.pop %v1247
      %v1249 = vmul.f32 %v1236, 1.442695
      %v1250 = vpow.pop %v1249
      %v1251 = vmul.f32 %v1237, 1.442695
      %v1252 = vpow.pop %v1251
      %v1253 = vmul.f32 %v1238, 1.442695
      %v1254 = vpow.pop %v1253
      %v1255 = vsel %vm1206, %v1240, 0.0
      %1256 = vadd.xlane.f32.xlu0 %v1255
      %v1257 = vpop.xlane.xlu0 %1256
      %v1258 = vsel %vm1206, %v1242, 0.0
      %1259 = vadd.xlane.f32.xlu0 %v1258
      %v1260 = vpop.xlane.xlu0 %1259
      %v1261 = vsel %vm1206, %v1244, 0.0
      %1262 = vadd.xlane.f32.xlu0 %v1261
      %v1263 = vpop.xlane.xlu0 %1262
      %v1264 = vsel %vm1206, %v1246, 0.0
      %1265 = vadd.xlane.f32.xlu0 %v1264
      %v1266 = vpop.xlane.xlu0 %1265
      %v1267 = vsel %vm1206, %v1248, 0.0
      %1268 = vadd.xlane.f32.xlu0 %v1267
      %v1269 = vpop.xlane.xlu0 %1268
      %v1270 = vsel %vm1206, %v1250, 0.0
      %1271 = vadd.xlane.f32.xlu0 %v1270
      %v1272 = vpop.xlane.xlu0 %1271
      %v1273 = vsel %vm1206, %v1252, 0.0
      %1274 = vadd.xlane.f32.xlu0 %v1273
      %v1275 = vpop.xlane.xlu0 %1274
      %v1276 = vsel %vm1206, %v1254, 0.0
      %1277 = vadd.xlane.f32.xlu0 %v1276
      %v1278 = vpop.xlane.xlu0 %1277
      %v1279 = vrcp.pop %v1257
      %v1280 = vrcp.pop %v1260
      %v1281 = vrcp.pop %v1263
      %v1282 = vrcp.pop %v1266
      %v1283 = vrcp.pop %v1269
      %v1284 = vrcp.pop %v1272
      %v1285 = vrcp.pop %v1275
      %v1286 = vrcp.pop %v1278
      %v1287 = vmul.f32 %v1240, %v1279
      %v1288 = vmul.f32 %v1242, %v1280
      %v1289 = vmul.f32 %v1244, %v1281
      %v1290 = vmul.f32 %v1246, %v1282
      %v1291 = vmul.f32 %v1248, %v1283
      %v1292 = vmul.f32 %v1250, %v1284
      %v1293 = vmul.f32 %v1252, %v1285
      %v1294 = vmul.f32 %v1254, %v1286
      %v1295 = vpack.c.bf16 %v1287, %v1287
      %v1296 = vpack.c.bf16 %v1288, %v1288
      %v1297 = vpack.c.bf16 %v1289, %v1289
      %v1298 = vpack.c.bf16 %v1290, %v1290
      %v1299 = vpack.c.bf16 %v1291, %v1291
      %v1300 = vpack.c.bf16 %v1292, %v1292
      %v1301 = vpack.c.bf16 %v1293, %v1293
      %v1302 = vpack.c.bf16 %v1294, %v1294
      %v1304 = vsel %vm1206, %v1295, 0
      %vm1306 = vcmask 1043456
      %v1308 = vsel %vm1306, %v807, 0
      %1310 = vmatprep.subr.bf16.mxu0 0
      %1311 = vmatpush1.bf16.msra.mxu0 %v1308
      %1312 = vmatprep.subr.bf16.mxu0 0
      %1313 = vmatpush1.bf16.msra.mxu0 0
      %1314 = vmatprep.subr.bf16.mxu0 0
      %1315 = vmatpush1.bf16.msra.mxu0 0
      %1316 = vmatprep.subr.bf16.mxu0 0
      %1317 = vmatpush1.bf16.msra.mxu0 0
      %1318 = vmatprep.subr.bf16.mxu0 0
      %1319 = vmatpush1.bf16.msra.mxu0 0
      %1320 = vmatprep.subr.bf16.mxu0 0
      %1321 = vmatpush1.bf16.msra.mxu0 0
      %1322 = vmatprep.subr.bf16.mxu0 0
      %1323 = vmatpush1.bf16.msra.mxu0 0
      %1324 = vmatprep.subr.bf16.mxu0 0
      %1325 = vmatpush1.bf16.msra.mxu0 0
      %1326 = vmatprep.subr.bf16.mxu0 0
      %1327 = vmatpush1.bf16.msra.mxu0 0
      %1328 = vmatprep.subr.bf16.mxu0 0
      %1329 = vmatpush1.bf16.msra.mxu0 0
      %1330 = vmatprep.subr.bf16.mxu0 0
      %1331 = vmatpush1.bf16.msra.mxu0 0
      %1332 = vmatprep.subr.bf16.mxu0 0
      %1333 = vmatpush1.bf16.msra.mxu0 0
      %1334 = vmatprep.subr.bf16.mxu0 0
      %1335 = vmatpush1.bf16.msra.mxu0 0
      %1336 = vmatprep.subr.bf16.mxu0 0
      %1337 = vmatpush1.bf16.msra.mxu0 0
      %1338 = vmatprep.subr.bf16.mxu0 0
      %1339 = vmatpush1.bf16.msra.mxu0 0
      %1340 = vmatprep.subr.bf16.mxu0 0
      %1341 = vmatpush1.bf16.msra.mxu0 0
      %1342 = vmatprep.mubr.bf16.mxu0 0
      %1343 = vmatmul.mubr.bf16.gmra.mrb[0].mxu0 %v1304
      %v1344 = vpop.f32.mrb[0].mxu0
      %v1345 = vadd.f32 0.0, %v1344
      %v1346 = vpop.f32.mrb[0].mxu0
      %v1347 = vpop.f32.mrb[0].mxu0
      %v1348 = vpop.f32.mrb[0].mxu0
      %1349 = vdwg.mxu0
      %v1351 = vsel %vm1206, %v1296, 0
      %v1354 = vsel %vm1306, %v810, 0
      %1356 = vmatprep.subr.bf16.mxu0 0
      %1357 = vmatpush1.bf16.msra.mxu0 %v1354
      %1358 = vmatprep.subr.bf16.mxu0 0
      %1359 = vmatpush1.bf16.msra.mxu0 0
      %1360 = vmatprep.subr.bf16.mxu0 0
      %1361 = vmatpush1.bf16.msra.mxu0 0
      %1362 = vmatprep.subr.bf16.mxu0 0
      %1363 = vmatpush1.bf16.msra.mxu0 0
      %1364 = vmatprep.subr.bf16.mxu0 0
      %1365 = vmatpush1.bf16.msra.mxu0 0
      %1366 = vmatprep.subr.bf16.mxu0 0
      %1367 = vmatpush1.bf16.msra.mxu0 0
      %1368 = vmatprep.subr.bf16.mxu0 0
      %1369 = vmatpush1.bf16.msra.mxu0 0
      %1370 = vmatprep.subr.bf16.mxu0 0
      %1371 = vmatpush1.bf16.msra.mxu0 0
      %1372 = vmatprep.subr.bf16.mxu0 0
      %1373 = vmatpush1.bf16.msra.mxu0 0
      %1374 = vmatprep.subr.bf16.mxu0 0
      %1375 = vmatpush1.bf16.msra.mxu0 0
      %1376 = vmatprep.subr.bf16.mxu0 0
      %1377 = vmatpush1.bf16.msra.mxu0 0
      %1378 = vmatprep.subr.bf16.mxu0 0
      %1379 = vmatpush1.bf16.msra.mxu0 0
      %1380 = vmatprep.subr.bf16.mxu0 0
      %1381 = vmatpush1.bf16.msra.mxu0 0
      %1382 = vmatprep.subr.bf16.mxu0 0
      %1383 = vmatpush1.bf16.msra.mxu0 0
      %1384 = vmatprep.subr.bf16.mxu0 0
      %1385 = vmatpush1.bf16.msra.mxu0 0
      %1386 = vmatprep.subr.bf16.mxu0 0
      %1387 = vmatpush1.bf16.msra.mxu0 0
      %1388 = vmatprep.mubr.bf16.mxu0 0
      %1389 = vmatmul.mubr.bf16.gmra.mrb[0].mxu0 %v1351
      %v1390 = vpop.f32.mrb[0].mxu0
      %v1391 = vadd.f32 0.0, %v1390
      %v1392 = vpop.f32.mrb[0].mxu0
      %v1393 = vpop.f32.mrb[0].mxu0
      %v1394 = vpop.f32.mrb[0].mxu0
      %1395 = vdwg.mxu0
      %v1397 = vsel %vm1206, %v1297, 0
      %v1400 = vsel %vm1306, %v813, 0
      %1402 = vmatprep.subr.bf16.mxu0 0
      %1403 = vmatpush1.bf16.msra.mxu0 %v1400
      %1404 = vmatprep.subr.bf16.mxu0 0
      %1405 = vmatpush1.bf16.msra.mxu0 0
      %1406 = vmatprep.subr.bf16.mxu0 0
      %1407 = vmatpush1.bf16.msra.mxu0 0
      %1408 = vmatprep.subr.bf16.mxu0 0
      %1409 = vmatpush1.bf16.msra.mxu0 0
      %1410 = vmatprep.subr.bf16.mxu0 0
      %1411 = vmatpush1.bf16.msra.mxu0 0
      %1412 = vmatprep.subr.bf16.mxu0 0
      %1413 = vmatpush1.bf16.msra.mxu0 0
      %1414 = vmatprep.subr.bf16.mxu0 0
      %1415 = vmatpush1.bf16.msra.mxu0 0
      %1416 = vmatprep.subr.bf16.mxu0 0
      %1417 = vmatpush1.bf16.msra.mxu0 0
      %1418 = vmatprep.subr.bf16.mxu0 0
      %1419 = vmatpush1.bf16.msra.mxu0 0
      %1420 = vmatprep.subr.bf16.mxu0 0
      %1421 = vmatpush1.bf16.msra.mxu0 0
      %1422 = vmatprep.subr.bf16.mxu0 0
      %1423 = vmatpush1.bf16.msra.mxu0 0
      %1424 = vmatprep.subr.bf16.mxu0 0
      %1425 = vmatpush1.bf16.msra.mxu0 0
      %1426 = vmatprep.subr.bf16.mxu0 0
      %1427 = vmatpush1.bf16.msra.mxu0 0
      %1428 = vmatprep.subr.bf16.mxu0 0
      %1429 = vmatpush1.bf16.msra.mxu0 0
      %1430 = vmatprep.subr.bf16.mxu0 0
      %1431 = vmatpush1.bf16.msra.mxu0 0
      %1432 = vmatprep.subr.bf16.mxu0 0
      %1433 = vmatpush1.bf16.msra.mxu0 0
      %1434 = vmatprep.mubr.bf16.mxu0 0
      %1435 = vmatmul.mubr.bf16.gmra.mrb[0].mxu0 %v1397
      %v1436 = vpop.f32.mrb[0].mxu0
      %v1437 = vadd.f32 0.0, %v1436
      %v1438 = vpop.f32.mrb[0].mxu0
      %v1439 = vpop.f32.mrb[0].mxu0
      %v1440 = vpop.f32.mrb[0].mxu0
      %1441 = vdwg.mxu0
      %v1443 = vsel %vm1206, %v1298, 0
      %v1446 = vsel %vm1306, %v816, 0
      %1448 = vmatprep.subr.bf16.mxu0 0
      %1449 = vmatpush1.bf16.msra.mxu0 %v1446
      %1450 = vmatprep.subr.bf16.mxu0 0
      %1451 = vmatpush1.bf16.msra.mxu0 0
      %1452 = vmatprep.subr.bf16.mxu0 0
      %1453 = vmatpush1.bf16.msra.mxu0 0
      %1454 = vmatprep.subr.bf16.mxu0 0
      %1455 = vmatpush1.bf16.msra.mxu0 0
      %1456 = vmatprep.subr.bf16.mxu0 0
      %1457 = vmatpush1.bf16.msra.mxu0 0
      %1458 = vmatprep.subr.bf16.mxu0 0
      %1459 = vmatpush1.bf16.msra.mxu0 0
      %1460 = vmatprep.subr.bf16.mxu0 0
      %1461 = vmatpush1.bf16.msra.mxu0 0
      %1462 = vmatprep.subr.bf16.mxu0 0
      %1463 = vmatpush1.bf16.msra.mxu0 0
      %1464 = vmatprep.subr.bf16.mxu0 0
      %1465 = vmatpush1.bf16.msra.mxu0 0
      %1466 = vmatprep.subr.bf16.mxu0 0
      %1467 = vmatpush1.bf16.msra.mxu0 0
      %1468 = vmatprep.subr.bf16.mxu0 0
      %1469 = vmatpush1.bf16.msra.mxu0 0
      %1470 = vmatprep.subr.bf16.mxu0 0
      %1471 = vmatpush1.bf16.msra.mxu0 0
      %1472 = vmatprep.subr.bf16.mxu0 0
      %1473 = vmatpush1.bf16.msra.mxu0 0
      %1474 = vmatprep.subr.bf16.mxu0 0
      %1475 = vmatpush1.bf16.msra.mxu0 0
      %1476 = vmatprep.subr.bf16.mxu0 0
      %1477 = vmatpush1.bf16.msra.mxu0 0
      %1478 = vmatprep.subr.bf16.mxu0 0
      %1479 = vmatpush1.bf16.msra.mxu0 0
      %1480 = vmatprep.mubr.bf16.mxu0 0
      %1481 = vmatmul.mubr.bf16.gmra.mrb[0].mxu0 %v1443
      %v1482 = vpop.f32.mrb[0].mxu0
      %v1483 = vadd.f32 0.0, %v1482
      %v1484 = vpop.f32.mrb[0].mxu0
      %v1485 = vpop.f32.mrb[0].mxu0
      %v1486 = vpop.f32.mrb[0].mxu0
      %1487 = vdwg.mxu0
      %v1489 = vsel %vm1206, %v1299, 0
      %v1492 = vsel %vm1306, %v819, 0
      %1494 = vmatprep.subr.bf16.mxu0 0
      %1495 = vmatpush1.bf16.msra.mxu0 %v1492
      %1496 = vmatprep.subr.bf16.mxu0 0
      %1497 = vmatpush1.bf16.msra.mxu0 0
      %1498 = vmatprep.subr.bf16.mxu0 0
      %1499 = vmatpush1.bf16.msra.mxu0 0
      %1500 = vmatprep.subr.bf16.mxu0 0
      %1501 = vmatpush1.bf16.msra.mxu0 0
      %1502 = vmatprep.subr.bf16.mxu0 0
      %1503 = vmatpush1.bf16.msra.mxu0 0
      %1504 = vmatprep.subr.bf16.mxu0 0
      %1505 = vmatpush1.bf16.msra.mxu0 0
      %1506 = vmatprep.subr.bf16.mxu0 0
      %1507 = vmatpush1.bf16.msra.mxu0 0
      %1508 = vmatprep.subr.bf16.mxu0 0
      %1509 = vmatpush1.bf16.msra.mxu0 0
      %1510 = vmatprep.subr.bf16.mxu0 0
      %1511 = vmatpush1.bf16.msra.mxu0 0
      %1512 = vmatprep.subr.bf16.mxu0 0
      %1513 = vmatpush1.bf16.msra.mxu0 0
      %1514 = vmatprep.subr.bf16.mxu0 0
      %1515 = vmatpush1.bf16.msra.mxu0 0
      %1516 = vmatprep.subr.bf16.mxu0 0
      %1517 = vmatpush1.bf16.msra.mxu0 0
      %1518 = vmatprep.subr.bf16.mxu0 0
      %1519 = vmatpush1.bf16.msra.mxu0 0
      %1520 = vmatprep.subr.bf16.mxu0 0
      %1521 = vmatpush1.bf16.msra.mxu0 0
      %1522 = vmatprep.subr.bf16.mxu0 0
      %1523 = vmatpush1.bf16.msra.mxu0 0
      %1524 = vmatprep.subr.bf16.mxu0 0
      %1525 = vmatpush1.bf16.msra.mxu0 0
      %1526 = vmatprep.mubr.bf16.mxu0 0
      %1527 = vmatmul.mubr.bf16.gmra.mrb[0].mxu0 %v1489
      %v1528 = vpop.f32.mrb[0].mxu0
      %v1529 = vadd.f32 0.0, %v1528
      %v1530 = vpop.f32.mrb[0].mxu0
      %v1531 = vpop.f32.mrb[0].mxu0
      %v1532 = vpop.f32.mrb[0].mxu0
      %1533 = vdwg.mxu0
      %v1535 = vsel %vm1206, %v1300, 0
      %v1538 = vsel %vm1306, %v822, 0
      %1540 = vmatprep.subr.bf16.mxu0 0
      %1541 = vmatpush1.bf16.msra.mxu0 %v1538
      %1542 = vmatprep.subr.bf16.mxu0 0
      %1543 = vmatpush1.bf16.msra.mxu0 0
      %1544 = vmatprep.subr.bf16.mxu0 0
      %1545 = vmatpush1.bf16.msra.mxu0 0
      %1546 = vmatprep.subr.bf16.mxu0 0
      %1547 = vmatpush1.bf16.msra.mxu0 0
      %1548 = vmatprep.subr.bf16.mxu0 0
      %1549 = vmatpush1.bf16.msra.mxu0 0
      %1550 = vmatprep.subr.bf16.mxu0 0
      %1551 = vmatpush1.bf16.msra.mxu0 0
      %1552 = vmatprep.subr.bf16.mxu0 0
      %1553 = vmatpush1.bf16.msra.mxu0 0
      %1554 = vmatprep.subr.bf16.mxu0 0
      %1555 = vmatpush1.bf16.msra.mxu0 0
      %1556 = vmatprep.subr.bf16.mxu0 0
      %1557 = vmatpush1.bf16.msra.mxu0 0
      %1558 = vmatprep.subr.bf16.mxu0 0
      %1559 = vmatpush1.bf16.msra.mxu0 0
      %1560 = vmatprep.subr.bf16.mxu0 0
      %1561 = vmatpush1.bf16.msra.mxu0 0
      %1562 = vmatprep.subr.bf16.mxu0 0
      %1563 = vmatpush1.bf16.msra.mxu0 0
      %1564 = vmatprep.subr.bf16.mxu0 0
      %1565 = vmatpush1.bf16.msra.mxu0 0
      %1566 = vmatprep.subr.bf16.mxu0 0
      %1567 = vmatpush1.bf16.msra.mxu0 0
      %1568 = vmatprep.subr.bf16.mxu0 0
      %1569 = vmatpush1.bf16.msra.mxu0 0
      %1570 = vmatprep.subr.bf16.mxu0 0
      %1571 = vmatpush1.bf16.msra.mxu0 0
      %1572 = vmatprep.mubr.bf16.mxu0 0
      %1573 = vmatmul.mubr.bf16.gmra.mrb[0].mxu0 %v1535
      %v1574 = vpop.f32.mrb[0].mxu0
      %v1575 = vadd.f32 0.0, %v1574
      %v1576 = vpop.f32.mrb[0].mxu0
      %v1577 = vpop.f32.mrb[0].mxu0
      %v1578 = vpop.f32.mrb[0].mxu0
      %1579 = vdwg.mxu0
      %v1581 = vsel %vm1206, %v1301, 0
      %v1584 = vsel %vm1306, %v825, 0
      %1586 = vmatprep.subr.bf16.mxu0 0
      %1587 = vmatpush1.bf16.msra.mxu0 %v1584
      %1588 = vmatprep.subr.bf16.mxu0 0
      %1589 = vmatpush1.bf16.msra.mxu0 0
      %1590 = vmatprep.subr.bf16.mxu0 0
      %1591 = vmatpush1.bf16.msra.mxu0 0
      %1592 = vmatprep.subr.bf16.mxu0 0
      %1593 = vmatpush1.bf16.msra.mxu0 0
      %1594 = vmatprep.subr.bf16.mxu0 0
      %1595 = vmatpush1.bf16.msra.mxu0 0
      %1596 = vmatprep.subr.bf16.mxu0 0
      %1597 = vmatpush1.bf16.msra.mxu0 0
      %1598 = vmatprep.subr.bf16.mxu0 0
      %1599 = vmatpush1.bf16.msra.mxu0 0
      %1600 = vmatprep.subr.bf16.mxu0 0
      %1601 = vmatpush1.bf16.msra.mxu0 0
      %1602 = vmatprep.subr.bf16.mxu0 0
      %1603 = vmatpush1.bf16.msra.mxu0 0
      %1604 = vmatprep.subr.bf16.mxu0 0
      %1605 = vmatpush1.bf16.msra.mxu0 0
      %1606 = vmatprep.subr.bf16.mxu0 0
      %1607 = vmatpush1.bf16.msra.mxu0 0
      %1608 = vmatprep.subr.bf16.mxu0 0
      %1609 = vmatpush1.bf16.msra.mxu0 0
      %1610 = vmatprep.subr.bf16.mxu0 0
      %1611 = vmatpush1.bf16.msra.mxu0 0
      %1612 = vmatprep.subr.bf16.mxu0 0
      %1613 = vmatpush1.bf16.msra.mxu0 0
      %1614 = vmatprep.subr.bf16.mxu0 0
      %1615 = vmatpush1.bf16.msra.mxu0 0
      %1616 = vmatprep.subr.bf16.mxu0 0
      %1617 = vmatpush1.bf16.msra.mxu0 0
      %1618 = vmatprep.mubr.bf16.mxu0 0
      %1619 = vmatmul.mubr.bf16.gmra.mrb[0].mxu0 %v1581
      %v1620 = vpop.f32.mrb[0].mxu0
      %v1621 = vadd.f32 0.0, %v1620
      %v1622 = vpop.f32.mrb[0].mxu0
      %v1623 = vpop.f32.mrb[0].mxu0
      %v1624 = vpop.f32.mrb[0].mxu0
      %1625 = vdwg.mxu0
      %v1627 = vsel %vm1206, %v1302, 0
      %v1630 = vsel %vm1306, %v828, 0
      %1632 = vmatprep.subr.bf16.mxu0 0
      %1633 = vmatpush1.bf16.msra.mxu0 %v1630
      %1634 = vmatprep.subr.bf16.mxu0 0
      %1635 = vmatpush1.bf16.msra.mxu0 0
      %1636 = vmatprep.subr.bf16.mxu0 0
      %1637 = vmatpush1.bf16.msra.mxu0 0
      %1638 = vmatprep.subr.bf16.mxu0 0
      %1639 = vmatpush1.bf16.msra.mxu0 0
      %1640 = vmatprep.subr.bf16.mxu0 0
      %1641 = vmatpush1.bf16.msra.mxu0 0
      %1642 = vmatprep.subr.bf16.mxu0 0
      %1643 = vmatpush1.bf16.msra.mxu0 0
      %1644 = vmatprep.subr.bf16.mxu0 0
      %1645 = vmatpush1.bf16.msra.mxu0 0
      %1646 = vmatprep.subr.bf16.mxu0 0
      %1647 = vmatpush1.bf16.msra.mxu0 0
      %1648 = vmatprep.subr.bf16.mxu0 0
      %1649 = vmatpush1.bf16.msra.mxu0 0
      %1650 = vmatprep.subr.bf16.mxu0 0
      %1651 = vmatpush1.bf16.msra.mxu0 0
      %1652 = vmatprep.subr.bf16.mxu0 0
      %1653 = vmatpush1.bf16.msra.mxu0 0
      %1654 = vmatprep.subr.bf16.mxu0 0
      %1655 = vmatpush1.bf16.msra.mxu0 0
      %1656 = vmatprep.subr.bf16.mxu0 0
      %1657 = vmatpush1.bf16.msra.mxu0 0
      %1658 = vmatprep.subr.bf16.mxu0 0
      %1659 = vmatpush1.bf16.msra.mxu0 0
      %1660 = vmatprep.subr.bf16.mxu0 0
      %1661 = vmatpush1.bf16.msra.mxu0 0
      %1662 = vmatprep.subr.bf16.mxu0 0
      %1663 = vmatpush1.bf16.msra.mxu0 0
      %1664 = vmatprep.mubr.bf16.mxu0 0
      %1665 = vmatmul.mubr.bf16.gmra.mrb[0].mxu0 %v1627
      %v1666 = vpop.f32.mrb[0].mxu0
      %v1667 = vadd.f32 0.0, %v1666
      %v1668 = vpop.f32.mrb[0].mxu0
      %v1669 = vpop.f32.mrb[0].mxu0
      %v1670 = vpop.f32.mrb[0].mxu0
      %1671 = vdwg.mxu0
      %v1672 = vcombine.low %v1345, %v1437
      %v1673 = vcombine.high %v1345, %v1437
      %v1675 = vunpack.c.l.s4 1983009808
      %v1676 = vunpack.c.0.s8 %v1675
      %v1677 = vlaneseq
      %v1678 = vshrl.u32 %v1677, 7
      %v1679 = vsub.s32 %v1676, %v1678
      %v1680 = vrot.slane %v1672, %v1679
      %v1682 = vunpack.c.l.s4 1983009808
      %v1683 = vunpack.c.0.s8 %v1682
      %v1684 = vlaneseq
      %v1685 = vshrl.u32 %v1684, 7
      %v1686 = vsub.s32 %v1683, %v1685
      %v1687 = vrot.slane %v1673, %v1686
      %v1688 = vcombine.low %v1391, %v1483
      %v1689 = vcombine.high %v1391, %v1483
      %v1691 = vunpack.c.l.s4 1983009808
      %v1692 = vunpack.c.0.s8 %v1691
      %v1693 = vlaneseq
      %v1694 = vshrl.u32 %v1693, 7
      %v1695 = vsub.s32 %v1692, %v1694
      %v1696 = vrot.slane %v1688, %v1695
      %v1698 = vunpack.c.l.s4 1983009808
      %v1699 = vunpack.c.0.s8 %v1698
      %v1700 = vlaneseq
      %v1701 = vshrl.u32 %v1700, 7
      %v1702 = vsub.s32 %v1699, %v1701
      %v1703 = vrot.slane %v1689, %v1702
      %v1704 = vcombine.low %v1529, %v1621
      %v1705 = vcombine.high %v1529, %v1621
      %v1707 = vunpack.c.l.s4 1983009808
      %v1708 = vunpack.c.0.s8 %v1707
      %v1709 = vlaneseq
      %v1710 = vshrl.u32 %v1709, 7
      %v1711 = vsub.s32 %v1708, %v1710
      %v1712 = vrot.slane %v1704, %v1711
      %v1714 = vunpack.c.l.s4 1983009808
      %v1715 = vunpack.c.0.s8 %v1714
      %v1716 = vlaneseq
      %v1717 = vshrl.u32 %v1716, 7
      %v1718 = vsub.s32 %v1715, %v1717
      %v1719 = vrot.slane %v1705, %v1718
      %v1720 = vcombine.low %v1575, %v1667
      %v1721 = vcombine.high %v1575, %v1667
      %v1723 = vunpack.c.l.s4 1983009808
      %v1724 = vunpack.c.0.s8 %v1723
      %v1725 = vlaneseq
      %v1726 = vshrl.u32 %v1725, 7
      %v1727 = vsub.s32 %v1724, %v1726
      %v1728 = vrot.slane %v1720, %v1727
      %v1730 = vunpack.c.l.s4 1983009808
      %v1731 = vunpack.c.0.s8 %v1730
      %v1732 = vlaneseq
      %v1733 = vshrl.u32 %v1732, 7
      %v1734 = vsub.s32 %v1731, %v1733
      %v1735 = vrot.slane %v1721, %v1734
      %v1736 = vcombine.low %v1680, %v1696
      %v1737 = vcombine.high %v1680, %v1696
      %v1739 = vunpack.c.l.s4 1934713408
      %v1740 = vunpack.c.0.s8 %v1739
      %v1741 = vlaneseq
      %v1742 = vshrl.u32 %v1741, 7
      %v1743 = vsub.s32 %v1740, %v1742
      %v1744 = vrot.slane %v1736, %v1743
      %v1746 = vunpack.c.l.s4 1934713408
      %v1747 = vunpack.c.0.s8 %v1746
      %v1748 = vlaneseq
      %v1749 = vshrl.u32 %v1748, 7
      %v1750 = vsub.s32 %v1747, %v1749
      %v1751 = vrot.slane %v1737, %v1750
      %v1752 = vcombine.low %v1687, %v1703
      %v1753 = vcombine.high %v1687, %v1703
      %v1755 = vunpack.c.l.s4 1934713408
      %v1756 = vunpack.c.0.s8 %v1755
      %v1757 = vlaneseq
      %v1758 = vshrl.u32 %v1757, 7
      %v1759 = vsub.s32 %v1756, %v1758
      %v1760 = vrot.slane %v1752, %v1759
      %v1762 = vunpack.c.l.s4 1934713408
      %v1763 = vunpack.c.0.s8 %v1762
      %v1764 = vlaneseq
      %v1765 = vshrl.u32 %v1764, 7
      %v1766 = vsub.s32 %v1763, %v1765
      %v1767 = vrot.slane %v1753, %v1766
      %v1768 = vcombine.low %v1712, %v1728
      %v1769 = vcombine.high %v1712, %v1728
      %v1771 = vunpack.c.l.s4 1934713408
      %v1772 = vunpack.c.0.s8 %v1771
      %v1773 = vlaneseq
      %v1774 = vshrl.u32 %v1773, 7
      %v1775 = vsub.s32 %v1772, %v1774
      %v1776 = vrot.slane %v1768, %v1775
      %v1778 = vunpack.c.l.s4 1934713408
      %v1779 = vunpack.c.0.s8 %v1778
      %v1780 = vlaneseq
      %v1781 = vshrl.u32 %v1780, 7
      %v1782 = vsub.s32 %v1779, %v1781
      %v1783 = vrot.slane %v1769, %v1782
      %v1784 = vcombine.low %v1719, %v1735
      %v1785 = vcombine.high %v1719, %v1735
      %v1787 = vunpack.c.l.s4 1934713408
      %v1788 = vunpack.c.0.s8 %v1787
      %v1789 = vlaneseq
      %v1790 = vshrl.u32 %v1789, 7
      %v1791 = vsub.s32 %v1788, %v1790
      %v1792 = vrot.slane %v1784, %v1791
      %v1794 = vunpack.c.l.s4 1934713408
      %v1795 = vunpack.c.0.s8 %v1794
      %v1796 = vlaneseq
      %v1797 = vshrl.u32 %v1796, 7
      %v1798 = vsub.s32 %v1795, %v1797
      %v1799 = vrot.slane %v1785, %v1798
      %v1800 = vcombine.low %v1744, %v1776
      %v1801 = vcombine.high %v1744, %v1776
      %v1802 = vcombine.low %v1751, %v1783
      %v1803 = vcombine.high %v1751, %v1783
      %v1804 = vcombine.low %v1760, %v1792
      %v1805 = vcombine.high %v1760, %v1792
      %v1806 = vcombine.low %v1767, %v1799
      %v1807 = vcombine.high %v1767, %v1799
      %v1808 = vcombine.low %v1800, %v1802
      %v1809 = vcombine.high %v1800, %v1802
      %v1811 = vunpack.c.l.s4 1983009808
      %v1812 = vunpack.c.0.s8 %v1811
      %v1813 = vlaneseq
      %v1814 = vshrl.u32 %v1813, 7
      %v1815 = vsub.s32 %v1812, %v1814
      %v1816 = vrot.slane %v1808, %v1815
      %v1818 = vunpack.c.l.s4 1983009808
      %v1819 = vunpack.c.0.s8 %v1818
      %v1820 = vlaneseq
      %v1821 = vshrl.u32 %v1820, 7
      %v1822 = vsub.s32 %v1819, %v1821
      %v1823 = vrot.slane %v1809, %v1822
      %v1824 = vcombine.low %v1801, %v1803
      %v1825 = vcombine.high %v1801, %v1803
      %v1827 = vunpack.c.l.s4 1983009808
      %v1828 = vunpack.c.0.s8 %v1827
      %v1829 = vlaneseq
      %v1830 = vshrl.u32 %v1829, 7
      %v1831 = vsub.s32 %v1828, %v1830
      %v1832 = vrot.slane %v1824, %v1831
      %v1834 = vunpack.c.l.s4 1983009808
      %v1835 = vunpack.c.0.s8 %v1834
      %v1836 = vlaneseq
      %v1837 = vshrl.u32 %v1836, 7
      %v1838 = vsub.s32 %v1835, %v1837
      %v1839 = vrot.slane %v1825, %v1838
      %v1840 = vcombine.low %v1804, %v1806
      %v1841 = vcombine.high %v1804, %v1806
      %v1843 = vunpack.c.l.s4 1983009808
      %v1844 = vunpack.c.0.s8 %v1843
      %v1845 = vlaneseq
      %v1846 = vshrl.u32 %v1845, 7
      %v1847 = vsub.s32 %v1844, %v1846
      %v1848 = vrot.slane %v1840, %v1847
      %v1850 = vunpack.c.l.s4 1983009808
      %v1851 = vunpack.c.0.s8 %v1850
      %v1852 = vlaneseq
      %v1853 = vshrl.u32 %v1852, 7
      %v1854 = vsub.s32 %v1851, %v1853
      %v1855 = vrot.slane %v1841, %v1854
      %v1856 = vcombine.low %v1805, %v1807
      %v1857 = vcombine.high %v1805, %v1807
      %v1859 = vunpack.c.l.s4 1983009808
      %v1860 = vunpack.c.0.s8 %v1859
      %v1861 = vlaneseq
      %v1862 = vshrl.u32 %v1861, 7
      %v1863 = vsub.s32 %v1860, %v1862
      %v1864 = vrot.slane %v1856, %v1863
      %v1866 = vunpack.c.l.s4 1983009808
      %v1867 = vunpack.c.0.s8 %v1866
      %v1868 = vlaneseq
      %v1869 = vshrl.u32 %v1868, 7
      %v1870 = vsub.s32 %v1867, %v1869
      %v1871 = vrot.slane %v1857, %v1870
      %v1872 = vcombine.low %v1816, %v1832
      %v1873 = vcombine.high %v1816, %v1832
      %v1875 = vunpack.c.l.s4 1934713408
      %v1876 = vunpack.c.0.s8 %v1875
      %v1877 = vlaneseq
      %v1878 = vshrl.u32 %v1877, 7
      %v1879 = vsub.s32 %v1876, %v1878
      %v1880 = vrot.slane %v1872, %v1879
      %v1882 = vunpack.c.l.s4 1934713408
      %v1883 = vunpack.c.0.s8 %v1882
      %v1884 = vlaneseq
      %v1885 = vshrl.u32 %v1884, 7
      %v1886 = vsub.s32 %v1883, %v1885
      %v1887 = vrot.slane %v1873, %v1886
      %v1888 = vcombine.low %v1823, %v1839
      %v1889 = vcombine.high %v1823, %v1839
      %v1891 = vunpack.c.l.s4 1934713408
      %v1892 = vunpack.c.0.s8 %v1891
      %v1893 = vlaneseq
      %v1894 = vshrl.u32 %v1893, 7
      %v1895 = vsub.s32 %v1892, %v1894
      %v1896 = vrot.slane %v1888, %v1895
      %v1898 = vunpack.c.l.s4 1934713408
      %v1899 = vunpack.c.0.s8 %v1898
      %v1900 = vlaneseq
      %v1901 = vshrl.u32 %v1900, 7
      %v1902 = vsub.s32 %v1899, %v1901
      %v1903 = vrot.slane %v1889, %v1902
      %v1904 = vcombine.low %v1848, %v1864
      %v1905 = vcombine.high %v1848, %v1864
      %v1907 = vunpack.c.l.s4 1934713408
      %v1908 = vunpack.c.0.s8 %v1907
      %v1909 = vlaneseq
      %v1910 = vshrl.u32 %v1909, 7
      %v1911 = vsub.s32 %v1908, %v1910
      %v1912 = vrot.slane %v1904, %v1911
      %v1914 = vunpack.c.l.s4 1934713408
      %v1915 = vunpack.c.0.s8 %v1914
      %v1916 = vlaneseq
      %v1917 = vshrl.u32 %v1916, 7
      %v1918 = vsub.s32 %v1915, %v1917
      %v1919 = vrot.slane %v1905, %v1918
      %v1920 = vcombine.low %v1855, %v1871
      %v1921 = vcombine.high %v1855, %v1871
      %v1923 = vunpack.c.l.s4 1934713408
      %v1924 = vunpack.c.0.s8 %v1923
      %v1925 = vlaneseq
      %v1926 = vshrl.u32 %v1925, 7
      %v1927 = vsub.s32 %v1924, %v1926
      %v1928 = vrot.slane %v1920, %v1927
      %v1930 = vunpack.c.l.s4 1934713408
      %v1931 = vunpack.c.0.s8 %v1930
      %v1932 = vlaneseq
      %v1933 = vshrl.u32 %v1932, 7
      %v1934 = vsub.s32 %v1931, %v1933
      %v1935 = vrot.slane %v1921, %v1934
      %v1936 = vcombine.low %v1880, %v1912
      %v1937 = vcombine.high %v1880, %v1912
      %v1938 = vcombine.low %v1887, %v1919
      %v1939 = vcombine.high %v1887, %v1919
      %v1940 = vcombine.low %v1896, %v1928
      %v1941 = vcombine.high %v1896, %v1928
      %v1942 = vcombine.low %v1903, %v1935
      %v1943 = vcombine.high %v1903, %v1935
      %1945 = vrot.lane.b32.xlu0 %v1937, 16
      %v1946 = vpop.permute.xlu0 %1945
      %1949 = vrot.lane.b32.xlu0 %v1938, 32
      %v1950 = vpop.permute.xlu0 %1949
      %1953 = vrot.lane.b32.xlu0 %v1939, 48
      %v1954 = vpop.permute.xlu0 %1953
      %1957 = vrot.lane.b32.xlu0 %v1940, 64
      %v1958 = vpop.permute.xlu0 %1957
      %1961 = vrot.lane.b32.xlu0 %v1941, 80
      %v1962 = vpop.permute.xlu0 %1961
      %1965 = vrot.lane.b32.xlu0 %v1942, 96
      %v1966 = vpop.permute.xlu0 %1965
      %1969 = vrot.lane.b32.xlu0 %v1943, 112
      %v1970 = vpop.permute.xlu0 %1969
      %v1972 = vsel %vm829, %v1936, %v1946
      %vm1973 = vcmask 261120
      %v1974 = vsel %vm1973, %v1972, %v1950
      %vm1975 = vcmask 392192
      %v1976 = vsel %vm1975, %v1974, %v1954
      %vm1977 = vcmask 523264
      %v1978 = vsel %vm1977, %v1976, %v1958
      %vm1979 = vcmask 654336
      %v1980 = vsel %vm1979, %v1978, %v1962
      %vm1981 = vcmask 785408
      %v1982 = vsel %vm1981, %v1980, %v1966
      %vm1983 = vcmask 916480
      %v1984 = vsel %vm1983, %v1982, %v1970
      %v1985 = vpack.c.bf16 %v1984, %v1984
      %1986 = vst [vmem:[%s189] sm:$0xf] %v1985
      %p1987 = scmp.lt.s32.totalorder %s17, 1
      %s1988 = scalar_select %p1987, %s17, 1
      %p1989 = scmp.lt.s32.totalorder %s18, 0
      %s1990 = scalar_select %p1989, %s18, 0
      %s1991 = sadd.s32 %s1990, %s1988
      %s1992 = smul.addr %s1991, 4
      %s1993 = scalar_lea.vmem %s2, %s1992
      // Predicated region
      $region29: #{chatbot_forward.45} parent=27 // pred_check
        %p1994 = pneg %p99
      $region30: #{chatbot_forward.45} parent=27 // pred_check_branch
        %1996 = sbr.rel (%p1994) target = $region32
      $region31: #{chatbot_forward.45} parent=27 // pred_region
        _
      $region32: #{chatbot_forward.45} parent=27 // pred_fallthru
        _
    $region28: #{chatbot_forward.45} parent=5 // pred_fallthru
      _
    %p1997 = scmp.le.s32.totalorder 2, %s8
    // Predicated region
    $region33: #{chatbot_forward.45} parent=5 // pred_check
      %p1998 = pneg %p1997
    $region34: #{chatbot_forward.45} parent=5 // pred_check_branch
      %2000 = sbr.rel (%p1998) target = $region36
    $region35: #{chatbot_forward.45} parent=5 // pred_region
      %s2001 = ssub.s32 %s8, 2
      // Predicated region
      $region37: #{chatbot_forward.45} parent=35 // pred_check
        %p2002 = pneg %p105
      $region38: #{chatbot_forward.45} parent=35 // pred_check_branch
        %2004 = sbr.rel (%p2002) target = $region40
      $region39: #{chatbot_forward.45} parent=35 // pred_region
        %p2005 = scmp.lt.s32.totalorder %s19, 1
        %s2006 = scalar_select %p2005, %s19, 1
        %p2007 = scmp.lt.s32.totalorder %s20, 0
        %s2008 = scalar_select %p2007, %s20, 0
        %s2009 = sadd.s32 %s2008, %s2006
        %s2010 = smul.addr %s2009, 4
        %s2011 = scalar_lea.vmem %s2, %s2010
      $region40: #{chatbot_forward.45} parent=35 // pred_fallthru
        _
    $region36: #{chatbot_forward.45} parent=5 // pred_fallthru
      _
  $region6: #{chatbot_forward.45} parent=0 // loop_footer
    %s12 = sadd.s32 1, %s8
  $region7: #{chatbot_forward.45} parent=0 // loop_footer_branch
    %7 = sbr.rel target = $region3
  $region8: #{chatbot_forward.45} parent=0 // loop_exit
    _

</llo_original>
